<compile_context>
chip_gen: v5e
topology: v5e:2x2
jax: 0.10.0
libtpu: 0.0.40
codegen_flags: <defaults>
</compile_context>

<pallas_src>
import functools

import jax
import jax.numpy as jnp
from jax import lax
from jax.experimental import pallas as pl
from jax.experimental.pallas import tpu as pltpu


# ---------------------------------------------------------------------------
# Fused conv(+bias)[+InstanceNorm][+LeakyReLU] kernel
# ---------------------------------------------------------------------------
def _conv_block_kernel(x_ref, w_ref, b_ref, o_ref, *, k, stride, Ho, Wo, Hs,
                       apply_in, eps, negative_slope):
    """One (sample, Cout-tile): 3x3 conv as 9 shifted MXU matmuls + fused
    epilogue.

    x_ref: (1, stride*stride*Hs, Ws, Cin) bf16 — phase-decomposed padded input.
    w_ref: (k*k, Cin, tcout)               bf16 — tap-major packed weights.
    b_ref: (1, tcout)                      f32.
    o_ref: (1, Ho*Wo, tcout).
    """
    cin = x_ref.shape[-1]
    tcout = o_ref.shape[-1]
    M = Ho * Wo

    x = x_ref[0]                                    # (s*s*Hs, Ws, Cin)
    acc = jnp.zeros((M, tcout), jnp.float32)
    for kh in range(k):                             # 9 taps, Python-unrolled
        for kw in range(k):
            p = (kh % stride) * stride + (kw % stride)
            dh, dw = kh // stride, kw // stride
            xs = x[p * Hs + dh:p * Hs + dh + Ho, dw:dw + Wo, :]
            acc = acc + jnp.dot(xs.reshape(M, cin), w_ref[kh * k + kw],
                                preferred_element_type=jnp.float32)

    acc = acc + b_ref[...].astype(jnp.float32)      # (1, tcout) broadcast

    if apply_in:
        # InstanceNorm2d(affine=False, eps): per-channel stats over the full
        # spatial extent of this sample (exact — block spans all of M).
        mean = jnp.mean(acc, axis=0, keepdims=True)
        var = jnp.mean(acc * acc, axis=0, keepdims=True) - mean * mean
        acc = (acc - mean) * lax.rsqrt(jnp.maximum(var, 0.0) + eps)

    if negative_slope is not None:
        acc = jnp.where(acc >= 0, acc, negative_slope * acc)

    # NOTE: for Cout < 128 (first and last layer) the store is lane-sparse;
    # packing those outputs lane-dense is a further optimization not done here.
    o_ref[0] = acc.astype(o_ref.dtype)


# ---------------------------------------------------------------------------
# Wrapper: pad + phase decomposition (cheap, ~1x activation traffic) + call
# ---------------------------------------------------------------------------
def conv_block_pallas(x_nhwc, w_packed, b2d, *, stride, apply_in,
                      negative_slope, out_dtype):
    """3x3 conv, padding=1, given stride, with fused IN/LeakyReLU epilogue.

    x_nhwc: (N, H, W, Cin); w_packed: (9, Cin, Cout) bf16; b2d: (1, Cout) f32.
    Returns (N, Ho, Wo, Cout) in `out_dtype`.
    """
    N, H, W, Cin = x_nhwc.shape
    k, pad, s = 3, 1, stride
    Cout = w_packed.shape[-1]
    Ho = (H + 2 * pad - k) // s + 1
    Wo = (W + 2 * pad - k) // s + 1
    halo = (k - 1) // s
    Hs, Ws = Ho + halo, Wo + halo
    M = Ho * Wo

    # Zero-pad (conv padding=1) and extend so every stride-phase has exactly
    # (Hs, Ws) rows/cols; the extension rows are never read by valid taps.
    xp = jnp.pad(x_nhwc.astype(jnp.bfloat16),
                 ((0, 0), (pad, pad), (pad, pad), (0, 0)))
    eh = s * Hs - xp.shape[1]
    ew = s * Ws - xp.shape[2]
    if eh > 0 or ew > 0:
        xp = jnp.pad(xp, ((0, 0), (0, max(eh, 0)), (0, max(ew, 0)), (0, 0)))
    # Phase (space-to-depth) decomposition: tap (kh, kw) of a stride-s conv
    # becomes a CONTIGUOUS window of phase (kh%s, kw%s).
    x_ph = jnp.concatenate(
        [xp[:, ph::s, pw::s, :] for ph in range(s) for pw in range(s)],
        axis=1)                                       # (N, s*s*Hs, Ws, Cin)

    tcout = Cout if Cout <= 256 else 256              # MXU-width Cout tiles
    grid = (N, Cout // tcout)

    # Explicit VMEM budget: double-buffered blocks + in-kernel f32 acc headroom.
    blk_bytes = (s * s * Hs * Ws * Cin * 2 + k * k * Cin * tcout * 2
                 + tcout * 4 + M * tcout * jnp.dtype(out_dtype).itemsize)
    vmem_limit = int(min(max(4 * blk_bytes + (8 << 20), 32 << 20), 48 << 20))

    kernel = functools.partial(
        _conv_block_kernel, k=k, stride=s, Ho=Ho, Wo=Wo, Hs=Hs,
        apply_in=apply_in, eps=1e-5, negative_slope=negative_slope)

    out = pl.pallas_call(
        kernel,
        out_shape=jax.ShapeDtypeStruct((N, M, Cout), out_dtype),
        grid_spec=pltpu.PrefetchScalarGridSpec(
            num_scalar_prefetch=0,
            grid=grid,
            in_specs=[
                pl.BlockSpec((1, s * s * Hs, Ws, Cin),
                             lambda n, c: (n, 0, 0, 0)),
                pl.BlockSpec((k * k, Cin, tcout), lambda n, c: (0, 0, c)),
                pl.BlockSpec((1, tcout), lambda n, c: (0, c)),
            ],
            out_specs=pl.BlockSpec((1, M, tcout), lambda n, c: (n, 0, c)),
        ),
        compiler_params=pltpu.CompilerParams(
            dimension_semantics=("parallel", "parallel"),
            vmem_limit_bytes=vmem_limit,
        ),
    )(x_ph, w_packed, b2d)

    # Row-major (N, Ho*Wo, Cout) -> (N, Ho, Wo, Cout) is a free reshape.
    return out.reshape(N, Ho, Wo, Cout)


# ---------------------------------------------------------------------------
# Discriminator: parameter init, one-time packing, forward
# ---------------------------------------------------------------------------
# (out_filters, stride, normalize) as in the PyTorch module, channels=3 input.
_BLOCK_CFG = [(64, 2, False), (128, 2, True), (256, 2, True), (512, 1, True)]


def init_discriminator_params(key, channels=3):
    """Raw params in PyTorch layout: [(w_oihw, b), ...]."""
    params = []
    in_f = channels
    cfg = _BLOCK_CFG + [(1, 1, None)]        # final Conv2d(512, 1, 3, 1, 1)
    for out_f, _, _ in cfg:
        key, kw, kb = jax.random.split(key, 3)
        w = 0.02 * jax.random.normal(kw, (out_f, in_f, 3, 3), jnp.float32)
        b = 0.02 * jax.random.normal(kb, (out_f,), jnp.float32)
        params.append((w, b))
        in_f = out_f
    return params


def pack_params(params):
    """One-time repack: (Cout,Cin,3,3) f32 -> (9, Cin, Cout) bf16; bias (1,Cout) f32."""
    packed = []
    for w, b in params:
        cout, cin = w.shape[0], w.shape[1]
        w_p = jnp.transpose(w, (2, 3, 1, 0)).reshape(9, cin, cout)
        packed.append((w_p.astype(jnp.bfloat16),
                       b.astype(jnp.float32).reshape(1, cout)))
    return packed


def discriminator_forward(packed_params, img_nchw):
    """img_nchw: (N, 3, H, W) float32 -> (N, 1, H//8, W//8) float32."""
    x = jnp.transpose(img_nchw, (0, 2, 3, 1)).astype(jnp.bfloat16)  # -> NHWC
    for (w_p, b), (_, stride, normalize) in zip(packed_params[:-1], _BLOCK_CFG):
        x = conv_block_pallas(x, w_p, b, stride=stride, apply_in=normalize,
                              negative_slope=0.2, out_dtype=jnp.bfloat16)
    w_p, b = packed_params[-1]
    x = conv_block_pallas(x, w_p, b, stride=1, apply_in=False,
                          negative_slope=None, out_dtype=jnp.float32)
    return jnp.transpose(x, (0, 3, 1, 2))            # NHWC -> NCHW


if __name__ == "__main__":
    key = jax.random.PRNGKey(0)
    key, pkey, xkey = jax.random.split(key, 3)

    params = init_discriminator_params(pkey, channels=3)
    packed = pack_params(params)
    img = jax.random.normal(xkey, (2, 3, 16, 16), jnp.float32)   # NCHW

    fwd = jax.jit(discriminator_forward)
    out = fwd(packed, img)
    jax.block_until_ready(out)
    assert out.shape == (2, 1, 2, 2), out.shape
    print("KERNEL_OK")
</pallas_src>

<mosaic_0001>
module attributes {stable_mosaic.version = 11 : i64} {
  func.func @_conv_block_kernel(%arg0: i32, %arg1: i32, %arg2: memref<1x36x9x3xbf16, #tpu.memory_space<vmem>>, %arg3: memref<9x3x64xbf16, #tpu.memory_space<vmem>>, %arg4: memref<1x64xf32, #tpu.memory_space<vmem>>, %arg5: memref<1x64x64xbf16, #tpu.memory_space<vmem>>) attributes {dimension_semantics = [#tpu.dimension_semantics<parallel>, #tpu.dimension_semantics<parallel>], iteration_bounds = array<i64: 2, 1>, scalar_prefetch = 0 : i64, scratch_operands = 0 : i64, tpu.core_type = #tpu.core_type<tc>, window_params = [{transform_indices = @transform_0, window_bounds = array<i64: 1, 36, 9, 3>}, {transform_indices = @transform_1, window_bounds = array<i64: 9, 3, 64>}, {transform_indices = @transform_2, window_bounds = array<i64: 1, 64>}, {transform_indices = @transform_3, window_bounds = array<i64: 1, 64, 64>}]} {
    %c0 = arith.constant 0 : index
    %c0_0 = arith.constant 0 : index
    %c0_1 = arith.constant 0 : index
    %c0_2 = arith.constant 0 : index
    %0 = vector.load %arg2[%c0, %c0_0, %c0_1, %c0_2] : memref<1x36x9x3xbf16, #tpu.memory_space<vmem>>, vector<1x36x9x3xbf16>
    %1 = vector.shape_cast %0 : vector<1x36x9x3xbf16> to vector<36x9x3xbf16>
    %cst = arith.constant 0.000000e+00 : f32
    %2 = vector.broadcast %cst : f32 to vector<64x64xf32>
    %3 = vector.extract_strided_slice %1 {offsets = [0, 0, 0], sizes = [8, 8, 3], strides = [1, 1, 1]} : vector<36x9x3xbf16> to vector<8x8x3xbf16>
    %4 = vector.shape_cast %3 : vector<8x8x3xbf16> to vector<64x3xbf16>
    %c0_3 = arith.constant 0 : index
    %c0_4 = arith.constant 0 : index
    %c0_5 = arith.constant 0 : index
    %5 = vector.load %arg3[%c0_3, %c0_4, %c0_5] : memref<9x3x64xbf16, #tpu.memory_space<vmem>>, vector<1x3x64xbf16>
    %6 = vector.shape_cast %5 : vector<1x3x64xbf16> to vector<3x64xbf16>
    %cst_6 = arith.constant dense<0.000000e+00> : vector<64x64xf32>
    %7 = tpu.matmul %4, %6, %cst_6 {dimension_numbers = #tpu.dot_dimension_numbers<[1], [0], [0], [1], [0, 0, 1, 1], [], []>} : vector<64x3xbf16>, vector<3x64xbf16>, vector<64x64xf32> -> vector<64x64xf32>
    %8 = arith.addf %2, %7 : vector<64x64xf32>
    %9 = vector.extract_strided_slice %1 {offsets = [9, 0, 0], sizes = [8, 8, 3], strides = [1, 1, 1]} : vector<36x9x3xbf16> to vector<8x8x3xbf16>
    %10 = vector.shape_cast %9 : vector<8x8x3xbf16> to vector<64x3xbf16>
    %c1 = arith.constant 1 : index
    %c0_7 = arith.constant 0 : index
    %c0_8 = arith.constant 0 : index
    %11 = vector.load %arg3[%c1, %c0_7, %c0_8] : memref<9x3x64xbf16, #tpu.memory_space<vmem>>, vector<1x3x64xbf16>
    %12 = vector.shape_cast %11 : vector<1x3x64xbf16> to vector<3x64xbf16>
    %cst_9 = arith.constant dense<0.000000e+00> : vector<64x64xf32>
    %13 = tpu.matmul %10, %12, %cst_9 {dimension_numbers = #tpu.dot_dimension_numbers<[1], [0], [0], [1], [0, 0, 1, 1], [], []>} : vector<64x3xbf16>, vector<3x64xbf16>, vector<64x64xf32> -> vector<64x64xf32>
    %14 = arith.addf %8, %13 : vector<64x64xf32>
    %15 = vector.extract_strided_slice %1 {offsets = [0, 1, 0], sizes = [8, 8, 3], strides = [1, 1, 1]} : vector<36x9x3xbf16> to vector<8x8x3xbf16>
    %16 = vector.shape_cast %15 : vector<8x8x3xbf16> to vector<64x3xbf16>
    %c2 = arith.constant 2 : index
    %c0_10 = arith.constant 0 : index
    %c0_11 = arith.constant 0 : index
    %17 = vector.load %arg3[%c2, %c0_10, %c0_11] : memref<9x3x64xbf16, #tpu.memory_space<vmem>>, vector<1x3x64xbf16>
    %18 = vector.shape_cast %17 : vector<1x3x64xbf16> to vector<3x64xbf16>
    %cst_12 = arith.constant dense<0.000000e+00> : vector<64x64xf32>
    %19 = tpu.matmul %16, %18, %cst_12 {dimension_numbers = #tpu.dot_dimension_numbers<[1], [0], [0], [1], [0, 0, 1, 1], [], []>} : vector<64x3xbf16>, vector<3x64xbf16>, vector<64x64xf32> -> vector<64x64xf32>
    %20 = arith.addf %14, %19 : vector<64x64xf32>
    %21 = vector.extract_strided_slice %1 {offsets = [18, 0, 0], sizes = [8, 8, 3], strides = [1, 1, 1]} : vector<36x9x3xbf16> to vector<8x8x3xbf16>
    %22 = vector.shape_cast %21 : vector<8x8x3xbf16> to vector<64x3xbf16>
    %c3 = arith.constant 3 : index
    %c0_13 = arith.constant 0 : index
    %c0_14 = arith.constant 0 : index
    %23 = vector.load %arg3[%c3, %c0_13, %c0_14] : memref<9x3x64xbf16, #tpu.memory_space<vmem>>, vector<1x3x64xbf16>
    %24 = vector.shape_cast %23 : vector<1x3x64xbf16> to vector<3x64xbf16>
    %cst_15 = arith.constant dense<0.000000e+00> : vector<64x64xf32>
    %25 = tpu.matmul %22, %24, %cst_15 {dimension_numbers = #tpu.dot_dimension_numbers<[1], [0], [0], [1], [0, 0, 1, 1], [], []>} : vector<64x3xbf16>, vector<3x64xbf16>, vector<64x64xf32> -> vector<64x64xf32>
    %26 = arith.addf %20, %25 : vector<64x64xf32>
    %27 = vector.extract_strided_slice %1 {offsets = [27, 0, 0], sizes = [8, 8, 3], strides = [1, 1, 1]} : vector<36x9x3xbf16> to vector<8x8x3xbf16>
    %28 = vector.shape_cast %27 : vector<8x8x3xbf16> to vector<64x3xbf16>
    %c4 = arith.constant 4 : index
    %c0_16 = arith.constant 0 : index
    %c0_17 = arith.constant 0 : index
    %29 = vector.load %arg3[%c4, %c0_16, %c0_17] : memref<9x3x64xbf16, #tpu.memory_space<vmem>>, vector<1x3x64xbf16>
    %30 = vector.shape_cast %29 : vector<1x3x64xbf16> to vector<3x64xbf16>
    %cst_18 = arith.constant dense<0.000000e+00> : vector<64x64xf32>
    %31 = tpu.matmul %28, %30, %cst_18 {dimension_numbers = #tpu.dot_dimension_numbers<[1], [0], [0], [1], [0, 0, 1, 1], [], []>} : vector<64x3xbf16>, vector<3x64xbf16>, vector<64x64xf32> -> vector<64x64xf32>
    %32 = arith.addf %26, %31 : vector<64x64xf32>
    %33 = vector.extract_strided_slice %1 {offsets = [18, 1, 0], sizes = [8, 8, 3], strides = [1, 1, 1]} : vector<36x9x3xbf16> to vector<8x8x3xbf16>
    %34 = vector.shape_cast %33 : vector<8x8x3xbf16> to vector<64x3xbf16>
    %c5 = arith.constant 5 : index
    %c0_19 = arith.constant 0 : index
    %c0_20 = arith.constant 0 : index
    %35 = vector.load %arg3[%c5, %c0_19, %c0_20] : memref<9x3x64xbf16, #tpu.memory_space<vmem>>, vector<1x3x64xbf16>
    %36 = vector.shape_cast %35 : vector<1x3x64xbf16> to vector<3x64xbf16>
    %cst_21 = arith.constant dense<0.000000e+00> : vector<64x64xf32>
    %37 = tpu.matmul %34, %36, %cst_21 {dimension_numbers = #tpu.dot_dimension_numbers<[1], [0], [0], [1], [0, 0, 1, 1], [], []>} : vector<64x3xbf16>, vector<3x64xbf16>, vector<64x64xf32> -> vector<64x64xf32>
    %38 = arith.addf %32, %37 : vector<64x64xf32>
    %39 = vector.extract_strided_slice %1 {offsets = [1, 0, 0], sizes = [8, 8, 3], strides = [1, 1, 1]} : vector<36x9x3xbf16> to vector<8x8x3xbf16>
    %40 = vector.shape_cast %39 : vector<8x8x3xbf16> to vector<64x3xbf16>
    %c6 = arith.constant 6 : index
    %c0_22 = arith.constant 0 : index
    %c0_23 = arith.constant 0 : index
    %41 = vector.load %arg3[%c6, %c0_22, %c0_23] : memref<9x3x64xbf16, #tpu.memory_space<vmem>>, vector<1x3x64xbf16>
    %42 = vector.shape_cast %41 : vector<1x3x64xbf16> to vector<3x64xbf16>
    %cst_24 = arith.constant dense<0.000000e+00> : vector<64x64xf32>
    %43 = tpu.matmul %40, %42, %cst_24 {dimension_numbers = #tpu.dot_dimension_numbers<[1], [0], [0], [1], [0, 0, 1, 1], [], []>} : vector<64x3xbf16>, vector<3x64xbf16>, vector<64x64xf32> -> vector<64x64xf32>
    %44 = arith.addf %38, %43 : vector<64x64xf32>
    %45 = vector.extract_strided_slice %1 {offsets = [10, 0, 0], sizes = [8, 8, 3], strides = [1, 1, 1]} : vector<36x9x3xbf16> to vector<8x8x3xbf16>
    %46 = vector.shape_cast %45 : vector<8x8x3xbf16> to vector<64x3xbf16>
    %c7 = arith.constant 7 : index
    %c0_25 = arith.constant 0 : index
    %c0_26 = arith.constant 0 : index
    %47 = vector.load %arg3[%c7, %c0_25, %c0_26] : memref<9x3x64xbf16, #tpu.memory_space<vmem>>, vector<1x3x64xbf16>
    %48 = vector.shape_cast %47 : vector<1x3x64xbf16> to vector<3x64xbf16>
    %cst_27 = arith.constant dense<0.000000e+00> : vector<64x64xf32>
    %49 = tpu.matmul %46, %48, %cst_27 {dimension_numbers = #tpu.dot_dimension_numbers<[1], [0], [0], [1], [0, 0, 1, 1], [], []>} : vector<64x3xbf16>, vector<3x64xbf16>, vector<64x64xf32> -> vector<64x64xf32>
    %50 = arith.addf %44, %49 : vector<64x64xf32>
    %51 = vector.extract_strided_slice %1 {offsets = [1, 1, 0], sizes = [8, 8, 3], strides = [1, 1, 1]} : vector<36x9x3xbf16> to vector<8x8x3xbf16>
    %52 = vector.shape_cast %51 : vector<8x8x3xbf16> to vector<64x3xbf16>
    %c8 = arith.constant 8 : index
    %c0_28 = arith.constant 0 : index
    %c0_29 = arith.constant 0 : index
    %53 = vector.load %arg3[%c8, %c0_28, %c0_29] : memref<9x3x64xbf16, #tpu.memory_space<vmem>>, vector<1x3x64xbf16>
    %54 = vector.shape_cast %53 : vector<1x3x64xbf16> to vector<3x64xbf16>
    %cst_30 = arith.constant dense<0.000000e+00> : vector<64x64xf32>
    %55 = tpu.matmul %52, %54, %cst_30 {dimension_numbers = #tpu.dot_dimension_numbers<[1], [0], [0], [1], [0, 0, 1, 1], [], []>} : vector<64x3xbf16>, vector<3x64xbf16>, vector<64x64xf32> -> vector<64x64xf32>
    %56 = arith.addf %50, %55 : vector<64x64xf32>
    %c0_31 = arith.constant 0 : index
    %c0_32 = arith.constant 0 : index
    %57 = vector.load %arg4[%c0_31, %c0_32] : memref<1x64xf32, #tpu.memory_space<vmem>>, vector<1x64xf32>
    %58 = vector.broadcast %57 : vector<1x64xf32> to vector<64x64xf32>
    %59 = arith.addf %56, %58 : vector<64x64xf32>
    %cst_33 = arith.constant 0.000000e+00 : f32
    %60 = vector.broadcast %cst_33 : f32 to vector<64x64xf32>
    %61 = arith.cmpf oge, %59, %60 : vector<64x64xf32>
    %cst_34 = arith.constant 2.000000e-01 : f32
    %62 = vector.broadcast %cst_34 : f32 to vector<64x64xf32>
    %63 = arith.mulf %62, %59 : vector<64x64xf32>
    %64 = arith.select %61, %59, %63 : vector<64x64xi1>, vector<64x64xf32>
    %65 = arith.truncf %64 : vector<64x64xf32> to vector<64x64xbf16>
    %c0_35 = arith.constant 0 : index
    %c0_36 = arith.constant 0 : index
    %c0_37 = arith.constant 0 : index
    %66 = vector.load %arg5[%c0_35, %c0_36, %c0_37] : memref<1x64x64xbf16, #tpu.memory_space<vmem>>, vector<1x64x64xbf16>
    %67 = vector.shape_cast %66 : vector<1x64x64xbf16> to vector<64x64xbf16>
    %68 = vector.shape_cast %65 : vector<64x64xbf16> to vector<1x64x64xbf16>
    tpu.vector_store %arg5[%c0_35, %c0_36, %c0_37], %68 {strides = array<i32>} : memref<1x64x64xbf16, #tpu.memory_space<vmem>>, vector<1x64x64xbf16>,
    return
  }
  func.func @transform_0(%arg0: i32, %arg1: i32) -> (i32, i32, i32, i32) {
    %c0_i32 = arith.constant 0 : i32
    %c0_i32_0 = arith.constant 0 : i32
    %c0_i32_1 = arith.constant 0 : i32
    %c0_i32_2 = arith.constant 0 : i32
    return %arg0, %c0_i32, %c0_i32_0, %c0_i32_1 : i32, i32, i32, i32
  }
  func.func @transform_1(%arg0: i32, %arg1: i32) -> (i32, i32, i32) {
    %c0_i32 = arith.constant 0 : i32
    %c0_i32_0 = arith.constant 0 : i32
    %c0_i32_1 = arith.constant 0 : i32
    return %c0_i32, %c0_i32_0, %arg1 : i32, i32, i32
  }
  func.func @transform_2(%arg0: i32, %arg1: i32) -> (i32, i32) {
    %c0_i32 = arith.constant 0 : i32
    %c0_i32_0 = arith.constant 0 : i32
    return %c0_i32, %arg1 : i32, i32
  }
  func.func @transform_3(%arg0: i32, %arg1: i32) -> (i32, i32, i32) {
    %c0_i32 = arith.constant 0 : i32
    %c0_i32_0 = arith.constant 0 : i32
    return %arg0, %c0_i32, %arg1 : i32, i32, i32
  }
}

module attributes {stable_mosaic.version = 11 : i64} {
  func.func @_conv_block_kernel(%arg0: i32, %arg1: i32, %arg2: memref<1x20x5x64xbf16, #tpu.memory_space<vmem>>, %arg3: memref<9x64x128xbf16, #tpu.memory_space<vmem>>, %arg4: memref<1x128xf32, #tpu.memory_space<vmem>>, %arg5: memref<1x16x128xbf16, #tpu.memory_space<vmem>>) attributes {dimension_semantics = [#tpu.dimension_semantics<parallel>, #tpu.dimension_semantics<parallel>], iteration_bounds = array<i64: 2, 1>, scalar_prefetch = 0 : i64, scratch_operands = 0 : i64, tpu.core_type = #tpu.core_type<tc>, window_params = [{transform_indices = @transform_0, window_bounds = array<i64: 1, 20, 5, 64>}, {transform_indices = @transform_1, window_bounds = array<i64: 9, 64, 128>}, {transform_indices = @transform_2, window_bounds = array<i64: 1, 128>}, {transform_indices = @transform_3, window_bounds = array<i64: 1, 16, 128>}]} {
    %c0 = arith.constant 0 : index
    %c0_0 = arith.constant 0 : index
    %c0_1 = arith.constant 0 : index
    %c0_2 = arith.constant 0 : index
    %0 = vector.load %arg2[%c0, %c0_0, %c0_1, %c0_2] : memref<1x20x5x64xbf16, #tpu.memory_space<vmem>>, vector<1x20x5x64xbf16>
    %1 = vector.shape_cast %0 : vector<1x20x5x64xbf16> to vector<20x5x64xbf16>
    %cst = arith.constant 0.000000e+00 : f32
    %2 = vector.broadcast %cst : f32 to vector<16x128xf32>
    %3 = vector.extract_strided_slice %1 {offsets = [0, 0, 0], sizes = [4, 4, 64], strides = [1, 1, 1]} : vector<20x5x64xbf16> to vector<4x4x64xbf16>
    %4 = vector.shape_cast %3 : vector<4x4x64xbf16> to vector<16x64xbf16>
    %c0_3 = arith.constant 0 : index
    %c0_4 = arith.constant 0 : index
    %c0_5 = arith.constant 0 : index
    %5 = vector.load %arg3[%c0_3, %c0_4, %c0_5] : memref<9x64x128xbf16, #tpu.memory_space<vmem>>, vector<1x64x128xbf16>
    %6 = vector.shape_cast %5 : vector<1x64x128xbf16> to vector<64x128xbf16>
    %cst_6 = arith.constant dense<0.000000e+00> : vector<16x128xf32>
    %7 = tpu.matmul %4, %6, %cst_6 {dimension_numbers = #tpu.dot_dimension_numbers<[1], [0], [0], [1], [0, 0, 1, 1], [], []>} : vector<16x64xbf16>, vector<64x128xbf16>, vector<16x128xf32> -> vector<16x128xf32>
    %8 = arith.addf %2, %7 : vector<16x128xf32>
    %9 = vector.extract_strided_slice %1 {offsets = [5, 0, 0], sizes = [4, 4, 64], strides = [1, 1, 1]} : vector<20x5x64xbf16> to vector<4x4x64xbf16>
    %10 = vector.shape_cast %9 : vector<4x4x64xbf16> to vector<16x64xbf16>
    %c1 = arith.constant 1 : index
    %c0_7 = arith.constant 0 : index
    %c0_8 = arith.constant 0 : index
    %11 = vector.load %arg3[%c1, %c0_7, %c0_8] : memref<9x64x128xbf16, #tpu.memory_space<vmem>>, vector<1x64x128xbf16>
    %12 = vector.shape_cast %11 : vector<1x64x128xbf16> to vector<64x128xbf16>
    %cst_9 = arith.constant dense<0.000000e+00> : vector<16x128xf32>
    %13 = tpu.matmul %10, %12, %cst_9 {dimension_numbers = #tpu.dot_dimension_numbers<[1], [0], [0], [1], [0, 0, 1, 1], [], []>} : vector<16x64xbf16>, vector<64x128xbf16>, vector<16x128xf32> -> vector<16x128xf32>
    %14 = arith.addf %8, %13 : vector<16x128xf32>
    %15 = vector.extract_strided_slice %1 {offsets = [0, 1, 0], sizes = [4, 4, 64], strides = [1, 1, 1]} : vector<20x5x64xbf16> to vector<4x4x64xbf16>
    %16 = vector.shape_cast %15 : vector<4x4x64xbf16> to vector<16x64xbf16>
    %c2 = arith.constant 2 : index
    %c0_10 = arith.constant 0 : index
    %c0_11 = arith.constant 0 : index
    %17 = vector.load %arg3[%c2, %c0_10, %c0_11] : memref<9x64x128xbf16, #tpu.memory_space<vmem>>, vector<1x64x128xbf16>
    %18 = vector.shape_cast %17 : vector<1x64x128xbf16> to vector<64x128xbf16>
    %cst_12 = arith.constant dense<0.000000e+00> : vector<16x128xf32>
    %19 = tpu.matmul %16, %18, %cst_12 {dimension_numbers = #tpu.dot_dimension_numbers<[1], [0], [0], [1], [0, 0, 1, 1], [], []>} : vector<16x64xbf16>, vector<64x128xbf16>, vector<16x128xf32> -> vector<16x128xf32>
    %20 = arith.addf %14, %19 : vector<16x128xf32>
    %21 = vector.extract_strided_slice %1 {offsets = [10, 0, 0], sizes = [4, 4, 64], strides = [1, 1, 1]} : vector<20x5x64xbf16> to vector<4x4x64xbf16>
    %22 = vector.shape_cast %21 : vector<4x4x64xbf16> to vector<16x64xbf16>
    %c3 = arith.constant 3 : index
    %c0_13 = arith.constant 0 : index
    %c0_14 = arith.constant 0 : index
    %23 = vector.load %arg3[%c3, %c0_13, %c0_14] : memref<9x64x128xbf16, #tpu.memory_space<vmem>>, vector<1x64x128xbf16>
    %24 = vector.shape_cast %23 : vector<1x64x128xbf16> to vector<64x128xbf16>
    %cst_15 = arith.constant dense<0.000000e+00> : vector<16x128xf32>
    %25 = tpu.matmul %22, %24, %cst_15 {dimension_numbers = #tpu.dot_dimension_numbers<[1], [0], [0], [1], [0, 0, 1, 1], [], []>} : vector<16x64xbf16>, vector<64x128xbf16>, vector<16x128xf32> -> vector<16x128xf32>
    %26 = arith.addf %20, %25 : vector<16x128xf32>
    %27 = vector.extract_strided_slice %1 {offsets = [15, 0, 0], sizes = [4, 4, 64], strides = [1, 1, 1]} : vector<20x5x64xbf16> to vector<4x4x64xbf16>
    %28 = vector.shape_cast %27 : vector<4x4x64xbf16> to vector<16x64xbf16>
    %c4 = arith.constant 4 : index
    %c0_16 = arith.constant 0 : index
    %c0_17 = arith.constant 0 : index
    %29 = vector.load %arg3[%c4, %c0_16, %c0_17] : memref<9x64x128xbf16, #tpu.memory_space<vmem>>, vector<1x64x128xbf16>
    %30 = vector.shape_cast %29 : vector<1x64x128xbf16> to vector<64x128xbf16>
    %cst_18 = arith.constant dense<0.000000e+00> : vector<16x128xf32>
    %31 = tpu.matmul %28, %30, %cst_18 {dimension_numbers = #tpu.dot_dimension_numbers<[1], [0], [0], [1], [0, 0, 1, 1], [], []>} : vector<16x64xbf16>, vector<64x128xbf16>, vector<16x128xf32> -> vector<16x128xf32>
    %32 = arith.addf %26, %31 : vector<16x128xf32>
    %33 = vector.extract_strided_slice %1 {offsets = [10, 1, 0], sizes = [4, 4, 64], strides = [1, 1, 1]} : vector<20x5x64xbf16> to vector<4x4x64xbf16>
    %34 = vector.shape_cast %33 : vector<4x4x64xbf16> to vector<16x64xbf16>
    %c5 = arith.constant 5 : index
    %c0_19 = arith.constant 0 : index
    %c0_20 = arith.constant 0 : index
    %35 = vector.load %arg3[%c5, %c0_19, %c0_20] : memref<9x64x128xbf16, #tpu.memory_space<vmem>>, vector<1x64x128xbf16>
    %36 = vector.shape_cast %35 : vector<1x64x128xbf16> to vector<64x128xbf16>
    %cst_21 = arith.constant dense<0.000000e+00> : vector<16x128xf32>
    %37 = tpu.matmul %34, %36, %cst_21 {dimension_numbers = #tpu.dot_dimension_numbers<[1], [0], [0], [1], [0, 0, 1, 1], [], []>} : vector<16x64xbf16>, vector<64x128xbf16>, vector<16x128xf32> -> vector<16x128xf32>
    %38 = arith.addf %32, %37 : vector<16x128xf32>
    %39 = vector.extract_strided_slice %1 {offsets = [1, 0, 0], sizes = [4, 4, 64], strides = [1, 1, 1]} : vector<20x5x64xbf16> to vector<4x4x64xbf16>
    %40 = vector.shape_cast %39 : vector<4x4x64xbf16> to vector<16x64xbf16>
    %c6 = arith.constant 6 : index
    %c0_22 = arith.constant 0 : index
    %c0_23 = arith.constant 0 : index
    %41 = vector.load %arg3[%c6, %c0_22, %c0_23] : memref<9x64x128xbf16, #tpu.memory_space<vmem>>, vector<1x64x128xbf16>
    %42 = vector.shape_cast %41 : vector<1x64x128xbf16> to vector<64x128xbf16>
    %cst_24 = arith.constant dense<0.000000e+00> : vector<16x128xf32>
    %43 = tpu.matmul %40, %42, %cst_24 {dimension_numbers = #tpu.dot_dimension_numbers<[1], [0], [0], [1], [0, 0, 1, 1], [], []>} : vector<16x64xbf16>, vector<64x128xbf16>, vector<16x128xf32> -> vector<16x128xf32>
    %44 = arith.addf %38, %43 : vector<16x128xf32>
    %45 = vector.extract_strided_slice %1 {offsets = [6, 0, 0], sizes = [4, 4, 64], strides = [1, 1, 1]} : vector<20x5x64xbf16> to vector<4x4x64xbf16>
    %46 = vector.shape_cast %45 : vector<4x4x64xbf16> to vector<16x64xbf16>
    %c7 = arith.constant 7 : index
    %c0_25 = arith.constant 0 : index
    %c0_26 = arith.constant 0 : index
    %47 = vector.load %arg3[%c7, %c0_25, %c0_26] : memref<9x64x128xbf16, #tpu.memory_space<vmem>>, vector<1x64x128xbf16>
    %48 = vector.shape_cast %47 : vector<1x64x128xbf16> to vector<64x128xbf16>
    %cst_27 = arith.constant dense<0.000000e+00> : vector<16x128xf32>
    %49 = tpu.matmul %46, %48, %cst_27 {dimension_numbers = #tpu.dot_dimension_numbers<[1], [0], [0], [1], [0, 0, 1, 1], [], []>} : vector<16x64xbf16>, vector<64x128xbf16>, vector<16x128xf32> -> vector<16x128xf32>
    %50 = arith.addf %44, %49 : vector<16x128xf32>
    %51 = vector.extract_strided_slice %1 {offsets = [1, 1, 0], sizes = [4, 4, 64], strides = [1, 1, 1]} : vector<20x5x64xbf16> to vector<4x4x64xbf16>
    %52 = vector.shape_cast %51 : vector<4x4x64xbf16> to vector<16x64xbf16>
    %c8 = arith.constant 8 : index
    %c0_28 = arith.constant 0 : index
    %c0_29 = arith.constant 0 : index
    %53 = vector.load %arg3[%c8, %c0_28, %c0_29] : memref<9x64x128xbf16, #tpu.memory_space<vmem>>, vector<1x64x128xbf16>
    %54 = vector.shape_cast %53 : vector<1x64x128xbf16> to vector<64x128xbf16>
    %cst_30 = arith.constant dense<0.000000e+00> : vector<16x128xf32>
    %55 = tpu.matmul %52, %54, %cst_30 {dimension_numbers = #tpu.dot_dimension_numbers<[1], [0], [0], [1], [0, 0, 1, 1], [], []>} : vector<16x64xbf16>, vector<64x128xbf16>, vector<16x128xf32> -> vector<16x128xf32>
    %56 = arith.addf %50, %55 : vector<16x128xf32>
    %c0_31 = arith.constant 0 : index
    %c0_32 = arith.constant 0 : index
    %57 = vector.load %arg4[%c0_31, %c0_32] : memref<1x128xf32, #tpu.memory_space<vmem>>, vector<1x128xf32>
    %58 = vector.broadcast %57 : vector<1x128xf32> to vector<16x128xf32>
    %59 = arith.addf %56, %58 : vector<16x128xf32>
    %cst_33 = arith.constant dense<0.000000e+00> : vector<128xf32>
    %60 = vector.multi_reduction <add>, %59, %cst_33 [0] : vector<16x128xf32> to vector<128xf32>
    %61 = vector.shape_cast %60 : vector<128xf32> to vector<1x128xf32>
    %cst_34 = arith.constant 1.600000e+01 : f32
    %62 = vector.broadcast %cst_34 : f32 to vector<1x128xf32>
    %63 = arith.divf %61, %62 : vector<1x128xf32>
    %64 = arith.mulf %59, %59 : vector<16x128xf32>
    %cst_35 = arith.constant dense<0.000000e+00> : vector<128xf32>
    %65 = vector.multi_reduction <add>, %64, %cst_35 [0] : vector<16x128xf32> to vector<128xf32>
    %66 = vector.shape_cast %65 : vector<128xf32> to vector<1x128xf32>
    %cst_36 = arith.constant 1.600000e+01 : f32
    %67 = vector.broadcast %cst_36 : f32 to vector<1x128xf32>
    %68 = arith.divf %66, %67 : vector<1x128xf32>
    %69 = arith.mulf %63, %63 : vector<1x128xf32>
    %70 = arith.subf %68, %69 : vector<1x128xf32>
    %71 = vector.broadcast %63 : vector<1x128xf32> to vector<16x128xf32>
    %72 = arith.subf %59, %71 : vector<16x128xf32>
    %cst_37 = arith.constant 0.000000e+00 : f32
    %73 = vector.broadcast %cst_37 : f32 to vector<1x128xf32>
    %74 = arith.maximumf %70, %73 : vector<1x128xf32>
    %cst_38 = arith.constant 9.99999974E-6 : f32
    %75 = vector.broadcast %cst_38 : f32 to vector<1x128xf32>
    %76 = arith.addf %74, %75 : vector<1x128xf32>
    %77 = math.rsqrt %76 : vector<1x128xf32>
    %78 = vector.broadcast %77 : vector<1x128xf32> to vector<16x128xf32>
    %79 = arith.mulf %72, %78 : vector<16x128xf32>
    %cst_39 = arith.constant 0.000000e+00 : f32
    %80 = vector.broadcast %cst_39 : f32 to vector<16x128xf32>
    %81 = arith.cmpf oge, %79, %80 : vector<16x128xf32>
    %cst_40 = arith.constant 2.000000e-01 : f32
    %82 = vector.broadcast %cst_40 : f32 to vector<16x128xf32>
    %83 = arith.mulf %82, %79 : vector<16x128xf32>
    %84 = arith.select %81, %79, %83 : vector<16x128xi1>, vector<16x128xf32>
    %85 = arith.truncf %84 : vector<16x128xf32> to vector<16x128xbf16>
    %c0_41 = arith.constant 0 : index
    %c0_42 = arith.constant 0 : index
    %c0_43 = arith.constant 0 : index
    %86 = vector.load %arg5[%c0_41, %c0_42, %c0_43] : memref<1x16x128xbf16, #tpu.memory_space<vmem>>, vector<1x16x128xbf16>
    %87 = vector.shape_cast %86 : vector<1x16x128xbf16> to vector<16x128xbf16>
    %88 = vector.shape_cast %85 : vector<16x128xbf16> to vector<1x16x128xbf16>
    tpu.vector_store %arg5[%c0_41, %c0_42, %c0_43], %88 {strides = array<i32>} : memref<1x16x128xbf16, #tpu.memory_space<vmem>>, vector<1x16x128xbf16>,
    return
  }
  func.func @transform_0(%arg0: i32, %arg1: i32) -> (i32, i32, i32, i32) {
    %c0_i32 = arith.constant 0 : i32
    %c0_i32_0 = arith.constant 0 : i32
    %c0_i32_1 = arith.constant 0 : i32
    %c0_i32_2 = arith.constant 0 : i32
    return %arg0, %c0_i32, %c0_i32_0, %c0_i32_1 : i32, i32, i32, i32
  }
  func.func @transform_1(%arg0: i32, %arg1: i32) -> (i32, i32, i32) {
    %c0_i32 = arith.constant 0 : i32
    %c0_i32_0 = arith.constant 0 : i32
    %c0_i32_1 = arith.constant 0 : i32
    return %c0_i32, %c0_i32_0, %arg1 : i32, i32, i32
  }
  func.func @transform_2(%arg0: i32, %arg1: i32) -> (i32, i32) {
    %c0_i32 = arith.constant 0 : i32
    %c0_i32_0 = arith.constant 0 : i32
    return %c0_i32, %arg1 : i32, i32
  }
  func.func @transform_3(%arg0: i32, %arg1: i32) -> (i32, i32, i32) {
    %c0_i32 = arith.constant 0 : i32
    %c0_i32_0 = arith.constant 0 : i32
    return %arg0, %c0_i32, %arg1 : i32, i32, i32
  }
}

module attributes {stable_mosaic.version = 11 : i64} {
  func.func @_conv_block_kernel(%arg0: i32, %arg1: i32, %arg2: memref<1x12x3x128xbf16, #tpu.memory_space<vmem>>, %arg3: memref<9x128x256xbf16, #tpu.memory_space<vmem>>, %arg4: memref<1x256xf32, #tpu.memory_space<vmem>>, %arg5: memref<1x4x256xbf16, #tpu.memory_space<vmem>>) attributes {dimension_semantics = [#tpu.dimension_semantics<parallel>, #tpu.dimension_semantics<parallel>], iteration_bounds = array<i64: 2, 1>, scalar_prefetch = 0 : i64, scratch_operands = 0 : i64, tpu.core_type = #tpu.core_type<tc>, window_params = [{transform_indices = @transform_0, window_bounds = array<i64: 1, 12, 3, 128>}, {transform_indices = @transform_1, window_bounds = array<i64: 9, 128, 256>}, {transform_indices = @transform_2, window_bounds = array<i64: 1, 256>}, {transform_indices = @transform_3, window_bounds = array<i64: 1, 4, 256>}]} {
    %c0 = arith.constant 0 : index
    %c0_0 = arith.constant 0 : index
    %c0_1 = arith.constant 0 : index
    %c0_2 = arith.constant 0 : index
    %0 = vector.load %arg2[%c0, %c0_0, %c0_1, %c0_2] : memref<1x12x3x128xbf16, #tpu.memory_space<vmem>>, vector<1x12x3x128xbf16>
    %1 = vector.shape_cast %0 : vector<1x12x3x128xbf16> to vector<12x3x128xbf16>
    %cst = arith.constant 0.000000e+00 : f32
    %2 = vector.broadcast %cst : f32 to vector<4x256xf32>
    %3 = vector.extract_strided_slice %1 {offsets = [0, 0, 0], sizes = [2, 2, 128], strides = [1, 1, 1]} : vector<12x3x128xbf16> to vector<2x2x128xbf16>
    %4 = vector.shape_cast %3 : vector<2x2x128xbf16> to vector<4x128xbf16>
    %c0_3 = arith.constant 0 : index
    %c0_4 = arith.constant 0 : index
    %c0_5 = arith.constant 0 : index
    %5 = vector.load %arg3[%c0_3, %c0_4, %c0_5] : memref<9x128x256xbf16, #tpu.memory_space<vmem>>, vector<1x128x256xbf16>
    %6 = vector.shape_cast %5 : vector<1x128x256xbf16> to vector<128x256xbf16>
    %cst_6 = arith.constant dense<0.000000e+00> : vector<4x256xf32>
    %7 = tpu.matmul %4, %6, %cst_6 {dimension_numbers = #tpu.dot_dimension_numbers<[1], [0], [0], [1], [0, 0, 1, 1], [], []>} : vector<4x128xbf16>, vector<128x256xbf16>, vector<4x256xf32> -> vector<4x256xf32>
    %8 = arith.addf %2, %7 : vector<4x256xf32>
    %9 = vector.extract_strided_slice %1 {offsets = [3, 0, 0], sizes = [2, 2, 128], strides = [1, 1, 1]} : vector<12x3x128xbf16> to vector<2x2x128xbf16>
    %10 = vector.shape_cast %9 : vector<2x2x128xbf16> to vector<4x128xbf16>
    %c1 = arith.constant 1 : index
    %c0_7 = arith.constant 0 : index
    %c0_8 = arith.constant 0 : index
    %11 = vector.load %arg3[%c1, %c0_7, %c0_8] : memref<9x128x256xbf16, #tpu.memory_space<vmem>>, vector<1x128x256xbf16>
    %12 = vector.shape_cast %11 : vector<1x128x256xbf16> to vector<128x256xbf16>
    %cst_9 = arith.constant dense<0.000000e+00> : vector<4x256xf32>
    %13 = tpu.matmul %10, %12, %cst_9 {dimension_numbers = #tpu.dot_dimension_numbers<[1], [0], [0], [1], [0, 0, 1, 1], [], []>} : vector<4x128xbf16>, vector<128x256xbf16>, vector<4x256xf32> -> vector<4x256xf32>
    %14 = arith.addf %8, %13 : vector<4x256xf32>
    %15 = vector.extract_strided_slice %1 {offsets = [0, 1, 0], sizes = [2, 2, 128], strides = [1, 1, 1]} : vector<12x3x128xbf16> to vector<2x2x128xbf16>
    %16 = vector.shape_cast %15 : vector<2x2x128xbf16> to vector<4x128xbf16>
    %c2 = arith.constant 2 : index
    %c0_10 = arith.constant 0 : index
    %c0_11 = arith.constant 0 : index
    %17 = vector.load %arg3[%c2, %c0_10, %c0_11] : memref<9x128x256xbf16, #tpu.memory_space<vmem>>, vector<1x128x256xbf16>
    %18 = vector.shape_cast %17 : vector<1x128x256xbf16> to vector<128x256xbf16>
    %cst_12 = arith.constant dense<0.000000e+00> : vector<4x256xf32>
    %19 = tpu.matmul %16, %18, %cst_12 {dimension_numbers = #tpu.dot_dimension_numbers<[1], [0], [0], [1], [0, 0, 1, 1], [], []>} : vector<4x128xbf16>, vector<128x256xbf16>, vector<4x256xf32> -> vector<4x256xf32>
    %20 = arith.addf %14, %19 : vector<4x256xf32>
    %21 = vector.extract_strided_slice %1 {offsets = [6, 0, 0], sizes = [2, 2, 128], strides = [1, 1, 1]} : vector<12x3x128xbf16> to vector<2x2x128xbf16>
    %22 = vector.shape_cast %21 : vector<2x2x128xbf16> to vector<4x128xbf16>
    %c3 = arith.constant 3 : index
    %c0_13 = arith.constant 0 : index
    %c0_14 = arith.constant 0 : index
    %23 = vector.load %arg3[%c3, %c0_13, %c0_14] : memref<9x128x256xbf16, #tpu.memory_space<vmem>>, vector<1x128x256xbf16>
    %24 = vector.shape_cast %23 : vector<1x128x256xbf16> to vector<128x256xbf16>
    %cst_15 = arith.constant dense<0.000000e+00> : vector<4x256xf32>
    %25 = tpu.matmul %22, %24, %cst_15 {dimension_numbers = #tpu.dot_dimension_numbers<[1], [0], [0], [1], [0, 0, 1, 1], [], []>} : vector<4x128xbf16>, vector<128x256xbf16>, vector<4x256xf32> -> vector<4x256xf32>
    %26 = arith.addf %20, %25 : vector<4x256xf32>
    %27 = vector.extract_strided_slice %1 {offsets = [9, 0, 0], sizes = [2, 2, 128], strides = [1, 1, 1]} : vector<12x3x128xbf16> to vector<2x2x128xbf16>
    %28 = vector.shape_cast %27 : vector<2x2x128xbf16> to vector<4x128xbf16>
    %c4 = arith.constant 4 : index
    %c0_16 = arith.constant 0 : index
    %c0_17 = arith.constant 0 : index
    %29 = vector.load %arg3[%c4, %c0_16, %c0_17] : memref<9x128x256xbf16, #tpu.memory_space<vmem>>, vector<1x128x256xbf16>
    %30 = vector.shape_cast %29 : vector<1x128x256xbf16> to vector<128x256xbf16>
    %cst_18 = arith.constant dense<0.000000e+00> : vector<4x256xf32>
    %31 = tpu.matmul %28, %30, %cst_18 {dimension_numbers = #tpu.dot_dimension_numbers<[1], [0], [0], [1], [0, 0, 1, 1], [], []>} : vector<4x128xbf16>, vector<128x256xbf16>, vector<4x256xf32> -> vector<4x256xf32>
    %32 = arith.addf %26, %31 : vector<4x256xf32>
    %33 = vector.extract_strided_slice %1 {offsets = [6, 1, 0], sizes = [2, 2, 128], strides = [1, 1, 1]} : vector<12x3x128xbf16> to vector<2x2x128xbf16>
    %34 = vector.shape_cast %33 : vector<2x2x128xbf16> to vector<4x128xbf16>
    %c5 = arith.constant 5 : index
    %c0_19 = arith.constant 0 : index
    %c0_20 = arith.constant 0 : index
    %35 = vector.load %arg3[%c5, %c0_19, %c0_20] : memref<9x128x256xbf16, #tpu.memory_space<vmem>>, vector<1x128x256xbf16>
    %36 = vector.shape_cast %35 : vector<1x128x256xbf16> to vector<128x256xbf16>
    %cst_21 = arith.constant dense<0.000000e+00> : vector<4x256xf32>
    %37 = tpu.matmul %34, %36, %cst_21 {dimension_numbers = #tpu.dot_dimension_numbers<[1], [0], [0], [1], [0, 0, 1, 1], [], []>} : vector<4x128xbf16>, vector<128x256xbf16>, vector<4x256xf32> -> vector<4x256xf32>
    %38 = arith.addf %32, %37 : vector<4x256xf32>
    %39 = vector.extract_strided_slice %1 {offsets = [1, 0, 0], sizes = [2, 2, 128], strides = [1, 1, 1]} : vector<12x3x128xbf16> to vector<2x2x128xbf16>
    %40 = vector.shape_cast %39 : vector<2x2x128xbf16> to vector<4x128xbf16>
    %c6 = arith.constant 6 : index
    %c0_22 = arith.constant 0 : index
    %c0_23 = arith.constant 0 : index
    %41 = vector.load %arg3[%c6, %c0_22, %c0_23] : memref<9x128x256xbf16, #tpu.memory_space<vmem>>, vector<1x128x256xbf16>
    %42 = vector.shape_cast %41 : vector<1x128x256xbf16> to vector<128x256xbf16>
    %cst_24 = arith.constant dense<0.000000e+00> : vector<4x256xf32>
    %43 = tpu.matmul %40, %42, %cst_24 {dimension_numbers = #tpu.dot_dimension_numbers<[1], [0], [0], [1], [0, 0, 1, 1], [], []>} : vector<4x128xbf16>, vector<128x256xbf16>, vector<4x256xf32> -> vector<4x256xf32>
    %44 = arith.addf %38, %43 : vector<4x256xf32>
    %45 = vector.extract_strided_slice %1 {offsets = [4, 0, 0], sizes = [2, 2, 128], strides = [1, 1, 1]} : vector<12x3x128xbf16> to vector<2x2x128xbf16>
    %46 = vector.shape_cast %45 : vector<2x2x128xbf16> to vector<4x128xbf16>
    %c7 = arith.constant 7 : index
    %c0_25 = arith.constant 0 : index
    %c0_26 = arith.constant 0 : index
    %47 = vector.load %arg3[%c7, %c0_25, %c0_26] : memref<9x128x256xbf16, #tpu.memory_space<vmem>>, vector<1x128x256xbf16>
    %48 = vector.shape_cast %47 : vector<1x128x256xbf16> to vector<128x256xbf16>
    %cst_27 = arith.constant dense<0.000000e+00> : vector<4x256xf32>
    %49 = tpu.matmul %46, %48, %cst_27 {dimension_numbers = #tpu.dot_dimension_numbers<[1], [0], [0], [1], [0, 0, 1, 1], [], []>} : vector<4x128xbf16>, vector<128x256xbf16>, vector<4x256xf32> -> vector<4x256xf32>
    %50 = arith.addf %44, %49 : vector<4x256xf32>
    %51 = vector.extract_strided_slice %1 {offsets = [1, 1, 0], sizes = [2, 2, 128], strides = [1, 1, 1]} : vector<12x3x128xbf16> to vector<2x2x128xbf16>
    %52 = vector.shape_cast %51 : vector<2x2x128xbf16> to vector<4x128xbf16>
    %c8 = arith.constant 8 : index
    %c0_28 = arith.constant 0 : index
    %c0_29 = arith.constant 0 : index
    %53 = vector.load %arg3[%c8, %c0_28, %c0_29] : memref<9x128x256xbf16, #tpu.memory_space<vmem>>, vector<1x128x256xbf16>
    %54 = vector.shape_cast %53 : vector<1x128x256xbf16> to vector<128x256xbf16>
    %cst_30 = arith.constant dense<0.000000e+00> : vector<4x256xf32>
    %55 = tpu.matmul %52, %54, %cst_30 {dimension_numbers = #tpu.dot_dimension_numbers<[1], [0], [0], [1], [0, 0, 1, 1], [], []>} : vector<4x128xbf16>, vector<128x256xbf16>, vector<4x256xf32> -> vector<4x256xf32>
    %56 = arith.addf %50, %55 : vector<4x256xf32>
    %c0_31 = arith.constant 0 : index
    %c0_32 = arith.constant 0 : index
    %57 = vector.load %arg4[%c0_31, %c0_32] : memref<1x256xf32, #tpu.memory_space<vmem>>, vector<1x256xf32>
    %58 = vector.broadcast %57 : vector<1x256xf32> to vector<4x256xf32>
    %59 = arith.addf %56, %58 : vector<4x256xf32>
    %cst_33 = arith.constant dense<0.000000e+00> : vector<256xf32>
    %60 = vector.multi_reduction <add>, %59, %cst_33 [0] : vector<4x256xf32> to vector<256xf32>
    %61 = vector.shape_cast %60 : vector<256xf32> to vector<1x256xf32>
    %cst_34 = arith.constant 4.000000e+00 : f32
    %62 = vector.broadcast %cst_34 : f32 to vector<1x256xf32>
    %63 = arith.divf %61, %62 : vector<1x256xf32>
    %64 = arith.mulf %59, %59 : vector<4x256xf32>
    %cst_35 = arith.constant dense<0.000000e+00> : vector<256xf32>
    %65 = vector.multi_reduction <add>, %64, %cst_35 [0] : vector<4x256xf32> to vector<256xf32>
    %66 = vector.shape_cast %65 : vector<256xf32> to vector<1x256xf32>
    %cst_36 = arith.constant 4.000000e+00 : f32
    %67 = vector.broadcast %cst_36 : f32 to vector<1x256xf32>
    %68 = arith.divf %66, %67 : vector<1x256xf32>
    %69 = arith.mulf %63, %63 : vector<1x256xf32>
    %70 = arith.subf %68, %69 : vector<1x256xf32>
    %71 = vector.broadcast %63 : vector<1x256xf32> to vector<4x256xf32>
    %72 = arith.subf %59, %71 : vector<4x256xf32>
    %cst_37 = arith.constant 0.000000e+00 : f32
    %73 = vector.broadcast %cst_37 : f32 to vector<1x256xf32>
    %74 = arith.maximumf %70, %73 : vector<1x256xf32>
    %cst_38 = arith.constant 9.99999974E-6 : f32
    %75 = vector.broadcast %cst_38 : f32 to vector<1x256xf32>
    %76 = arith.addf %74, %75 : vector<1x256xf32>
    %77 = math.rsqrt %76 : vector<1x256xf32>
    %78 = vector.broadcast %77 : vector<1x256xf32> to vector<4x256xf32>
    %79 = arith.mulf %72, %78 : vector<4x256xf32>
    %cst_39 = arith.constant 0.000000e+00 : f32
    %80 = vector.broadcast %cst_39 : f32 to vector<4x256xf32>
    %81 = arith.cmpf oge, %79, %80 : vector<4x256xf32>
    %cst_40 = arith.constant 2.000000e-01 : f32
    %82 = vector.broadcast %cst_40 : f32 to vector<4x256xf32>
    %83 = arith.mulf %82, %79 : vector<4x256xf32>
    %84 = arith.select %81, %79, %83 : vector<4x256xi1>, vector<4x256xf32>
    %85 = arith.truncf %84 : vector<4x256xf32> to vector<4x256xbf16>
    %c0_41 = arith.constant 0 : index
    %c0_42 = arith.constant 0 : index
    %c0_43 = arith.constant 0 : index
    %86 = vector.load %arg5[%c0_41, %c0_42, %c0_43] : memref<1x4x256xbf16, #tpu.memory_space<vmem>>, vector<1x4x256xbf16>
    %87 = vector.shape_cast %86 : vector<1x4x256xbf16> to vector<4x256xbf16>
    %88 = vector.shape_cast %85 : vector<4x256xbf16> to vector<1x4x256xbf16>
    tpu.vector_store %arg5[%c0_41, %c0_42, %c0_43], %88 {strides = array<i32>} : memref<1x4x256xbf16, #tpu.memory_space<vmem>>, vector<1x4x256xbf16>,
    return
  }
  func.func @transform_0(%arg0: i32, %arg1: i32) -> (i32, i32, i32, i32) {
    %c0_i32 = arith.constant 0 : i32
    %c0_i32_0 = arith.constant 0 : i32
    %c0_i32_1 = arith.constant 0 : i32
    %c0_i32_2 = arith.constant 0 : i32
    return %arg0, %c0_i32, %c0_i32_0, %c0_i32_1 : i32, i32, i32, i32
  }
  func.func @transform_1(%arg0: i32, %arg1: i32) -> (i32, i32, i32) {
    %c0_i32 = arith.constant 0 : i32
    %c0_i32_0 = arith.constant 0 : i32
    %c0_i32_1 = arith.constant 0 : i32
    return %c0_i32, %c0_i32_0, %arg1 : i32, i32, i32
  }
  func.func @transform_2(%arg0: i32, %arg1: i32) -> (i32, i32) {
    %c0_i32 = arith.constant 0 : i32
    %c0_i32_0 = arith.constant 0 : i32
    return %c0_i32, %arg1 : i32, i32
  }
  func.func @transform_3(%arg0: i32, %arg1: i32) -> (i32, i32, i32) {
    %c0_i32 = arith.constant 0 : i32
    %c0_i32_0 = arith.constant 0 : i32
    return %arg0, %c0_i32, %arg1 : i32, i32, i32
  }
}

module attributes {stable_mosaic.version = 11 : i64} {
  func.func @_conv_block_kernel(%arg0: i32, %arg1: i32, %arg2: memref<1x4x4x256xbf16, #tpu.memory_space<vmem>>, %arg3: memref<9x256x256xbf16, #tpu.memory_space<vmem>>, %arg4: memref<1x256xf32, #tpu.memory_space<vmem>>, %arg5: memref<1x4x256xbf16, #tpu.memory_space<vmem>>) attributes {dimension_semantics = [#tpu.dimension_semantics<parallel>, #tpu.dimension_semantics<parallel>], iteration_bounds = array<i64: 2, 2>, scalar_prefetch = 0 : i64, scratch_operands = 0 : i64, tpu.core_type = #tpu.core_type<tc>, window_params = [{transform_indices = @transform_0, window_bounds = array<i64: 1, 4, 4, 256>}, {transform_indices = @transform_1, window_bounds = array<i64: 9, 256, 256>}, {transform_indices = @transform_2, window_bounds = array<i64: 1, 256>}, {transform_indices = @transform_3, window_bounds = array<i64: 1, 4, 256>}]} {
    %c0 = arith.constant 0 : index
    %c0_0 = arith.constant 0 : index
    %c0_1 = arith.constant 0 : index
    %c0_2 = arith.constant 0 : index
    %0 = vector.load %arg2[%c0, %c0_0, %c0_1, %c0_2] : memref<1x4x4x256xbf16, #tpu.memory_space<vmem>>, vector<1x4x4x256xbf16>
    %1 = vector.shape_cast %0 : vector<1x4x4x256xbf16> to vector<4x4x256xbf16>
    %cst = arith.constant 0.000000e+00 : f32
    %2 = vector.broadcast %cst : f32 to vector<4x256xf32>
    %3 = vector.extract_strided_slice %1 {offsets = [0, 0, 0], sizes = [2, 2, 256], strides = [1, 1, 1]} : vector<4x4x256xbf16> to vector<2x2x256xbf16>
    %4 = vector.shape_cast %3 : vector<2x2x256xbf16> to vector<4x256xbf16>
    %c0_3 = arith.constant 0 : index
    %c0_4 = arith.constant 0 : index
    %c0_5 = arith.constant 0 : index
    %5 = vector.load %arg3[%c0_3, %c0_4, %c0_5] : memref<9x256x256xbf16, #tpu.memory_space<vmem>>, vector<1x256x256xbf16>
    %6 = vector.shape_cast %5 : vector<1x256x256xbf16> to vector<256x256xbf16>
    %cst_6 = arith.constant dense<0.000000e+00> : vector<4x256xf32>
    %7 = tpu.matmul %4, %6, %cst_6 {dimension_numbers = #tpu.dot_dimension_numbers<[1], [0], [0], [1], [0, 0, 1, 1], [], []>} : vector<4x256xbf16>, vector<256x256xbf16>, vector<4x256xf32> -> vector<4x256xf32>
    %8 = arith.addf %2, %7 : vector<4x256xf32>
    %9 = vector.extract_strided_slice %1 {offsets = [0, 1, 0], sizes = [2, 2, 256], strides = [1, 1, 1]} : vector<4x4x256xbf16> to vector<2x2x256xbf16>
    %10 = vector.shape_cast %9 : vector<2x2x256xbf16> to vector<4x256xbf16>
    %c1 = arith.constant 1 : index
    %c0_7 = arith.constant 0 : index
    %c0_8 = arith.constant 0 : index
    %11 = vector.load %arg3[%c1, %c0_7, %c0_8] : memref<9x256x256xbf16, #tpu.memory_space<vmem>>, vector<1x256x256xbf16>
    %12 = vector.shape_cast %11 : vector<1x256x256xbf16> to vector<256x256xbf16>
    %cst_9 = arith.constant dense<0.000000e+00> : vector<4x256xf32>
    %13 = tpu.matmul %10, %12, %cst_9 {dimension_numbers = #tpu.dot_dimension_numbers<[1], [0], [0], [1], [0, 0, 1, 1], [], []>} : vector<4x256xbf16>, vector<256x256xbf16>, vector<4x256xf32> -> vector<4x256xf32>
    %14 = arith.addf %8, %13 : vector<4x256xf32>
    %15 = vector.extract_strided_slice %1 {offsets = [0, 2, 0], sizes = [2, 2, 256], strides = [1, 1, 1]} : vector<4x4x256xbf16> to vector<2x2x256xbf16>
    %16 = vector.shape_cast %15 : vector<2x2x256xbf16> to vector<4x256xbf16>
    %c2 = arith.constant 2 : index
    %c0_10 = arith.constant 0 : index
    %c0_11 = arith.constant 0 : index
    %17 = vector.load %arg3[%c2, %c0_10, %c0_11] : memref<9x256x256xbf16, #tpu.memory_space<vmem>>, vector<1x256x256xbf16>
    %18 = vector.shape_cast %17 : vector<1x256x256xbf16> to vector<256x256xbf16>
    %cst_12 = arith.constant dense<0.000000e+00> : vector<4x256xf32>
    %19 = tpu.matmul %16, %18, %cst_12 {dimension_numbers = #tpu.dot_dimension_numbers<[1], [0], [0], [1], [0, 0, 1, 1], [], []>} : vector<4x256xbf16>, vector<256x256xbf16>, vector<4x256xf32> -> vector<4x256xf32>
    %20 = arith.addf %14, %19 : vector<4x256xf32>
    %21 = vector.extract_strided_slice %1 {offsets = [1, 0, 0], sizes = [2, 2, 256], strides = [1, 1, 1]} : vector<4x4x256xbf16> to vector<2x2x256xbf16>
    %22 = vector.shape_cast %21 : vector<2x2x256xbf16> to vector<4x256xbf16>
    %c3 = arith.constant 3 : index
    %c0_13 = arith.constant 0 : index
    %c0_14 = arith.constant 0 : index
    %23 = vector.load %arg3[%c3, %c0_13, %c0_14] : memref<9x256x256xbf16, #tpu.memory_space<vmem>>, vector<1x256x256xbf16>
    %24 = vector.shape_cast %23 : vector<1x256x256xbf16> to vector<256x256xbf16>
    %cst_15 = arith.constant dense<0.000000e+00> : vector<4x256xf32>
    %25 = tpu.matmul %22, %24, %cst_15 {dimension_numbers = #tpu.dot_dimension_numbers<[1], [0], [0], [1], [0, 0, 1, 1], [], []>} : vector<4x256xbf16>, vector<256x256xbf16>, vector<4x256xf32> -> vector<4x256xf32>
    %26 = arith.addf %20, %25 : vector<4x256xf32>
    %27 = vector.extract_strided_slice %1 {offsets = [1, 1, 0], sizes = [2, 2, 256], strides = [1, 1, 1]} : vector<4x4x256xbf16> to vector<2x2x256xbf16>
    %28 = vector.shape_cast %27 : vector<2x2x256xbf16> to vector<4x256xbf16>
    %c4 = arith.constant 4 : index
    %c0_16 = arith.constant 0 : index
    %c0_17 = arith.constant 0 : index
    %29 = vector.load %arg3[%c4, %c0_16, %c0_17] : memref<9x256x256xbf16, #tpu.memory_space<vmem>>, vector<1x256x256xbf16>
    %30 = vector.shape_cast %29 : vector<1x256x256xbf16> to vector<256x256xbf16>
    %cst_18 = arith.constant dense<0.000000e+00> : vector<4x256xf32>
    %31 = tpu.matmul %28, %30, %cst_18 {dimension_numbers = #tpu.dot_dimension_numbers<[1], [0], [0], [1], [0, 0, 1, 1], [], []>} : vector<4x256xbf16>, vector<256x256xbf16>, vector<4x256xf32> -> vector<4x256xf32>
    %32 = arith.addf %26, %31 : vector<4x256xf32>
    %33 = vector.extract_strided_slice %1 {offsets = [1, 2, 0], sizes = [2, 2, 256], strides = [1, 1, 1]} : vector<4x4x256xbf16> to vector<2x2x256xbf16>
    %34 = vector.shape_cast %33 : vector<2x2x256xbf16> to vector<4x256xbf16>
    %c5 = arith.constant 5 : index
    %c0_19 = arith.constant 0 : index
    %c0_20 = arith.constant 0 : index
    %35 = vector.load %arg3[%c5, %c0_19, %c0_20] : memref<9x256x256xbf16, #tpu.memory_space<vmem>>, vector<1x256x256xbf16>
    %36 = vector.shape_cast %35 : vector<1x256x256xbf16> to vector<256x256xbf16>
    %cst_21 = arith.constant dense<0.000000e+00> : vector<4x256xf32>
    %37 = tpu.matmul %34, %36, %cst_21 {dimension_numbers = #tpu.dot_dimension_numbers<[1], [0], [0], [1], [0, 0, 1, 1], [], []>} : vector<4x256xbf16>, vector<256x256xbf16>, vector<4x256xf32> -> vector<4x256xf32>
    %38 = arith.addf %32, %37 : vector<4x256xf32>
    %39 = vector.extract_strided_slice %1 {offsets = [2, 0, 0], sizes = [2, 2, 256], strides = [1, 1, 1]} : vector<4x4x256xbf16> to vector<2x2x256xbf16>
    %40 = vector.shape_cast %39 : vector<2x2x256xbf16> to vector<4x256xbf16>
    %c6 = arith.constant 6 : index
    %c0_22 = arith.constant 0 : index
    %c0_23 = arith.constant 0 : index
    %41 = vector.load %arg3[%c6, %c0_22, %c0_23] : memref<9x256x256xbf16, #tpu.memory_space<vmem>>, vector<1x256x256xbf16>
    %42 = vector.shape_cast %41 : vector<1x256x256xbf16> to vector<256x256xbf16>
    %cst_24 = arith.constant dense<0.000000e+00> : vector<4x256xf32>
    %43 = tpu.matmul %40, %42, %cst_24 {dimension_numbers = #tpu.dot_dimension_numbers<[1], [0], [0], [1], [0, 0, 1, 1], [], []>} : vector<4x256xbf16>, vector<256x256xbf16>, vector<4x256xf32> -> vector<4x256xf32>
    %44 = arith.addf %38, %43 : vector<4x256xf32>
    %45 = vector.extract_strided_slice %1 {offsets = [2, 1, 0], sizes = [2, 2, 256], strides = [1, 1, 1]} : vector<4x4x256xbf16> to vector<2x2x256xbf16>
    %46 = vector.shape_cast %45 : vector<2x2x256xbf16> to vector<4x256xbf16>
    %c7 = arith.constant 7 : index
    %c0_25 = arith.constant 0 : index
    %c0_26 = arith.constant 0 : index
    %47 = vector.load %arg3[%c7, %c0_25, %c0_26] : memref<9x256x256xbf16, #tpu.memory_space<vmem>>, vector<1x256x256xbf16>
    %48 = vector.shape_cast %47 : vector<1x256x256xbf16> to vector<256x256xbf16>
    %cst_27 = arith.constant dense<0.000000e+00> : vector<4x256xf32>
    %49 = tpu.matmul %46, %48, %cst_27 {dimension_numbers = #tpu.dot_dimension_numbers<[1], [0], [0], [1], [0, 0, 1, 1], [], []>} : vector<4x256xbf16>, vector<256x256xbf16>, vector<4x256xf32> -> vector<4x256xf32>
    %50 = arith.addf %44, %49 : vector<4x256xf32>
    %51 = vector.extract_strided_slice %1 {offsets = [2, 2, 0], sizes = [2, 2, 256], strides = [1, 1, 1]} : vector<4x4x256xbf16> to vector<2x2x256xbf16>
    %52 = vector.shape_cast %51 : vector<2x2x256xbf16> to vector<4x256xbf16>
    %c8 = arith.constant 8 : index
    %c0_28 = arith.constant 0 : index
    %c0_29 = arith.constant 0 : index
    %53 = vector.load %arg3[%c8, %c0_28, %c0_29] : memref<9x256x256xbf16, #tpu.memory_space<vmem>>, vector<1x256x256xbf16>
    %54 = vector.shape_cast %53 : vector<1x256x256xbf16> to vector<256x256xbf16>
    %cst_30 = arith.constant dense<0.000000e+00> : vector<4x256xf32>
    %55 = tpu.matmul %52, %54, %cst_30 {dimension_numbers = #tpu.dot_dimension_numbers<[1], [0], [0], [1], [0, 0, 1, 1], [], []>} : vector<4x256xbf16>, vector<256x256xbf16>, vector<4x256xf32> -> vector<4x256xf32>
    %56 = arith.addf %50, %55 : vector<4x256xf32>
    %c0_31 = arith.constant 0 : index
    %c0_32 = arith.constant 0 : index
    %57 = vector.load %arg4[%c0_31, %c0_32] : memref<1x256xf32, #tpu.memory_space<vmem>>, vector<1x256xf32>
    %58 = vector.broadcast %57 : vector<1x256xf32> to vector<4x256xf32>
    %59 = arith.addf %56, %58 : vector<4x256xf32>
    %cst_33 = arith.constant dense<0.000000e+00> : vector<256xf32>
    %60 = vector.multi_reduction <add>, %59, %cst_33 [0] : vector<4x256xf32> to vector<256xf32>
    %61 = vector.shape_cast %60 : vector<256xf32> to vector<1x256xf32>
    %cst_34 = arith.constant 4.000000e+00 : f32
    %62 = vector.broadcast %cst_34 : f32 to vector<1x256xf32>
    %63 = arith.divf %61, %62 : vector<1x256xf32>
    %64 = arith.mulf %59, %59 : vector<4x256xf32>
    %cst_35 = arith.constant dense<0.000000e+00> : vector<256xf32>
    %65 = vector.multi_reduction <add>, %64, %cst_35 [0] : vector<4x256xf32> to vector<256xf32>
    %66 = vector.shape_cast %65 : vector<256xf32> to vector<1x256xf32>
    %cst_36 = arith.constant 4.000000e+00 : f32
    %67 = vector.broadcast %cst_36 : f32 to vector<1x256xf32>
    %68 = arith.divf %66, %67 : vector<1x256xf32>
    %69 = arith.mulf %63, %63 : vector<1x256xf32>
    %70 = arith.subf %68, %69 : vector<1x256xf32>
    %71 = vector.broadcast %63 : vector<1x256xf32> to vector<4x256xf32>
    %72 = arith.subf %59, %71 : vector<4x256xf32>
    %cst_37 = arith.constant 0.000000e+00 : f32
    %73 = vector.broadcast %cst_37 : f32 to vector<1x256xf32>
    %74 = arith.maximumf %70, %73 : vector<1x256xf32>
    %cst_38 = arith.constant 9.99999974E-6 : f32
    %75 = vector.broadcast %cst_38 : f32 to vector<1x256xf32>
    %76 = arith.addf %74, %75 : vector<1x256xf32>
    %77 = math.rsqrt %76 : vector<1x256xf32>
    %78 = vector.broadcast %77 : vector<1x256xf32> to vector<4x256xf32>
    %79 = arith.mulf %72, %78 : vector<4x256xf32>
    %cst_39 = arith.constant 0.000000e+00 : f32
    %80 = vector.broadcast %cst_39 : f32 to vector<4x256xf32>
    %81 = arith.cmpf oge, %79, %80 : vector<4x256xf32>
    %cst_40 = arith.constant 2.000000e-01 : f32
    %82 = vector.broadcast %cst_40 : f32 to vector<4x256xf32>
    %83 = arith.mulf %82, %79 : vector<4x256xf32>
    %84 = arith.select %81, %79, %83 : vector<4x256xi1>, vector<4x256xf32>
    %85 = arith.truncf %84 : vector<4x256xf32> to vector<4x256xbf16>
    %c0_41 = arith.constant 0 : index
    %c0_42 = arith.constant 0 : index
    %c0_43 = arith.constant 0 : index
    %86 = vector.load %arg5[%c0_41, %c0_42, %c0_43] : memref<1x4x256xbf16, #tpu.memory_space<vmem>>, vector<1x4x256xbf16>
    %87 = vector.shape_cast %86 : vector<1x4x256xbf16> to vector<4x256xbf16>
    %88 = vector.shape_cast %85 : vector<4x256xbf16> to vector<1x4x256xbf16>
    tpu.vector_store %arg5[%c0_41, %c0_42, %c0_43], %88 {strides = array<i32>} : memref<1x4x256xbf16, #tpu.memory_space<vmem>>, vector<1x4x256xbf16>,
    return
  }
  func.func @transform_0(%arg0: i32, %arg1: i32) -> (i32, i32, i32, i32) {
    %c0_i32 = arith.constant 0 : i32
    %c0_i32_0 = arith.constant 0 : i32
    %c0_i32_1 = arith.constant 0 : i32
    %c0_i32_2 = arith.constant 0 : i32
    return %arg0, %c0_i32, %c0_i32_0, %c0_i32_1 : i32, i32, i32, i32
  }
  func.func @transform_1(%arg0: i32, %arg1: i32) -> (i32, i32, i32) {
    %c0_i32 = arith.constant 0 : i32
    %c0_i32_0 = arith.constant 0 : i32
    %c0_i32_1 = arith.constant 0 : i32
    return %c0_i32, %c0_i32_0, %arg1 : i32, i32, i32
  }
  func.func @transform_2(%arg0: i32, %arg1: i32) -> (i32, i32) {
    %c0_i32 = arith.constant 0 : i32
    %c0_i32_0 = arith.constant 0 : i32
    return %c0_i32, %arg1 : i32, i32
  }
  func.func @transform_3(%arg0: i32, %arg1: i32) -> (i32, i32, i32) {
    %c0_i32 = arith.constant 0 : i32
    %c0_i32_0 = arith.constant 0 : i32
    return %arg0, %c0_i32, %arg1 : i32, i32, i32
  }
}

module attributes {stable_mosaic.version = 11 : i64} {
  func.func @_conv_block_kernel(%arg0: i32, %arg1: i32, %arg2: memref<1x4x4x512xbf16, #tpu.memory_space<vmem>>, %arg3: memref<9x512x1xbf16, #tpu.memory_space<vmem>>, %arg4: memref<1x1xf32, #tpu.memory_space<vmem>>, %arg5: memref<1x4x1xf32, #tpu.memory_space<vmem>>) attributes {dimension_semantics = [#tpu.dimension_semantics<parallel>, #tpu.dimension_semantics<parallel>], iteration_bounds = array<i64: 2, 1>, scalar_prefetch = 0 : i64, scratch_operands = 0 : i64, tpu.core_type = #tpu.core_type<tc>, window_params = [{transform_indices = @transform_0, window_bounds = array<i64: 1, 4, 4, 512>}, {transform_indices = @transform_1, window_bounds = array<i64: 9, 512, 1>}, {transform_indices = @transform_2, window_bounds = array<i64: 1, 1>}, {transform_indices = @transform_3, window_bounds = array<i64: 1, 4, 1>}]} {
    %c0 = arith.constant 0 : index
    %c0_0 = arith.constant 0 : index
    %c0_1 = arith.constant 0 : index
    %c0_2 = arith.constant 0 : index
    %0 = vector.load %arg2[%c0, %c0_0, %c0_1, %c0_2] : memref<1x4x4x512xbf16, #tpu.memory_space<vmem>>, vector<1x4x4x512xbf16>
    %1 = vector.shape_cast %0 : vector<1x4x4x512xbf16> to vector<4x4x512xbf16>
    %cst = arith.constant 0.000000e+00 : f32
    %2 = vector.broadcast %cst : f32 to vector<4x1xf32>
    %3 = vector.extract_strided_slice %1 {offsets = [0, 0, 0], sizes = [2, 2, 512], strides = [1, 1, 1]} : vector<4x4x512xbf16> to vector<2x2x512xbf16>
    %4 = vector.shape_cast %3 : vector<2x2x512xbf16> to vector<4x512xbf16>
    %c0_3 = arith.constant 0 : index
    %c0_4 = arith.constant 0 : index
    %c0_5 = arith.constant 0 : index
    %5 = vector.load %arg3[%c0_3, %c0_4, %c0_5] : memref<9x512x1xbf16, #tpu.memory_space<vmem>>, vector<1x512x1xbf16>
    %6 = vector.shape_cast %5 : vector<1x512x1xbf16> to vector<512x1xbf16>
    %cst_6 = arith.constant dense<0.000000e+00> : vector<4x1xf32>
    %7 = tpu.matmul %4, %6, %cst_6 {dimension_numbers = #tpu.dot_dimension_numbers<[1], [0], [0], [1], [0, 0, 1, 1], [], []>} : vector<4x512xbf16>, vector<512x1xbf16>, vector<4x1xf32> -> vector<4x1xf32>
    %8 = arith.addf %2, %7 : vector<4x1xf32>
    %9 = vector.extract_strided_slice %1 {offsets = [0, 1, 0], sizes = [2, 2, 512], strides = [1, 1, 1]} : vector<4x4x512xbf16> to vector<2x2x512xbf16>
    %10 = vector.shape_cast %9 : vector<2x2x512xbf16> to vector<4x512xbf16>
    %c1 = arith.constant 1 : index
    %c0_7 = arith.constant 0 : index
    %c0_8 = arith.constant 0 : index
    %11 = vector.load %arg3[%c1, %c0_7, %c0_8] : memref<9x512x1xbf16, #tpu.memory_space<vmem>>, vector<1x512x1xbf16>
    %12 = vector.shape_cast %11 : vector<1x512x1xbf16> to vector<512x1xbf16>
    %cst_9 = arith.constant dense<0.000000e+00> : vector<4x1xf32>
    %13 = tpu.matmul %10, %12, %cst_9 {dimension_numbers = #tpu.dot_dimension_numbers<[1], [0], [0], [1], [0, 0, 1, 1], [], []>} : vector<4x512xbf16>, vector<512x1xbf16>, vector<4x1xf32> -> vector<4x1xf32>
    %14 = arith.addf %8, %13 : vector<4x1xf32>
    %15 = vector.extract_strided_slice %1 {offsets = [0, 2, 0], sizes = [2, 2, 512], strides = [1, 1, 1]} : vector<4x4x512xbf16> to vector<2x2x512xbf16>
    %16 = vector.shape_cast %15 : vector<2x2x512xbf16> to vector<4x512xbf16>
    %c2 = arith.constant 2 : index
    %c0_10 = arith.constant 0 : index
    %c0_11 = arith.constant 0 : index
    %17 = vector.load %arg3[%c2, %c0_10, %c0_11] : memref<9x512x1xbf16, #tpu.memory_space<vmem>>, vector<1x512x1xbf16>
    %18 = vector.shape_cast %17 : vector<1x512x1xbf16> to vector<512x1xbf16>
    %cst_12 = arith.constant dense<0.000000e+00> : vector<4x1xf32>
    %19 = tpu.matmul %16, %18, %cst_12 {dimension_numbers = #tpu.dot_dimension_numbers<[1], [0], [0], [1], [0, 0, 1, 1], [], []>} : vector<4x512xbf16>, vector<512x1xbf16>, vector<4x1xf32> -> vector<4x1xf32>
    %20 = arith.addf %14, %19 : vector<4x1xf32>
    %21 = vector.extract_strided_slice %1 {offsets = [1, 0, 0], sizes = [2, 2, 512], strides = [1, 1, 1]} : vector<4x4x512xbf16> to vector<2x2x512xbf16>
    %22 = vector.shape_cast %21 : vector<2x2x512xbf16> to vector<4x512xbf16>
    %c3 = arith.constant 3 : index
    %c0_13 = arith.constant 0 : index
    %c0_14 = arith.constant 0 : index
    %23 = vector.load %arg3[%c3, %c0_13, %c0_14] : memref<9x512x1xbf16, #tpu.memory_space<vmem>>, vector<1x512x1xbf16>
    %24 = vector.shape_cast %23 : vector<1x512x1xbf16> to vector<512x1xbf16>
    %cst_15 = arith.constant dense<0.000000e+00> : vector<4x1xf32>
    %25 = tpu.matmul %22, %24, %cst_15 {dimension_numbers = #tpu.dot_dimension_numbers<[1], [0], [0], [1], [0, 0, 1, 1], [], []>} : vector<4x512xbf16>, vector<512x1xbf16>, vector<4x1xf32> -> vector<4x1xf32>
    %26 = arith.addf %20, %25 : vector<4x1xf32>
    %27 = vector.extract_strided_slice %1 {offsets = [1, 1, 0], sizes = [2, 2, 512], strides = [1, 1, 1]} : vector<4x4x512xbf16> to vector<2x2x512xbf16>
    %28 = vector.shape_cast %27 : vector<2x2x512xbf16> to vector<4x512xbf16>
    %c4 = arith.constant 4 : index
    %c0_16 = arith.constant 0 : index
    %c0_17 = arith.constant 0 : index
    %29 = vector.load %arg3[%c4, %c0_16, %c0_17] : memref<9x512x1xbf16, #tpu.memory_space<vmem>>, vector<1x512x1xbf16>
    %30 = vector.shape_cast %29 : vector<1x512x1xbf16> to vector<512x1xbf16>
    %cst_18 = arith.constant dense<0.000000e+00> : vector<4x1xf32>
    %31 = tpu.matmul %28, %30, %cst_18 {dimension_numbers = #tpu.dot_dimension_numbers<[1], [0], [0], [1], [0, 0, 1, 1], [], []>} : vector<4x512xbf16>, vector<512x1xbf16>, vector<4x1xf32> -> vector<4x1xf32>
    %32 = arith.addf %26, %31 : vector<4x1xf32>
    %33 = vector.extract_strided_slice %1 {offsets = [1, 2, 0], sizes = [2, 2, 512], strides = [1, 1, 1]} : vector<4x4x512xbf16> to vector<2x2x512xbf16>
    %34 = vector.shape_cast %33 : vector<2x2x512xbf16> to vector<4x512xbf16>
    %c5 = arith.constant 5 : index
    %c0_19 = arith.constant 0 : index
    %c0_20 = arith.constant 0 : index
    %35 = vector.load %arg3[%c5, %c0_19, %c0_20] : memref<9x512x1xbf16, #tpu.memory_space<vmem>>, vector<1x512x1xbf16>
    %36 = vector.shape_cast %35 : vector<1x512x1xbf16> to vector<512x1xbf16>
    %cst_21 = arith.constant dense<0.000000e+00> : vector<4x1xf32>
    %37 = tpu.matmul %34, %36, %cst_21 {dimension_numbers = #tpu.dot_dimension_numbers<[1], [0], [0], [1], [0, 0, 1, 1], [], []>} : vector<4x512xbf16>, vector<512x1xbf16>, vector<4x1xf32> -> vector<4x1xf32>
    %38 = arith.addf %32, %37 : vector<4x1xf32>
    %39 = vector.extract_strided_slice %1 {offsets = [2, 0, 0], sizes = [2, 2, 512], strides = [1, 1, 1]} : vector<4x4x512xbf16> to vector<2x2x512xbf16>
    %40 = vector.shape_cast %39 : vector<2x2x512xbf16> to vector<4x512xbf16>
    %c6 = arith.constant 6 : index
    %c0_22 = arith.constant 0 : index
    %c0_23 = arith.constant 0 : index
    %41 = vector.load %arg3[%c6, %c0_22, %c0_23] : memref<9x512x1xbf16, #tpu.memory_space<vmem>>, vector<1x512x1xbf16>
    %42 = vector.shape_cast %41 : vector<1x512x1xbf16> to vector<512x1xbf16>
    %cst_24 = arith.constant dense<0.000000e+00> : vector<4x1xf32>
    %43 = tpu.matmul %40, %42, %cst_24 {dimension_numbers = #tpu.dot_dimension_numbers<[1], [0], [0], [1], [0, 0, 1, 1], [], []>} : vector<4x512xbf16>, vector<512x1xbf16>, vector<4x1xf32> -> vector<4x1xf32>
    %44 = arith.addf %38, %43 : vector<4x1xf32>
    %45 = vector.extract_strided_slice %1 {offsets = [2, 1, 0], sizes = [2, 2, 512], strides = [1, 1, 1]} : vector<4x4x512xbf16> to vector<2x2x512xbf16>
    %46 = vector.shape_cast %45 : vector<2x2x512xbf16> to vector<4x512xbf16>
    %c7 = arith.constant 7 : index
    %c0_25 = arith.constant 0 : index
    %c0_26 = arith.constant 0 : index
    %47 = vector.load %arg3[%c7, %c0_25, %c0_26] : memref<9x512x1xbf16, #tpu.memory_space<vmem>>, vector<1x512x1xbf16>
    %48 = vector.shape_cast %47 : vector<1x512x1xbf16> to vector<512x1xbf16>
    %cst_27 = arith.constant dense<0.000000e+00> : vector<4x1xf32>
    %49 = tpu.matmul %46, %48, %cst_27 {dimension_numbers = #tpu.dot_dimension_numbers<[1], [0], [0], [1], [0, 0, 1, 1], [], []>} : vector<4x512xbf16>, vector<512x1xbf16>, vector<4x1xf32> -> vector<4x1xf32>
    %50 = arith.addf %44, %49 : vector<4x1xf32>
    %51 = vector.extract_strided_slice %1 {offsets = [2, 2, 0], sizes = [2, 2, 512], strides = [1, 1, 1]} : vector<4x4x512xbf16> to vector<2x2x512xbf16>
    %52 = vector.shape_cast %51 : vector<2x2x512xbf16> to vector<4x512xbf16>
    %c8 = arith.constant 8 : index
    %c0_28 = arith.constant 0 : index
    %c0_29 = arith.constant 0 : index
    %53 = vector.load %arg3[%c8, %c0_28, %c0_29] : memref<9x512x1xbf16, #tpu.memory_space<vmem>>, vector<1x512x1xbf16>
    %54 = vector.shape_cast %53 : vector<1x512x1xbf16> to vector<512x1xbf16>
    %cst_30 = arith.constant dense<0.000000e+00> : vector<4x1xf32>
    %55 = tpu.matmul %52, %54, %cst_30 {dimension_numbers = #tpu.dot_dimension_numbers<[1], [0], [0], [1], [0, 0, 1, 1], [], []>} : vector<4x512xbf16>, vector<512x1xbf16>, vector<4x1xf32> -> vector<4x1xf32>
    %56 = arith.addf %50, %55 : vector<4x1xf32>
    %c0_31 = arith.constant 0 : index
    %c0_32 = arith.constant 0 : index
    %57 = vector.load %arg4[%c0_31, %c0_32] : memref<1x1xf32, #tpu.memory_space<vmem>>, vector<1x1xf32>
    %58 = vector.broadcast %57 : vector<1x1xf32> to vector<4x1xf32>
    %59 = arith.addf %56, %58 : vector<4x1xf32>
    %c0_33 = arith.constant 0 : index
    %c0_34 = arith.constant 0 : index
    %c0_35 = arith.constant 0 : index
    %60 = vector.load %arg5[%c0_33, %c0_34, %c0_35] : memref<1x4x1xf32, #tpu.memory_space<vmem>>, vector<1x4x1xf32>
    %61 = vector.shape_cast %60 : vector<1x4x1xf32> to vector<4x1xf32>
    %62 = vector.shape_cast %59 : vector<4x1xf32> to vector<1x4x1xf32>
    tpu.vector_store %arg5[%c0_33, %c0_34, %c0_35], %62 {strides = array<i32>} : memref<1x4x1xf32, #tpu.memory_space<vmem>>, vector<1x4x1xf32>,
    return
  }
  func.func @transform_0(%arg0: i32, %arg1: i32) -> (i32, i32, i32, i32) {
    %c0_i32 = arith.constant 0 : i32
    %c0_i32_0 = arith.constant 0 : i32
    %c0_i32_1 = arith.constant 0 : i32
    %c0_i32_2 = arith.constant 0 : i32
    return %arg0, %c0_i32, %c0_i32_0, %c0_i32_1 : i32, i32, i32, i32
  }
  func.func @transform_1(%arg0: i32, %arg1: i32) -> (i32, i32, i32) {
    %c0_i32 = arith.constant 0 : i32
    %c0_i32_0 = arith.constant 0 : i32
    %c0_i32_1 = arith.constant 0 : i32
    return %c0_i32, %c0_i32_0, %arg1 : i32, i32, i32
  }
  func.func @transform_2(%arg0: i32, %arg1: i32) -> (i32, i32) {
    %c0_i32 = arith.constant 0 : i32
    %c0_i32_0 = arith.constant 0 : i32
    return %c0_i32, %arg1 : i32, i32
  }
  func.func @transform_3(%arg0: i32, %arg1: i32) -> (i32, i32, i32) {
    %c0_i32 = arith.constant 0 : i32
    %c0_i32_0 = arith.constant 0 : i32
    return %arg0, %c0_i32, %arg1 : i32, i32, i32
  }
}

</mosaic_0001>

<llo_original>
// kernel: discriminator_forward.5
$region0: #{discriminator_forward.5}
  #allocation0 [shape = 'u32[]', space=smem, size = 0x4, offset = 0x4, fixed_abs, tag = 'smem constant byte address 0x4 - core index']
  #allocation1 [shape = 'u32[72,128]{1,0:T(1,128)}', space=vmem, size = 0x9000, scoped, tag = 'internal scratch']
  %s0 = inlined_call_operand.vmem [shape: bf16[2,36,9,3], index: 0, kind: input, shape index: {}]
  %s1 = inlined_call_operand.hbm [shape: bf16[9,3,64], index: 1, kind: input, shape index: {}]
  %s2 = inlined_call_operand.hbm [shape: f32[1,64], index: 2, kind: input, shape index: {}]
  %s3 = inlined_call_operand.vmem [shape: bf16[2,64,64], index: 3, kind: output, shape index: {}]
  %s4 = sld [smem:[#allocation0]]
  $region53: #{discriminator_forward.5} parent=0
    _
  %s6 = ssub.s32 1, %s4
  %s7 = scalar_select 0, %s6, %s4
  $region1: #{discriminator_forward.5} parent=0
    #allocation2 [shape = 'u8[9216]{0}', space=vmem, size = 0x2400, scoped, tag = 'input window, operand 1, single buffered']
    #allocation3 [shape = 's32[2]{0}', space=sflag, size = 0x8, scoped, tag = 'scoped memory for discriminator_forward.5']
    #allocation4 [shape = 'u8[512]{0}', space=vmem, size = 0x400, scoped, tag = 'input window, operand 2, single buffered']
    #allocation5 [shape = 's32[1]{0}', space=sflag, size = 0x4, scoped, tag = 'scoped memory for discriminator_forward.5']
    %8 = vsyncpa [#allocation3], 0
    %9 = vsyncpa [#allocation5], 0
    loop: start=0, step=1, limit=4
    $region2: #{discriminator_forward.5} parent=1 // loop_pre_header
      _
    $region3: #{discriminator_forward.5} parent=1 // loop_header
      %s11 = sphi 0, %s15
      %p12 = scmp.ge.s32.totalorder %s11, 4
      %s18 = sphi 0, %s30
      %s19 = sphi 0, %s26
      %s20 = sphi 0, %s18
      %s21 = sphi 0, %s19
      %s22 = sphi 0, %s20
      %s23 = sphi 0, %s21
      %s33 = sphi 0, %s35
      %s36 = sphi 0, %s33
      %s37 = sphi 0, %s36
      %s53 = sphi 0, %s37
      %s59 = sphi 0, %s61
      %s62 = sphi 0, %s59
      %s63 = sphi 0, %s62
      %s79 = sphi 0, %s63
      %s85 = sphi 0, %s87
      %s88 = sphi 0, %s85
      %s89 = sphi 0, %s88
      %s105 = sphi 0, %s89
      %s113 = sphi 0, %s115
      %s116 = sphi 0, %s113
      %s117 = sphi 0, %s116
      %s133 = sphi 0, %s117
    $region4: #{discriminator_forward.5} parent=1 // loop_header_branch
      %14 = sbr.rel (%p12) target = $region8
    $region5: #{discriminator_forward.5} parent=1 // loop_body
      %s16 = ssub.s32 %s11, 1
      %s17 = ssub.s32 %s11, 2
      %s24 = sadd.s32 1, %s19
      %p25 = scmp.ge.s32.totalorder %s24, 1
      %s26 = scalar_select %p25, 0, %s24
      %s27 = sadd.s32 1, %s18
      %s28 = scalar_select %p25, %s27, %s18
      %p29 = scmp.ge.s32.totalorder %s28, 2
      %s30 = scalar_select %p29, 0, %s28
      %s31 = ssub.s32 %s18, %s30
      %p32 = scmp.eq.s32.totalorder %s31, 0
      %s34 = sadd.s32 %s33, 1
      %s35 = scalar_select %p32, %s33, %s34
      %p38 = pneg %p32
      %p39 = scmp.eq.s32.totalorder %s11, 1
      %p40 = por %p38, %p39
      %p41 = scmp.ne.s32.totalorder %s33, %s36
      %p42 = scmp.eq.s32.totalorder %s11, 0
      %p43 = por %p41, %p42
      %p44 = scmp.ne.s32.totalorder %s33, %s36
      %p45 = scmp.eq.s32.totalorder %s16, 1
      %p46 = por %p44, %p45
      %p47 = scmp.ne.s32.totalorder %s36, %s37
      %p48 = scmp.eq.s32.totalorder %s16, 0
      %p49 = por %p47, %p48
      %p50 = scmp.ne.s32.totalorder %s36, %s37
      %p51 = scmp.eq.s32.totalorder %s17, 1
      %p52 = por %p50, %p51
      %p54 = scmp.ne.s32.totalorder %s37, %s53
      %p55 = scmp.eq.s32.totalorder %s17, 0
      %p56 = por %p54, %p55
      %s57 = ssub.s32 %s19, %s26
      %p58 = scmp.eq.s32.totalorder %s57, 0
      %s60 = sadd.s32 %s59, 1
      %s61 = scalar_select %p58, %s59, %s60
      %p64 = pneg %p58
      %p65 = scmp.eq.s32.totalorder %s11, 1
      %p66 = por %p64, %p65
      %p67 = scmp.ne.s32.totalorder %s59, %s62
      %p68 = scmp.eq.s32.totalorder %s11, 0
      %p69 = por %p67, %p68
      %p70 = scmp.ne.s32.totalorder %s59, %s62
      %p71 = scmp.eq.s32.totalorder %s16, 1
      %p72 = por %p70, %p71
      %p73 = scmp.ne.s32.totalorder %s62, %s63
      %p74 = scmp.eq.s32.totalorder %s16, 0
      %p75 = por %p73, %p74
      %p76 = scmp.ne.s32.totalorder %s62, %s63
      %p77 = scmp.eq.s32.totalorder %s17, 1
      %p78 = por %p76, %p77
      %p80 = scmp.ne.s32.totalorder %s63, %s79
      %p81 = scmp.eq.s32.totalorder %s17, 0
      %p82 = por %p80, %p81
      %s83 = ssub.s32 %s19, %s26
      %p84 = scmp.eq.s32.totalorder %s83, 0
      %s86 = sadd.s32 %s85, 1
      %s87 = scalar_select %p84, %s85, %s86
      %p90 = pneg %p84
      %p91 = scmp.eq.s32.totalorder %s11, 1
      %p92 = por %p90, %p91
      %p93 = scmp.ne.s32.totalorder %s85, %s88
      %p94 = scmp.eq.s32.totalorder %s11, 0
      %p95 = por %p93, %p94
      %p96 = scmp.ne.s32.totalorder %s85, %s88
      %p97 = scmp.eq.s32.totalorder %s16, 1
      %p98 = por %p96, %p97
      %p99 = scmp.ne.s32.totalorder %s88, %s89
      %p100 = scmp.eq.s32.totalorder %s16, 0
      %p101 = por %p99, %p100
      %p102 = scmp.ne.s32.totalorder %s88, %s89
      %p103 = scmp.eq.s32.totalorder %s17, 1
      %p104 = por %p102, %p103
      %p106 = scmp.ne.s32.totalorder %s89, %s105
      %p107 = scmp.eq.s32.totalorder %s17, 0
      %p108 = por %p106, %p107
      %s109 = ssub.s32 %s18, %s30
      %s110 = ssub.s32 %s19, %s26
      %s111 = sor.u32 %s109, %s110
      %p112 = scmp.eq.s32.totalorder %s111, 0
      %s114 = sadd.s32 %s113, 1
      %s115 = scalar_select %p112, %s113, %s114
      %p118 = pneg %p112
      %p119 = scmp.eq.s32.totalorder %s11, 1
      %p120 = por %p118, %p119
      %p121 = scmp.ne.s32.totalorder %s113, %s116
      %p122 = scmp.eq.s32.totalorder %s11, 0
      %p123 = por %p121, %p122
      %p124 = scmp.ne.s32.totalorder %s113, %s116
      %p125 = scmp.eq.s32.totalorder %s16, 1
      %p126 = por %p124, %p125
      %p127 = scmp.ne.s32.totalorder %s116, %s117
      %p128 = scmp.eq.s32.totalorder %s16, 0
      %p129 = por %p127, %p128
      %p130 = scmp.ne.s32.totalorder %s116, %s117
      %p131 = scmp.eq.s32.totalorder %s17, 1
      %p132 = por %p130, %p131
      %p134 = scmp.ne.s32.totalorder %s117, %s133
      %p135 = scmp.eq.s32.totalorder %s17, 0
      %p136 = por %p134, %p135
      %p137 = scmp.le.s32.totalorder 1, %s11
      %p138 = scmp.lt.s32.totalorder %s11, 3
      %p139 = pnand %p137, %p138
      %p140 = pneg %p139
      // Predicated region
      $region9: #{discriminator_forward.5} parent=5 // pred_check
        _
      $region10: #{discriminator_forward.5} parent=5 // pred_check_branch
        %142 = sbr.rel (%p139) target = $region12
      $region11: #{discriminator_forward.5} parent=5 // pred_region
        %s143 = ssub.s32 %s11, 1
        // Predicated region
        $region13: #{discriminator_forward.5} parent=11 // pred_check
          %p144 = pneg %p75
        $region14: #{discriminator_forward.5} parent=11 // pred_check_branch
          %146 = sbr.rel (%p144) target = $region16
        $region15: #{discriminator_forward.5} parent=11 // pred_region
          %148 = vsyncadd [#allocation3], 0
          %s149 = smul.addr %s21, 2
          %s150 = scalar_lea.hbm %s1, %s149
          %s151 = sshll.u32 %s150, 4
          %s152 = int_to_ptr.hbm [resolvable:$true] %s151
          %s153 = sshll.u32 [#allocation2], 4
          %s154 = int_to_ptr.vmem [resolvable:$true] %s153
          %159 = dma.hbm_to_vmem [thread:$0]  %s152, 288, %s154, [#allocation3], 32, 32, 2
        $region16: #{discriminator_forward.5} parent=11 // pred_fallthru
          _
        // Predicated region
        $region17: #{discriminator_forward.5} parent=11 // pred_check
          %p160 = pneg %p101
        $region18: #{discriminator_forward.5} parent=11 // pred_check_branch
          %162 = sbr.rel (%p160) target = $region20
        $region19: #{discriminator_forward.5} parent=11 // pred_region
          %164 = vsyncadd [#allocation5], 0
          %s165 = scalar_lea.hbm %s2, %s21
          %s167 = sshll.u32 %s165, 4
          %s168 = int_to_ptr.hbm [resolvable:$true] %s167
          %s169 = sshll.u32 [#allocation4], 4
          %s170 = int_to_ptr.vmem [resolvable:$true] %s169
          %172 = dma.hbm_to_vmem [thread:$0]  %s168, 16, %s170, [#allocation5]
        $region20: #{discriminator_forward.5} parent=11 // pred_fallthru
          _
      $region12: #{discriminator_forward.5} parent=5 // pred_fallthru
        _
      %p173 = scmp.lt.s32.totalorder %s11, 2
      // Predicated region
      $region21: #{discriminator_forward.5} parent=5 // pred_check
        %p174 = pneg %p173
      $region22: #{discriminator_forward.5} parent=5 // pred_check_branch
        %176 = sbr.rel (%p174) target = $region24
      $region23: #{discriminator_forward.5} parent=5 // pred_region
        // Predicated region
        $region25: #{discriminator_forward.5} parent=23 // pred_check
          %p177 = pneg %p43
        $region26: #{discriminator_forward.5} parent=23 // pred_check_branch
          %179 = sbr.rel (%p177) target = $region28
        $region27: #{discriminator_forward.5} parent=23 // pred_region
          %p180 = scmp.lt.s32.totalorder %s18, 1
          %s181 = scalar_select %p180, %s18, 1
          %s182 = smul.addr %s181, 72
          %s183 = smul.addr %s182, 4
          %s184 = scalar_lea.vmem %s0, %s183
        $region28: #{discriminator_forward.5} parent=23 // pred_fallthru
          _
      $region24: #{discriminator_forward.5} parent=5 // pred_fallthru
        _
      %p185 = scmp.le.s32.totalorder 1, %s11
      %p186 = scmp.lt.s32.totalorder %s11, 3
      %p187 = pnand %p185, %p186
      %p188 = pneg %p187
      // Predicated region
      $region29: #{discriminator_forward.5} parent=5 // pred_check
        _
      $region30: #{discriminator_forward.5} parent=5 // pred_check_branch
        %190 = sbr.rel (%p187) target = $region32
      $region31: #{discriminator_forward.5} parent=5 // pred_region
        %s191 = ssub.s32 %s11, 1
        // Predicated region
        $region33: #{discriminator_forward.5} parent=31 // pred_check
          %p192 = pneg %p75
        $region34: #{discriminator_forward.5} parent=31 // pred_check_branch
          %194 = sbr.rel (%p192) target = $region36
        $region35: #{discriminator_forward.5} parent=31 // pred_region
          %196 = dma.done [#allocation3], 288
        $region36: #{discriminator_forward.5} parent=31 // pred_fallthru
          _
        // Predicated region
        $region37: #{discriminator_forward.5} parent=31 // pred_check
          %p197 = pneg %p101
        $region38: #{discriminator_forward.5} parent=31 // pred_check_branch
          %199 = sbr.rel (%p197) target = $region40
        $region39: #{discriminator_forward.5} parent=31 // pred_region
          %201 = dma.done [#allocation5], 16
        $region40: #{discriminator_forward.5} parent=31 // pred_fallthru
          _
        %p202 = scmp.lt.s32.totalorder %s20, 1
        %s203 = scalar_select %p202, %s20, 1
        %s204 = smul.addr %s203, 72
        %s205 = smul.addr %s204, 4
        %s206 = scalar_lea.vmem %s0, %s205
        %p207 = pneg %p49
        %p208 = pneg %p46
        %p209 = pneg %p75
        %p210 = pneg %p72
        %p211 = pneg %p101
        %p212 = pneg %p98
        %p213 = pneg %p129
        %p214 = pneg %p126
        %p215 = scmp.lt.s32.totalorder %s20, 1
        %s216 = scalar_select %p215, %s20, 1
        %p217 = scmp.lt.s32.totalorder %s21, 0
        %s218 = scalar_select %p217, %s21, 0
        %s219 = smul.addr %s216, 8
        %s220 = sadd.s32 %s218, %s219
        %s221 = smul.addr %s220, 4
        %s222 = scalar_lea.vmem %s3, %s221
        %p223 = scmp.lt.s32.totalorder %s20, 1
        %s224 = scalar_select %p223, %s20, 1
        %s225 = smul.addr %s224, 72
        %s226 = smul.addr %s225, 4
        %s227 = scalar_lea.vmem %s0, %s226
        %p228 = scmp.lt.s32.totalorder %s20, 1
        %s229 = scalar_select %p228, %s20, 1
        %p230 = scmp.lt.s32.totalorder %s21, 0
        %s231 = scalar_select %p230, %s21, 0
        %s232 = smul.addr %s229, 8
        %s233 = sadd.s32 %s231, %s232
        %s234 = smul.addr %s233, 4
        %s235 = scalar_lea.vmem %s3, %s234
        %v237 = vld [vmem:[%s227] sm:$0xf]
        %v238 = vld [vmem:[%s227 + $0x4] sm:$0x1]
        %v239 = vld [vmem:[%s227 + $0x8] sm:$0xf]
        %v240 = vld [vmem:[%s227 + $0xc] sm:$0x1]
        %v241 = vld [vmem:[%s227 + $0x10] sm:$0xf]
        %v242 = vld [vmem:[%s227 + $0x14] sm:$0x1]
        %v243 = vld [vmem:[%s227 + $0x18] sm:$0xf]
        %v244 = vld [vmem:[%s227 + $0x1c] sm:$0x1]
        %v245 = vld [vmem:[%s227 + $0x20] sm:$0xf]
        %v246 = vld [vmem:[%s227 + $0x24] sm:$0x1]
        %v247 = vld [vmem:[%s227 + $0x28] sm:$0xf]
        %v248 = vld [vmem:[%s227 + $0x2c] sm:$0x1]
        %v249 = vld [vmem:[%s227 + $0x30] sm:$0xf]
        %v250 = vld [vmem:[%s227 + $0x34] sm:$0x1]
        %v251 = vld [vmem:[%s227 + $0x38] sm:$0xf]
        %v252 = vld [vmem:[%s227 + $0x3c] sm:$0x1]
        %v253 = vld [vmem:[%s227 + $0x40] sm:$0xf]
        %v254 = vld [vmem:[%s227 + $0x44] sm:$0x1]
        %v255 = vld [vmem:[%s227 + $0x48] sm:$0xf]
        %v256 = vld [vmem:[%s227 + $0x50] sm:$0xf]
        %v257 = vld [vmem:[%s227 + $0x58] sm:$0xf]
        %v258 = vld [vmem:[%s227 + $0x60] sm:$0xf]
        %v259 = vld [vmem:[%s227 + $0x68] sm:$0xf]
        %v260 = vld [vmem:[%s227 + $0x70] sm:$0xf]
        %v261 = vld [vmem:[%s227 + $0x78] sm:$0xf]
        %v262 = vld [vmem:[%s227 + $0x80] sm:$0xf]
        %v263 = vld [vmem:[%s227 + $0x88] sm:$0xf]
        %v264 = vld [vmem:[%s227 + $0x90] sm:$0xf]
        %v265 = vld [vmem:[%s227 + $0x94] sm:$0x1]
        %v266 = vld [vmem:[%s227 + $0x98] sm:$0xf]
        %v267 = vld [vmem:[%s227 + $0x9c] sm:$0x1]
        %v268 = vld [vmem:[%s227 + $0xa0] sm:$0xf]
        %v269 = vld [vmem:[%s227 + $0xa4] sm:$0x1]
        %v270 = vld [vmem:[%s227 + $0xa8] sm:$0xf]
        %v271 = vld [vmem:[%s227 + $0xac] sm:$0x1]
        %v272 = vld [vmem:[%s227 + $0xb0] sm:$0xf]
        %v273 = vld [vmem:[%s227 + $0xb4] sm:$0x1]
        %v274 = vld [vmem:[%s227 + $0xb8] sm:$0xf]
        %v275 = vld [vmem:[%s227 + $0xbc] sm:$0x1]
        %v276 = vld [vmem:[%s227 + $0xc0] sm:$0xf]
        %v277 = vld [vmem:[%s227 + $0xc4] sm:$0x1]
        %v278 = vld [vmem:[%s227 + $0xc8] sm:$0xf]
        %v279 = vld [vmem:[%s227 + $0xcc] sm:$0x1]
        %v280 = vld [vmem:[%s227 + $0xd8] sm:$0xf]
        %v281 = vld [vmem:[%s227 + $0xe0] sm:$0xf]
        %v282 = vld [vmem:[%s227 + $0xe8] sm:$0xf]
        %v283 = vld [vmem:[%s227 + $0xf0] sm:$0xf]
        %v284 = vld [vmem:[%s227 + $0xf8] sm:$0xf]
        %v285 = vld [vmem:[%s227 + $0x100] sm:$0xf]
        %v286 = vld [vmem:[%s227 + $0x108] sm:$0xf]
        %v287 = vld [vmem:[%s227 + $0x110] sm:$0xf]
        %v288 = vld [vmem:[#allocation2] sm:$0x3]
        %s289 = scalar_lea.vmem [#allocation2], 2
        %v290 = vld [vmem:[%s289] sm:$0x3]
        %v299 = vunpack.c.l.b16 %v255
        %v300 = vunpack.c.l.b16 %v256
        %v301 = vunpack.c.l.b16 %v257
        %v302 = vunpack.c.l.b16 %v258
        %v303 = vunpack.c.l.b16 %v259
        %v304 = vunpack.c.l.b16 %v260
        %v305 = vunpack.c.l.b16 %v261
        %v306 = vunpack.c.l.b16 %v262
        %v307 = vpack.c.b16 %v300, %v299
        %v308 = vpack.c.b16 %v302, %v301
        %v309 = vpack.c.b16 %v304, %v303
        %v310 = vpack.c.b16 %v306, %v305
        %vm311 = vcmask 23552
        %v313 = vsel %vm311, %v307, 0
        %v316 = vsel %vm311, %v308, 0
        %v319 = vsel %vm311, %v309, 0
        %v322 = vsel %vm311, %v310, 0
        %vm324 = vcmask 1040384
        %vm325 = vcmask 1041408
        %v326 = vsel %vm324, 4294967295, 65535
        %v327 = vsel %vm325, %v326, 0
        %v329 = vand.u32 %v290, %v327
        %331 = vmatpush.bf16.msra.mxu0 0
        %332 = vmatpush.bf16.msra.mxu0 0
        %333 = vmatpush.bf16.msra.mxu0 0
        %334 = vmatpush.bf16.msra.mxu0 0
        %335 = vmatpush.bf16.msra.mxu0 0
        %336 = vmatpush.bf16.msra.mxu0 0
        %337 = vmatpush.bf16.msra.mxu0 0
        %338 = vmatpush.bf16.msra.mxu0 %v329
        %339 = vmatmul.bf16.gmra.mxu0 %v313
        %v340 = vpop.f32.mrf.mxu0
        %v341 = vadd.f32 0.0, %v340
        %v342 = vpop.f32.mrf.mxu0
        %v343 = vadd.f32 0.0, %v342
        %344 = vmatmul.bf16.gmra.mxu0 %v316
        %v345 = vpop.f32.mrf.mxu0
        %v346 = vadd.f32 0.0, %v345
        %v347 = vpop.f32.mrf.mxu0
        %v348 = vadd.f32 0.0, %v347
        %349 = vmatmul.bf16.gmra.mxu0 %v319
        %v350 = vpop.f32.mrf.mxu0
        %v351 = vadd.f32 0.0, %v350
        %v352 = vpop.f32.mrf.mxu0
        %v353 = vadd.f32 0.0, %v352
        %354 = vmatmul.bf16.gmra.mxu0 %v322
        %v355 = vpop.f32.mrf.mxu0
        %v356 = vadd.f32 0.0, %v355
        %v357 = vpop.f32.mrf.mxu0
        %v358 = vadd.f32 0.0, %v357
        %359 = vdwg.mxu0
        %v368 = vunpack.c.l.b16 %v237
        %v369 = vunpack.c.l.b16 %v239
        %v370 = vunpack.c.l.b16 %v241
        %v371 = vunpack.c.l.b16 %v243
        %v372 = vunpack.c.l.b16 %v245
        %v373 = vunpack.c.l.b16 %v247
        %v374 = vunpack.c.l.b16 %v249
        %v375 = vunpack.c.l.b16 %v251
        %v376 = vpack.c.b16 %v369, %v368
        %v377 = vpack.c.b16 %v371, %v370
        %v378 = vpack.c.b16 %v373, %v372
        %v379 = vpack.c.b16 %v375, %v374
        %v381 = vsel %vm311, %v376, 0
        %v384 = vsel %vm311, %v377, 0
        %v387 = vsel %vm311, %v378, 0
        %v390 = vsel %vm311, %v379, 0
        %v393 = vand.u32 %v288, %v327
        %395 = vmatpush.bf16.msra.mxu0 0
        %396 = vmatpush.bf16.msra.mxu0 0
        %397 = vmatpush.bf16.msra.mxu0 0
        %398 = vmatpush.bf16.msra.mxu0 0
        %399 = vmatpush.bf16.msra.mxu0 0
        %400 = vmatpush.bf16.msra.mxu0 0
        %401 = vmatpush.bf16.msra.mxu0 0
        %402 = vmatpush.bf16.msra.mxu0 %v393
        %403 = vmatmul.bf16.gmra.mxu0 %v381
        %v404 = vpop.f32.mrf.mxu0
        %v405 = vadd.f32 %v341, %v404
        %v406 = vpop.f32.mrf.mxu0
        %v407 = vadd.f32 %v343, %v406
        %408 = vmatmul.bf16.gmra.mxu0 %v384
        %v409 = vpop.f32.mrf.mxu0
        %v410 = vadd.f32 %v346, %v409
        %v411 = vpop.f32.mrf.mxu0
        %v412 = vadd.f32 %v348, %v411
        %413 = vmatmul.bf16.gmra.mxu0 %v387
        %v414 = vpop.f32.mrf.mxu0
        %v415 = vadd.f32 %v351, %v414
        %v416 = vpop.f32.mrf.mxu0
        %v417 = vadd.f32 %v353, %v416
        %418 = vmatmul.bf16.gmra.mxu0 %v390
        %v419 = vpop.f32.mrf.mxu0
        %v420 = vadd.f32 %v356, %v419
        %v421 = vpop.f32.mrf.mxu0
        %v422 = vadd.f32 %v358, %v421
        %423 = vdwg.mxu0
        %vm424 = vsmask.f32 3328
        %vm425 = vsmask.f32 7440
        %vm426 = vmor %vm424, %vm425
        %v428 = vshrl.u32 %v237, 16
        %v430 = vrot.slane %v428, 4
        %v431 = vshll.u32 %v237, 16
        %v433 = vrot.slane %v431, 5
        %v434 = vor.u32 %v430, %v433
        %v435 = vrot.slane %v434, 4
        %v437 = vshll.u32 %v238, 16
        %v439 = vrot.slane %v437, 5
        %v440 = vsel %vm426, %v435, %v439
        %v442 = vshrl.u32 %v239, 16
        %v444 = vrot.slane %v442, 4
        %v445 = vshll.u32 %v239, 16
        %v447 = vrot.slane %v445, 5
        %v448 = vor.u32 %v444, %v447
        %v449 = vrot.slane %v448, 4
        %v451 = vshll.u32 %v240, 16
        %v453 = vrot.slane %v451, 5
        %v454 = vsel %vm426, %v449, %v453
        %v456 = vshrl.u32 %v241, 16
        %v458 = vrot.slane %v456, 4
        %v459 = vshll.u32 %v241, 16
        %v461 = vrot.slane %v459, 5
        %v462 = vor.u32 %v458, %v461
        %v463 = vrot.slane %v462, 4
        %v465 = vshll.u32 %v242, 16
        %v467 = vrot.slane %v465, 5
        %v468 = vsel %vm426, %v463, %v467
        %v470 = vshrl.u32 %v243, 16
        %v472 = vrot.slane %v470, 4
        %v473 = vshll.u32 %v243, 16
        %v475 = vrot.slane %v473, 5
        %v476 = vor.u32 %v472, %v475
        %v477 = vrot.slane %v476, 4
        %v479 = vshll.u32 %v244, 16
        %v481 = vrot.slane %v479, 5
        %v482 = vsel %vm426, %v477, %v481
        %v484 = vshrl.u32 %v245, 16
        %v486 = vrot.slane %v484, 4
        %v487 = vshll.u32 %v245, 16
        %v489 = vrot.slane %v487, 5
        %v490 = vor.u32 %v486, %v489
        %v491 = vrot.slane %v490, 4
        %v493 = vshll.u32 %v246, 16
        %v495 = vrot.slane %v493, 5
        %v496 = vsel %vm426, %v491, %v495
        %v498 = vshrl.u32 %v247, 16
        %v500 = vrot.slane %v498, 4
        %v501 = vshll.u32 %v247, 16
        %v503 = vrot.slane %v501, 5
        %v504 = vor.u32 %v500, %v503
        %v505 = vrot.slane %v504, 4
        %v507 = vshll.u32 %v248, 16
        %v509 = vrot.slane %v507, 5
        %v510 = vsel %vm426, %v505, %v509
        %v512 = vshrl.u32 %v249, 16
        %v514 = vrot.slane %v512, 4
        %v515 = vshll.u32 %v249, 16
        %v517 = vrot.slane %v515, 5
        %v518 = vor.u32 %v514, %v517
        %v519 = vrot.slane %v518, 4
        %v521 = vshll.u32 %v250, 16
        %v523 = vrot.slane %v521, 5
        %v524 = vsel %vm426, %v519, %v523
        %v526 = vshrl.u32 %v251, 16
        %v528 = vrot.slane %v526, 4
        %v529 = vshll.u32 %v251, 16
        %v531 = vrot.slane %v529, 5
        %v532 = vor.u32 %v528, %v531
        %v533 = vrot.slane %v532, 4
        %v535 = vshll.u32 %v252, 16
        %v537 = vrot.slane %v535, 5
        %v538 = vsel %vm426, %v533, %v537
        %s539 = scalar_lea.vmem [#allocation2], 4
        %v540 = vld [vmem:[%s539] sm:$0x3]
        %v541 = vunpack.c.l.b16 %v440
        %v542 = vunpack.c.l.b16 %v454
        %v543 = vunpack.c.l.b16 %v468
        %v544 = vunpack.c.l.b16 %v482
        %v545 = vunpack.c.l.b16 %v496
        %v546 = vunpack.c.l.b16 %v510
        %v547 = vunpack.c.l.b16 %v524
        %v548 = vunpack.c.l.b16 %v538
        %v549 = vpack.c.b16 %v542, %v541
        %v550 = vpack.c.b16 %v544, %v543
        %v551 = vpack.c.b16 %v546, %v545
        %v552 = vpack.c.b16 %v548, %v547
        %v554 = vsel %vm311, %v549, 0
        %v557 = vsel %vm311, %v550, 0
        %v560 = vsel %vm311, %v551, 0
        %v563 = vsel %vm311, %v552, 0
        %v566 = vand.u32 %v540, %v327
        %568 = vmatpush.bf16.msra.mxu0 0
        %569 = vmatpush.bf16.msra.mxu0 0
        %570 = vmatpush.bf16.msra.mxu0 0
        %571 = vmatpush.bf16.msra.mxu0 0
        %572 = vmatpush.bf16.msra.mxu0 0
        %573 = vmatpush.bf16.msra.mxu0 0
        %574 = vmatpush.bf16.msra.mxu0 0
        %575 = vmatpush.bf16.msra.mxu0 %v566
        %576 = vmatmul.bf16.gmra.mxu0 %v554
        %v577 = vpop.f32.mrf.mxu0
        %v578 = vadd.f32 0.0, %v577
        %v579 = vpop.f32.mrf.mxu0
        %v580 = vadd.f32 0.0, %v579
        %581 = vmatmul.bf16.gmra.mxu0 %v557
        %v582 = vpop.f32.mrf.mxu0
        %v583 = vadd.f32 0.0, %v582
        %v584 = vpop.f32.mrf.mxu0
        %v585 = vadd.f32 0.0, %v584
        %586 = vmatmul.bf16.gmra.mxu0 %v560
        %v587 = vpop.f32.mrf.mxu0
        %v588 = vadd.f32 0.0, %v587
        %v589 = vpop.f32.mrf.mxu0
        %v590 = vadd.f32 0.0, %v589
        %591 = vmatmul.bf16.gmra.mxu0 %v563
        %v592 = vpop.f32.mrf.mxu0
        %v593 = vadd.f32 0.0, %v592
        %v594 = vpop.f32.mrf.mxu0
        %v595 = vadd.f32 0.0, %v594
        %596 = vdwg.mxu0
        %v597 = vadd.f32 %v405, %v578
        %v598 = vadd.f32 %v407, %v580
        %v599 = vadd.f32 %v410, %v583
        %v600 = vadd.f32 %v412, %v585
        %v601 = vadd.f32 %v415, %v588
        %v602 = vadd.f32 %v417, %v590
        %v603 = vadd.f32 %v420, %v593
        %v604 = vadd.f32 %v422, %v595
        %s605 = scalar_lea.vmem [#allocation2], 6
        %v606 = vld [vmem:[%s605] sm:$0x3]
        %v615 = vunpack.c.l.b16 %v264
        %v616 = vunpack.c.l.b16 %v266
        %v617 = vunpack.c.l.b16 %v268
        %v618 = vunpack.c.l.b16 %v270
        %v619 = vunpack.c.l.b16 %v272
        %v620 = vunpack.c.l.b16 %v274
        %v621 = vunpack.c.l.b16 %v276
        %v622 = vunpack.c.l.b16 %v278
        %v623 = vpack.c.b16 %v616, %v615
        %v624 = vpack.c.b16 %v618, %v617
        %v625 = vpack.c.b16 %v620, %v619
        %v626 = vpack.c.b16 %v622, %v621
        %v628 = vsel %vm311, %v623, 0
        %v631 = vsel %vm311, %v624, 0
        %v634 = vsel %vm311, %v625, 0
        %v637 = vsel %vm311, %v626, 0
        %v640 = vand.u32 %v606, %v327
        %642 = vmatpush.bf16.msra.mxu0 0
        %643 = vmatpush.bf16.msra.mxu0 0
        %644 = vmatpush.bf16.msra.mxu0 0
        %645 = vmatpush.bf16.msra.mxu0 0
        %646 = vmatpush.bf16.msra.mxu0 0
        %647 = vmatpush.bf16.msra.mxu0 0
        %648 = vmatpush.bf16.msra.mxu0 0
        %649 = vmatpush.bf16.msra.mxu0 %v640
        %650 = vmatmul.bf16.gmra.mxu0 %v628
        %v651 = vpop.f32.mrf.mxu0
        %v652 = vadd.f32 0.0, %v651
        %v653 = vpop.f32.mrf.mxu0
        %v654 = vadd.f32 0.0, %v653
        %655 = vmatmul.bf16.gmra.mxu0 %v631
        %v656 = vpop.f32.mrf.mxu0
        %v657 = vadd.f32 0.0, %v656
        %v658 = vpop.f32.mrf.mxu0
        %v659 = vadd.f32 0.0, %v658
        %660 = vmatmul.bf16.gmra.mxu0 %v634
        %v661 = vpop.f32.mrf.mxu0
        %v662 = vadd.f32 0.0, %v661
        %v663 = vpop.f32.mrf.mxu0
        %v664 = vadd.f32 0.0, %v663
        %665 = vmatmul.bf16.gmra.mxu0 %v637
        %v666 = vpop.f32.mrf.mxu0
        %v667 = vadd.f32 0.0, %v666
        %v668 = vpop.f32.mrf.mxu0
        %v669 = vadd.f32 0.0, %v668
        %670 = vdwg.mxu0
        %v671 = vadd.f32 %v597, %v652
        %v672 = vadd.f32 %v598, %v654
        %v673 = vadd.f32 %v599, %v657
        %v674 = vadd.f32 %v600, %v659
        %v675 = vadd.f32 %v601, %v662
        %v676 = vadd.f32 %v602, %v664
        %v677 = vadd.f32 %v603, %v667
        %v678 = vadd.f32 %v604, %v669
        %s679 = scalar_lea.vmem [#allocation2], 8
        %v680 = vld [vmem:[%s679] sm:$0x3]
        %v689 = vunpack.c.l.b16 %v280
        %v690 = vunpack.c.l.b16 %v281
        %v691 = vunpack.c.l.b16 %v282
        %v692 = vunpack.c.l.b16 %v283
        %v693 = vunpack.c.l.b16 %v284
        %v694 = vunpack.c.l.b16 %v285
        %v695 = vunpack.c.l.b16 %v286
        %v696 = vunpack.c.l.b16 %v287
        %v697 = vpack.c.b16 %v690, %v689
        %v698 = vpack.c.b16 %v692, %v691
        %v699 = vpack.c.b16 %v694, %v693
        %v700 = vpack.c.b16 %v696, %v695
        %v702 = vsel %vm311, %v697, 0
        %v705 = vsel %vm311, %v698, 0
        %v708 = vsel %vm311, %v699, 0
        %v711 = vsel %vm311, %v700, 0
        %v714 = vand.u32 %v680, %v327
        %716 = vmatpush.bf16.msra.mxu0 0
        %717 = vmatpush.bf16.msra.mxu0 0
        %718 = vmatpush.bf16.msra.mxu0 0
        %719 = vmatpush.bf16.msra.mxu0 0
        %720 = vmatpush.bf16.msra.mxu0 0
        %721 = vmatpush.bf16.msra.mxu0 0
        %722 = vmatpush.bf16.msra.mxu0 0
        %723 = vmatpush.bf16.msra.mxu0 %v714
        %724 = vmatmul.bf16.gmra.mxu0 %v702
        %v725 = vpop.f32.mrf.mxu0
        %v726 = vadd.f32 0.0, %v725
        %v727 = vpop.f32.mrf.mxu0
        %v728 = vadd.f32 0.0, %v727
        %729 = vmatmul.bf16.gmra.mxu0 %v705
        %v730 = vpop.f32.mrf.mxu0
        %v731 = vadd.f32 0.0, %v730
        %v732 = vpop.f32.mrf.mxu0
        %v733 = vadd.f32 0.0, %v732
        %734 = vmatmul.bf16.gmra.mxu0 %v708
        %v735 = vpop.f32.mrf.mxu0
        %v736 = vadd.f32 0.0, %v735
        %v737 = vpop.f32.mrf.mxu0
        %v738 = vadd.f32 0.0, %v737
        %739 = vmatmul.bf16.gmra.mxu0 %v711
        %v740 = vpop.f32.mrf.mxu0
        %v741 = vadd.f32 0.0, %v740
        %v742 = vpop.f32.mrf.mxu0
        %v743 = vadd.f32 0.0, %v742
        %744 = vdwg.mxu0
        %v745 = vadd.f32 %v671, %v726
        %v746 = vadd.f32 %v672, %v728
        %v747 = vadd.f32 %v673, %v731
        %v748 = vadd.f32 %v674, %v733
        %v749 = vadd.f32 %v675, %v736
        %v750 = vadd.f32 %v676, %v738
        %v751 = vadd.f32 %v677, %v741
        %v752 = vadd.f32 %v678, %v743
        %v754 = vshrl.u32 %v264, 16
        %v756 = vrot.slane %v754, 4
        %v757 = vshll.u32 %v264, 16
        %v759 = vrot.slane %v757, 5
        %v760 = vor.u32 %v756, %v759
        %v761 = vrot.slane %v760, 4
        %v763 = vshll.u32 %v265, 16
        %v765 = vrot.slane %v763, 5
        %v766 = vsel %vm426, %v761, %v765
        %v768 = vshrl.u32 %v266, 16
        %v770 = vrot.slane %v768, 4
        %v771 = vshll.u32 %v266, 16
        %v773 = vrot.slane %v771, 5
        %v774 = vor.u32 %v770, %v773
        %v775 = vrot.slane %v774, 4
        %v777 = vshll.u32 %v267, 16
        %v779 = vrot.slane %v777, 5
        %v780 = vsel %vm426, %v775, %v779
        %v782 = vshrl.u32 %v268, 16
        %v784 = vrot.slane %v782, 4
        %v785 = vshll.u32 %v268, 16
        %v787 = vrot.slane %v785, 5
        %v788 = vor.u32 %v784, %v787
        %v789 = vrot.slane %v788, 4
        %v791 = vshll.u32 %v269, 16
        %v793 = vrot.slane %v791, 5
        %v794 = vsel %vm426, %v789, %v793
        %v796 = vshrl.u32 %v270, 16
        %v798 = vrot.slane %v796, 4
        %v799 = vshll.u32 %v270, 16
        %v801 = vrot.slane %v799, 5
        %v802 = vor.u32 %v798, %v801
        %v803 = vrot.slane %v802, 4
        %v805 = vshll.u32 %v271, 16
        %v807 = vrot.slane %v805, 5
        %v808 = vsel %vm426, %v803, %v807
        %v810 = vshrl.u32 %v272, 16
        %v812 = vrot.slane %v810, 4
        %v813 = vshll.u32 %v272, 16
        %v815 = vrot.slane %v813, 5
        %v816 = vor.u32 %v812, %v815
        %v817 = vrot.slane %v816, 4
        %v819 = vshll.u32 %v273, 16
        %v821 = vrot.slane %v819, 5
        %v822 = vsel %vm426, %v817, %v821
        %v824 = vshrl.u32 %v274, 16
        %v826 = vrot.slane %v824, 4
        %v827 = vshll.u32 %v274, 16
        %v829 = vrot.slane %v827, 5
        %v830 = vor.u32 %v826, %v829
        %v831 = vrot.slane %v830, 4
        %v833 = vshll.u32 %v275, 16
        %v835 = vrot.slane %v833, 5
        %v836 = vsel %vm426, %v831, %v835
        %v838 = vshrl.u32 %v276, 16
        %v840 = vrot.slane %v838, 4
        %v841 = vshll.u32 %v276, 16
        %v843 = vrot.slane %v841, 5
        %v844 = vor.u32 %v840, %v843
        %v845 = vrot.slane %v844, 4
        %v847 = vshll.u32 %v277, 16
        %v849 = vrot.slane %v847, 5
        %v850 = vsel %vm426, %v845, %v849
        %v852 = vshrl.u32 %v278, 16
        %v854 = vrot.slane %v852, 4
        %v855 = vshll.u32 %v278, 16
        %v857 = vrot.slane %v855, 5
        %v858 = vor.u32 %v854, %v857
        %v859 = vrot.slane %v858, 4
        %v861 = vshll.u32 %v279, 16
        %v863 = vrot.slane %v861, 5
        %v864 = vsel %vm426, %v859, %v863
        %s865 = scalar_lea.vmem [#allocation2], 10
        %v866 = vld [vmem:[%s865] sm:$0x3]
        %v867 = vunpack.c.l.b16 %v766
        %v868 = vunpack.c.l.b16 %v780
        %v869 = vunpack.c.l.b16 %v794
        %v870 = vunpack.c.l.b16 %v808
        %v871 = vunpack.c.l.b16 %v822
        %v872 = vunpack.c.l.b16 %v836
        %v873 = vunpack.c.l.b16 %v850
        %v874 = vunpack.c.l.b16 %v864
        %v875 = vpack.c.b16 %v868, %v867
        %v876 = vpack.c.b16 %v870, %v869
        %v877 = vpack.c.b16 %v872, %v871
        %v878 = vpack.c.b16 %v874, %v873
        %v880 = vsel %vm311, %v875, 0
        %v883 = vsel %vm311, %v876, 0
        %v886 = vsel %vm311, %v877, 0
        %v889 = vsel %vm311, %v878, 0
        %v892 = vand.u32 %v866, %v327
        %894 = vmatpush.bf16.msra.mxu0 0
        %895 = vmatpush.bf16.msra.mxu0 0
        %896 = vmatpush.bf16.msra.mxu0 0
        %897 = vmatpush.bf16.msra.mxu0 0
        %898 = vmatpush.bf16.msra.mxu0 0
        %899 = vmatpush.bf16.msra.mxu0 0
        %900 = vmatpush.bf16.msra.mxu0 0
        %901 = vmatpush.bf16.msra.mxu0 %v892
        %902 = vmatmul.bf16.gmra.mxu0 %v880
        %v903 = vpop.f32.mrf.mxu0
        %v904 = vadd.f32 0.0, %v903
        %v905 = vpop.f32.mrf.mxu0
        %v906 = vadd.f32 0.0, %v905
        %907 = vmatmul.bf16.gmra.mxu0 %v883
        %v908 = vpop.f32.mrf.mxu0
        %v909 = vadd.f32 0.0, %v908
        %v910 = vpop.f32.mrf.mxu0
        %v911 = vadd.f32 0.0, %v910
        %912 = vmatmul.bf16.gmra.mxu0 %v886
        %v913 = vpop.f32.mrf.mxu0
        %v914 = vadd.f32 0.0, %v913
        %v915 = vpop.f32.mrf.mxu0
        %v916 = vadd.f32 0.0, %v915
        %917 = vmatmul.bf16.gmra.mxu0 %v889
        %v918 = vpop.f32.mrf.mxu0
        %v919 = vadd.f32 0.0, %v918
        %v920 = vpop.f32.mrf.mxu0
        %v921 = vadd.f32 0.0, %v920
        %922 = vdwg.mxu0
        %v923 = vadd.f32 %v745, %v904
        %v924 = vadd.f32 %v746, %v906
        %v925 = vadd.f32 %v747, %v909
        %v926 = vadd.f32 %v748, %v911
        %v927 = vadd.f32 %v749, %v914
        %v928 = vadd.f32 %v750, %v916
        %v929 = vadd.f32 %v751, %v919
        %v930 = vadd.f32 %v752, %v921
        %s931 = scalar_lea.vmem [#allocation2], 12
        %v932 = vld [vmem:[%s931] sm:$0x3]
        %v934 = vunpack.c.l.b16 %v253
        %v935 = vpack.c.b16 %v370, %v369
        %v936 = vpack.c.b16 %v372, %v371
        %v937 = vpack.c.b16 %v374, %v373
        %v938 = vpack.c.b16 %v934, %v375
        %v940 = vsel %vm311, %v935, 0
        %v943 = vsel %vm311, %v936, 0
        %v946 = vsel %vm311, %v937, 0
        %v949 = vsel %vm311, %v938, 0
        %v952 = vand.u32 %v932, %v327
        %954 = vmatpush.bf16.msra.mxu0 0
        %955 = vmatpush.bf16.msra.mxu0 0
        %956 = vmatpush.bf16.msra.mxu0 0
        %957 = vmatpush.bf16.msra.mxu0 0
        %958 = vmatpush.bf16.msra.mxu0 0
        %959 = vmatpush.bf16.msra.mxu0 0
        %960 = vmatpush.bf16.msra.mxu0 0
        %961 = vmatpush.bf16.msra.mxu0 %v952
        %962 = vmatmul.bf16.gmra.mxu0 %v940
        %v963 = vpop.f32.mrf.mxu0
        %v964 = vadd.f32 0.0, %v963
        %v965 = vpop.f32.mrf.mxu0
        %v966 = vadd.f32 0.0, %v965
        %967 = vmatmul.bf16.gmra.mxu0 %v943
        %v968 = vpop.f32.mrf.mxu0
        %v969 = vadd.f32 0.0, %v968
        %v970 = vpop.f32.mrf.mxu0
        %v971 = vadd.f32 0.0, %v970
        %972 = vmatmul.bf16.gmra.mxu0 %v946
        %v973 = vpop.f32.mrf.mxu0
        %v974 = vadd.f32 0.0, %v973
        %v975 = vpop.f32.mrf.mxu0
        %v976 = vadd.f32 0.0, %v975
        %977 = vmatmul.bf16.gmra.mxu0 %v949
        %v978 = vpop.f32.mrf.mxu0
        %v979 = vadd.f32 0.0, %v978
        %v980 = vpop.f32.mrf.mxu0
        %v981 = vadd.f32 0.0, %v980
        %982 = vdwg.mxu0
        %v983 = vadd.f32 %v923, %v964
        %v984 = vadd.f32 %v924, %v966
        %v985 = vadd.f32 %v925, %v969
        %v986 = vadd.f32 %v926, %v971
        %v987 = vadd.f32 %v927, %v974
        %v988 = vadd.f32 %v928, %v976
        %v989 = vadd.f32 %v929, %v979
        %v990 = vadd.f32 %v930, %v981
        %s991 = scalar_lea.vmem [#allocation2], 14
        %v992 = vld [vmem:[%s991] sm:$0x3]
        %v994 = vunpack.c.l.b16 %v263
        %v995 = vpack.c.b16 %v301, %v300
        %v996 = vpack.c.b16 %v303, %v302
        %v997 = vpack.c.b16 %v305, %v304
        %v998 = vpack.c.b16 %v994, %v306
        %v1000 = vsel %vm311, %v995, 0
        %v1003 = vsel %vm311, %v996, 0
        %v1006 = vsel %vm311, %v997, 0
        %v1009 = vsel %vm311, %v998, 0
        %v1012 = vand.u32 %v992, %v327
        %1014 = vmatpush.bf16.msra.mxu0 0
        %1015 = vmatpush.bf16.msra.mxu0 0
        %1016 = vmatpush.bf16.msra.mxu0 0
        %1017 = vmatpush.bf16.msra.mxu0 0
        %1018 = vmatpush.bf16.msra.mxu0 0
        %1019 = vmatpush.bf16.msra.mxu0 0
        %1020 = vmatpush.bf16.msra.mxu0 0
        %1021 = vmatpush.bf16.msra.mxu0 %v1012
        %1022 = vmatmul.bf16.gmra.mxu0 %v1000
        %v1023 = vpop.f32.mrf.mxu0
        %v1024 = vadd.f32 0.0, %v1023
        %v1025 = vpop.f32.mrf.mxu0
        %v1026 = vadd.f32 0.0, %v1025
        %1027 = vmatmul.bf16.gmra.mxu0 %v1003
        %v1028 = vpop.f32.mrf.mxu0
        %v1029 = vadd.f32 0.0, %v1028
        %v1030 = vpop.f32.mrf.mxu0
        %v1031 = vadd.f32 0.0, %v1030
        %1032 = vmatmul.bf16.gmra.mxu0 %v1006
        %v1033 = vpop.f32.mrf.mxu0
        %v1034 = vadd.f32 0.0, %v1033
        %v1035 = vpop.f32.mrf.mxu0
        %v1036 = vadd.f32 0.0, %v1035
        %1037 = vmatmul.bf16.gmra.mxu0 %v1009
        %v1038 = vpop.f32.mrf.mxu0
        %v1039 = vadd.f32 0.0, %v1038
        %v1040 = vpop.f32.mrf.mxu0
        %v1041 = vadd.f32 0.0, %v1040
        %1042 = vdwg.mxu0
        %v1043 = vadd.f32 %v983, %v1024
        %v1044 = vadd.f32 %v984, %v1026
        %v1045 = vadd.f32 %v985, %v1029
        %v1046 = vadd.f32 %v986, %v1031
        %v1047 = vadd.f32 %v987, %v1034
        %v1048 = vadd.f32 %v988, %v1036
        %v1049 = vadd.f32 %v989, %v1039
        %v1050 = vadd.f32 %v990, %v1041
        %v1052 = vshrl.u32 %v253, 16
        %v1054 = vrot.slane %v1052, 4
        %v1055 = vshll.u32 %v253, 16
        %v1057 = vrot.slane %v1055, 5
        %v1058 = vor.u32 %v1054, %v1057
        %v1059 = vrot.slane %v1058, 4
        %v1061 = vshll.u32 %v254, 16
        %v1063 = vrot.slane %v1061, 5
        %v1064 = vsel %vm426, %v1059, %v1063
        %s1065 = scalar_lea.vmem [#allocation2], 16
        %v1066 = vld [vmem:[%s1065] sm:$0x3]
        %v1067 = vunpack.c.l.b16 %v1064
        %v1068 = vpack.c.b16 %v543, %v542
        %v1069 = vpack.c.b16 %v545, %v544
        %v1070 = vpack.c.b16 %v547, %v546
        %v1071 = vpack.c.b16 %v1067, %v548
        %v1073 = vsel %vm311, %v1068, 0
        %v1076 = vsel %vm311, %v1069, 0
        %v1079 = vsel %vm311, %v1070, 0
        %v1082 = vsel %vm311, %v1071, 0
        %v1085 = vand.u32 %v1066, %v327
        %1087 = vmatpush.bf16.msra.mxu0 0
        %1088 = vmatpush.bf16.msra.mxu0 0
        %1089 = vmatpush.bf16.msra.mxu0 0
        %1090 = vmatpush.bf16.msra.mxu0 0
        %1091 = vmatpush.bf16.msra.mxu0 0
        %1092 = vmatpush.bf16.msra.mxu0 0
        %1093 = vmatpush.bf16.msra.mxu0 0
        %1094 = vmatpush.bf16.msra.mxu0 %v1085
        %1095 = vmatmul.bf16.gmra.mxu0 %v1073
        %v1096 = vpop.f32.mrf.mxu0
        %v1097 = vadd.f32 0.0, %v1096
        %v1098 = vpop.f32.mrf.mxu0
        %v1099 = vadd.f32 0.0, %v1098
        %1100 = vmatmul.bf16.gmra.mxu0 %v1076
        %v1101 = vpop.f32.mrf.mxu0
        %v1102 = vadd.f32 0.0, %v1101
        %v1103 = vpop.f32.mrf.mxu0
        %v1104 = vadd.f32 0.0, %v1103
        %1105 = vmatmul.bf16.gmra.mxu0 %v1079
        %v1106 = vpop.f32.mrf.mxu0
        %v1107 = vadd.f32 0.0, %v1106
        %v1108 = vpop.f32.mrf.mxu0
        %v1109 = vadd.f32 0.0, %v1108
        %1110 = vmatmul.bf16.gmra.mxu0 %v1082
        %v1111 = vpop.f32.mrf.mxu0
        %v1112 = vadd.f32 0.0, %v1111
        %v1113 = vpop.f32.mrf.mxu0
        %v1114 = vadd.f32 0.0, %v1113
        %1115 = vdwg.mxu0
        %v1116 = vadd.f32 %v1043, %v1097
        %v1117 = vadd.f32 %v1044, %v1099
        %v1118 = vadd.f32 %v1045, %v1102
        %v1119 = vadd.f32 %v1046, %v1104
        %v1120 = vadd.f32 %v1047, %v1107
        %v1121 = vadd.f32 %v1048, %v1109
        %v1122 = vadd.f32 %v1049, %v1112
        %v1123 = vadd.f32 %v1050, %v1114
        %v1124 = vld [vmem:[#allocation4] sm:$0x1]
        %v1126 = vperm.slane %v1124, 0
        %v1128 = vadd.f32 %v1116, %v1126
        %v1129 = vadd.f32 %v1117, %v1126
        %v1130 = vadd.f32 %v1118, %v1126
        %v1131 = vadd.f32 %v1119, %v1126
        %v1132 = vadd.f32 %v1120, %v1126
        %v1133 = vadd.f32 %v1121, %v1126
        %v1134 = vadd.f32 %v1122, %v1126
        %v1135 = vadd.f32 %v1123, %v1126
        %vm1136 = vcmp.ge.f32.partialorder %v1128, 0.0
        %vm1137 = vcmp.ge.f32.partialorder %v1129, 0.0
        %vm1138 = vcmp.ge.f32.partialorder %v1130, 0.0
        %vm1139 = vcmp.ge.f32.partialorder %v1131, 0.0
        %vm1140 = vcmp.ge.f32.partialorder %v1132, 0.0
        %vm1141 = vcmp.ge.f32.partialorder %v1133, 0.0
        %vm1142 = vcmp.ge.f32.partialorder %v1134, 0.0
        %vm1143 = vcmp.ge.f32.partialorder %v1135, 0.0
        %v1144 = vmul.f32 %v1128, 0.2
        %v1145 = vmul.f32 %v1129, 0.2
        %v1146 = vmul.f32 %v1130, 0.2
        %v1147 = vmul.f32 %v1131, 0.2
        %v1148 = vmul.f32 %v1132, 0.2
        %v1149 = vmul.f32 %v1133, 0.2
        %v1150 = vmul.f32 %v1134, 0.2
        %v1151 = vmul.f32 %v1135, 0.2
        %v1152 = vsel %vm1136, %v1128, %v1144
        %v1153 = vsel %vm1137, %v1129, %v1145
        %v1154 = vsel %vm1138, %v1130, %v1146
        %v1155 = vsel %vm1139, %v1131, %v1147
        %v1156 = vsel %vm1140, %v1132, %v1148
        %v1157 = vsel %vm1141, %v1133, %v1149
        %v1158 = vsel %vm1142, %v1134, %v1150
        %v1159 = vsel %vm1143, %v1135, %v1151
        %v1160 = vpack.c.bf16 %v1152, %v1152
        %v1161 = vpack.c.bf16 %v1153, %v1153
        %v1162 = vpack.c.bf16 %v1154, %v1154
        %v1163 = vpack.c.bf16 %v1155, %v1155
        %v1164 = vpack.c.bf16 %v1156, %v1156
        %v1165 = vpack.c.bf16 %v1157, %v1157
        %v1166 = vpack.c.bf16 %v1158, %v1158
        %v1167 = vpack.c.bf16 %v1159, %v1159
        %vm1168 = vcmask 519168
        %1169 = vst.msk [vmem:[%s235] sm:$0xf] %vm1168, %v1160
        %1170 = vst.msk [vmem:[%s235 + $0x4] sm:$0xf] %vm1168, %v1161
        %1171 = vst.msk [vmem:[%s235 + $0x8] sm:$0xf] %vm1168, %v1162
        %1172 = vst.msk [vmem:[%s235 + $0xc] sm:$0xf] %vm1168, %v1163
        %1173 = vst.msk [vmem:[%s235 + $0x10] sm:$0xf] %vm1168, %v1164
        %1174 = vst.msk [vmem:[%s235 + $0x14] sm:$0xf] %vm1168, %v1165
        %1175 = vst.msk [vmem:[%s235 + $0x18] sm:$0xf] %vm1168, %v1166
        %1176 = vst.msk [vmem:[%s235 + $0x1c] sm:$0xf] %vm1168, %v1167
        %p1177 = scmp.lt.s32.totalorder %s20, 1
        %s1178 = scalar_select %p1177, %s20, 1
        %p1179 = scmp.lt.s32.totalorder %s21, 0
        %s1180 = scalar_select %p1179, %s21, 0
        %s1181 = smul.addr %s1178, 8
        %s1182 = sadd.s32 %s1180, %s1181
        %s1183 = smul.addr %s1182, 4
        %s1184 = scalar_lea.vmem %s3, %s1183
        // Predicated region
        $region41: #{discriminator_forward.5} parent=31 // pred_check
          %p1185 = pneg %p126
        $region42: #{discriminator_forward.5} parent=31 // pred_check_branch
          %1187 = sbr.rel (%p1185) target = $region44
        $region43: #{discriminator_forward.5} parent=31 // pred_region
          _
        $region44: #{discriminator_forward.5} parent=31 // pred_fallthru
          _
      $region32: #{discriminator_forward.5} parent=5 // pred_fallthru
        _
      %p1188 = scmp.le.s32.totalorder 2, %s11
      // Predicated region
      $region45: #{discriminator_forward.5} parent=5 // pred_check
        %p1189 = pneg %p1188
      $region46: #{discriminator_forward.5} parent=5 // pred_check_branch
        %1191 = sbr.rel (%p1189) target = $region48
      $region47: #{discriminator_forward.5} parent=5 // pred_region
        %s1192 = ssub.s32 %s11, 2
        // Predicated region
        $region49: #{discriminator_forward.5} parent=47 // pred_check
          %p1193 = pneg %p132
        $region50: #{discriminator_forward.5} parent=47 // pred_check_branch
          %1195 = sbr.rel (%p1193) target = $region52
        $region51: #{discriminator_forward.5} parent=47 // pred_region
          %p1196 = scmp.lt.s32.totalorder %s22, 1
          %s1197 = scalar_select %p1196, %s22, 1
          %p1198 = scmp.lt.s32.totalorder %s23, 0
          %s1199 = scalar_select %p1198, %s23, 0
          %s1200 = smul.addr %s1197, 8
          %s1201 = sadd.s32 %s1199, %s1200
          %s1202 = smul.addr %s1201, 4
          %s1203 = scalar_lea.vmem %s3, %s1202
        $region52: #{discriminator_forward.5} parent=47 // pred_fallthru
          _
      $region48: #{discriminator_forward.5} parent=5 // pred_fallthru
        _
    $region6: #{discriminator_forward.5} parent=1 // loop_footer
      %s15 = sadd.s32 1, %s11
    $region7: #{discriminator_forward.5} parent=1 // loop_footer_branch
      %10 = sbr.rel target = $region3
    $region8: #{discriminator_forward.5} parent=1 // loop_exit
      _
    %1204 = vsyncpa [#allocation3], 1
    %s1205 = scalar_lea.sflag [#allocation3], 1
    %1206 = vsyncpa %s1205, 1
    %1207 = vsyncpa [#allocation5], 1

// kernel: discriminator_forward.6
$region0: #{discriminator_forward.6}
  #allocation0 [shape = 'u32[]', space=smem, size = 0x4, offset = 0x4, fixed_abs, tag = 'smem constant byte address 0x4 - core index']
  #allocation1 [shape = 'u32[72,128]{1,0:T(1,128)}', space=vmem, size = 0x9000, scoped, tag = 'internal scratch']
  %s0 = inlined_call_operand.vmem [shape: bf16[2,20,5,64], index: 0, kind: input, shape index: {}]
  %s1 = inlined_call_operand.hbm [shape: bf16[9,64,128], index: 1, kind: input, shape index: {}]
  %s2 = inlined_call_operand.hbm [shape: f32[1,128], index: 2, kind: input, shape index: {}]
  %s3 = inlined_call_operand.vmem [shape: bf16[2,16,128], index: 3, kind: output, shape index: {}]
  %s4 = sld [smem:[#allocation0]]
  $region53: #{discriminator_forward.6} parent=0
    _
  %s6 = ssub.s32 1, %s4
  %s7 = scalar_select 0, %s6, %s4
  $region1: #{discriminator_forward.6} parent=0
    #allocation2 [shape = 'u8[147456]{0}', space=vmem, size = 0x24000, scoped, tag = 'input window, operand 1, single buffered']
    #allocation3 [shape = 's32[2]{0}', space=sflag, size = 0x8, scoped, tag = 'scoped memory for discriminator_forward.6']
    #allocation4 [shape = 'u8[512]{0}', space=vmem, size = 0x400, scoped, tag = 'input window, operand 2, single buffered']
    #allocation5 [shape = 's32[1]{0}', space=sflag, size = 0x4, scoped, tag = 'scoped memory for discriminator_forward.6']
    %8 = vsyncpa [#allocation3], 0
    %9 = vsyncpa [#allocation5], 0
    loop: start=0, step=1, limit=4
    $region2: #{discriminator_forward.6} parent=1 // loop_pre_header
      _
    $region3: #{discriminator_forward.6} parent=1 // loop_header
      %s11 = sphi 0, %s15
      %p12 = scmp.ge.s32.totalorder %s11, 4
      %s18 = sphi 0, %s30
      %s19 = sphi 0, %s26
      %s20 = sphi 0, %s18
      %s21 = sphi 0, %s19
      %s22 = sphi 0, %s20
      %s23 = sphi 0, %s21
      %s33 = sphi 0, %s35
      %s36 = sphi 0, %s33
      %s37 = sphi 0, %s36
      %s53 = sphi 0, %s37
      %s59 = sphi 0, %s61
      %s62 = sphi 0, %s59
      %s63 = sphi 0, %s62
      %s79 = sphi 0, %s63
      %s85 = sphi 0, %s87
      %s88 = sphi 0, %s85
      %s89 = sphi 0, %s88
      %s105 = sphi 0, %s89
      %s113 = sphi 0, %s115
      %s116 = sphi 0, %s113
      %s117 = sphi 0, %s116
      %s133 = sphi 0, %s117
    $region4: #{discriminator_forward.6} parent=1 // loop_header_branch
      %14 = sbr.rel (%p12) target = $region8
    $region5: #{discriminator_forward.6} parent=1 // loop_body
      %s16 = ssub.s32 %s11, 1
      %s17 = ssub.s32 %s11, 2
      %s24 = sadd.s32 1, %s19
      %p25 = scmp.ge.s32.totalorder %s24, 1
      %s26 = scalar_select %p25, 0, %s24
      %s27 = sadd.s32 1, %s18
      %s28 = scalar_select %p25, %s27, %s18
      %p29 = scmp.ge.s32.totalorder %s28, 2
      %s30 = scalar_select %p29, 0, %s28
      %s31 = ssub.s32 %s18, %s30
      %p32 = scmp.eq.s32.totalorder %s31, 0
      %s34 = sadd.s32 %s33, 1
      %s35 = scalar_select %p32, %s33, %s34
      %p38 = pneg %p32
      %p39 = scmp.eq.s32.totalorder %s11, 1
      %p40 = por %p38, %p39
      %p41 = scmp.ne.s32.totalorder %s33, %s36
      %p42 = scmp.eq.s32.totalorder %s11, 0
      %p43 = por %p41, %p42
      %p44 = scmp.ne.s32.totalorder %s33, %s36
      %p45 = scmp.eq.s32.totalorder %s16, 1
      %p46 = por %p44, %p45
      %p47 = scmp.ne.s32.totalorder %s36, %s37
      %p48 = scmp.eq.s32.totalorder %s16, 0
      %p49 = por %p47, %p48
      %p50 = scmp.ne.s32.totalorder %s36, %s37
      %p51 = scmp.eq.s32.totalorder %s17, 1
      %p52 = por %p50, %p51
      %p54 = scmp.ne.s32.totalorder %s37, %s53
      %p55 = scmp.eq.s32.totalorder %s17, 0
      %p56 = por %p54, %p55
      %s57 = ssub.s32 %s19, %s26
      %p58 = scmp.eq.s32.totalorder %s57, 0
      %s60 = sadd.s32 %s59, 1
      %s61 = scalar_select %p58, %s59, %s60
      %p64 = pneg %p58
      %p65 = scmp.eq.s32.totalorder %s11, 1
      %p66 = por %p64, %p65
      %p67 = scmp.ne.s32.totalorder %s59, %s62
      %p68 = scmp.eq.s32.totalorder %s11, 0
      %p69 = por %p67, %p68
      %p70 = scmp.ne.s32.totalorder %s59, %s62
      %p71 = scmp.eq.s32.totalorder %s16, 1
      %p72 = por %p70, %p71
      %p73 = scmp.ne.s32.totalorder %s62, %s63
      %p74 = scmp.eq.s32.totalorder %s16, 0
      %p75 = por %p73, %p74
      %p76 = scmp.ne.s32.totalorder %s62, %s63
      %p77 = scmp.eq.s32.totalorder %s17, 1
      %p78 = por %p76, %p77
      %p80 = scmp.ne.s32.totalorder %s63, %s79
      %p81 = scmp.eq.s32.totalorder %s17, 0
      %p82 = por %p80, %p81
      %s83 = ssub.s32 %s19, %s26
      %p84 = scmp.eq.s32.totalorder %s83, 0
      %s86 = sadd.s32 %s85, 1
      %s87 = scalar_select %p84, %s85, %s86
      %p90 = pneg %p84
      %p91 = scmp.eq.s32.totalorder %s11, 1
      %p92 = por %p90, %p91
      %p93 = scmp.ne.s32.totalorder %s85, %s88
      %p94 = scmp.eq.s32.totalorder %s11, 0
      %p95 = por %p93, %p94
      %p96 = scmp.ne.s32.totalorder %s85, %s88
      %p97 = scmp.eq.s32.totalorder %s16, 1
      %p98 = por %p96, %p97
      %p99 = scmp.ne.s32.totalorder %s88, %s89
      %p100 = scmp.eq.s32.totalorder %s16, 0
      %p101 = por %p99, %p100
      %p102 = scmp.ne.s32.totalorder %s88, %s89
      %p103 = scmp.eq.s32.totalorder %s17, 1
      %p104 = por %p102, %p103
      %p106 = scmp.ne.s32.totalorder %s89, %s105
      %p107 = scmp.eq.s32.totalorder %s17, 0
      %p108 = por %p106, %p107
      %s109 = ssub.s32 %s18, %s30
      %s110 = ssub.s32 %s19, %s26
      %s111 = sor.u32 %s109, %s110
      %p112 = scmp.eq.s32.totalorder %s111, 0
      %s114 = sadd.s32 %s113, 1
      %s115 = scalar_select %p112, %s113, %s114
      %p118 = pneg %p112
      %p119 = scmp.eq.s32.totalorder %s11, 1
      %p120 = por %p118, %p119
      %p121 = scmp.ne.s32.totalorder %s113, %s116
      %p122 = scmp.eq.s32.totalorder %s11, 0
      %p123 = por %p121, %p122
      %p124 = scmp.ne.s32.totalorder %s113, %s116
      %p125 = scmp.eq.s32.totalorder %s16, 1
      %p126 = por %p124, %p125
      %p127 = scmp.ne.s32.totalorder %s116, %s117
      %p128 = scmp.eq.s32.totalorder %s16, 0
      %p129 = por %p127, %p128
      %p130 = scmp.ne.s32.totalorder %s116, %s117
      %p131 = scmp.eq.s32.totalorder %s17, 1
      %p132 = por %p130, %p131
      %p134 = scmp.ne.s32.totalorder %s117, %s133
      %p135 = scmp.eq.s32.totalorder %s17, 0
      %p136 = por %p134, %p135
      %p137 = scmp.le.s32.totalorder 1, %s11
      %p138 = scmp.lt.s32.totalorder %s11, 3
      %p139 = pnand %p137, %p138
      %p140 = pneg %p139
      // Predicated region
      $region9: #{discriminator_forward.6} parent=5 // pred_check
        _
      $region10: #{discriminator_forward.6} parent=5 // pred_check_branch
        %142 = sbr.rel (%p139) target = $region12
      $region11: #{discriminator_forward.6} parent=5 // pred_region
        %s143 = ssub.s32 %s11, 1
        // Predicated region
        $region13: #{discriminator_forward.6} parent=11 // pred_check
          %p144 = pneg %p75
        $region14: #{discriminator_forward.6} parent=11 // pred_check_branch
          %146 = sbr.rel (%p144) target = $region16
        $region15: #{discriminator_forward.6} parent=11 // pred_region
          %148 = vsyncadd [#allocation3], 0
          %s149 = smul.addr %s21, 4
          %s150 = scalar_lea.hbm %s1, %s149
          %s151 = sshll.u32 %s150, 4
          %s152 = int_to_ptr.hbm [resolvable:$true] %s151
          %s153 = sshll.u32 [#allocation2], 4
          %s154 = int_to_ptr.vmem [resolvable:$true] %s153
          %159 = dma.hbm_to_vmem [thread:$0]  %s152, 4608, %s154, [#allocation3], 64, 64, 4
        $region16: #{discriminator_forward.6} parent=11 // pred_fallthru
          _
        // Predicated region
        $region17: #{discriminator_forward.6} parent=11 // pred_check
          %p160 = pneg %p101
        $region18: #{discriminator_forward.6} parent=11 // pred_check_branch
          %162 = sbr.rel (%p160) target = $region20
        $region19: #{discriminator_forward.6} parent=11 // pred_region
          %164 = vsyncadd [#allocation5], 0
          %s165 = scalar_lea.hbm %s2, %s21
          %s167 = sshll.u32 %s165, 4
          %s168 = int_to_ptr.hbm [resolvable:$true] %s167
          %s169 = sshll.u32 [#allocation4], 4
          %s170 = int_to_ptr.vmem [resolvable:$true] %s169
          %172 = dma.hbm_to_vmem [thread:$0]  %s168, 16, %s170, [#allocation5]
        $region20: #{discriminator_forward.6} parent=11 // pred_fallthru
          _
      $region12: #{discriminator_forward.6} parent=5 // pred_fallthru
        _
      %p173 = scmp.lt.s32.totalorder %s11, 2
      // Predicated region
      $region21: #{discriminator_forward.6} parent=5 // pred_check
        %p174 = pneg %p173
      $region22: #{discriminator_forward.6} parent=5 // pred_check_branch
        %176 = sbr.rel (%p174) target = $region24
      $region23: #{discriminator_forward.6} parent=5 // pred_region
        // Predicated region
        $region25: #{discriminator_forward.6} parent=23 // pred_check
          %p177 = pneg %p43
        $region26: #{discriminator_forward.6} parent=23 // pred_check_branch
          %179 = sbr.rel (%p177) target = $region28
        $region27: #{discriminator_forward.6} parent=23 // pred_region
          %p180 = scmp.lt.s32.totalorder %s18, 1
          %s181 = scalar_select %p180, %s18, 1
          %s182 = smul.addr %s181, 20
          %s183 = smul.addr %s182, 4
          %s184 = scalar_lea.vmem %s0, %s183
        $region28: #{discriminator_forward.6} parent=23 // pred_fallthru
          _
      $region24: #{discriminator_forward.6} parent=5 // pred_fallthru
        _
      %p185 = scmp.le.s32.totalorder 1, %s11
      %p186 = scmp.lt.s32.totalorder %s11, 3
      %p187 = pnand %p185, %p186
      %p188 = pneg %p187
      // Predicated region
      $region29: #{discriminator_forward.6} parent=5 // pred_check
        _
      $region30: #{discriminator_forward.6} parent=5 // pred_check_branch
        %190 = sbr.rel (%p187) target = $region32
      $region31: #{discriminator_forward.6} parent=5 // pred_region
        %s191 = ssub.s32 %s11, 1
        // Predicated region
        $region33: #{discriminator_forward.6} parent=31 // pred_check
          %p192 = pneg %p75
        $region34: #{discriminator_forward.6} parent=31 // pred_check_branch
          %194 = sbr.rel (%p192) target = $region36
        $region35: #{discriminator_forward.6} parent=31 // pred_region
          %196 = dma.done [#allocation3], 4608
        $region36: #{discriminator_forward.6} parent=31 // pred_fallthru
          _
        // Predicated region
        $region37: #{discriminator_forward.6} parent=31 // pred_check
          %p197 = pneg %p101
        $region38: #{discriminator_forward.6} parent=31 // pred_check_branch
          %199 = sbr.rel (%p197) target = $region40
        $region39: #{discriminator_forward.6} parent=31 // pred_region
          %201 = dma.done [#allocation5], 16
        $region40: #{discriminator_forward.6} parent=31 // pred_fallthru
          _
        %p202 = scmp.lt.s32.totalorder %s20, 1
        %s203 = scalar_select %p202, %s20, 1
        %s204 = smul.addr %s203, 20
        %s205 = smul.addr %s204, 4
        %s206 = scalar_lea.vmem %s0, %s205
        %p207 = pneg %p49
        %p208 = pneg %p46
        %p209 = pneg %p75
        %p210 = pneg %p72
        %p211 = pneg %p101
        %p212 = pneg %p98
        %p213 = pneg %p129
        %p214 = pneg %p126
        %p215 = scmp.lt.s32.totalorder %s20, 1
        %s216 = scalar_select %p215, %s20, 1
        %p217 = scmp.lt.s32.totalorder %s21, 0
        %s218 = scalar_select %p217, %s21, 0
        %s219 = smul.addr %s216, 2
        %s220 = sadd.s32 %s218, %s219
        %s221 = smul.addr %s220, 4
        %s222 = scalar_lea.vmem %s3, %s221
        %p223 = scmp.lt.s32.totalorder %s20, 1
        %s224 = scalar_select %p223, %s20, 1
        %s225 = smul.addr %s224, 20
        %s226 = smul.addr %s225, 4
        %s227 = scalar_lea.vmem %s0, %s226
        %p228 = scmp.lt.s32.totalorder %s20, 1
        %s229 = scalar_select %p228, %s20, 1
        %p230 = scmp.lt.s32.totalorder %s21, 0
        %s231 = scalar_select %p230, %s21, 0
        %s232 = smul.addr %s229, 2
        %s233 = sadd.s32 %s231, %s232
        %s234 = smul.addr %s233, 4
        %s235 = scalar_lea.vmem %s3, %s234
        %v237 = vld [vmem:[%s227] sm:$0x7]
        %v238 = vld [vmem:[%s227 + $0x4] sm:$0x7]
        %v239 = vld [vmem:[%s227 + $0x8] sm:$0x7]
        %v240 = vld [vmem:[%s227 + $0xc] sm:$0x7]
        %v241 = vld [vmem:[%s227 + $0x10] sm:$0x7]
        %v242 = vld [vmem:[%s227 + $0x14] sm:$0x7]
        %v243 = vld [vmem:[%s227 + $0x18] sm:$0x7]
        %v244 = vld [vmem:[%s227 + $0x1c] sm:$0x7]
        %v245 = vld [vmem:[%s227 + $0x20] sm:$0x7]
        %v246 = vld [vmem:[%s227 + $0x24] sm:$0x7]
        %v247 = vld [vmem:[%s227 + $0x28] sm:$0x7]
        %v248 = vld [vmem:[%s227 + $0x2c] sm:$0x7]
        %v249 = vld [vmem:[%s227 + $0x30] sm:$0x7]
        %v250 = vld [vmem:[%s227 + $0x34] sm:$0x7]
        %v251 = vld [vmem:[%s227 + $0x3c] sm:$0x7]
        %v252 = vld [vmem:[%s227 + $0x40] sm:$0x7]
        %v253 = vld [vmem:[%s227 + $0x44] sm:$0x7]
        %v254 = vld [vmem:[%s227 + $0x48] sm:$0x7]
        %v255 = vld [vmem:[#allocation2] sm:$0xf]
        %v256 = vld [vmem:[#allocation2 + $0x4] sm:$0xf]
        %v257 = vld [vmem:[#allocation2 + $0x8] sm:$0xf]
        %v258 = vld [vmem:[#allocation2 + $0xc] sm:$0xf]
        %v259 = vld [vmem:[#allocation2 + $0x10] sm:$0xf]
        %v260 = vld [vmem:[#allocation2 + $0x14] sm:$0xf]
        %v261 = vld [vmem:[#allocation2 + $0x18] sm:$0xf]
        %v262 = vld [vmem:[#allocation2 + $0x1c] sm:$0xf]
        %s263 = scalar_lea.vmem [#allocation2], 32
        %v264 = vld [vmem:[%s263] sm:$0xf]
        %v265 = vld [vmem:[%s263 + $0x4] sm:$0xf]
        %v266 = vld [vmem:[%s263 + $0x8] sm:$0xf]
        %v267 = vld [vmem:[%s263 + $0xc] sm:$0xf]
        %v268 = vld [vmem:[%s263 + $0x10] sm:$0xf]
        %v269 = vld [vmem:[%s263 + $0x14] sm:$0xf]
        %v270 = vld [vmem:[%s263 + $0x18] sm:$0xf]
        %v271 = vld [vmem:[%s263 + $0x1c] sm:$0xf]
        %273 = vst [vmem:[#allocation1] ss:$4 sm:$0xff] %v242
        %s275 = scalar_lea.vmem [#allocation1], 1
        %276 = vst [vmem:[%s275] ss:$4 sm:$0xff] %v243
        %s278 = scalar_lea.vmem [#allocation1], 2
        %279 = vst [vmem:[%s278] ss:$4 sm:$0xff] %v244
        %s281 = scalar_lea.vmem [#allocation1], 3
        %282 = vst [vmem:[%s281] ss:$4 sm:$0xff] %v245
        %v283 = vld.sshfl [vmem:[#allocation1] sm:$0xff pattern:$0x73625140]
        %v292 = vunpack.c.l.b16 %v264
        %v293 = vunpack.c.l.b16 %v265
        %v294 = vunpack.c.l.b16 %v266
        %v295 = vunpack.c.l.b16 %v267
        %v296 = vunpack.c.l.b16 %v268
        %v297 = vunpack.c.l.b16 %v269
        %v298 = vunpack.c.l.b16 %v270
        %v299 = vunpack.c.l.b16 %v271
        %v300 = vpack.c.b16 %v293, %v292
        %v301 = vpack.c.b16 %v295, %v294
        %v302 = vpack.c.b16 %v297, %v296
        %v303 = vpack.c.b16 %v299, %v298
        %vm308 = vcmask 523264
        %v309 = vsel %vm308, %v283, 0
        %311 = vmatpush.bf16.msra.mxu0 0
        %312 = vmatpush.bf16.msra.mxu0 0
        %313 = vmatpush.bf16.msra.mxu0 0
        %314 = vmatpush.bf16.msra.mxu0 0
        %315 = vmatpush.bf16.msra.mxu0 %v303
        %316 = vmatpush.bf16.msra.mxu0 %v302
        %317 = vmatpush.bf16.msra.mxu0 %v301
        %318 = vmatpush.bf16.msra.mxu0 %v300
        %319 = vmatmul.bf16.gmra.mxu0 %v309
        %v320 = vpop.f32.mrf.mxu0
        %v321 = vadd.f32 0.0, %v320
        %v322 = vpop.f32.mrf.mxu0
        %v323 = vadd.f32 0.0, %v322
        %324 = vdwg.mxu0
        %326 = vst [vmem:[#allocation1] ss:$4 sm:$0xff] %v237
        %s328 = scalar_lea.vmem [#allocation1], 1
        %329 = vst [vmem:[%s328] ss:$4 sm:$0xff] %v238
        %s331 = scalar_lea.vmem [#allocation1], 2
        %332 = vst [vmem:[%s331] ss:$4 sm:$0xff] %v239
        %s334 = scalar_lea.vmem [#allocation1], 3
        %335 = vst [vmem:[%s334] ss:$4 sm:$0xff] %v240
        %v336 = vld.sshfl [vmem:[#allocation1] sm:$0xff pattern:$0x73625140]
        %v345 = vunpack.c.l.b16 %v255
        %v346 = vunpack.c.l.b16 %v256
        %v347 = vunpack.c.l.b16 %v257
        %v348 = vunpack.c.l.b16 %v258
        %v349 = vunpack.c.l.b16 %v259
        %v350 = vunpack.c.l.b16 %v260
        %v351 = vunpack.c.l.b16 %v261
        %v352 = vunpack.c.l.b16 %v262
        %v353 = vpack.c.b16 %v346, %v345
        %v354 = vpack.c.b16 %v348, %v347
        %v355 = vpack.c.b16 %v350, %v349
        %v356 = vpack.c.b16 %v352, %v351
        %v361 = vsel %vm308, %v336, 0
        %363 = vmatpush.bf16.msra.mxu0 0
        %364 = vmatpush.bf16.msra.mxu0 0
        %365 = vmatpush.bf16.msra.mxu0 0
        %366 = vmatpush.bf16.msra.mxu0 0
        %367 = vmatpush.bf16.msra.mxu0 %v356
        %368 = vmatpush.bf16.msra.mxu0 %v355
        %369 = vmatpush.bf16.msra.mxu0 %v354
        %370 = vmatpush.bf16.msra.mxu0 %v353
        %371 = vmatmul.bf16.gmra.mxu0 %v361
        %v372 = vpop.f32.mrf.mxu0
        %v373 = vadd.f32 %v321, %v372
        %v374 = vpop.f32.mrf.mxu0
        %v375 = vadd.f32 %v323, %v374
        %376 = vdwg.mxu0
        %v381 = vrot.slane %v237, 2
        %v382 = vrot.slane %v238, 2
        %v383 = vrot.slane %v239, 2
        %v384 = vrot.slane %v240, 2
        %vm385 = vcmask 1041408
        %v387 = vsel %vm385, %v237, %v381
        %vm388 = vcmask 1043458
        %v389 = vsel %vm388, %v237, %v381
        %v391 = vrot.slane %v389, 2
        %v393 = vsel %vm385, %v238, %v382
        %v394 = vsel %vm388, %v238, %v382
        %v396 = vrot.slane %v394, 2
        %v398 = vsel %vm385, %v239, %v383
        %v399 = vsel %vm388, %v239, %v383
        %v401 = vrot.slane %v399, 2
        %v403 = vsel %vm385, %v240, %v384
        %v404 = vsel %vm388, %v240, %v384
        %v406 = vrot.slane %v404, 2
        %vm407 = vsmask.f32 1280
        %vm408 = vsmask.f32 3336
        %vm409 = vmor %vm407, %vm408
        %vm410 = vsmask.f32 5392
        %vm411 = vmor %vm409, %vm410
        %vm412 = vsmask.f32 7448
        %vm413 = vmor %vm411, %vm412
        %v414 = vshrl.u32 %v387, 16
        %v416 = vrot.slane %v414, 6
        %v417 = vshll.u32 %v387, 16
        %v419 = vrot.slane %v417, 7
        %v420 = vor.u32 %v416, %v419
        %v421 = vrot.slane %v420, 2
        %v423 = vshll.u32 %v391, 16
        %v425 = vrot.slane %v423, 7
        %v426 = vsel %vm413, %v421, %v425
        %v427 = vshrl.u32 %v393, 16
        %v429 = vrot.slane %v427, 6
        %v430 = vshll.u32 %v393, 16
        %v432 = vrot.slane %v430, 7
        %v433 = vor.u32 %v429, %v432
        %v434 = vrot.slane %v433, 2
        %v436 = vshll.u32 %v396, 16
        %v438 = vrot.slane %v436, 7
        %v439 = vsel %vm413, %v434, %v438
        %v440 = vshrl.u32 %v398, 16
        %v442 = vrot.slane %v440, 6
        %v443 = vshll.u32 %v398, 16
        %v445 = vrot.slane %v443, 7
        %v446 = vor.u32 %v442, %v445
        %v447 = vrot.slane %v446, 2
        %v449 = vshll.u32 %v401, 16
        %v451 = vrot.slane %v449, 7
        %v452 = vsel %vm413, %v447, %v451
        %v453 = vshrl.u32 %v403, 16
        %v455 = vrot.slane %v453, 6
        %v456 = vshll.u32 %v403, 16
        %v458 = vrot.slane %v456, 7
        %v459 = vor.u32 %v455, %v458
        %v460 = vrot.slane %v459, 2
        %v462 = vshll.u32 %v406, 16
        %v464 = vrot.slane %v462, 7
        %v465 = vsel %vm413, %v460, %v464
        %s466 = scalar_lea.vmem [#allocation2], 64
        %v467 = vld [vmem:[%s466] sm:$0xf]
        %v468 = vld [vmem:[%s466 + $0x4] sm:$0xf]
        %v469 = vld [vmem:[%s466 + $0x8] sm:$0xf]
        %v470 = vld [vmem:[%s466 + $0xc] sm:$0xf]
        %v471 = vld [vmem:[%s466 + $0x10] sm:$0xf]
        %v472 = vld [vmem:[%s466 + $0x14] sm:$0xf]
        %v473 = vld [vmem:[%s466 + $0x18] sm:$0xf]
        %v474 = vld [vmem:[%s466 + $0x1c] sm:$0xf]
        %476 = vst [vmem:[#allocation1] ss:$4 sm:$0xff] %v426
        %s478 = scalar_lea.vmem [#allocation1], 1
        %479 = vst [vmem:[%s478] ss:$4 sm:$0xff] %v439
        %s481 = scalar_lea.vmem [#allocation1], 2
        %482 = vst [vmem:[%s481] ss:$4 sm:$0xff] %v452
        %s484 = scalar_lea.vmem [#allocation1], 3
        %485 = vst [vmem:[%s484] ss:$4 sm:$0xff] %v465
        %v486 = vld.sshfl [vmem:[#allocation1] sm:$0xff pattern:$0x73625140]
        %v495 = vunpack.c.l.b16 %v467
        %v496 = vunpack.c.l.b16 %v468
        %v497 = vunpack.c.l.b16 %v469
        %v498 = vunpack.c.l.b16 %v470
        %v499 = vunpack.c.l.b16 %v471
        %v500 = vunpack.c.l.b16 %v472
        %v501 = vunpack.c.l.b16 %v473
        %v502 = vunpack.c.l.b16 %v474
        %v503 = vpack.c.b16 %v496, %v495
        %v504 = vpack.c.b16 %v498, %v497
        %v505 = vpack.c.b16 %v500, %v499
        %v506 = vpack.c.b16 %v502, %v501
        %v511 = vsel %vm308, %v486, 0
        %513 = vmatpush.bf16.msra.mxu0 0
        %514 = vmatpush.bf16.msra.mxu0 0
        %515 = vmatpush.bf16.msra.mxu0 0
        %516 = vmatpush.bf16.msra.mxu0 0
        %517 = vmatpush.bf16.msra.mxu0 %v506
        %518 = vmatpush.bf16.msra.mxu0 %v505
        %519 = vmatpush.bf16.msra.mxu0 %v504
        %520 = vmatpush.bf16.msra.mxu0 %v503
        %521 = vmatmul.bf16.gmra.mxu0 %v511
        %v522 = vpop.f32.mrf.mxu0
        %v523 = vadd.f32 0.0, %v522
        %v524 = vpop.f32.mrf.mxu0
        %v525 = vadd.f32 0.0, %v524
        %526 = vdwg.mxu0
        %v527 = vadd.f32 %v373, %v523
        %v528 = vadd.f32 %v375, %v525
        %s529 = scalar_lea.vmem [#allocation2], 96
        %v530 = vld [vmem:[%s529] sm:$0xf]
        %v531 = vld [vmem:[%s529 + $0x4] sm:$0xf]
        %v532 = vld [vmem:[%s529 + $0x8] sm:$0xf]
        %v533 = vld [vmem:[%s529 + $0xc] sm:$0xf]
        %v534 = vld [vmem:[%s529 + $0x10] sm:$0xf]
        %v535 = vld [vmem:[%s529 + $0x14] sm:$0xf]
        %v536 = vld [vmem:[%s529 + $0x18] sm:$0xf]
        %v537 = vld [vmem:[%s529 + $0x1c] sm:$0xf]
        %539 = vst [vmem:[#allocation1] ss:$4 sm:$0xff] %v247
        %s541 = scalar_lea.vmem [#allocation1], 1
        %542 = vst [vmem:[%s541] ss:$4 sm:$0xff] %v248
        %s544 = scalar_lea.vmem [#allocation1], 2
        %545 = vst [vmem:[%s544] ss:$4 sm:$0xff] %v249
        %s547 = scalar_lea.vmem [#allocation1], 3
        %548 = vst [vmem:[%s547] ss:$4 sm:$0xff] %v250
        %v549 = vld.sshfl [vmem:[#allocation1] sm:$0xff pattern:$0x73625140]
        %v558 = vunpack.c.l.b16 %v530
        %v559 = vunpack.c.l.b16 %v531
        %v560 = vunpack.c.l.b16 %v532
        %v561 = vunpack.c.l.b16 %v533
        %v562 = vunpack.c.l.b16 %v534
        %v563 = vunpack.c.l.b16 %v535
        %v564 = vunpack.c.l.b16 %v536
        %v565 = vunpack.c.l.b16 %v537
        %v566 = vpack.c.b16 %v559, %v558
        %v567 = vpack.c.b16 %v561, %v560
        %v568 = vpack.c.b16 %v563, %v562
        %v569 = vpack.c.b16 %v565, %v564
        %v574 = vsel %vm308, %v549, 0
        %576 = vmatpush.bf16.msra.mxu0 0
        %577 = vmatpush.bf16.msra.mxu0 0
        %578 = vmatpush.bf16.msra.mxu0 0
        %579 = vmatpush.bf16.msra.mxu0 0
        %580 = vmatpush.bf16.msra.mxu0 %v569
        %581 = vmatpush.bf16.msra.mxu0 %v568
        %582 = vmatpush.bf16.msra.mxu0 %v567
        %583 = vmatpush.bf16.msra.mxu0 %v566
        %584 = vmatmul.bf16.gmra.mxu0 %v574
        %v585 = vpop.f32.mrf.mxu0
        %v586 = vadd.f32 0.0, %v585
        %v587 = vpop.f32.mrf.mxu0
        %v588 = vadd.f32 0.0, %v587
        %589 = vdwg.mxu0
        %v590 = vadd.f32 %v527, %v586
        %v591 = vadd.f32 %v528, %v588
        %s592 = scalar_lea.vmem [#allocation2], 128
        %v593 = vld [vmem:[%s592] sm:$0xf]
        %v594 = vld [vmem:[%s592 + $0x4] sm:$0xf]
        %v595 = vld [vmem:[%s592 + $0x8] sm:$0xf]
        %v596 = vld [vmem:[%s592 + $0xc] sm:$0xf]
        %v597 = vld [vmem:[%s592 + $0x10] sm:$0xf]
        %v598 = vld [vmem:[%s592 + $0x14] sm:$0xf]
        %v599 = vld [vmem:[%s592 + $0x18] sm:$0xf]
        %v600 = vld [vmem:[%s592 + $0x1c] sm:$0xf]
        %602 = vst [vmem:[#allocation1] ss:$4 sm:$0xff] %v251
        %s604 = scalar_lea.vmem [#allocation1], 1
        %605 = vst [vmem:[%s604] ss:$4 sm:$0xff] %v252
        %s607 = scalar_lea.vmem [#allocation1], 2
        %608 = vst [vmem:[%s607] ss:$4 sm:$0xff] %v253
        %s610 = scalar_lea.vmem [#allocation1], 3
        %611 = vst [vmem:[%s610] ss:$4 sm:$0xff] %v254
        %v612 = vld.sshfl [vmem:[#allocation1] sm:$0xff pattern:$0x73625140]
        %v621 = vunpack.c.l.b16 %v593
        %v622 = vunpack.c.l.b16 %v594
        %v623 = vunpack.c.l.b16 %v595
        %v624 = vunpack.c.l.b16 %v596
        %v625 = vunpack.c.l.b16 %v597
        %v626 = vunpack.c.l.b16 %v598
        %v627 = vunpack.c.l.b16 %v599
        %v628 = vunpack.c.l.b16 %v600
        %v629 = vpack.c.b16 %v622, %v621
        %v630 = vpack.c.b16 %v624, %v623
        %v631 = vpack.c.b16 %v626, %v625
        %v632 = vpack.c.b16 %v628, %v627
        %v637 = vsel %vm308, %v612, 0
        %639 = vmatpush.bf16.msra.mxu0 0
        %640 = vmatpush.bf16.msra.mxu0 0
        %641 = vmatpush.bf16.msra.mxu0 0
        %642 = vmatpush.bf16.msra.mxu0 0
        %643 = vmatpush.bf16.msra.mxu0 %v632
        %644 = vmatpush.bf16.msra.mxu0 %v631
        %645 = vmatpush.bf16.msra.mxu0 %v630
        %646 = vmatpush.bf16.msra.mxu0 %v629
        %647 = vmatmul.bf16.gmra.mxu0 %v637
        %v648 = vpop.f32.mrf.mxu0
        %v649 = vadd.f32 0.0, %v648
        %v650 = vpop.f32.mrf.mxu0
        %v651 = vadd.f32 0.0, %v650
        %652 = vdwg.mxu0
        %v653 = vadd.f32 %v590, %v649
        %v654 = vadd.f32 %v591, %v651
        %v659 = vrot.slane %v247, 2
        %v660 = vrot.slane %v248, 2
        %v661 = vrot.slane %v249, 2
        %v662 = vrot.slane %v250, 2
        %v664 = vsel %vm385, %v247, %v659
        %v665 = vsel %vm388, %v247, %v659
        %v667 = vrot.slane %v665, 2
        %v669 = vsel %vm385, %v248, %v660
        %v670 = vsel %vm388, %v248, %v660
        %v672 = vrot.slane %v670, 2
        %v674 = vsel %vm385, %v249, %v661
        %v675 = vsel %vm388, %v249, %v661
        %v677 = vrot.slane %v675, 2
        %v679 = vsel %vm385, %v250, %v662
        %v680 = vsel %vm388, %v250, %v662
        %v682 = vrot.slane %v680, 2
        %v683 = vshrl.u32 %v664, 16
        %v685 = vrot.slane %v683, 6
        %v686 = vshll.u32 %v664, 16
        %v688 = vrot.slane %v686, 7
        %v689 = vor.u32 %v685, %v688
        %v690 = vrot.slane %v689, 2
        %v692 = vshll.u32 %v667, 16
        %v694 = vrot.slane %v692, 7
        %v695 = vsel %vm413, %v690, %v694
        %v696 = vshrl.u32 %v669, 16
        %v698 = vrot.slane %v696, 6
        %v699 = vshll.u32 %v669, 16
        %v701 = vrot.slane %v699, 7
        %v702 = vor.u32 %v698, %v701
        %v703 = vrot.slane %v702, 2
        %v705 = vshll.u32 %v672, 16
        %v707 = vrot.slane %v705, 7
        %v708 = vsel %vm413, %v703, %v707
        %v709 = vshrl.u32 %v674, 16
        %v711 = vrot.slane %v709, 6
        %v712 = vshll.u32 %v674, 16
        %v714 = vrot.slane %v712, 7
        %v715 = vor.u32 %v711, %v714
        %v716 = vrot.slane %v715, 2
        %v718 = vshll.u32 %v677, 16
        %v720 = vrot.slane %v718, 7
        %v721 = vsel %vm413, %v716, %v720
        %v722 = vshrl.u32 %v679, 16
        %v724 = vrot.slane %v722, 6
        %v725 = vshll.u32 %v679, 16
        %v727 = vrot.slane %v725, 7
        %v728 = vor.u32 %v724, %v727
        %v729 = vrot.slane %v728, 2
        %v731 = vshll.u32 %v682, 16
        %v733 = vrot.slane %v731, 7
        %v734 = vsel %vm413, %v729, %v733
        %s735 = scalar_lea.vmem [#allocation2], 160
        %v736 = vld [vmem:[%s735] sm:$0xf]
        %v737 = vld [vmem:[%s735 + $0x4] sm:$0xf]
        %v738 = vld [vmem:[%s735 + $0x8] sm:$0xf]
        %v739 = vld [vmem:[%s735 + $0xc] sm:$0xf]
        %v740 = vld [vmem:[%s735 + $0x10] sm:$0xf]
        %v741 = vld [vmem:[%s735 + $0x14] sm:$0xf]
        %v742 = vld [vmem:[%s735 + $0x18] sm:$0xf]
        %v743 = vld [vmem:[%s735 + $0x1c] sm:$0xf]
        %745 = vst [vmem:[#allocation1] ss:$4 sm:$0xff] %v695
        %s747 = scalar_lea.vmem [#allocation1], 1
        %748 = vst [vmem:[%s747] ss:$4 sm:$0xff] %v708
        %s750 = scalar_lea.vmem [#allocation1], 2
        %751 = vst [vmem:[%s750] ss:$4 sm:$0xff] %v721
        %s753 = scalar_lea.vmem [#allocation1], 3
        %754 = vst [vmem:[%s753] ss:$4 sm:$0xff] %v734
        %v755 = vld.sshfl [vmem:[#allocation1] sm:$0xff pattern:$0x73625140]
        %v764 = vunpack.c.l.b16 %v736
        %v765 = vunpack.c.l.b16 %v737
        %v766 = vunpack.c.l.b16 %v738
        %v767 = vunpack.c.l.b16 %v739
        %v768 = vunpack.c.l.b16 %v740
        %v769 = vunpack.c.l.b16 %v741
        %v770 = vunpack.c.l.b16 %v742
        %v771 = vunpack.c.l.b16 %v743
        %v772 = vpack.c.b16 %v765, %v764
        %v773 = vpack.c.b16 %v767, %v766
        %v774 = vpack.c.b16 %v769, %v768
        %v775 = vpack.c.b16 %v771, %v770
        %v780 = vsel %vm308, %v755, 0
        %782 = vmatpush.bf16.msra.mxu0 0
        %783 = vmatpush.bf16.msra.mxu0 0
        %784 = vmatpush.bf16.msra.mxu0 0
        %785 = vmatpush.bf16.msra.mxu0 0
        %786 = vmatpush.bf16.msra.mxu0 %v775
        %787 = vmatpush.bf16.msra.mxu0 %v774
        %788 = vmatpush.bf16.msra.mxu0 %v773
        %789 = vmatpush.bf16.msra.mxu0 %v772
        %790 = vmatmul.bf16.gmra.mxu0 %v780
        %v791 = vpop.f32.mrf.mxu0
        %v792 = vadd.f32 0.0, %v791
        %v793 = vpop.f32.mrf.mxu0
        %v794 = vadd.f32 0.0, %v793
        %795 = vdwg.mxu0
        %v796 = vadd.f32 %v653, %v792
        %v797 = vadd.f32 %v654, %v794
        %s798 = scalar_lea.vmem [#allocation2], 192
        %v799 = vld [vmem:[%s798] sm:$0xf]
        %v800 = vld [vmem:[%s798 + $0x4] sm:$0xf]
        %v801 = vld [vmem:[%s798 + $0x8] sm:$0xf]
        %v802 = vld [vmem:[%s798 + $0xc] sm:$0xf]
        %v803 = vld [vmem:[%s798 + $0x10] sm:$0xf]
        %v804 = vld [vmem:[%s798 + $0x14] sm:$0xf]
        %v805 = vld [vmem:[%s798 + $0x18] sm:$0xf]
        %v806 = vld [vmem:[%s798 + $0x1c] sm:$0xf]
        %807 = vst [vmem:[#allocation1] ss:$4 sm:$0xff] %v238
        %s808 = scalar_lea.vmem [#allocation1], 1
        %809 = vst [vmem:[%s808] ss:$4 sm:$0xff] %v239
        %s810 = scalar_lea.vmem [#allocation1], 2
        %811 = vst [vmem:[%s810] ss:$4 sm:$0xff] %v240
        %s813 = scalar_lea.vmem [#allocation1], 3
        %814 = vst [vmem:[%s813] ss:$4 sm:$0xff] %v241
        %v815 = vld.sshfl [vmem:[#allocation1] sm:$0xff pattern:$0x73625140]
        %v824 = vunpack.c.l.b16 %v799
        %v825 = vunpack.c.l.b16 %v800
        %v826 = vunpack.c.l.b16 %v801
        %v827 = vunpack.c.l.b16 %v802
        %v828 = vunpack.c.l.b16 %v803
        %v829 = vunpack.c.l.b16 %v804
        %v830 = vunpack.c.l.b16 %v805
        %v831 = vunpack.c.l.b16 %v806
        %v832 = vpack.c.b16 %v825, %v824
        %v833 = vpack.c.b16 %v827, %v826
        %v834 = vpack.c.b16 %v829, %v828
        %v835 = vpack.c.b16 %v831, %v830
        %v840 = vsel %vm308, %v815, 0
        %842 = vmatpush.bf16.msra.mxu0 0
        %843 = vmatpush.bf16.msra.mxu0 0
        %844 = vmatpush.bf16.msra.mxu0 0
        %845 = vmatpush.bf16.msra.mxu0 0
        %846 = vmatpush.bf16.msra.mxu0 %v835
        %847 = vmatpush.bf16.msra.mxu0 %v834
        %848 = vmatpush.bf16.msra.mxu0 %v833
        %849 = vmatpush.bf16.msra.mxu0 %v832
        %850 = vmatmul.bf16.gmra.mxu0 %v840
        %v851 = vpop.f32.mrf.mxu0
        %v852 = vadd.f32 0.0, %v851
        %v853 = vpop.f32.mrf.mxu0
        %v854 = vadd.f32 0.0, %v853
        %855 = vdwg.mxu0
        %v856 = vadd.f32 %v796, %v852
        %v857 = vadd.f32 %v797, %v854
        %s858 = scalar_lea.vmem [#allocation2], 224
        %v859 = vld [vmem:[%s858] sm:$0xf]
        %v860 = vld [vmem:[%s858 + $0x4] sm:$0xf]
        %v861 = vld [vmem:[%s858 + $0x8] sm:$0xf]
        %v862 = vld [vmem:[%s858 + $0xc] sm:$0xf]
        %v863 = vld [vmem:[%s858 + $0x10] sm:$0xf]
        %v864 = vld [vmem:[%s858 + $0x14] sm:$0xf]
        %v865 = vld [vmem:[%s858 + $0x18] sm:$0xf]
        %v866 = vld [vmem:[%s858 + $0x1c] sm:$0xf]
        %867 = vst [vmem:[#allocation1] ss:$4 sm:$0xff] %v243
        %s868 = scalar_lea.vmem [#allocation1], 1
        %869 = vst [vmem:[%s868] ss:$4 sm:$0xff] %v244
        %s870 = scalar_lea.vmem [#allocation1], 2
        %871 = vst [vmem:[%s870] ss:$4 sm:$0xff] %v245
        %s873 = scalar_lea.vmem [#allocation1], 3
        %874 = vst [vmem:[%s873] ss:$4 sm:$0xff] %v246
        %v875 = vld.sshfl [vmem:[#allocation1] sm:$0xff pattern:$0x73625140]
        %v884 = vunpack.c.l.b16 %v859
        %v885 = vunpack.c.l.b16 %v860
        %v886 = vunpack.c.l.b16 %v861
        %v887 = vunpack.c.l.b16 %v862
        %v888 = vunpack.c.l.b16 %v863
        %v889 = vunpack.c.l.b16 %v864
        %v890 = vunpack.c.l.b16 %v865
        %v891 = vunpack.c.l.b16 %v866
        %v892 = vpack.c.b16 %v885, %v884
        %v893 = vpack.c.b16 %v887, %v886
        %v894 = vpack.c.b16 %v889, %v888
        %v895 = vpack.c.b16 %v891, %v890
        %v900 = vsel %vm308, %v875, 0
        %902 = vmatpush.bf16.msra.mxu0 0
        %903 = vmatpush.bf16.msra.mxu0 0
        %904 = vmatpush.bf16.msra.mxu0 0
        %905 = vmatpush.bf16.msra.mxu0 0
        %906 = vmatpush.bf16.msra.mxu0 %v895
        %907 = vmatpush.bf16.msra.mxu0 %v894
        %908 = vmatpush.bf16.msra.mxu0 %v893
        %909 = vmatpush.bf16.msra.mxu0 %v892
        %910 = vmatmul.bf16.gmra.mxu0 %v900
        %v911 = vpop.f32.mrf.mxu0
        %v912 = vadd.f32 0.0, %v911
        %v913 = vpop.f32.mrf.mxu0
        %v914 = vadd.f32 0.0, %v913
        %915 = vdwg.mxu0
        %v916 = vadd.f32 %v856, %v912
        %v917 = vadd.f32 %v857, %v914
        %v919 = vrot.slane %v241, 2
        %v921 = vsel %vm385, %v241, %v919
        %v922 = vsel %vm388, %v241, %v919
        %v924 = vrot.slane %v922, 2
        %v925 = vshrl.u32 %v921, 16
        %v927 = vrot.slane %v925, 6
        %v928 = vshll.u32 %v921, 16
        %v930 = vrot.slane %v928, 7
        %v931 = vor.u32 %v927, %v930
        %v932 = vrot.slane %v931, 2
        %v934 = vshll.u32 %v924, 16
        %v936 = vrot.slane %v934, 7
        %v937 = vsel %vm413, %v932, %v936
        %s938 = scalar_lea.vmem [#allocation2], 256
        %v939 = vld [vmem:[%s938] sm:$0xf]
        %v940 = vld [vmem:[%s938 + $0x4] sm:$0xf]
        %v941 = vld [vmem:[%s938 + $0x8] sm:$0xf]
        %v942 = vld [vmem:[%s938 + $0xc] sm:$0xf]
        %v943 = vld [vmem:[%s938 + $0x10] sm:$0xf]
        %v944 = vld [vmem:[%s938 + $0x14] sm:$0xf]
        %v945 = vld [vmem:[%s938 + $0x18] sm:$0xf]
        %v946 = vld [vmem:[%s938 + $0x1c] sm:$0xf]
        %947 = vst [vmem:[#allocation1] ss:$4 sm:$0xff] %v439
        %s948 = scalar_lea.vmem [#allocation1], 1
        %949 = vst [vmem:[%s948] ss:$4 sm:$0xff] %v452
        %s950 = scalar_lea.vmem [#allocation1], 2
        %951 = vst [vmem:[%s950] ss:$4 sm:$0xff] %v465
        %s953 = scalar_lea.vmem [#allocation1], 3
        %954 = vst [vmem:[%s953] ss:$4 sm:$0xff] %v937
        %v955 = vld.sshfl [vmem:[#allocation1] sm:$0xff pattern:$0x73625140]
        %v964 = vunpack.c.l.b16 %v939
        %v965 = vunpack.c.l.b16 %v940
        %v966 = vunpack.c.l.b16 %v941
        %v967 = vunpack.c.l.b16 %v942
        %v968 = vunpack.c.l.b16 %v943
        %v969 = vunpack.c.l.b16 %v944
        %v970 = vunpack.c.l.b16 %v945
        %v971 = vunpack.c.l.b16 %v946
        %v972 = vpack.c.b16 %v965, %v964
        %v973 = vpack.c.b16 %v967, %v966
        %v974 = vpack.c.b16 %v969, %v968
        %v975 = vpack.c.b16 %v971, %v970
        %v980 = vsel %vm308, %v955, 0
        %982 = vmatpush.bf16.msra.mxu0 0
        %983 = vmatpush.bf16.msra.mxu0 0
        %984 = vmatpush.bf16.msra.mxu0 0
        %985 = vmatpush.bf16.msra.mxu0 0
        %986 = vmatpush.bf16.msra.mxu0 %v975
        %987 = vmatpush.bf16.msra.mxu0 %v974
        %988 = vmatpush.bf16.msra.mxu0 %v973
        %989 = vmatpush.bf16.msra.mxu0 %v972
        %990 = vmatmul.bf16.gmra.mxu0 %v980
        %v991 = vpop.f32.mrf.mxu0
        %v992 = vadd.f32 0.0, %v991
        %v993 = vpop.f32.mrf.mxu0
        %v994 = vadd.f32 0.0, %v993
        %995 = vdwg.mxu0
        %v996 = vadd.f32 %v916, %v992
        %v997 = vadd.f32 %v917, %v994
        %v998 = vld [vmem:[#allocation4] sm:$0x1]
        %v1000 = vperm.slane %v998, 0
        %v1002 = vadd.f32 %v996, %v1000
        %v1003 = vadd.f32 %v997, %v1000
        %v1004 = vadd.f32 %v1002, %v1003
        %v1005 = vrot.slane %v1004, 4
        %v1006 = vadd.f32 %v1004, %v1005
        %v1007 = vrot.slane %v1006, 2
        %v1008 = vadd.f32 %v1006, %v1007
        %v1009 = vrot.slane %v1008, 1
        %v1010 = vadd.f32 %v1008, %v1009
        %v1011 = vrcp.pop 16.0
        %v1012 = vmul.f32 16.0, %v1011
        %v1013 = vsub.f32 1.0, %v1012
        %v1014 = vmul.f32 %v1011, %v1013
        %v1015 = vadd.f32 %v1011, %v1014
        %vm1016 = vweird.f32 %v1011
        %v1017 = vsel %vm1016, %v1011, %v1015
        %v1018 = vmul.f32 %v1010, %v1017
        %v1019 = vmul.f32 %v1002, %v1002
        %v1020 = vmul.f32 %v1003, %v1003
        %v1021 = vadd.f32 %v1019, %v1020
        %v1022 = vrot.slane %v1021, 4
        %v1023 = vadd.f32 %v1021, %v1022
        %v1024 = vrot.slane %v1023, 2
        %v1025 = vadd.f32 %v1023, %v1024
        %v1026 = vrot.slane %v1025, 1
        %v1027 = vadd.f32 %v1025, %v1026
        %v1028 = vmul.f32 %v1027, %v1017
        %v1029 = vmul.f32 %v1018, %v1018
        %v1030 = vsub.f32 %v1028, %v1029
        %v1031 = vsub.f32 %v1002, %v1018
        %v1032 = vsub.f32 %v1003, %v1018
        %v1033 = vmax.f32 %v1030, 0.0
        %v1034 = vadd.f32 %v1033, 1e-05
        %v1035 = vrsqrt.pop %v1034
        %v1036 = vmul.f32 %v1035, %v1034
        %v1037 = vmul.f32 %v1036, %v1035
        %v1038 = vmul.f32 0.5, %v1037
        %v1039 = vsub.f32 1.5, %v1038
        %v1040 = vmul.f32 %v1035, %v1039
        %vm1041 = vweird.f32 %v1034
        %vm1042 = vweird.f32 %v1035
        %vm1043 = vmor %vm1041, %vm1042
        %v1044 = vsel %vm1043, %v1035, %v1040
        %v1045 = vmul.f32 %v1031, %v1044
        %v1046 = vmul.f32 %v1032, %v1044
        %vm1047 = vcmp.ge.f32.partialorder %v1045, 0.0
        %vm1048 = vcmp.ge.f32.partialorder %v1046, 0.0
        %v1049 = vmul.f32 %v1045, 0.2
        %v1050 = vmul.f32 %v1046, 0.2
        %v1051 = vsel %vm1047, %v1045, %v1049
        %v1052 = vsel %vm1048, %v1046, %v1050
        %v1053 = vpack.c.bf16 %v1051, %v1051
        %v1054 = vpack.c.bf16 %v1052, %v1052
        %1055 = vst [vmem:[%s235] sm:$0xf] %v1053
        %1056 = vst [vmem:[%s235 + $0x4] sm:$0xf] %v1054
        %p1057 = scmp.lt.s32.totalorder %s20, 1
        %s1058 = scalar_select %p1057, %s20, 1
        %p1059 = scmp.lt.s32.totalorder %s21, 0
        %s1060 = scalar_select %p1059, %s21, 0
        %s1061 = smul.addr %s1058, 2
        %s1062 = sadd.s32 %s1060, %s1061
        %s1063 = smul.addr %s1062, 4
        %s1064 = scalar_lea.vmem %s3, %s1063
        // Predicated region
        $region41: #{discriminator_forward.6} parent=31 // pred_check
          %p1065 = pneg %p126
        $region42: #{discriminator_forward.6} parent=31 // pred_check_branch
          %1067 = sbr.rel (%p1065) target = $region44
        $region43: #{discriminator_forward.6} parent=31 // pred_region
          _
        $region44: #{discriminator_forward.6} parent=31 // pred_fallthru
          _
      $region32: #{discriminator_forward.6} parent=5 // pred_fallthru
        _
      %p1068 = scmp.le.s32.totalorder 2, %s11
      // Predicated region
      $region45: #{discriminator_forward.6} parent=5 // pred_check
        %p1069 = pneg %p1068
      $region46: #{discriminator_forward.6} parent=5 // pred_check_branch
        %1071 = sbr.rel (%p1069) target = $region48
      $region47: #{discriminator_forward.6} parent=5 // pred_region
        %s1072 = ssub.s32 %s11, 2
        // Predicated region
        $region49: #{discriminator_forward.6} parent=47 // pred_check
          %p1073 = pneg %p132
        $region50: #{discriminator_forward.6} parent=47 // pred_check_branch
          %1075 = sbr.rel (%p1073) target = $region52
        $region51: #{discriminator_forward.6} parent=47 // pred_region
          %p1076 = scmp.lt.s32.totalorder %s22, 1
          %s1077 = scalar_select %p1076, %s22, 1
          %p1078 = scmp.lt.s32.totalorder %s23, 0
          %s1079 = scalar_select %p1078, %s23, 0
          %s1080 = smul.addr %s1077, 2
          %s1081 = sadd.s32 %s1079, %s1080
          %s1082 = smul.addr %s1081, 4
          %s1083 = scalar_lea.vmem %s3, %s1082
        $region52: #{discriminator_forward.6} parent=47 // pred_fallthru
          _
      $region48: #{discriminator_forward.6} parent=5 // pred_fallthru
        _
    $region6: #{discriminator_forward.6} parent=1 // loop_footer
      %s15 = sadd.s32 1, %s11
    $region7: #{discriminator_forward.6} parent=1 // loop_footer_branch
      %10 = sbr.rel target = $region3
    $region8: #{discriminator_forward.6} parent=1 // loop_exit
      _
    %1084 = vsyncpa [#allocation3], 1
    %s1085 = scalar_lea.sflag [#allocation3], 1
    %1086 = vsyncpa %s1085, 1
    %1087 = vsyncpa [#allocation5], 1

// kernel: discriminator_forward.7
$region0: #{discriminator_forward.7}
  #allocation0 [shape = 'u32[]', space=smem, size = 0x4, offset = 0x4, fixed_abs, tag = 'smem constant byte address 0x4 - core index']
  #allocation1 [shape = 'u32[72,128]{1,0:T(1,128)}', space=vmem, size = 0x9000, scoped, tag = 'internal scratch']
  %s0 = inlined_call_operand.vmem [shape: bf16[2,12,3,128], index: 0, kind: input, shape index: {}]
  %s1 = inlined_call_operand.hbm [shape: bf16[9,128,256], index: 1, kind: input, shape index: {}]
  %s2 = inlined_call_operand.hbm [shape: f32[1,256], index: 2, kind: input, shape index: {}]
  %s3 = inlined_call_operand.vmem [shape: bf16[2,4,256], index: 3, kind: output, shape index: {}]
  %s4 = sld [smem:[#allocation0]]
  $region53: #{discriminator_forward.7} parent=0
    _
  %s6 = ssub.s32 1, %s4
  %s7 = scalar_select 0, %s6, %s4
  $region1: #{discriminator_forward.7} parent=0
    #allocation2 [shape = 'u8[589824]{0}', space=vmem, size = 0x90000, scoped, tag = 'input window, operand 1, single buffered']
    #allocation3 [shape = 's32[2]{0}', space=sflag, size = 0x8, scoped, tag = 'scoped memory for discriminator_forward.7']
    #allocation4 [shape = 'u8[1024]{0}', space=vmem, size = 0x400, scoped, tag = 'input window, operand 2, single buffered']
    #allocation5 [shape = 's32[1]{0}', space=sflag, size = 0x4, scoped, tag = 'scoped memory for discriminator_forward.7']
    %8 = vsyncpa [#allocation3], 0
    %9 = vsyncpa [#allocation5], 0
    loop: start=0, step=1, limit=4
    $region2: #{discriminator_forward.7} parent=1 // loop_pre_header
      _
    $region3: #{discriminator_forward.7} parent=1 // loop_header
      %s11 = sphi 0, %s15
      %p12 = scmp.ge.s32.totalorder %s11, 4
      %s18 = sphi 0, %s30
      %s19 = sphi 0, %s26
      %s20 = sphi 0, %s18
      %s21 = sphi 0, %s19
      %s22 = sphi 0, %s20
      %s23 = sphi 0, %s21
      %s33 = sphi 0, %s35
      %s36 = sphi 0, %s33
      %s37 = sphi 0, %s36
      %s53 = sphi 0, %s37
      %s59 = sphi 0, %s61
      %s62 = sphi 0, %s59
      %s63 = sphi 0, %s62
      %s79 = sphi 0, %s63
      %s85 = sphi 0, %s87
      %s88 = sphi 0, %s85
      %s89 = sphi 0, %s88
      %s105 = sphi 0, %s89
      %s113 = sphi 0, %s115
      %s116 = sphi 0, %s113
      %s117 = sphi 0, %s116
      %s133 = sphi 0, %s117
    $region4: #{discriminator_forward.7} parent=1 // loop_header_branch
      %14 = sbr.rel (%p12) target = $region8
    $region5: #{discriminator_forward.7} parent=1 // loop_body
      %s16 = ssub.s32 %s11, 1
      %s17 = ssub.s32 %s11, 2
      %s24 = sadd.s32 1, %s19
      %p25 = scmp.ge.s32.totalorder %s24, 1
      %s26 = scalar_select %p25, 0, %s24
      %s27 = sadd.s32 1, %s18
      %s28 = scalar_select %p25, %s27, %s18
      %p29 = scmp.ge.s32.totalorder %s28, 2
      %s30 = scalar_select %p29, 0, %s28
      %s31 = ssub.s32 %s18, %s30
      %p32 = scmp.eq.s32.totalorder %s31, 0
      %s34 = sadd.s32 %s33, 1
      %s35 = scalar_select %p32, %s33, %s34
      %p38 = pneg %p32
      %p39 = scmp.eq.s32.totalorder %s11, 1
      %p40 = por %p38, %p39
      %p41 = scmp.ne.s32.totalorder %s33, %s36
      %p42 = scmp.eq.s32.totalorder %s11, 0
      %p43 = por %p41, %p42
      %p44 = scmp.ne.s32.totalorder %s33, %s36
      %p45 = scmp.eq.s32.totalorder %s16, 1
      %p46 = por %p44, %p45
      %p47 = scmp.ne.s32.totalorder %s36, %s37
      %p48 = scmp.eq.s32.totalorder %s16, 0
      %p49 = por %p47, %p48
      %p50 = scmp.ne.s32.totalorder %s36, %s37
      %p51 = scmp.eq.s32.totalorder %s17, 1
      %p52 = por %p50, %p51
      %p54 = scmp.ne.s32.totalorder %s37, %s53
      %p55 = scmp.eq.s32.totalorder %s17, 0
      %p56 = por %p54, %p55
      %s57 = ssub.s32 %s19, %s26
      %p58 = scmp.eq.s32.totalorder %s57, 0
      %s60 = sadd.s32 %s59, 1
      %s61 = scalar_select %p58, %s59, %s60
      %p64 = pneg %p58
      %p65 = scmp.eq.s32.totalorder %s11, 1
      %p66 = por %p64, %p65
      %p67 = scmp.ne.s32.totalorder %s59, %s62
      %p68 = scmp.eq.s32.totalorder %s11, 0
      %p69 = por %p67, %p68
      %p70 = scmp.ne.s32.totalorder %s59, %s62
      %p71 = scmp.eq.s32.totalorder %s16, 1
      %p72 = por %p70, %p71
      %p73 = scmp.ne.s32.totalorder %s62, %s63
      %p74 = scmp.eq.s32.totalorder %s16, 0
      %p75 = por %p73, %p74
      %p76 = scmp.ne.s32.totalorder %s62, %s63
      %p77 = scmp.eq.s32.totalorder %s17, 1
      %p78 = por %p76, %p77
      %p80 = scmp.ne.s32.totalorder %s63, %s79
      %p81 = scmp.eq.s32.totalorder %s17, 0
      %p82 = por %p80, %p81
      %s83 = ssub.s32 %s19, %s26
      %p84 = scmp.eq.s32.totalorder %s83, 0
      %s86 = sadd.s32 %s85, 1
      %s87 = scalar_select %p84, %s85, %s86
      %p90 = pneg %p84
      %p91 = scmp.eq.s32.totalorder %s11, 1
      %p92 = por %p90, %p91
      %p93 = scmp.ne.s32.totalorder %s85, %s88
      %p94 = scmp.eq.s32.totalorder %s11, 0
      %p95 = por %p93, %p94
      %p96 = scmp.ne.s32.totalorder %s85, %s88
      %p97 = scmp.eq.s32.totalorder %s16, 1
      %p98 = por %p96, %p97
      %p99 = scmp.ne.s32.totalorder %s88, %s89
      %p100 = scmp.eq.s32.totalorder %s16, 0
      %p101 = por %p99, %p100
      %p102 = scmp.ne.s32.totalorder %s88, %s89
      %p103 = scmp.eq.s32.totalorder %s17, 1
      %p104 = por %p102, %p103
      %p106 = scmp.ne.s32.totalorder %s89, %s105
      %p107 = scmp.eq.s32.totalorder %s17, 0
      %p108 = por %p106, %p107
      %s109 = ssub.s32 %s18, %s30
      %s110 = ssub.s32 %s19, %s26
      %s111 = sor.u32 %s109, %s110
      %p112 = scmp.eq.s32.totalorder %s111, 0
      %s114 = sadd.s32 %s113, 1
      %s115 = scalar_select %p112, %s113, %s114
      %p118 = pneg %p112
      %p119 = scmp.eq.s32.totalorder %s11, 1
      %p120 = por %p118, %p119
      %p121 = scmp.ne.s32.totalorder %s113, %s116
      %p122 = scmp.eq.s32.totalorder %s11, 0
      %p123 = por %p121, %p122
      %p124 = scmp.ne.s32.totalorder %s113, %s116
      %p125 = scmp.eq.s32.totalorder %s16, 1
      %p126 = por %p124, %p125
      %p127 = scmp.ne.s32.totalorder %s116, %s117
      %p128 = scmp.eq.s32.totalorder %s16, 0
      %p129 = por %p127, %p128
      %p130 = scmp.ne.s32.totalorder %s116, %s117
      %p131 = scmp.eq.s32.totalorder %s17, 1
      %p132 = por %p130, %p131
      %p134 = scmp.ne.s32.totalorder %s117, %s133
      %p135 = scmp.eq.s32.totalorder %s17, 0
      %p136 = por %p134, %p135
      %p137 = scmp.le.s32.totalorder 1, %s11
      %p138 = scmp.lt.s32.totalorder %s11, 3
      %p139 = pnand %p137, %p138
      %p140 = pneg %p139
      // Predicated region
      $region9: #{discriminator_forward.7} parent=5 // pred_check
        _
      $region10: #{discriminator_forward.7} parent=5 // pred_check_branch
        %142 = sbr.rel (%p139) target = $region12
      $region11: #{discriminator_forward.7} parent=5 // pred_region
        %s143 = ssub.s32 %s11, 1
        // Predicated region
        $region13: #{discriminator_forward.7} parent=11 // pred_check
          %p144 = pneg %p75
        $region14: #{discriminator_forward.7} parent=11 // pred_check_branch
          %146 = sbr.rel (%p144) target = $region16
        $region15: #{discriminator_forward.7} parent=11 // pred_region
          %s147 = smul.u32 2, %s21
          %149 = vsyncadd [#allocation3], 0
          %s150 = smul.addr %s147, 4
          %s151 = scalar_lea.hbm %s1, %s150
          %s152 = sshll.u32 %s151, 4
          %s153 = int_to_ptr.hbm [resolvable:$true] %s152
          %s154 = sshll.u32 [#allocation2], 4
          %s155 = int_to_ptr.vmem [resolvable:$true] %s154
          %160 = dma.hbm_to_vmem [thread:$0]  %s153, 18432, %s155, [#allocation3], 128, 128, 8
        $region16: #{discriminator_forward.7} parent=11 // pred_fallthru
          _
        // Predicated region
        $region17: #{discriminator_forward.7} parent=11 // pred_check
          %p161 = pneg %p101
        $region18: #{discriminator_forward.7} parent=11 // pred_check_branch
          %163 = sbr.rel (%p161) target = $region20
        $region19: #{discriminator_forward.7} parent=11 // pred_region
          %s164 = smul.u32 2, %s21
          %166 = vsyncadd [#allocation5], 0
          %s167 = scalar_lea.hbm %s2, %s164
          %s169 = sshll.u32 %s167, 4
          %s170 = int_to_ptr.hbm [resolvable:$true] %s169
          %s171 = sshll.u32 [#allocation4], 4
          %s172 = int_to_ptr.vmem [resolvable:$true] %s171
          %174 = dma.hbm_to_vmem [thread:$0]  %s170, 32, %s172, [#allocation5]
        $region20: #{discriminator_forward.7} parent=11 // pred_fallthru
          _
      $region12: #{discriminator_forward.7} parent=5 // pred_fallthru
        _
      %p175 = scmp.lt.s32.totalorder %s11, 2
      // Predicated region
      $region21: #{discriminator_forward.7} parent=5 // pred_check
        %p176 = pneg %p175
      $region22: #{discriminator_forward.7} parent=5 // pred_check_branch
        %178 = sbr.rel (%p176) target = $region24
      $region23: #{discriminator_forward.7} parent=5 // pred_region
        // Predicated region
        $region25: #{discriminator_forward.7} parent=23 // pred_check
          %p179 = pneg %p43
        $region26: #{discriminator_forward.7} parent=23 // pred_check_branch
          %181 = sbr.rel (%p179) target = $region28
        $region27: #{discriminator_forward.7} parent=23 // pred_region
          %p182 = scmp.lt.s32.totalorder %s18, 1
          %s183 = scalar_select %p182, %s18, 1
          %s184 = smul.addr %s183, 12
          %s185 = smul.addr %s184, 2
          %s186 = scalar_lea.vmem %s0, %s185
        $region28: #{discriminator_forward.7} parent=23 // pred_fallthru
          _
      $region24: #{discriminator_forward.7} parent=5 // pred_fallthru
        _
      %p187 = scmp.le.s32.totalorder 1, %s11
      %p188 = scmp.lt.s32.totalorder %s11, 3
      %p189 = pnand %p187, %p188
      %p190 = pneg %p189
      // Predicated region
      $region29: #{discriminator_forward.7} parent=5 // pred_check
        _
      $region30: #{discriminator_forward.7} parent=5 // pred_check_branch
        %192 = sbr.rel (%p189) target = $region32
      $region31: #{discriminator_forward.7} parent=5 // pred_region
        %s193 = ssub.s32 %s11, 1
        // Predicated region
        $region33: #{discriminator_forward.7} parent=31 // pred_check
          %p194 = pneg %p75
        $region34: #{discriminator_forward.7} parent=31 // pred_check_branch
          %196 = sbr.rel (%p194) target = $region36
        $region35: #{discriminator_forward.7} parent=31 // pred_region
          %198 = dma.done [#allocation3], 18432
        $region36: #{discriminator_forward.7} parent=31 // pred_fallthru
          _
        // Predicated region
        $region37: #{discriminator_forward.7} parent=31 // pred_check
          %p199 = pneg %p101
        $region38: #{discriminator_forward.7} parent=31 // pred_check_branch
          %201 = sbr.rel (%p199) target = $region40
        $region39: #{discriminator_forward.7} parent=31 // pred_region
          %203 = dma.done [#allocation5], 32
        $region40: #{discriminator_forward.7} parent=31 // pred_fallthru
          _
        %p204 = scmp.lt.s32.totalorder %s20, 1
        %s205 = scalar_select %p204, %s20, 1
        %s206 = smul.addr %s205, 12
        %s207 = smul.addr %s206, 2
        %s208 = scalar_lea.vmem %s0, %s207
        %p209 = pneg %p49
        %p210 = pneg %p46
        %p211 = pneg %p75
        %p212 = pneg %p72
        %p213 = pneg %p101
        %p214 = pneg %p98
        %p215 = pneg %p129
        %p216 = pneg %p126
        %s217 = smul.u32 2, %s21
        %p218 = scmp.lt.s32.totalorder %s20, 1
        %s219 = scalar_select %p218, %s20, 1
        %p220 = scmp.lt.s32.totalorder %s217, 1
        %s221 = scalar_select %p220, %s217, 1
        %s222 = smul.addr %s219, 2
        %s223 = sadd.s32 %s221, %s222
        %s224 = smul.addr %s223, 2
        %s225 = scalar_lea.vmem %s3, %s224
        %p226 = scmp.lt.s32.totalorder %s20, 1
        %s227 = scalar_select %p226, %s20, 1
        %s228 = smul.addr %s227, 12
        %s229 = smul.addr %s228, 2
        %s230 = scalar_lea.vmem %s0, %s229
        %s231 = smul.u32 2, %s21
        %s232 = smul.u32 2, %s21
        %s233 = smul.u32 2, %s21
        %p234 = scmp.lt.s32.totalorder %s20, 1
        %s235 = scalar_select %p234, %s20, 1
        %p236 = scmp.lt.s32.totalorder %s233, 1
        %s237 = scalar_select %p236, %s233, 1
        %s238 = smul.addr %s235, 2
        %s239 = sadd.s32 %s237, %s238
        %s240 = smul.addr %s239, 2
        %s241 = scalar_lea.vmem %s3, %s240
        %s242 = smul.u32 2, %s21
        %v243 = vld [vmem:[%s230] sm:$0x3]
        %v244 = vld [vmem:[%s230 + $0x2] sm:$0x3]
        %v245 = vld [vmem:[%s230 + $0x4] sm:$0x3]
        %v246 = vld [vmem:[%s230 + $0x6] sm:$0x3]
        %v247 = vld [vmem:[%s230 + $0x8] sm:$0x3]
        %v248 = vld [vmem:[%s230 + $0xa] sm:$0x3]
        %v249 = vld [vmem:[%s230 + $0xc] sm:$0x3]
        %v250 = vld [vmem:[%s230 + $0xe] sm:$0x3]
        %v251 = vld [vmem:[%s230 + $0x12] sm:$0x3]
        %v252 = vld [vmem:[%s230 + $0x14] sm:$0x3]
        %v253 = vld [vmem:[#allocation2] sm:$0xff]
        %v254 = vld [vmem:[#allocation2 + $0x8] sm:$0xff]
        %v255 = vld [vmem:[#allocation2 + $0x10] sm:$0xff]
        %v256 = vld [vmem:[#allocation2 + $0x18] sm:$0xff]
        %v257 = vld [vmem:[#allocation2 + $0x20] sm:$0xff]
        %v258 = vld [vmem:[#allocation2 + $0x28] sm:$0xff]
        %v259 = vld [vmem:[#allocation2 + $0x30] sm:$0xff]
        %v260 = vld [vmem:[#allocation2 + $0x38] sm:$0xff]
        %v261 = vld [vmem:[#allocation2 + $0x40] sm:$0xff]
        %v262 = vld [vmem:[#allocation2 + $0x48] sm:$0xff]
        %v263 = vld [vmem:[#allocation2 + $0x50] sm:$0xff]
        %v264 = vld [vmem:[#allocation2 + $0x58] sm:$0xff]
        %v265 = vld [vmem:[#allocation2 + $0x60] sm:$0xff]
        %v266 = vld [vmem:[#allocation2 + $0x68] sm:$0xff]
        %v267 = vld [vmem:[#allocation2 + $0x70] sm:$0xff]
        %v268 = vld [vmem:[#allocation2 + $0x78] sm:$0xff]
        %s269 = scalar_lea.vmem [#allocation2], 128
        %v270 = vld [vmem:[%s269] sm:$0xff]
        %v271 = vld [vmem:[%s269 + $0x8] sm:$0xff]
        %v272 = vld [vmem:[%s269 + $0x10] sm:$0xff]
        %v273 = vld [vmem:[%s269 + $0x18] sm:$0xff]
        %v274 = vld [vmem:[%s269 + $0x20] sm:$0xff]
        %v275 = vld [vmem:[%s269 + $0x28] sm:$0xff]
        %v276 = vld [vmem:[%s269 + $0x30] sm:$0xff]
        %v277 = vld [vmem:[%s269 + $0x38] sm:$0xff]
        %v278 = vld [vmem:[%s269 + $0x40] sm:$0xff]
        %v279 = vld [vmem:[%s269 + $0x48] sm:$0xff]
        %v280 = vld [vmem:[%s269 + $0x50] sm:$0xff]
        %v281 = vld [vmem:[%s269 + $0x58] sm:$0xff]
        %v282 = vld [vmem:[%s269 + $0x60] sm:$0xff]
        %v283 = vld [vmem:[%s269 + $0x68] sm:$0xff]
        %v284 = vld [vmem:[%s269 + $0x70] sm:$0xff]
        %v285 = vld [vmem:[%s269 + $0x78] sm:$0xff]
        %287 = vst [vmem:[#allocation1] ss:$9 sm:$0xff] %v246
        %s289 = scalar_lea.vmem [#allocation1], 1
        %290 = vst [vmem:[%s289] ss:$9 sm:$0xff] %v247
        %v291 = vld [vmem:[#allocation1] sm:$0xff]
        %v309 = vunpack.c.l.b16 %v270
        %v310 = vunpack.c.h.b16 %v270
        %v311 = vunpack.c.l.b16 %v271
        %v312 = vunpack.c.h.b16 %v271
        %v313 = vunpack.c.l.b16 %v272
        %v314 = vunpack.c.h.b16 %v272
        %v315 = vunpack.c.l.b16 %v273
        %v316 = vunpack.c.h.b16 %v273
        %v317 = vunpack.c.l.b16 %v274
        %v318 = vunpack.c.h.b16 %v274
        %v319 = vunpack.c.l.b16 %v275
        %v320 = vunpack.c.h.b16 %v275
        %v321 = vunpack.c.l.b16 %v276
        %v322 = vunpack.c.h.b16 %v276
        %v323 = vunpack.c.l.b16 %v277
        %v324 = vunpack.c.h.b16 %v277
        %v325 = vunpack.c.l.b16 %v278
        %v326 = vunpack.c.h.b16 %v278
        %v327 = vunpack.c.l.b16 %v279
        %v328 = vunpack.c.h.b16 %v279
        %v329 = vunpack.c.l.b16 %v280
        %v330 = vunpack.c.h.b16 %v280
        %v331 = vunpack.c.l.b16 %v281
        %v332 = vunpack.c.h.b16 %v281
        %v333 = vunpack.c.l.b16 %v282
        %v334 = vunpack.c.h.b16 %v282
        %v335 = vunpack.c.l.b16 %v283
        %v336 = vunpack.c.h.b16 %v283
        %v337 = vunpack.c.l.b16 %v284
        %v338 = vunpack.c.h.b16 %v284
        %v339 = vunpack.c.l.b16 %v285
        %v340 = vunpack.c.h.b16 %v285
        %v341 = vpack.c.b16 %v311, %v309
        %v342 = vpack.c.b16 %v312, %v310
        %v343 = vpack.c.b16 %v315, %v313
        %v344 = vpack.c.b16 %v316, %v314
        %v345 = vpack.c.b16 %v319, %v317
        %v346 = vpack.c.b16 %v320, %v318
        %v347 = vpack.c.b16 %v323, %v321
        %v348 = vpack.c.b16 %v324, %v322
        %v349 = vpack.c.b16 %v327, %v325
        %v350 = vpack.c.b16 %v328, %v326
        %v351 = vpack.c.b16 %v331, %v329
        %v352 = vpack.c.b16 %v332, %v330
        %v353 = vpack.c.b16 %v335, %v333
        %v354 = vpack.c.b16 %v336, %v334
        %v355 = vpack.c.b16 %v339, %v337
        %v356 = vpack.c.b16 %v340, %v338
        %373 = vmatpush.bf16.msra.mxu0 %v355
        %374 = vmatpush.bf16.msra.mxu0 %v353
        %375 = vmatpush.bf16.msra.mxu0 %v351
        %376 = vmatpush.bf16.msra.mxu0 %v349
        %377 = vmatpush.bf16.msra.mxu0 %v347
        %378 = vmatpush.bf16.msra.mxu0 %v345
        %379 = vmatpush.bf16.msra.mxu0 %v343
        %380 = vmatpush.bf16.msra.mxu0 %v341
        %381 = vmatmul.bf16.gmra.mxu0 %v291
        %v382 = vpop.f32.mrf.mxu0
        %v383 = vadd.f32 0.0, %v382
        %v384 = vpop.f32.mrf.mxu0
        %385 = vdwg.mxu0
        %386 = vmatpush.bf16.msra.mxu0 %v356
        %387 = vmatpush.bf16.msra.mxu0 %v354
        %388 = vmatpush.bf16.msra.mxu0 %v352
        %389 = vmatpush.bf16.msra.mxu0 %v350
        %390 = vmatpush.bf16.msra.mxu0 %v348
        %391 = vmatpush.bf16.msra.mxu0 %v346
        %392 = vmatpush.bf16.msra.mxu0 %v344
        %393 = vmatpush.bf16.msra.mxu0 %v342
        %394 = vmatmul.bf16.gmra.mxu0 %v291
        %v395 = vpop.f32.mrf.mxu0
        %v396 = vadd.f32 0.0, %v395
        %v397 = vpop.f32.mrf.mxu0
        %398 = vdwg.mxu0
        %400 = vst [vmem:[#allocation1] ss:$9 sm:$0xff] %v243
        %s402 = scalar_lea.vmem [#allocation1], 1
        %403 = vst [vmem:[%s402] ss:$9 sm:$0xff] %v244
        %v404 = vld [vmem:[#allocation1] sm:$0xff]
        %v422 = vunpack.c.l.b16 %v253
        %v423 = vunpack.c.h.b16 %v253
        %v424 = vunpack.c.l.b16 %v254
        %v425 = vunpack.c.h.b16 %v254
        %v426 = vunpack.c.l.b16 %v255
        %v427 = vunpack.c.h.b16 %v255
        %v428 = vunpack.c.l.b16 %v256
        %v429 = vunpack.c.h.b16 %v256
        %v430 = vunpack.c.l.b16 %v257
        %v431 = vunpack.c.h.b16 %v257
        %v432 = vunpack.c.l.b16 %v258
        %v433 = vunpack.c.h.b16 %v258
        %v434 = vunpack.c.l.b16 %v259
        %v435 = vunpack.c.h.b16 %v259
        %v436 = vunpack.c.l.b16 %v260
        %v437 = vunpack.c.h.b16 %v260
        %v438 = vunpack.c.l.b16 %v261
        %v439 = vunpack.c.h.b16 %v261
        %v440 = vunpack.c.l.b16 %v262
        %v441 = vunpack.c.h.b16 %v262
        %v442 = vunpack.c.l.b16 %v263
        %v443 = vunpack.c.h.b16 %v263
        %v444 = vunpack.c.l.b16 %v264
        %v445 = vunpack.c.h.b16 %v264
        %v446 = vunpack.c.l.b16 %v265
        %v447 = vunpack.c.h.b16 %v265
        %v448 = vunpack.c.l.b16 %v266
        %v449 = vunpack.c.h.b16 %v266
        %v450 = vunpack.c.l.b16 %v267
        %v451 = vunpack.c.h.b16 %v267
        %v452 = vunpack.c.l.b16 %v268
        %v453 = vunpack.c.h.b16 %v268
        %v454 = vpack.c.b16 %v424, %v422
        %v455 = vpack.c.b16 %v425, %v423
        %v456 = vpack.c.b16 %v428, %v426
        %v457 = vpack.c.b16 %v429, %v427
        %v458 = vpack.c.b16 %v432, %v430
        %v459 = vpack.c.b16 %v433, %v431
        %v460 = vpack.c.b16 %v436, %v434
        %v461 = vpack.c.b16 %v437, %v435
        %v462 = vpack.c.b16 %v440, %v438
        %v463 = vpack.c.b16 %v441, %v439
        %v464 = vpack.c.b16 %v444, %v442
        %v465 = vpack.c.b16 %v445, %v443
        %v466 = vpack.c.b16 %v448, %v446
        %v467 = vpack.c.b16 %v449, %v447
        %v468 = vpack.c.b16 %v452, %v450
        %v469 = vpack.c.b16 %v453, %v451
        %486 = vmatpush.bf16.msra.mxu0 %v468
        %487 = vmatpush.bf16.msra.mxu0 %v466
        %488 = vmatpush.bf16.msra.mxu0 %v464
        %489 = vmatpush.bf16.msra.mxu0 %v462
        %490 = vmatpush.bf16.msra.mxu0 %v460
        %491 = vmatpush.bf16.msra.mxu0 %v458
        %492 = vmatpush.bf16.msra.mxu0 %v456
        %493 = vmatpush.bf16.msra.mxu0 %v454
        %494 = vmatmul.bf16.gmra.mxu0 %v404
        %v495 = vpop.f32.mrf.mxu0
        %v496 = vadd.f32 %v383, %v495
        %v497 = vpop.f32.mrf.mxu0
        %498 = vdwg.mxu0
        %499 = vmatpush.bf16.msra.mxu0 %v469
        %500 = vmatpush.bf16.msra.mxu0 %v467
        %501 = vmatpush.bf16.msra.mxu0 %v465
        %502 = vmatpush.bf16.msra.mxu0 %v463
        %503 = vmatpush.bf16.msra.mxu0 %v461
        %504 = vmatpush.bf16.msra.mxu0 %v459
        %505 = vmatpush.bf16.msra.mxu0 %v457
        %506 = vmatpush.bf16.msra.mxu0 %v455
        %507 = vmatmul.bf16.gmra.mxu0 %v404
        %v508 = vpop.f32.mrf.mxu0
        %v509 = vadd.f32 %v396, %v508
        %v510 = vpop.f32.mrf.mxu0
        %511 = vdwg.mxu0
        %v514 = vrot.slane %v243, 1
        %v515 = vrot.slane %v243, 2
        %v516 = vrot.slane %v243, 3
        %v517 = vrot.slane %v244, 1
        %v518 = vrot.slane %v244, 2
        %v519 = vrot.slane %v244, 3
        %vm520 = vcmask 1040384
        %v522 = vsel %vm520, %v243, %v514
        %vm523 = vcmask 1042434
        %v526 = vsel %vm523, %v515, %v516
        %vm527 = vcmask 1041408
        %v528 = vsel %vm527, %v522, %v526
        %vm529 = vcmask 1041409
        %v530 = vsel %vm529, %v243, %v514
        %vm531 = vcmask 1043459
        %v532 = vsel %vm531, %v515, %v516
        %vm533 = vcmask 1042433
        %v534 = vsel %vm533, %v530, %v532
        %v536 = vrot.slane %v534, 1
        %v538 = vsel %vm520, %v244, %v517
        %v541 = vsel %vm523, %v518, %v519
        %v542 = vsel %vm527, %v538, %v541
        %v543 = vsel %vm529, %v244, %v517
        %v544 = vsel %vm531, %v518, %v519
        %v545 = vsel %vm533, %v543, %v544
        %v547 = vrot.slane %v545, 1
        %vm548 = vsmask.f32 256
        %vm549 = vsmask.f32 1284
        %vm550 = vmor %vm548, %vm549
        %vm551 = vsmask.f32 2312
        %vm552 = vmor %vm550, %vm551
        %vm553 = vsmask.f32 3340
        %vm554 = vmor %vm552, %vm553
        %vm555 = vsmask.f32 4368
        %vm556 = vmor %vm554, %vm555
        %vm557 = vsmask.f32 5396
        %vm558 = vmor %vm556, %vm557
        %vm559 = vsmask.f32 6424
        %vm560 = vmor %vm558, %vm559
        %vm561 = vsmask.f32 7452
        %vm562 = vmor %vm560, %vm561
        %v563 = vshrl.u32 %v528, 16
        %v565 = vrot.slane %v563, 7
        %v566 = vrot.slane %v565, 1
        %v568 = vshll.u32 %v536, 16
        %v570 = vsel %vm562, %v566, %v568
        %v571 = vshrl.u32 %v542, 16
        %v573 = vrot.slane %v571, 7
        %v574 = vrot.slane %v573, 1
        %v576 = vshll.u32 %v547, 16
        %v578 = vsel %vm562, %v574, %v576
        %s579 = scalar_lea.vmem [#allocation2], 256
        %v580 = vld [vmem:[%s579] sm:$0xff]
        %v581 = vld [vmem:[%s579 + $0x8] sm:$0xff]
        %v582 = vld [vmem:[%s579 + $0x10] sm:$0xff]
        %v583 = vld [vmem:[%s579 + $0x18] sm:$0xff]
        %v584 = vld [vmem:[%s579 + $0x20] sm:$0xff]
        %v585 = vld [vmem:[%s579 + $0x28] sm:$0xff]
        %v586 = vld [vmem:[%s579 + $0x30] sm:$0xff]
        %v587 = vld [vmem:[%s579 + $0x38] sm:$0xff]
        %v588 = vld [vmem:[%s579 + $0x40] sm:$0xff]
        %v589 = vld [vmem:[%s579 + $0x48] sm:$0xff]
        %v590 = vld [vmem:[%s579 + $0x50] sm:$0xff]
        %v591 = vld [vmem:[%s579 + $0x58] sm:$0xff]
        %v592 = vld [vmem:[%s579 + $0x60] sm:$0xff]
        %v593 = vld [vmem:[%s579 + $0x68] sm:$0xff]
        %v594 = vld [vmem:[%s579 + $0x70] sm:$0xff]
        %v595 = vld [vmem:[%s579 + $0x78] sm:$0xff]
        %597 = vst [vmem:[#allocation1] ss:$9 sm:$0xff] %v570
        %s599 = scalar_lea.vmem [#allocation1], 1
        %600 = vst [vmem:[%s599] ss:$9 sm:$0xff] %v578
        %v601 = vld [vmem:[#allocation1] sm:$0xff]
        %v619 = vunpack.c.l.b16 %v580
        %v620 = vunpack.c.h.b16 %v580
        %v621 = vunpack.c.l.b16 %v581
        %v622 = vunpack.c.h.b16 %v581
        %v623 = vunpack.c.l.b16 %v582
        %v624 = vunpack.c.h.b16 %v582
        %v625 = vunpack.c.l.b16 %v583
        %v626 = vunpack.c.h.b16 %v583
        %v627 = vunpack.c.l.b16 %v584
        %v628 = vunpack.c.h.b16 %v584
        %v629 = vunpack.c.l.b16 %v585
        %v630 = vunpack.c.h.b16 %v585
        %v631 = vunpack.c.l.b16 %v586
        %v632 = vunpack.c.h.b16 %v586
        %v633 = vunpack.c.l.b16 %v587
        %v634 = vunpack.c.h.b16 %v587
        %v635 = vunpack.c.l.b16 %v588
        %v636 = vunpack.c.h.b16 %v588
        %v637 = vunpack.c.l.b16 %v589
        %v638 = vunpack.c.h.b16 %v589
        %v639 = vunpack.c.l.b16 %v590
        %v640 = vunpack.c.h.b16 %v590
        %v641 = vunpack.c.l.b16 %v591
        %v642 = vunpack.c.h.b16 %v591
        %v643 = vunpack.c.l.b16 %v592
        %v644 = vunpack.c.h.b16 %v592
        %v645 = vunpack.c.l.b16 %v593
        %v646 = vunpack.c.h.b16 %v593
        %v647 = vunpack.c.l.b16 %v594
        %v648 = vunpack.c.h.b16 %v594
        %v649 = vunpack.c.l.b16 %v595
        %v650 = vunpack.c.h.b16 %v595
        %v651 = vpack.c.b16 %v621, %v619
        %v652 = vpack.c.b16 %v622, %v620
        %v653 = vpack.c.b16 %v625, %v623
        %v654 = vpack.c.b16 %v626, %v624
        %v655 = vpack.c.b16 %v629, %v627
        %v656 = vpack.c.b16 %v630, %v628
        %v657 = vpack.c.b16 %v633, %v631
        %v658 = vpack.c.b16 %v634, %v632
        %v659 = vpack.c.b16 %v637, %v635
        %v660 = vpack.c.b16 %v638, %v636
        %v661 = vpack.c.b16 %v641, %v639
        %v662 = vpack.c.b16 %v642, %v640
        %v663 = vpack.c.b16 %v645, %v643
        %v664 = vpack.c.b16 %v646, %v644
        %v665 = vpack.c.b16 %v649, %v647
        %v666 = vpack.c.b16 %v650, %v648
        %683 = vmatpush.bf16.msra.mxu0 %v665
        %684 = vmatpush.bf16.msra.mxu0 %v663
        %685 = vmatpush.bf16.msra.mxu0 %v661
        %686 = vmatpush.bf16.msra.mxu0 %v659
        %687 = vmatpush.bf16.msra.mxu0 %v657
        %688 = vmatpush.bf16.msra.mxu0 %v655
        %689 = vmatpush.bf16.msra.mxu0 %v653
        %690 = vmatpush.bf16.msra.mxu0 %v651
        %691 = vmatmul.bf16.gmra.mxu0 %v601
        %v692 = vpop.f32.mrf.mxu0
        %v693 = vadd.f32 0.0, %v692
        %v694 = vpop.f32.mrf.mxu0
        %695 = vdwg.mxu0
        %696 = vmatpush.bf16.msra.mxu0 %v666
        %697 = vmatpush.bf16.msra.mxu0 %v664
        %698 = vmatpush.bf16.msra.mxu0 %v662
        %699 = vmatpush.bf16.msra.mxu0 %v660
        %700 = vmatpush.bf16.msra.mxu0 %v658
        %701 = vmatpush.bf16.msra.mxu0 %v656
        %702 = vmatpush.bf16.msra.mxu0 %v654
        %703 = vmatpush.bf16.msra.mxu0 %v652
        %704 = vmatmul.bf16.gmra.mxu0 %v601
        %v705 = vpop.f32.mrf.mxu0
        %v706 = vadd.f32 0.0, %v705
        %v707 = vpop.f32.mrf.mxu0
        %708 = vdwg.mxu0
        %v709 = vadd.f32 %v496, %v693
        %v710 = vadd.f32 %v509, %v706
        %s711 = scalar_lea.vmem [#allocation2], 384
        %v712 = vld [vmem:[%s711] sm:$0xff]
        %v713 = vld [vmem:[%s711 + $0x8] sm:$0xff]
        %v714 = vld [vmem:[%s711 + $0x10] sm:$0xff]
        %v715 = vld [vmem:[%s711 + $0x18] sm:$0xff]
        %v716 = vld [vmem:[%s711 + $0x20] sm:$0xff]
        %v717 = vld [vmem:[%s711 + $0x28] sm:$0xff]
        %v718 = vld [vmem:[%s711 + $0x30] sm:$0xff]
        %v719 = vld [vmem:[%s711 + $0x38] sm:$0xff]
        %v720 = vld [vmem:[%s711 + $0x40] sm:$0xff]
        %v721 = vld [vmem:[%s711 + $0x48] sm:$0xff]
        %v722 = vld [vmem:[%s711 + $0x50] sm:$0xff]
        %v723 = vld [vmem:[%s711 + $0x58] sm:$0xff]
        %v724 = vld [vmem:[%s711 + $0x60] sm:$0xff]
        %v725 = vld [vmem:[%s711 + $0x68] sm:$0xff]
        %v726 = vld [vmem:[%s711 + $0x70] sm:$0xff]
        %v727 = vld [vmem:[%s711 + $0x78] sm:$0xff]
        %729 = vst [vmem:[#allocation1] ss:$9 sm:$0xff] %v249
        %s731 = scalar_lea.vmem [#allocation1], 1
        %732 = vst [vmem:[%s731] ss:$9 sm:$0xff] %v250
        %v733 = vld [vmem:[#allocation1] sm:$0xff]
        %v751 = vunpack.c.l.b16 %v712
        %v752 = vunpack.c.h.b16 %v712
        %v753 = vunpack.c.l.b16 %v713
        %v754 = vunpack.c.h.b16 %v713
        %v755 = vunpack.c.l.b16 %v714
        %v756 = vunpack.c.h.b16 %v714
        %v757 = vunpack.c.l.b16 %v715
        %v758 = vunpack.c.h.b16 %v715
        %v759 = vunpack.c.l.b16 %v716
        %v760 = vunpack.c.h.b16 %v716
        %v761 = vunpack.c.l.b16 %v717
        %v762 = vunpack.c.h.b16 %v717
        %v763 = vunpack.c.l.b16 %v718
        %v764 = vunpack.c.h.b16 %v718
        %v765 = vunpack.c.l.b16 %v719
        %v766 = vunpack.c.h.b16 %v719
        %v767 = vunpack.c.l.b16 %v720
        %v768 = vunpack.c.h.b16 %v720
        %v769 = vunpack.c.l.b16 %v721
        %v770 = vunpack.c.h.b16 %v721
        %v771 = vunpack.c.l.b16 %v722
        %v772 = vunpack.c.h.b16 %v722
        %v773 = vunpack.c.l.b16 %v723
        %v774 = vunpack.c.h.b16 %v723
        %v775 = vunpack.c.l.b16 %v724
        %v776 = vunpack.c.h.b16 %v724
        %v777 = vunpack.c.l.b16 %v725
        %v778 = vunpack.c.h.b16 %v725
        %v779 = vunpack.c.l.b16 %v726
        %v780 = vunpack.c.h.b16 %v726
        %v781 = vunpack.c.l.b16 %v727
        %v782 = vunpack.c.h.b16 %v727
        %v783 = vpack.c.b16 %v753, %v751
        %v784 = vpack.c.b16 %v754, %v752
        %v785 = vpack.c.b16 %v757, %v755
        %v786 = vpack.c.b16 %v758, %v756
        %v787 = vpack.c.b16 %v761, %v759
        %v788 = vpack.c.b16 %v762, %v760
        %v789 = vpack.c.b16 %v765, %v763
        %v790 = vpack.c.b16 %v766, %v764
        %v791 = vpack.c.b16 %v769, %v767
        %v792 = vpack.c.b16 %v770, %v768
        %v793 = vpack.c.b16 %v773, %v771
        %v794 = vpack.c.b16 %v774, %v772
        %v795 = vpack.c.b16 %v777, %v775
        %v796 = vpack.c.b16 %v778, %v776
        %v797 = vpack.c.b16 %v781, %v779
        %v798 = vpack.c.b16 %v782, %v780
        %815 = vmatpush.bf16.msra.mxu0 %v797
        %816 = vmatpush.bf16.msra.mxu0 %v795
        %817 = vmatpush.bf16.msra.mxu0 %v793
        %818 = vmatpush.bf16.msra.mxu0 %v791
        %819 = vmatpush.bf16.msra.mxu0 %v789
        %820 = vmatpush.bf16.msra.mxu0 %v787
        %821 = vmatpush.bf16.msra.mxu0 %v785
        %822 = vmatpush.bf16.msra.mxu0 %v783
        %823 = vmatmul.bf16.gmra.mxu0 %v733
        %v824 = vpop.f32.mrf.mxu0
        %v825 = vadd.f32 0.0, %v824
        %v826 = vpop.f32.mrf.mxu0
        %827 = vdwg.mxu0
        %828 = vmatpush.bf16.msra.mxu0 %v798
        %829 = vmatpush.bf16.msra.mxu0 %v796
        %830 = vmatpush.bf16.msra.mxu0 %v794
        %831 = vmatpush.bf16.msra.mxu0 %v792
        %832 = vmatpush.bf16.msra.mxu0 %v790
        %833 = vmatpush.bf16.msra.mxu0 %v788
        %834 = vmatpush.bf16.msra.mxu0 %v786
        %835 = vmatpush.bf16.msra.mxu0 %v784
        %836 = vmatmul.bf16.gmra.mxu0 %v733
        %v837 = vpop.f32.mrf.mxu0
        %v838 = vadd.f32 0.0, %v837
        %v839 = vpop.f32.mrf.mxu0
        %840 = vdwg.mxu0
        %v841 = vadd.f32 %v709, %v825
        %v842 = vadd.f32 %v710, %v838
        %s843 = scalar_lea.vmem [#allocation2], 512
        %v844 = vld [vmem:[%s843] sm:$0xff]
        %v845 = vld [vmem:[%s843 + $0x8] sm:$0xff]
        %v846 = vld [vmem:[%s843 + $0x10] sm:$0xff]
        %v847 = vld [vmem:[%s843 + $0x18] sm:$0xff]
        %v848 = vld [vmem:[%s843 + $0x20] sm:$0xff]
        %v849 = vld [vmem:[%s843 + $0x28] sm:$0xff]
        %v850 = vld [vmem:[%s843 + $0x30] sm:$0xff]
        %v851 = vld [vmem:[%s843 + $0x38] sm:$0xff]
        %v852 = vld [vmem:[%s843 + $0x40] sm:$0xff]
        %v853 = vld [vmem:[%s843 + $0x48] sm:$0xff]
        %v854 = vld [vmem:[%s843 + $0x50] sm:$0xff]
        %v855 = vld [vmem:[%s843 + $0x58] sm:$0xff]
        %v856 = vld [vmem:[%s843 + $0x60] sm:$0xff]
        %v857 = vld [vmem:[%s843 + $0x68] sm:$0xff]
        %v858 = vld [vmem:[%s843 + $0x70] sm:$0xff]
        %v859 = vld [vmem:[%s843 + $0x78] sm:$0xff]
        %861 = vst [vmem:[#allocation1] ss:$9 sm:$0xff] %v251
        %s863 = scalar_lea.vmem [#allocation1], 1
        %864 = vst [vmem:[%s863] ss:$9 sm:$0xff] %v252
        %v865 = vld [vmem:[#allocation1] sm:$0xff]
        %v883 = vunpack.c.l.b16 %v844
        %v884 = vunpack.c.h.b16 %v844
        %v885 = vunpack.c.l.b16 %v845
        %v886 = vunpack.c.h.b16 %v845
        %v887 = vunpack.c.l.b16 %v846
        %v888 = vunpack.c.h.b16 %v846
        %v889 = vunpack.c.l.b16 %v847
        %v890 = vunpack.c.h.b16 %v847
        %v891 = vunpack.c.l.b16 %v848
        %v892 = vunpack.c.h.b16 %v848
        %v893 = vunpack.c.l.b16 %v849
        %v894 = vunpack.c.h.b16 %v849
        %v895 = vunpack.c.l.b16 %v850
        %v896 = vunpack.c.h.b16 %v850
        %v897 = vunpack.c.l.b16 %v851
        %v898 = vunpack.c.h.b16 %v851
        %v899 = vunpack.c.l.b16 %v852
        %v900 = vunpack.c.h.b16 %v852
        %v901 = vunpack.c.l.b16 %v853
        %v902 = vunpack.c.h.b16 %v853
        %v903 = vunpack.c.l.b16 %v854
        %v904 = vunpack.c.h.b16 %v854
        %v905 = vunpack.c.l.b16 %v855
        %v906 = vunpack.c.h.b16 %v855
        %v907 = vunpack.c.l.b16 %v856
        %v908 = vunpack.c.h.b16 %v856
        %v909 = vunpack.c.l.b16 %v857
        %v910 = vunpack.c.h.b16 %v857
        %v911 = vunpack.c.l.b16 %v858
        %v912 = vunpack.c.h.b16 %v858
        %v913 = vunpack.c.l.b16 %v859
        %v914 = vunpack.c.h.b16 %v859
        %v915 = vpack.c.b16 %v885, %v883
        %v916 = vpack.c.b16 %v886, %v884
        %v917 = vpack.c.b16 %v889, %v887
        %v918 = vpack.c.b16 %v890, %v888
        %v919 = vpack.c.b16 %v893, %v891
        %v920 = vpack.c.b16 %v894, %v892
        %v921 = vpack.c.b16 %v897, %v895
        %v922 = vpack.c.b16 %v898, %v896
        %v923 = vpack.c.b16 %v901, %v899
        %v924 = vpack.c.b16 %v902, %v900
        %v925 = vpack.c.b16 %v905, %v903
        %v926 = vpack.c.b16 %v906, %v904
        %v927 = vpack.c.b16 %v909, %v907
        %v928 = vpack.c.b16 %v910, %v908
        %v929 = vpack.c.b16 %v913, %v911
        %v930 = vpack.c.b16 %v914, %v912
        %947 = vmatpush.bf16.msra.mxu0 %v929
        %948 = vmatpush.bf16.msra.mxu0 %v927
        %949 = vmatpush.bf16.msra.mxu0 %v925
        %950 = vmatpush.bf16.msra.mxu0 %v923
        %951 = vmatpush.bf16.msra.mxu0 %v921
        %952 = vmatpush.bf16.msra.mxu0 %v919
        %953 = vmatpush.bf16.msra.mxu0 %v917
        %954 = vmatpush.bf16.msra.mxu0 %v915
        %955 = vmatmul.bf16.gmra.mxu0 %v865
        %v956 = vpop.f32.mrf.mxu0
        %v957 = vadd.f32 0.0, %v956
        %v958 = vpop.f32.mrf.mxu0
        %959 = vdwg.mxu0
        %960 = vmatpush.bf16.msra.mxu0 %v930
        %961 = vmatpush.bf16.msra.mxu0 %v928
        %962 = vmatpush.bf16.msra.mxu0 %v926
        %963 = vmatpush.bf16.msra.mxu0 %v924
        %964 = vmatpush.bf16.msra.mxu0 %v922
        %965 = vmatpush.bf16.msra.mxu0 %v920
        %966 = vmatpush.bf16.msra.mxu0 %v918
        %967 = vmatpush.bf16.msra.mxu0 %v916
        %968 = vmatmul.bf16.gmra.mxu0 %v865
        %v969 = vpop.f32.mrf.mxu0
        %v970 = vadd.f32 0.0, %v969
        %v971 = vpop.f32.mrf.mxu0
        %972 = vdwg.mxu0
        %v973 = vadd.f32 %v841, %v957
        %v974 = vadd.f32 %v842, %v970
        %v977 = vrot.slane %v249, 1
        %v978 = vrot.slane %v249, 2
        %v979 = vrot.slane %v249, 3
        %v980 = vrot.slane %v250, 1
        %v981 = vrot.slane %v250, 2
        %v982 = vrot.slane %v250, 3
        %v984 = vsel %vm520, %v249, %v977
        %v987 = vsel %vm523, %v978, %v979
        %v988 = vsel %vm527, %v984, %v987
        %v989 = vsel %vm529, %v249, %v977
        %v990 = vsel %vm531, %v978, %v979
        %v991 = vsel %vm533, %v989, %v990
        %v993 = vrot.slane %v991, 1
        %v995 = vsel %vm520, %v250, %v980
        %v998 = vsel %vm523, %v981, %v982
        %v999 = vsel %vm527, %v995, %v998
        %v1000 = vsel %vm529, %v250, %v980
        %v1001 = vsel %vm531, %v981, %v982
        %v1002 = vsel %vm533, %v1000, %v1001
        %v1004 = vrot.slane %v1002, 1
        %v1005 = vshrl.u32 %v988, 16
        %v1007 = vrot.slane %v1005, 7
        %v1008 = vrot.slane %v1007, 1
        %v1010 = vshll.u32 %v993, 16
        %v1012 = vsel %vm562, %v1008, %v1010
        %v1013 = vshrl.u32 %v999, 16
        %v1015 = vrot.slane %v1013, 7
        %v1016 = vrot.slane %v1015, 1
        %v1018 = vshll.u32 %v1004, 16
        %v1020 = vsel %vm562, %v1016, %v1018
        %s1021 = scalar_lea.vmem [#allocation2], 640
        %v1022 = vld [vmem:[%s1021] sm:$0xff]
        %v1023 = vld [vmem:[%s1021 + $0x8] sm:$0xff]
        %v1024 = vld [vmem:[%s1021 + $0x10] sm:$0xff]
        %v1025 = vld [vmem:[%s1021 + $0x18] sm:$0xff]
        %v1026 = vld [vmem:[%s1021 + $0x20] sm:$0xff]
        %v1027 = vld [vmem:[%s1021 + $0x28] sm:$0xff]
        %v1028 = vld [vmem:[%s1021 + $0x30] sm:$0xff]
        %v1029 = vld [vmem:[%s1021 + $0x38] sm:$0xff]
        %v1030 = vld [vmem:[%s1021 + $0x40] sm:$0xff]
        %v1031 = vld [vmem:[%s1021 + $0x48] sm:$0xff]
        %v1032 = vld [vmem:[%s1021 + $0x50] sm:$0xff]
        %v1033 = vld [vmem:[%s1021 + $0x58] sm:$0xff]
        %v1034 = vld [vmem:[%s1021 + $0x60] sm:$0xff]
        %v1035 = vld [vmem:[%s1021 + $0x68] sm:$0xff]
        %v1036 = vld [vmem:[%s1021 + $0x70] sm:$0xff]
        %v1037 = vld [vmem:[%s1021 + $0x78] sm:$0xff]
        %1039 = vst [vmem:[#allocation1] ss:$9 sm:$0xff] %v1012
        %s1041 = scalar_lea.vmem [#allocation1], 1
        %1042 = vst [vmem:[%s1041] ss:$9 sm:$0xff] %v1020
        %v1043 = vld [vmem:[#allocation1] sm:$0xff]
        %v1061 = vunpack.c.l.b16 %v1022
        %v1062 = vunpack.c.h.b16 %v1022
        %v1063 = vunpack.c.l.b16 %v1023
        %v1064 = vunpack.c.h.b16 %v1023
        %v1065 = vunpack.c.l.b16 %v1024
        %v1066 = vunpack.c.h.b16 %v1024
        %v1067 = vunpack.c.l.b16 %v1025
        %v1068 = vunpack.c.h.b16 %v1025
        %v1069 = vunpack.c.l.b16 %v1026
        %v1070 = vunpack.c.h.b16 %v1026
        %v1071 = vunpack.c.l.b16 %v1027
        %v1072 = vunpack.c.h.b16 %v1027
        %v1073 = vunpack.c.l.b16 %v1028
        %v1074 = vunpack.c.h.b16 %v1028
        %v1075 = vunpack.c.l.b16 %v1029
        %v1076 = vunpack.c.h.b16 %v1029
        %v1077 = vunpack.c.l.b16 %v1030
        %v1078 = vunpack.c.h.b16 %v1030
        %v1079 = vunpack.c.l.b16 %v1031
        %v1080 = vunpack.c.h.b16 %v1031
        %v1081 = vunpack.c.l.b16 %v1032
        %v1082 = vunpack.c.h.b16 %v1032
        %v1083 = vunpack.c.l.b16 %v1033
        %v1084 = vunpack.c.h.b16 %v1033
        %v1085 = vunpack.c.l.b16 %v1034
        %v1086 = vunpack.c.h.b16 %v1034
        %v1087 = vunpack.c.l.b16 %v1035
        %v1088 = vunpack.c.h.b16 %v1035
        %v1089 = vunpack.c.l.b16 %v1036
        %v1090 = vunpack.c.h.b16 %v1036
        %v1091 = vunpack.c.l.b16 %v1037
        %v1092 = vunpack.c.h.b16 %v1037
        %v1093 = vpack.c.b16 %v1063, %v1061
        %v1094 = vpack.c.b16 %v1064, %v1062
        %v1095 = vpack.c.b16 %v1067, %v1065
        %v1096 = vpack.c.b16 %v1068, %v1066
        %v1097 = vpack.c.b16 %v1071, %v1069
        %v1098 = vpack.c.b16 %v1072, %v1070
        %v1099 = vpack.c.b16 %v1075, %v1073
        %v1100 = vpack.c.b16 %v1076, %v1074
        %v1101 = vpack.c.b16 %v1079, %v1077
        %v1102 = vpack.c.b16 %v1080, %v1078
        %v1103 = vpack.c.b16 %v1083, %v1081
        %v1104 = vpack.c.b16 %v1084, %v1082
        %v1105 = vpack.c.b16 %v1087, %v1085
        %v1106 = vpack.c.b16 %v1088, %v1086
        %v1107 = vpack.c.b16 %v1091, %v1089
        %v1108 = vpack.c.b16 %v1092, %v1090
        %1125 = vmatpush.bf16.msra.mxu0 %v1107
        %1126 = vmatpush.bf16.msra.mxu0 %v1105
        %1127 = vmatpush.bf16.msra.mxu0 %v1103
        %1128 = vmatpush.bf16.msra.mxu0 %v1101
        %1129 = vmatpush.bf16.msra.mxu0 %v1099
        %1130 = vmatpush.bf16.msra.mxu0 %v1097
        %1131 = vmatpush.bf16.msra.mxu0 %v1095
        %1132 = vmatpush.bf16.msra.mxu0 %v1093
        %1133 = vmatmul.bf16.gmra.mxu0 %v1043
        %v1134 = vpop.f32.mrf.mxu0
        %v1135 = vadd.f32 0.0, %v1134
        %v1136 = vpop.f32.mrf.mxu0
        %1137 = vdwg.mxu0
        %1138 = vmatpush.bf16.msra.mxu0 %v1108
        %1139 = vmatpush.bf16.msra.mxu0 %v1106
        %1140 = vmatpush.bf16.msra.mxu0 %v1104
        %1141 = vmatpush.bf16.msra.mxu0 %v1102
        %1142 = vmatpush.bf16.msra.mxu0 %v1100
        %1143 = vmatpush.bf16.msra.mxu0 %v1098
        %1144 = vmatpush.bf16.msra.mxu0 %v1096
        %1145 = vmatpush.bf16.msra.mxu0 %v1094
        %1146 = vmatmul.bf16.gmra.mxu0 %v1043
        %v1147 = vpop.f32.mrf.mxu0
        %v1148 = vadd.f32 0.0, %v1147
        %v1149 = vpop.f32.mrf.mxu0
        %1150 = vdwg.mxu0
        %v1151 = vadd.f32 %v973, %v1135
        %v1152 = vadd.f32 %v974, %v1148
        %s1153 = scalar_lea.vmem [#allocation2], 768
        %v1154 = vld [vmem:[%s1153] sm:$0xff]
        %v1155 = vld [vmem:[%s1153 + $0x8] sm:$0xff]
        %v1156 = vld [vmem:[%s1153 + $0x10] sm:$0xff]
        %v1157 = vld [vmem:[%s1153 + $0x18] sm:$0xff]
        %v1158 = vld [vmem:[%s1153 + $0x20] sm:$0xff]
        %v1159 = vld [vmem:[%s1153 + $0x28] sm:$0xff]
        %v1160 = vld [vmem:[%s1153 + $0x30] sm:$0xff]
        %v1161 = vld [vmem:[%s1153 + $0x38] sm:$0xff]
        %v1162 = vld [vmem:[%s1153 + $0x40] sm:$0xff]
        %v1163 = vld [vmem:[%s1153 + $0x48] sm:$0xff]
        %v1164 = vld [vmem:[%s1153 + $0x50] sm:$0xff]
        %v1165 = vld [vmem:[%s1153 + $0x58] sm:$0xff]
        %v1166 = vld [vmem:[%s1153 + $0x60] sm:$0xff]
        %v1167 = vld [vmem:[%s1153 + $0x68] sm:$0xff]
        %v1168 = vld [vmem:[%s1153 + $0x70] sm:$0xff]
        %v1169 = vld [vmem:[%s1153 + $0x78] sm:$0xff]
        %1170 = vst [vmem:[#allocation1] ss:$9 sm:$0xff] %v244
        %s1172 = scalar_lea.vmem [#allocation1], 1
        %1173 = vst [vmem:[%s1172] ss:$9 sm:$0xff] %v245
        %v1174 = vld [vmem:[#allocation1] sm:$0xff]
        %v1192 = vunpack.c.l.b16 %v1154
        %v1193 = vunpack.c.h.b16 %v1154
        %v1194 = vunpack.c.l.b16 %v1155
        %v1195 = vunpack.c.h.b16 %v1155
        %v1196 = vunpack.c.l.b16 %v1156
        %v1197 = vunpack.c.h.b16 %v1156
        %v1198 = vunpack.c.l.b16 %v1157
        %v1199 = vunpack.c.h.b16 %v1157
        %v1200 = vunpack.c.l.b16 %v1158
        %v1201 = vunpack.c.h.b16 %v1158
        %v1202 = vunpack.c.l.b16 %v1159
        %v1203 = vunpack.c.h.b16 %v1159
        %v1204 = vunpack.c.l.b16 %v1160
        %v1205 = vunpack.c.h.b16 %v1160
        %v1206 = vunpack.c.l.b16 %v1161
        %v1207 = vunpack.c.h.b16 %v1161
        %v1208 = vunpack.c.l.b16 %v1162
        %v1209 = vunpack.c.h.b16 %v1162
        %v1210 = vunpack.c.l.b16 %v1163
        %v1211 = vunpack.c.h.b16 %v1163
        %v1212 = vunpack.c.l.b16 %v1164
        %v1213 = vunpack.c.h.b16 %v1164
        %v1214 = vunpack.c.l.b16 %v1165
        %v1215 = vunpack.c.h.b16 %v1165
        %v1216 = vunpack.c.l.b16 %v1166
        %v1217 = vunpack.c.h.b16 %v1166
        %v1218 = vunpack.c.l.b16 %v1167
        %v1219 = vunpack.c.h.b16 %v1167
        %v1220 = vunpack.c.l.b16 %v1168
        %v1221 = vunpack.c.h.b16 %v1168
        %v1222 = vunpack.c.l.b16 %v1169
        %v1223 = vunpack.c.h.b16 %v1169
        %v1224 = vpack.c.b16 %v1194, %v1192
        %v1225 = vpack.c.b16 %v1195, %v1193
        %v1226 = vpack.c.b16 %v1198, %v1196
        %v1227 = vpack.c.b16 %v1199, %v1197
        %v1228 = vpack.c.b16 %v1202, %v1200
        %v1229 = vpack.c.b16 %v1203, %v1201
        %v1230 = vpack.c.b16 %v1206, %v1204
        %v1231 = vpack.c.b16 %v1207, %v1205
        %v1232 = vpack.c.b16 %v1210, %v1208
        %v1233 = vpack.c.b16 %v1211, %v1209
        %v1234 = vpack.c.b16 %v1214, %v1212
        %v1235 = vpack.c.b16 %v1215, %v1213
        %v1236 = vpack.c.b16 %v1218, %v1216
        %v1237 = vpack.c.b16 %v1219, %v1217
        %v1238 = vpack.c.b16 %v1222, %v1220
        %v1239 = vpack.c.b16 %v1223, %v1221
        %1256 = vmatpush.bf16.msra.mxu0 %v1238
        %1257 = vmatpush.bf16.msra.mxu0 %v1236
        %1258 = vmatpush.bf16.msra.mxu0 %v1234
        %1259 = vmatpush.bf16.msra.mxu0 %v1232
        %1260 = vmatpush.bf16.msra.mxu0 %v1230
        %1261 = vmatpush.bf16.msra.mxu0 %v1228
        %1262 = vmatpush.bf16.msra.mxu0 %v1226
        %1263 = vmatpush.bf16.msra.mxu0 %v1224
        %1264 = vmatmul.bf16.gmra.mxu0 %v1174
        %v1265 = vpop.f32.mrf.mxu0
        %v1266 = vadd.f32 0.0, %v1265
        %v1267 = vpop.f32.mrf.mxu0
        %1268 = vdwg.mxu0
        %1269 = vmatpush.bf16.msra.mxu0 %v1239
        %1270 = vmatpush.bf16.msra.mxu0 %v1237
        %1271 = vmatpush.bf16.msra.mxu0 %v1235
        %1272 = vmatpush.bf16.msra.mxu0 %v1233
        %1273 = vmatpush.bf16.msra.mxu0 %v1231
        %1274 = vmatpush.bf16.msra.mxu0 %v1229
        %1275 = vmatpush.bf16.msra.mxu0 %v1227
        %1276 = vmatpush.bf16.msra.mxu0 %v1225
        %1277 = vmatmul.bf16.gmra.mxu0 %v1174
        %v1278 = vpop.f32.mrf.mxu0
        %v1279 = vadd.f32 0.0, %v1278
        %v1280 = vpop.f32.mrf.mxu0
        %1281 = vdwg.mxu0
        %v1282 = vadd.f32 %v1151, %v1266
        %v1283 = vadd.f32 %v1152, %v1279
        %s1284 = scalar_lea.vmem [#allocation2], 896
        %v1285 = vld [vmem:[%s1284] sm:$0xff]
        %v1286 = vld [vmem:[%s1284 + $0x8] sm:$0xff]
        %v1287 = vld [vmem:[%s1284 + $0x10] sm:$0xff]
        %v1288 = vld [vmem:[%s1284 + $0x18] sm:$0xff]
        %v1289 = vld [vmem:[%s1284 + $0x20] sm:$0xff]
        %v1290 = vld [vmem:[%s1284 + $0x28] sm:$0xff]
        %v1291 = vld [vmem:[%s1284 + $0x30] sm:$0xff]
        %v1292 = vld [vmem:[%s1284 + $0x38] sm:$0xff]
        %v1293 = vld [vmem:[%s1284 + $0x40] sm:$0xff]
        %v1294 = vld [vmem:[%s1284 + $0x48] sm:$0xff]
        %v1295 = vld [vmem:[%s1284 + $0x50] sm:$0xff]
        %v1296 = vld [vmem:[%s1284 + $0x58] sm:$0xff]
        %v1297 = vld [vmem:[%s1284 + $0x60] sm:$0xff]
        %v1298 = vld [vmem:[%s1284 + $0x68] sm:$0xff]
        %v1299 = vld [vmem:[%s1284 + $0x70] sm:$0xff]
        %v1300 = vld [vmem:[%s1284 + $0x78] sm:$0xff]
        %1301 = vst [vmem:[#allocation1] ss:$9 sm:$0xff] %v247
        %s1303 = scalar_lea.vmem [#allocation1], 1
        %1304 = vst [vmem:[%s1303] ss:$9 sm:$0xff] %v248
        %v1305 = vld [vmem:[#allocation1] sm:$0xff]
        %v1323 = vunpack.c.l.b16 %v1285
        %v1324 = vunpack.c.h.b16 %v1285
        %v1325 = vunpack.c.l.b16 %v1286
        %v1326 = vunpack.c.h.b16 %v1286
        %v1327 = vunpack.c.l.b16 %v1287
        %v1328 = vunpack.c.h.b16 %v1287
        %v1329 = vunpack.c.l.b16 %v1288
        %v1330 = vunpack.c.h.b16 %v1288
        %v1331 = vunpack.c.l.b16 %v1289
        %v1332 = vunpack.c.h.b16 %v1289
        %v1333 = vunpack.c.l.b16 %v1290
        %v1334 = vunpack.c.h.b16 %v1290
        %v1335 = vunpack.c.l.b16 %v1291
        %v1336 = vunpack.c.h.b16 %v1291
        %v1337 = vunpack.c.l.b16 %v1292
        %v1338 = vunpack.c.h.b16 %v1292
        %v1339 = vunpack.c.l.b16 %v1293
        %v1340 = vunpack.c.h.b16 %v1293
        %v1341 = vunpack.c.l.b16 %v1294
        %v1342 = vunpack.c.h.b16 %v1294
        %v1343 = vunpack.c.l.b16 %v1295
        %v1344 = vunpack.c.h.b16 %v1295
        %v1345 = vunpack.c.l.b16 %v1296
        %v1346 = vunpack.c.h.b16 %v1296
        %v1347 = vunpack.c.l.b16 %v1297
        %v1348 = vunpack.c.h.b16 %v1297
        %v1349 = vunpack.c.l.b16 %v1298
        %v1350 = vunpack.c.h.b16 %v1298
        %v1351 = vunpack.c.l.b16 %v1299
        %v1352 = vunpack.c.h.b16 %v1299
        %v1353 = vunpack.c.l.b16 %v1300
        %v1354 = vunpack.c.h.b16 %v1300
        %v1355 = vpack.c.b16 %v1325, %v1323
        %v1356 = vpack.c.b16 %v1326, %v1324
        %v1357 = vpack.c.b16 %v1329, %v1327
        %v1358 = vpack.c.b16 %v1330, %v1328
        %v1359 = vpack.c.b16 %v1333, %v1331
        %v1360 = vpack.c.b16 %v1334, %v1332
        %v1361 = vpack.c.b16 %v1337, %v1335
        %v1362 = vpack.c.b16 %v1338, %v1336
        %v1363 = vpack.c.b16 %v1341, %v1339
        %v1364 = vpack.c.b16 %v1342, %v1340
        %v1365 = vpack.c.b16 %v1345, %v1343
        %v1366 = vpack.c.b16 %v1346, %v1344
        %v1367 = vpack.c.b16 %v1349, %v1347
        %v1368 = vpack.c.b16 %v1350, %v1348
        %v1369 = vpack.c.b16 %v1353, %v1351
        %v1370 = vpack.c.b16 %v1354, %v1352
        %1387 = vmatpush.bf16.msra.mxu0 %v1369
        %1388 = vmatpush.bf16.msra.mxu0 %v1367
        %1389 = vmatpush.bf16.msra.mxu0 %v1365
        %1390 = vmatpush.bf16.msra.mxu0 %v1363
        %1391 = vmatpush.bf16.msra.mxu0 %v1361
        %1392 = vmatpush.bf16.msra.mxu0 %v1359
        %1393 = vmatpush.bf16.msra.mxu0 %v1357
        %1394 = vmatpush.bf16.msra.mxu0 %v1355
        %1395 = vmatmul.bf16.gmra.mxu0 %v1305
        %v1396 = vpop.f32.mrf.mxu0
        %v1397 = vadd.f32 0.0, %v1396
        %v1398 = vpop.f32.mrf.mxu0
        %1399 = vdwg.mxu0
        %1400 = vmatpush.bf16.msra.mxu0 %v1370
        %1401 = vmatpush.bf16.msra.mxu0 %v1368
        %1402 = vmatpush.bf16.msra.mxu0 %v1366
        %1403 = vmatpush.bf16.msra.mxu0 %v1364
        %1404 = vmatpush.bf16.msra.mxu0 %v1362
        %1405 = vmatpush.bf16.msra.mxu0 %v1360
        %1406 = vmatpush.bf16.msra.mxu0 %v1358
        %1407 = vmatpush.bf16.msra.mxu0 %v1356
        %1408 = vmatmul.bf16.gmra.mxu0 %v1305
        %v1409 = vpop.f32.mrf.mxu0
        %v1410 = vadd.f32 0.0, %v1409
        %v1411 = vpop.f32.mrf.mxu0
        %1412 = vdwg.mxu0
        %v1413 = vadd.f32 %v1282, %v1397
        %v1414 = vadd.f32 %v1283, %v1410
        %v1416 = vrot.slane %v245, 1
        %v1417 = vrot.slane %v245, 2
        %v1418 = vrot.slane %v245, 3
        %v1420 = vsel %vm520, %v245, %v1416
        %v1423 = vsel %vm523, %v1417, %v1418
        %v1424 = vsel %vm527, %v1420, %v1423
        %v1425 = vsel %vm529, %v245, %v1416
        %v1426 = vsel %vm531, %v1417, %v1418
        %v1427 = vsel %vm533, %v1425, %v1426
        %v1429 = vrot.slane %v1427, 1
        %v1430 = vshrl.u32 %v1424, 16
        %v1432 = vrot.slane %v1430, 7
        %v1433 = vrot.slane %v1432, 1
        %v1435 = vshll.u32 %v1429, 16
        %v1437 = vsel %vm562, %v1433, %v1435
        %s1438 = scalar_lea.vmem [#allocation2], 1024
        %v1439 = vld [vmem:[%s1438] sm:$0xff]
        %v1440 = vld [vmem:[%s1438 + $0x8] sm:$0xff]
        %v1441 = vld [vmem:[%s1438 + $0x10] sm:$0xff]
        %v1442 = vld [vmem:[%s1438 + $0x18] sm:$0xff]
        %v1443 = vld [vmem:[%s1438 + $0x20] sm:$0xff]
        %v1444 = vld [vmem:[%s1438 + $0x28] sm:$0xff]
        %v1445 = vld [vmem:[%s1438 + $0x30] sm:$0xff]
        %v1446 = vld [vmem:[%s1438 + $0x38] sm:$0xff]
        %v1447 = vld [vmem:[%s1438 + $0x40] sm:$0xff]
        %v1448 = vld [vmem:[%s1438 + $0x48] sm:$0xff]
        %v1449 = vld [vmem:[%s1438 + $0x50] sm:$0xff]
        %v1450 = vld [vmem:[%s1438 + $0x58] sm:$0xff]
        %v1451 = vld [vmem:[%s1438 + $0x60] sm:$0xff]
        %v1452 = vld [vmem:[%s1438 + $0x68] sm:$0xff]
        %v1453 = vld [vmem:[%s1438 + $0x70] sm:$0xff]
        %v1454 = vld [vmem:[%s1438 + $0x78] sm:$0xff]
        %1455 = vst [vmem:[#allocation1] ss:$9 sm:$0xff] %v578
        %s1457 = scalar_lea.vmem [#allocation1], 1
        %1458 = vst [vmem:[%s1457] ss:$9 sm:$0xff] %v1437
        %v1459 = vld [vmem:[#allocation1] sm:$0xff]
        %v1477 = vunpack.c.l.b16 %v1439
        %v1478 = vunpack.c.h.b16 %v1439
        %v1479 = vunpack.c.l.b16 %v1440
        %v1480 = vunpack.c.h.b16 %v1440
        %v1481 = vunpack.c.l.b16 %v1441
        %v1482 = vunpack.c.h.b16 %v1441
        %v1483 = vunpack.c.l.b16 %v1442
        %v1484 = vunpack.c.h.b16 %v1442
        %v1485 = vunpack.c.l.b16 %v1443
        %v1486 = vunpack.c.h.b16 %v1443
        %v1487 = vunpack.c.l.b16 %v1444
        %v1488 = vunpack.c.h.b16 %v1444
        %v1489 = vunpack.c.l.b16 %v1445
        %v1490 = vunpack.c.h.b16 %v1445
        %v1491 = vunpack.c.l.b16 %v1446
        %v1492 = vunpack.c.h.b16 %v1446
        %v1493 = vunpack.c.l.b16 %v1447
        %v1494 = vunpack.c.h.b16 %v1447
        %v1495 = vunpack.c.l.b16 %v1448
        %v1496 = vunpack.c.h.b16 %v1448
        %v1497 = vunpack.c.l.b16 %v1449
        %v1498 = vunpack.c.h.b16 %v1449
        %v1499 = vunpack.c.l.b16 %v1450
        %v1500 = vunpack.c.h.b16 %v1450
        %v1501 = vunpack.c.l.b16 %v1451
        %v1502 = vunpack.c.h.b16 %v1451
        %v1503 = vunpack.c.l.b16 %v1452
        %v1504 = vunpack.c.h.b16 %v1452
        %v1505 = vunpack.c.l.b16 %v1453
        %v1506 = vunpack.c.h.b16 %v1453
        %v1507 = vunpack.c.l.b16 %v1454
        %v1508 = vunpack.c.h.b16 %v1454
        %v1509 = vpack.c.b16 %v1479, %v1477
        %v1510 = vpack.c.b16 %v1480, %v1478
        %v1511 = vpack.c.b16 %v1483, %v1481
        %v1512 = vpack.c.b16 %v1484, %v1482
        %v1513 = vpack.c.b16 %v1487, %v1485
        %v1514 = vpack.c.b16 %v1488, %v1486
        %v1515 = vpack.c.b16 %v1491, %v1489
        %v1516 = vpack.c.b16 %v1492, %v1490
        %v1517 = vpack.c.b16 %v1495, %v1493
        %v1518 = vpack.c.b16 %v1496, %v1494
        %v1519 = vpack.c.b16 %v1499, %v1497
        %v1520 = vpack.c.b16 %v1500, %v1498
        %v1521 = vpack.c.b16 %v1503, %v1501
        %v1522 = vpack.c.b16 %v1504, %v1502
        %v1523 = vpack.c.b16 %v1507, %v1505
        %v1524 = vpack.c.b16 %v1508, %v1506
        %1541 = vmatpush.bf16.msra.mxu0 %v1523
        %1542 = vmatpush.bf16.msra.mxu0 %v1521
        %1543 = vmatpush.bf16.msra.mxu0 %v1519
        %1544 = vmatpush.bf16.msra.mxu0 %v1517
        %1545 = vmatpush.bf16.msra.mxu0 %v1515
        %1546 = vmatpush.bf16.msra.mxu0 %v1513
        %1547 = vmatpush.bf16.msra.mxu0 %v1511
        %1548 = vmatpush.bf16.msra.mxu0 %v1509
        %1549 = vmatmul.bf16.gmra.mxu0 %v1459
        %v1550 = vpop.f32.mrf.mxu0
        %v1551 = vadd.f32 0.0, %v1550
        %v1552 = vpop.f32.mrf.mxu0
        %1553 = vdwg.mxu0
        %1554 = vmatpush.bf16.msra.mxu0 %v1524
        %1555 = vmatpush.bf16.msra.mxu0 %v1522
        %1556 = vmatpush.bf16.msra.mxu0 %v1520
        %1557 = vmatpush.bf16.msra.mxu0 %v1518
        %1558 = vmatpush.bf16.msra.mxu0 %v1516
        %1559 = vmatpush.bf16.msra.mxu0 %v1514
        %1560 = vmatpush.bf16.msra.mxu0 %v1512
        %1561 = vmatpush.bf16.msra.mxu0 %v1510
        %1562 = vmatmul.bf16.gmra.mxu0 %v1459
        %v1563 = vpop.f32.mrf.mxu0
        %v1564 = vadd.f32 0.0, %v1563
        %v1565 = vpop.f32.mrf.mxu0
        %1566 = vdwg.mxu0
        %v1567 = vadd.f32 %v1413, %v1551
        %v1568 = vadd.f32 %v1414, %v1564
        %v1569 = vld [vmem:[#allocation4] sm:$0x3]
        %v1571 = vperm.slane %v1569, 0
        %v1572 = vperm.slane %v1569, 1
        %v1575 = vadd.f32 %v1567, %v1571
        %v1576 = vadd.f32 %v1568, %v1572
        %vm1577 = vcmask 1043456
        %v1578 = vsel %vm1577, %v1575, 0.0
        %v1579 = vrot.slane %v1578, 4
        %v1580 = vadd.f32 %v1578, %v1579
        %v1581 = vrot.slane %v1580, 2
        %v1582 = vadd.f32 %v1580, %v1581
        %v1583 = vrot.slane %v1582, 1
        %v1584 = vadd.f32 %v1582, %v1583
        %v1585 = vsel %vm1577, %v1576, 0.0
        %v1586 = vrot.slane %v1585, 4
        %v1587 = vadd.f32 %v1585, %v1586
        %v1588 = vrot.slane %v1587, 2
        %v1589 = vadd.f32 %v1587, %v1588
        %v1590 = vrot.slane %v1589, 1
        %v1591 = vadd.f32 %v1589, %v1590
        %v1592 = vrcp.pop 4.0
        %v1593 = vmul.f32 4.0, %v1592
        %v1594 = vsub.f32 1.0, %v1593
        %v1595 = vmul.f32 %v1592, %v1594
        %v1596 = vadd.f32 %v1592, %v1595
        %vm1597 = vweird.f32 %v1592
        %v1598 = vsel %vm1597, %v1592, %v1596
        %v1599 = vmul.f32 %v1584, %v1598
        %v1600 = vmul.f32 %v1591, %v1598
        %v1601 = vmul.f32 %v1575, %v1575
        %v1602 = vmul.f32 %v1576, %v1576
        %v1603 = vsel %vm1577, %v1601, 0.0
        %v1604 = vrot.slane %v1603, 4
        %v1605 = vadd.f32 %v1603, %v1604
        %v1606 = vrot.slane %v1605, 2
        %v1607 = vadd.f32 %v1605, %v1606
        %v1608 = vrot.slane %v1607, 1
        %v1609 = vadd.f32 %v1607, %v1608
        %v1610 = vsel %vm1577, %v1602, 0.0
        %v1611 = vrot.slane %v1610, 4
        %v1612 = vadd.f32 %v1610, %v1611
        %v1613 = vrot.slane %v1612, 2
        %v1614 = vadd.f32 %v1612, %v1613
        %v1615 = vrot.slane %v1614, 1
        %v1616 = vadd.f32 %v1614, %v1615
        %v1617 = vmul.f32 %v1609, %v1598
        %v1618 = vmul.f32 %v1616, %v1598
        %v1619 = vmul.f32 %v1599, %v1599
        %v1620 = vmul.f32 %v1600, %v1600
        %v1621 = vsub.f32 %v1617, %v1619
        %v1622 = vsub.f32 %v1618, %v1620
        %v1623 = vsub.f32 %v1575, %v1599
        %v1624 = vsub.f32 %v1576, %v1600
        %v1625 = vmax.f32 %v1621, 0.0
        %v1626 = vmax.f32 %v1622, 0.0
        %v1627 = vadd.f32 %v1625, 1e-05
        %v1628 = vadd.f32 %v1626, 1e-05
        %v1629 = vrsqrt.pop %v1627
        %v1630 = vmul.f32 %v1629, %v1627
        %v1631 = vmul.f32 %v1630, %v1629
        %v1632 = vmul.f32 0.5, %v1631
        %v1633 = vsub.f32 1.5, %v1632
        %v1634 = vmul.f32 %v1629, %v1633
        %vm1635 = vweird.f32 %v1627
        %vm1636 = vweird.f32 %v1629
        %vm1637 = vmor %vm1635, %vm1636
        %v1638 = vsel %vm1637, %v1629, %v1634
        %v1639 = vrsqrt.pop %v1628
        %v1640 = vmul.f32 %v1639, %v1628
        %v1641 = vmul.f32 %v1640, %v1639
        %v1642 = vmul.f32 0.5, %v1641
        %v1643 = vsub.f32 1.5, %v1642
        %v1644 = vmul.f32 %v1639, %v1643
        %vm1645 = vweird.f32 %v1628
        %vm1646 = vweird.f32 %v1639
        %vm1647 = vmor %vm1645, %vm1646
        %v1648 = vsel %vm1647, %v1639, %v1644
        %v1649 = vmul.f32 %v1623, %v1638
        %v1650 = vmul.f32 %v1624, %v1648
        %vm1651 = vcmp.ge.f32.partialorder %v1649, 0.0
        %vm1652 = vcmp.ge.f32.partialorder %v1650, 0.0
        %v1653 = vmul.f32 %v1649, 0.2
        %v1654 = vmul.f32 %v1650, 0.2
        %v1655 = vsel %vm1651, %v1649, %v1653
        %v1656 = vsel %vm1652, %v1650, %v1654
        %v1657 = vpack.c.bf16 %v1656, %v1655
        %v1659 = vrot.slane %v1657, 2
        %v1662 = vsel %vm527, %v1657, %v1659
        %1664 = vst [vmem:[%s241] sm:$0xf] %v1662
        %s1665 = smul.u32 2, %s21
        %p1666 = scmp.lt.s32.totalorder %s20, 1
        %s1667 = scalar_select %p1666, %s20, 1
        %p1668 = scmp.lt.s32.totalorder %s1665, 1
        %s1669 = scalar_select %p1668, %s1665, 1
        %s1670 = smul.addr %s1667, 2
        %s1671 = sadd.s32 %s1669, %s1670
        %s1672 = smul.addr %s1671, 2
        %s1673 = scalar_lea.vmem %s3, %s1672
        // Predicated region
        $region41: #{discriminator_forward.7} parent=31 // pred_check
          %p1674 = pneg %p126
        $region42: #{discriminator_forward.7} parent=31 // pred_check_branch
          %1676 = sbr.rel (%p1674) target = $region44
        $region43: #{discriminator_forward.7} parent=31 // pred_region
          %s1677 = smul.u32 2, %s21
        $region44: #{discriminator_forward.7} parent=31 // pred_fallthru
          _
      $region32: #{discriminator_forward.7} parent=5 // pred_fallthru
        _
      %p1678 = scmp.le.s32.totalorder 2, %s11
      // Predicated region
      $region45: #{discriminator_forward.7} parent=5 // pred_check
        %p1679 = pneg %p1678
      $region46: #{discriminator_forward.7} parent=5 // pred_check_branch
        %1681 = sbr.rel (%p1679) target = $region48
      $region47: #{discriminator_forward.7} parent=5 // pred_region
        %s1682 = ssub.s32 %s11, 2
        // Predicated region
        $region49: #{discriminator_forward.7} parent=47 // pred_check
          %p1683 = pneg %p132
        $region50: #{discriminator_forward.7} parent=47 // pred_check_branch
          %1685 = sbr.rel (%p1683) target = $region52
        $region51: #{discriminator_forward.7} parent=47 // pred_region
          %s1686 = smul.u32 2, %s23
          %p1687 = scmp.lt.s32.totalorder %s22, 1
          %s1688 = scalar_select %p1687, %s22, 1
          %p1689 = scmp.lt.s32.totalorder %s1686, 1
          %s1690 = scalar_select %p1689, %s1686, 1
          %s1691 = smul.addr %s1688, 2
          %s1692 = sadd.s32 %s1690, %s1691
          %s1693 = smul.addr %s1692, 2
          %s1694 = scalar_lea.vmem %s3, %s1693
        $region52: #{discriminator_forward.7} parent=47 // pred_fallthru
          _
      $region48: #{discriminator_forward.7} parent=5 // pred_fallthru
        _
    $region6: #{discriminator_forward.7} parent=1 // loop_footer
      %s15 = sadd.s32 1, %s11
    $region7: #{discriminator_forward.7} parent=1 // loop_footer_branch
      %10 = sbr.rel target = $region3
    $region8: #{discriminator_forward.7} parent=1 // loop_exit
      _
    %1695 = vsyncpa [#allocation3], 1
    %s1696 = scalar_lea.sflag [#allocation3], 1
    %1697 = vsyncpa %s1696, 1
    %1698 = vsyncpa [#allocation5], 1

// kernel: discriminator_forward.8
$region0: #{discriminator_forward.8}
  #allocation0 [shape = 'u32[]', space=smem, size = 0x4, offset = 0x4, fixed_abs, tag = 'smem constant byte address 0x4 - core index']
  #allocation1 [shape = 'u32[72,128]{1,0:T(1,128)}', space=vmem, size = 0x9000, scoped, tag = 'internal scratch']
  %s0 = inlined_call_operand.vmem [shape: bf16[2,4,4,256], index: 0, kind: input, shape index: {}]
  %s1 = inlined_call_operand.hbm [shape: bf16[9,256,512], index: 1, kind: input, shape index: {}]
  %s2 = inlined_call_operand.hbm [shape: f32[1,512], index: 2, kind: input, shape index: {}]
  %s3 = inlined_call_operand.vmem [shape: bf16[2,4,512], index: 3, kind: output, shape index: {}]
  %s4 = sld [smem:[#allocation0]]
  $region53: #{discriminator_forward.8} parent=0
    _
  %s6 = ssub.s32 1, %s4
  %s7 = scalar_select 0, %s6, %s4
  $region1: #{discriminator_forward.8} parent=0
    #allocation2 [shape = 'u8[2359296]{0}', space=vmem, size = 0x240000, scoped, tag = 'input window, operand 1']
    #allocation3 [shape = 's32[2]{0}', space=sflag, size = 0x8, scoped, tag = 'scoped memory for discriminator_forward.8']
    #allocation4 [shape = 'u8[2048]{0}', space=vmem, size = 0x800, scoped, tag = 'input window, operand 2']
    #allocation5 [shape = 's32[2]{0}', space=sflag, size = 0x8, scoped, tag = 'scoped memory for discriminator_forward.8']
    %8 = vsyncpa [#allocation3], 0
    %s9 = scalar_lea.sflag [#allocation3], 1
    %10 = vsyncpa %s9, 0
    %11 = vsyncpa [#allocation5], 0
    %s12 = scalar_lea.sflag [#allocation5], 1
    %13 = vsyncpa %s12, 0
    loop: start=0, step=1, limit=6
    $region2: #{discriminator_forward.8} parent=1 // loop_pre_header
      _
    $region3: #{discriminator_forward.8} parent=1 // loop_header
      %s15 = sphi 0, %s19
      %p16 = scmp.ge.s32.totalorder %s15, 6
      %s22 = sphi 0, %s34
      %s23 = sphi 0, %s30
      %s24 = sphi 0, %s22
      %s25 = sphi 0, %s23
      %s26 = sphi 0, %s24
      %s27 = sphi 0, %s25
      %s37 = sphi 0, %s39
      %s40 = sphi 0, %s37
      %s41 = sphi 0, %s40
      %s57 = sphi 0, %s41
      %s63 = sphi 0, %s65
      %s66 = sphi 0, %s63
      %s67 = sphi 0, %s66
      %s83 = sphi 0, %s67
      %s89 = sphi 0, %s91
      %s92 = sphi 0, %s89
      %s93 = sphi 0, %s92
      %s109 = sphi 0, %s93
      %s117 = sphi 0, %s119
      %s120 = sphi 0, %s117
      %s121 = sphi 0, %s120
      %s137 = sphi 0, %s121
    $region4: #{discriminator_forward.8} parent=1 // loop_header_branch
      %18 = sbr.rel (%p16) target = $region8
    $region5: #{discriminator_forward.8} parent=1 // loop_body
      %s20 = ssub.s32 %s15, 1
      %s21 = ssub.s32 %s15, 2
      %s28 = sadd.s32 1, %s23
      %p29 = scmp.ge.s32.totalorder %s28, 2
      %s30 = scalar_select %p29, 0, %s28
      %s31 = sadd.s32 1, %s22
      %s32 = scalar_select %p29, %s31, %s22
      %p33 = scmp.ge.s32.totalorder %s32, 2
      %s34 = scalar_select %p33, 0, %s32
      %s35 = ssub.s32 %s22, %s34
      %p36 = scmp.eq.s32.totalorder %s35, 0
      %s38 = sadd.s32 %s37, 1
      %s39 = scalar_select %p36, %s37, %s38
      %p42 = pneg %p36
      %p43 = scmp.eq.s32.totalorder %s15, 3
      %p44 = por %p42, %p43
      %p45 = scmp.ne.s32.totalorder %s37, %s40
      %p46 = scmp.eq.s32.totalorder %s15, 0
      %p47 = por %p45, %p46
      %p48 = scmp.ne.s32.totalorder %s37, %s40
      %p49 = scmp.eq.s32.totalorder %s20, 3
      %p50 = por %p48, %p49
      %p51 = scmp.ne.s32.totalorder %s40, %s41
      %p52 = scmp.eq.s32.totalorder %s20, 0
      %p53 = por %p51, %p52
      %p54 = scmp.ne.s32.totalorder %s40, %s41
      %p55 = scmp.eq.s32.totalorder %s21, 3
      %p56 = por %p54, %p55
      %p58 = scmp.ne.s32.totalorder %s41, %s57
      %p59 = scmp.eq.s32.totalorder %s21, 0
      %p60 = por %p58, %p59
      %s61 = ssub.s32 %s23, %s30
      %p62 = scmp.eq.s32.totalorder %s61, 0
      %s64 = sadd.s32 %s63, 1
      %s65 = scalar_select %p62, %s63, %s64
      %p68 = pneg %p62
      %p69 = scmp.eq.s32.totalorder %s15, 3
      %p70 = por %p68, %p69
      %p71 = scmp.ne.s32.totalorder %s63, %s66
      %p72 = scmp.eq.s32.totalorder %s15, 0
      %p73 = por %p71, %p72
      %p74 = scmp.ne.s32.totalorder %s63, %s66
      %p75 = scmp.eq.s32.totalorder %s20, 3
      %p76 = por %p74, %p75
      %p77 = scmp.ne.s32.totalorder %s66, %s67
      %p78 = scmp.eq.s32.totalorder %s20, 0
      %p79 = por %p77, %p78
      %p80 = scmp.ne.s32.totalorder %s66, %s67
      %p81 = scmp.eq.s32.totalorder %s21, 3
      %p82 = por %p80, %p81
      %p84 = scmp.ne.s32.totalorder %s67, %s83
      %p85 = scmp.eq.s32.totalorder %s21, 0
      %p86 = por %p84, %p85
      %s87 = ssub.s32 %s23, %s30
      %p88 = scmp.eq.s32.totalorder %s87, 0
      %s90 = sadd.s32 %s89, 1
      %s91 = scalar_select %p88, %s89, %s90
      %p94 = pneg %p88
      %p95 = scmp.eq.s32.totalorder %s15, 3
      %p96 = por %p94, %p95
      %p97 = scmp.ne.s32.totalorder %s89, %s92
      %p98 = scmp.eq.s32.totalorder %s15, 0
      %p99 = por %p97, %p98
      %p100 = scmp.ne.s32.totalorder %s89, %s92
      %p101 = scmp.eq.s32.totalorder %s20, 3
      %p102 = por %p100, %p101
      %p103 = scmp.ne.s32.totalorder %s92, %s93
      %p104 = scmp.eq.s32.totalorder %s20, 0
      %p105 = por %p103, %p104
      %p106 = scmp.ne.s32.totalorder %s92, %s93
      %p107 = scmp.eq.s32.totalorder %s21, 3
      %p108 = por %p106, %p107
      %p110 = scmp.ne.s32.totalorder %s93, %s109
      %p111 = scmp.eq.s32.totalorder %s21, 0
      %p112 = por %p110, %p111
      %s113 = ssub.s32 %s22, %s34
      %s114 = ssub.s32 %s23, %s30
      %s115 = sor.u32 %s113, %s114
      %p116 = scmp.eq.s32.totalorder %s115, 0
      %s118 = sadd.s32 %s117, 1
      %s119 = scalar_select %p116, %s117, %s118
      %p122 = pneg %p116
      %p123 = scmp.eq.s32.totalorder %s15, 3
      %p124 = por %p122, %p123
      %p125 = scmp.ne.s32.totalorder %s117, %s120
      %p126 = scmp.eq.s32.totalorder %s15, 0
      %p127 = por %p125, %p126
      %p128 = scmp.ne.s32.totalorder %s117, %s120
      %p129 = scmp.eq.s32.totalorder %s20, 3
      %p130 = por %p128, %p129
      %p131 = scmp.ne.s32.totalorder %s120, %s121
      %p132 = scmp.eq.s32.totalorder %s20, 0
      %p133 = por %p131, %p132
      %p134 = scmp.ne.s32.totalorder %s120, %s121
      %p135 = scmp.eq.s32.totalorder %s21, 3
      %p136 = por %p134, %p135
      %p138 = scmp.ne.s32.totalorder %s121, %s137
      %p139 = scmp.eq.s32.totalorder %s21, 0
      %p140 = por %p138, %p139
      %p141 = scmp.le.s32.totalorder 1, %s15
      %p142 = scmp.lt.s32.totalorder %s15, 5
      %p143 = pnand %p141, %p142
      %p144 = pneg %p143
      // Predicated region
      $region9: #{discriminator_forward.8} parent=5 // pred_check
        _
      $region10: #{discriminator_forward.8} parent=5 // pred_check_branch
        %146 = sbr.rel (%p143) target = $region12
      $region11: #{discriminator_forward.8} parent=5 // pred_region
        %s147 = ssub.s32 %s15, 1
      $region12: #{discriminator_forward.8} parent=5 // pred_fallthru
        _
      %p148 = scmp.lt.s32.totalorder %s15, 4
      // Predicated region
      $region13: #{discriminator_forward.8} parent=5 // pred_check
        %p149 = pneg %p148
      $region14: #{discriminator_forward.8} parent=5 // pred_check_branch
        %151 = sbr.rel (%p149) target = $region16
      $region15: #{discriminator_forward.8} parent=5 // pred_region
        // Predicated region
        $region17: #{discriminator_forward.8} parent=15 // pred_check
          %p152 = pneg %p47
        $region18: #{discriminator_forward.8} parent=15 // pred_check_branch
          %154 = sbr.rel (%p152) target = $region20
        $region19: #{discriminator_forward.8} parent=15 // pred_region
          %p155 = scmp.lt.s32.totalorder %s22, 1
          %s156 = scalar_select %p155, %s22, 1
          %s157 = smul.addr %s156, 8
          %s158 = smul.addr %s157, 2
          %s159 = scalar_lea.vmem %s0, %s158
        $region20: #{discriminator_forward.8} parent=15 // pred_fallthru
          _
        // Predicated region
        $region21: #{discriminator_forward.8} parent=15 // pred_check
          %p160 = pneg %p73
        $region22: #{discriminator_forward.8} parent=15 // pred_check_branch
          %162 = sbr.rel (%p160) target = $region24
        $region23: #{discriminator_forward.8} parent=15 // pred_region
          %s163 = sand.u32 %s63, 1
          %s164 = scalar_lea.sflag [#allocation3], %s163
          %s165 = sand.u32 %s63, 1
          %s166 = smul.addr %s165, 2304
          %s167 = scalar_lea.vmem [#allocation2], %s166
          %s168 = smul.u32 2, %s23
          %170 = vsyncadd %s164, 0
          %s171 = smul.addr %s168, 4
          %s172 = scalar_lea.hbm %s1, %s171
          %s173 = sshll.u32 %s172, 4
          %s174 = int_to_ptr.hbm [resolvable:$true] %s173
          %s175 = sshll.u32 %s167, 4
          %s176 = int_to_ptr.vmem [resolvable:$true] %s175
          %181 = dma.hbm_to_vmem [thread:$0]  %s174, 36864, %s176, %s164, 256, 128, 8
        $region24: #{discriminator_forward.8} parent=15 // pred_fallthru
          _
        // Predicated region
        $region25: #{discriminator_forward.8} parent=15 // pred_check
          %p182 = pneg %p99
        $region26: #{discriminator_forward.8} parent=15 // pred_check_branch
          %184 = sbr.rel (%p182) target = $region28
        $region27: #{discriminator_forward.8} parent=15 // pred_region
          %s185 = sand.u32 %s89, 1
          %s186 = scalar_lea.sflag [#allocation5], %s185
          %s187 = sand.u32 %s89, 1
          %s188 = smul.addr %s187, 2
          %s189 = scalar_lea.vmem [#allocation4], %s188
          %s190 = smul.u32 2, %s23
          %192 = vsyncadd %s186, 0
          %s193 = scalar_lea.hbm %s2, %s190
          %s195 = sshll.u32 %s193, 4
          %s196 = int_to_ptr.hbm [resolvable:$true] %s195
          %s197 = sshll.u32 %s189, 4
          %s198 = int_to_ptr.vmem [resolvable:$true] %s197
          %200 = dma.hbm_to_vmem [thread:$0]  %s196, 32, %s198, %s186
        $region28: #{discriminator_forward.8} parent=15 // pred_fallthru
          _
      $region16: #{discriminator_forward.8} parent=5 // pred_fallthru
        _
      %p201 = scmp.le.s32.totalorder 1, %s15
      %p202 = scmp.lt.s32.totalorder %s15, 5
      %p203 = pnand %p201, %p202
      %p204 = pneg %p203
      // Predicated region
      $region29: #{discriminator_forward.8} parent=5 // pred_check
        _
      $region30: #{discriminator_forward.8} parent=5 // pred_check_branch
        %206 = sbr.rel (%p203) target = $region32
      $region31: #{discriminator_forward.8} parent=5 // pred_region
        %s207 = ssub.s32 %s15, 1
        %s208 = sand.u32 %s66, 1
        %s209 = scalar_lea.sflag [#allocation3], %s208
        %s210 = sand.u32 %s66, 1
        %s211 = smul.addr %s210, 2304
        %s212 = scalar_lea.vmem [#allocation2], %s211
        // Predicated region
        $region33: #{discriminator_forward.8} parent=31 // pred_check
          %p213 = pneg %p79
        $region34: #{discriminator_forward.8} parent=31 // pred_check_branch
          %215 = sbr.rel (%p213) target = $region36
        $region35: #{discriminator_forward.8} parent=31 // pred_region
          %217 = dma.done %s209, 36864
        $region36: #{discriminator_forward.8} parent=31 // pred_fallthru
          _
        %s218 = sand.u32 %s92, 1
        %s219 = scalar_lea.sflag [#allocation5], %s218
        %s220 = sand.u32 %s92, 1
        %s221 = smul.addr %s220, 2
        %s222 = scalar_lea.vmem [#allocation4], %s221
        // Predicated region
        $region37: #{discriminator_forward.8} parent=31 // pred_check
          %p223 = pneg %p105
        $region38: #{discriminator_forward.8} parent=31 // pred_check_branch
          %225 = sbr.rel (%p223) target = $region40
        $region39: #{discriminator_forward.8} parent=31 // pred_region
          %227 = dma.done %s219, 32
        $region40: #{discriminator_forward.8} parent=31 // pred_fallthru
          _
        %p228 = scmp.lt.s32.totalorder %s24, 1
        %s229 = scalar_select %p228, %s24, 1
        %s230 = smul.addr %s229, 8
        %s231 = smul.addr %s230, 2
        %s232 = scalar_lea.vmem %s0, %s231
        %p233 = pneg %p53
        %p234 = pneg %p50
        %s235 = sand.u32 %s66, 1
        %s236 = scalar_lea.sflag [#allocation3], %s235
        %s237 = sand.u32 %s66, 1
        %s238 = smul.addr %s237, 2304
        %s239 = scalar_lea.vmem [#allocation2], %s238
        %p240 = pneg %p79
        %p241 = pneg %p76
        %s242 = sand.u32 %s92, 1
        %s243 = scalar_lea.sflag [#allocation5], %s242
        %s244 = sand.u32 %s92, 1
        %s245 = smul.addr %s244, 2
        %s246 = scalar_lea.vmem [#allocation4], %s245
        %p247 = pneg %p105
        %p248 = pneg %p102
        %p249 = pneg %p133
        %p250 = pneg %p130
        %s251 = smul.u32 2, %s25
        %p252 = scmp.lt.s32.totalorder %s24, 1
        %s253 = scalar_select %p252, %s24, 1
        %p254 = scmp.lt.s32.totalorder %s251, 3
        %s255 = scalar_select %p254, %s251, 3
        %s256 = smul.addr %s253, 4
        %s257 = sadd.s32 %s255, %s256
        %s258 = smul.addr %s257, 2
        %s259 = scalar_lea.vmem %s3, %s258
        %p260 = scmp.lt.s32.totalorder %s24, 1
        %s261 = scalar_select %p260, %s24, 1
        %s262 = smul.addr %s261, 8
        %s263 = smul.addr %s262, 2
        %s264 = scalar_lea.vmem %s0, %s263
        %s265 = smul.u32 2, %s25
        %s266 = smul.u32 2, %s25
        %s267 = smul.u32 2, %s25
        %p268 = scmp.lt.s32.totalorder %s24, 1
        %s269 = scalar_select %p268, %s24, 1
        %p270 = scmp.lt.s32.totalorder %s267, 3
        %s271 = scalar_select %p270, %s267, 3
        %s272 = smul.addr %s269, 4
        %s273 = sadd.s32 %s271, %s272
        %s274 = smul.addr %s273, 2
        %s275 = scalar_lea.vmem %s3, %s274
        %s276 = smul.u32 2, %s25
        %v277 = vld [vmem:[%s264] sm:$0xf]
        %v278 = vld [vmem:[%s264 + $0x4] sm:$0xf]
        %v279 = vld [vmem:[%s264 + $0x8] sm:$0xf]
        %v280 = vld [vmem:[%s264 + $0xc] sm:$0xf]
        %v283 = vrot.slane %v277, 1
        %v284 = vrot.slane %v277, 2
        %v285 = vrot.slane %v277, 3
        %v286 = vrot.slane %v278, 1
        %v287 = vrot.slane %v278, 2
        %v288 = vrot.slane %v278, 3
        %vm289 = vcmask 1040384
        %v292 = vsel %vm289, %v277, %v283
        %vm293 = vcmask 1042434
        %v296 = vsel %vm293, %v284, %v285
        %vm297 = vcmask 1041408
        %v298 = vsel %vm297, %v292, %v296
        %v301 = vsel %vm289, %v278, %v286
        %v304 = vsel %vm293, %v287, %v288
        %v305 = vsel %vm297, %v301, %v304
        %v306 = vld [vmem:[%s212] sm:$0xff]
        %v307 = vld [vmem:[%s212 + $0x8] sm:$0xff]
        %v308 = vld [vmem:[%s212 + $0x10] sm:$0xff]
        %v309 = vld [vmem:[%s212 + $0x18] sm:$0xff]
        %v310 = vld [vmem:[%s212 + $0x20] sm:$0xff]
        %v311 = vld [vmem:[%s212 + $0x28] sm:$0xff]
        %v312 = vld [vmem:[%s212 + $0x30] sm:$0xff]
        %v313 = vld [vmem:[%s212 + $0x38] sm:$0xff]
        %v314 = vld [vmem:[%s212 + $0x40] sm:$0xff]
        %v315 = vld [vmem:[%s212 + $0x48] sm:$0xff]
        %v316 = vld [vmem:[%s212 + $0x50] sm:$0xff]
        %v317 = vld [vmem:[%s212 + $0x58] sm:$0xff]
        %v318 = vld [vmem:[%s212 + $0x60] sm:$0xff]
        %v319 = vld [vmem:[%s212 + $0x68] sm:$0xff]
        %v320 = vld [vmem:[%s212 + $0x70] sm:$0xff]
        %v321 = vld [vmem:[%s212 + $0x78] sm:$0xff]
        %v322 = vld [vmem:[%s212 + $0x80] sm:$0xff]
        %v323 = vld [vmem:[%s212 + $0x88] sm:$0xff]
        %v324 = vld [vmem:[%s212 + $0x90] sm:$0xff]
        %v325 = vld [vmem:[%s212 + $0x98] sm:$0xff]
        %v326 = vld [vmem:[%s212 + $0xa0] sm:$0xff]
        %v327 = vld [vmem:[%s212 + $0xa8] sm:$0xff]
        %v328 = vld [vmem:[%s212 + $0xb0] sm:$0xff]
        %v329 = vld [vmem:[%s212 + $0xb8] sm:$0xff]
        %v330 = vld [vmem:[%s212 + $0xc0] sm:$0xff]
        %v331 = vld [vmem:[%s212 + $0xc8] sm:$0xff]
        %v332 = vld [vmem:[%s212 + $0xd0] sm:$0xff]
        %v333 = vld [vmem:[%s212 + $0xd8] sm:$0xff]
        %v334 = vld [vmem:[%s212 + $0xe0] sm:$0xff]
        %v335 = vld [vmem:[%s212 + $0xe8] sm:$0xff]
        %v336 = vld [vmem:[%s212 + $0xf0] sm:$0xff]
        %v337 = vld [vmem:[%s212 + $0xf8] sm:$0xff]
        %vm338 = vcmask 1041409
        %v339 = vsel %vm338, %v277, %v283
        %vm340 = vcmask 1043459
        %v341 = vsel %vm340, %v284, %v285
        %vm342 = vcmask 1042433
        %v343 = vsel %vm342, %v339, %v341
        %v345 = vrot.slane %v343, 1
        %v346 = vsel %vm338, %v278, %v286
        %v347 = vsel %vm340, %v287, %v288
        %v348 = vsel %vm342, %v346, %v347
        %v350 = vrot.slane %v348, 1
        %vm351 = vsmask.f32 256
        %vm352 = vsmask.f32 1284
        %vm353 = vmor %vm351, %vm352
        %vm354 = vsmask.f32 2312
        %vm355 = vmor %vm353, %vm354
        %vm356 = vsmask.f32 3340
        %vm357 = vmor %vm355, %vm356
        %vm358 = vsmask.f32 4368
        %vm359 = vmor %vm357, %vm358
        %vm360 = vsmask.f32 5396
        %vm361 = vmor %vm359, %vm360
        %vm362 = vsmask.f32 6424
        %vm363 = vmor %vm361, %vm362
        %vm364 = vsmask.f32 7452
        %vm365 = vmor %vm363, %vm364
        %v366 = vshrl.u32 %v298, 16
        %v368 = vrot.slane %v366, 7
        %v369 = vrot.slane %v368, 1
        %v371 = vshll.u32 %v345, 16
        %v373 = vsel %vm365, %v369, %v371
        %v374 = vshrl.u32 %v305, 16
        %v376 = vrot.slane %v374, 7
        %v377 = vrot.slane %v376, 1
        %v379 = vshll.u32 %v350, 16
        %v381 = vsel %vm365, %v377, %v379
        %s382 = scalar_lea.vmem %s212, 256 [#allocation2]
        %v383 = vld [vmem:[%s382] sm:$0xff]
        %v384 = vld [vmem:[%s382 + $0x8] sm:$0xff]
        %v385 = vld [vmem:[%s382 + $0x10] sm:$0xff]
        %v386 = vld [vmem:[%s382 + $0x18] sm:$0xff]
        %v387 = vld [vmem:[%s382 + $0x20] sm:$0xff]
        %v388 = vld [vmem:[%s382 + $0x28] sm:$0xff]
        %v389 = vld [vmem:[%s382 + $0x30] sm:$0xff]
        %v390 = vld [vmem:[%s382 + $0x38] sm:$0xff]
        %v391 = vld [vmem:[%s382 + $0x40] sm:$0xff]
        %v392 = vld [vmem:[%s382 + $0x48] sm:$0xff]
        %v393 = vld [vmem:[%s382 + $0x50] sm:$0xff]
        %v394 = vld [vmem:[%s382 + $0x58] sm:$0xff]
        %v395 = vld [vmem:[%s382 + $0x60] sm:$0xff]
        %v396 = vld [vmem:[%s382 + $0x68] sm:$0xff]
        %v397 = vld [vmem:[%s382 + $0x70] sm:$0xff]
        %v398 = vld [vmem:[%s382 + $0x78] sm:$0xff]
        %v399 = vld [vmem:[%s382 + $0x80] sm:$0xff]
        %v400 = vld [vmem:[%s382 + $0x88] sm:$0xff]
        %v401 = vld [vmem:[%s382 + $0x90] sm:$0xff]
        %v402 = vld [vmem:[%s382 + $0x98] sm:$0xff]
        %v403 = vld [vmem:[%s382 + $0xa0] sm:$0xff]
        %v404 = vld [vmem:[%s382 + $0xa8] sm:$0xff]
        %v405 = vld [vmem:[%s382 + $0xb0] sm:$0xff]
        %v406 = vld [vmem:[%s382 + $0xb8] sm:$0xff]
        %v407 = vld [vmem:[%s382 + $0xc0] sm:$0xff]
        %v408 = vld [vmem:[%s382 + $0xc8] sm:$0xff]
        %v409 = vld [vmem:[%s382 + $0xd0] sm:$0xff]
        %v410 = vld [vmem:[%s382 + $0xd8] sm:$0xff]
        %v411 = vld [vmem:[%s382 + $0xe0] sm:$0xff]
        %v412 = vld [vmem:[%s382 + $0xe8] sm:$0xff]
        %v413 = vld [vmem:[%s382 + $0xf0] sm:$0xff]
        %v414 = vld [vmem:[%s382 + $0xf8] sm:$0xff]
        %416 = vst [vmem:[#allocation1] ss:$9 sm:$0xff] %v373
        %s418 = scalar_lea.vmem [#allocation1], 1
        %419 = vst [vmem:[%s418] ss:$9 sm:$0xff] %v381
        %v420 = vld [vmem:[#allocation1] sm:$0xff]
        %v421 = vld [vmem:[#allocation1 + $0x9] sm:$0xff]
        %v456 = vunpack.c.l.b16 %v383
        %v457 = vunpack.c.h.b16 %v383
        %v458 = vunpack.c.l.b16 %v384
        %v459 = vunpack.c.h.b16 %v384
        %v460 = vunpack.c.l.b16 %v385
        %v461 = vunpack.c.h.b16 %v385
        %v462 = vunpack.c.l.b16 %v386
        %v463 = vunpack.c.h.b16 %v386
        %v464 = vunpack.c.l.b16 %v387
        %v465 = vunpack.c.h.b16 %v387
        %v466 = vunpack.c.l.b16 %v388
        %v467 = vunpack.c.h.b16 %v388
        %v468 = vunpack.c.l.b16 %v389
        %v469 = vunpack.c.h.b16 %v389
        %v470 = vunpack.c.l.b16 %v390
        %v471 = vunpack.c.h.b16 %v390
        %v472 = vunpack.c.l.b16 %v391
        %v473 = vunpack.c.h.b16 %v391
        %v474 = vunpack.c.l.b16 %v392
        %v475 = vunpack.c.h.b16 %v392
        %v476 = vunpack.c.l.b16 %v393
        %v477 = vunpack.c.h.b16 %v393
        %v478 = vunpack.c.l.b16 %v394
        %v479 = vunpack.c.h.b16 %v394
        %v480 = vunpack.c.l.b16 %v395
        %v481 = vunpack.c.h.b16 %v395
        %v482 = vunpack.c.l.b16 %v396
        %v483 = vunpack.c.h.b16 %v396
        %v484 = vunpack.c.l.b16 %v397
        %v485 = vunpack.c.h.b16 %v397
        %v486 = vunpack.c.l.b16 %v398
        %v487 = vunpack.c.h.b16 %v398
        %v488 = vunpack.c.l.b16 %v399
        %v489 = vunpack.c.h.b16 %v399
        %v490 = vunpack.c.l.b16 %v400
        %v491 = vunpack.c.h.b16 %v400
        %v492 = vunpack.c.l.b16 %v401
        %v493 = vunpack.c.h.b16 %v401
        %v494 = vunpack.c.l.b16 %v402
        %v495 = vunpack.c.h.b16 %v402
        %v496 = vunpack.c.l.b16 %v403
        %v497 = vunpack.c.h.b16 %v403
        %v498 = vunpack.c.l.b16 %v404
        %v499 = vunpack.c.h.b16 %v404
        %v500 = vunpack.c.l.b16 %v405
        %v501 = vunpack.c.h.b16 %v405
        %v502 = vunpack.c.l.b16 %v406
        %v503 = vunpack.c.h.b16 %v406
        %v504 = vunpack.c.l.b16 %v407
        %v505 = vunpack.c.h.b16 %v407
        %v506 = vunpack.c.l.b16 %v408
        %v507 = vunpack.c.h.b16 %v408
        %v508 = vunpack.c.l.b16 %v409
        %v509 = vunpack.c.h.b16 %v409
        %v510 = vunpack.c.l.b16 %v410
        %v511 = vunpack.c.h.b16 %v410
        %v512 = vunpack.c.l.b16 %v411
        %v513 = vunpack.c.h.b16 %v411
        %v514 = vunpack.c.l.b16 %v412
        %v515 = vunpack.c.h.b16 %v412
        %v516 = vunpack.c.l.b16 %v413
        %v517 = vunpack.c.h.b16 %v413
        %v518 = vunpack.c.l.b16 %v414
        %v519 = vunpack.c.h.b16 %v414
        %v520 = vpack.c.b16 %v458, %v456
        %v521 = vpack.c.b16 %v459, %v457
        %v522 = vpack.c.b16 %v462, %v460
        %v523 = vpack.c.b16 %v463, %v461
        %v524 = vpack.c.b16 %v466, %v464
        %v525 = vpack.c.b16 %v467, %v465
        %v526 = vpack.c.b16 %v470, %v468
        %v527 = vpack.c.b16 %v471, %v469
        %v528 = vpack.c.b16 %v474, %v472
        %v529 = vpack.c.b16 %v475, %v473
        %v530 = vpack.c.b16 %v478, %v476
        %v531 = vpack.c.b16 %v479, %v477
        %v532 = vpack.c.b16 %v482, %v480
        %v533 = vpack.c.b16 %v483, %v481
        %v534 = vpack.c.b16 %v486, %v484
        %v535 = vpack.c.b16 %v487, %v485
        %v536 = vpack.c.b16 %v490, %v488
        %v537 = vpack.c.b16 %v491, %v489
        %v538 = vpack.c.b16 %v494, %v492
        %v539 = vpack.c.b16 %v495, %v493
        %v540 = vpack.c.b16 %v498, %v496
        %v541 = vpack.c.b16 %v499, %v497
        %v542 = vpack.c.b16 %v502, %v500
        %v543 = vpack.c.b16 %v503, %v501
        %v544 = vpack.c.b16 %v506, %v504
        %v545 = vpack.c.b16 %v507, %v505
        %v546 = vpack.c.b16 %v510, %v508
        %v547 = vpack.c.b16 %v511, %v509
        %v548 = vpack.c.b16 %v514, %v512
        %v549 = vpack.c.b16 %v515, %v513
        %v550 = vpack.c.b16 %v518, %v516
        %v551 = vpack.c.b16 %v519, %v517
        %584 = vmatpush.bf16.msra.mxu0 %v534
        %585 = vmatpush.bf16.msra.mxu0 %v532
        %586 = vmatpush.bf16.msra.mxu0 %v530
        %587 = vmatpush.bf16.msra.mxu0 %v528
        %588 = vmatpush.bf16.msra.mxu0 %v526
        %589 = vmatpush.bf16.msra.mxu0 %v524
        %590 = vmatpush.bf16.msra.mxu0 %v522
        %591 = vmatpush.bf16.msra.mxu0 %v520
        %592 = vmatmul.bf16.gmra.mxu0 %v420
        %v593 = vpop.f32.mrf.mxu0
        %v594 = vadd.f32 0.0, %v593
        %v595 = vpop.f32.mrf.mxu0
        %596 = vdwg.mxu0
        %597 = vmatpush.bf16.msra.mxu0 %v550
        %598 = vmatpush.bf16.msra.mxu0 %v548
        %599 = vmatpush.bf16.msra.mxu0 %v546
        %600 = vmatpush.bf16.msra.mxu0 %v544
        %601 = vmatpush.bf16.msra.mxu0 %v542
        %602 = vmatpush.bf16.msra.mxu0 %v540
        %603 = vmatpush.bf16.msra.mxu0 %v538
        %604 = vmatpush.bf16.msra.mxu0 %v536
        %605 = vmatmul.bf16.gmra.mxu0 %v421
        %v606 = vpop.f32.mrf.mxu0
        %v607 = vadd.f32 %v594, %v606
        %v608 = vpop.f32.mrf.mxu0
        %609 = vdwg.mxu0
        %610 = vmatpush.bf16.msra.mxu0 %v535
        %611 = vmatpush.bf16.msra.mxu0 %v533
        %612 = vmatpush.bf16.msra.mxu0 %v531
        %613 = vmatpush.bf16.msra.mxu0 %v529
        %614 = vmatpush.bf16.msra.mxu0 %v527
        %615 = vmatpush.bf16.msra.mxu0 %v525
        %616 = vmatpush.bf16.msra.mxu0 %v523
        %617 = vmatpush.bf16.msra.mxu0 %v521
        %618 = vmatmul.bf16.gmra.mxu0 %v420
        %v619 = vpop.f32.mrf.mxu0
        %v620 = vadd.f32 0.0, %v619
        %v621 = vpop.f32.mrf.mxu0
        %622 = vdwg.mxu0
        %623 = vmatpush.bf16.msra.mxu0 %v551
        %624 = vmatpush.bf16.msra.mxu0 %v549
        %625 = vmatpush.bf16.msra.mxu0 %v547
        %626 = vmatpush.bf16.msra.mxu0 %v545
        %627 = vmatpush.bf16.msra.mxu0 %v543
        %628 = vmatpush.bf16.msra.mxu0 %v541
        %629 = vmatpush.bf16.msra.mxu0 %v539
        %630 = vmatpush.bf16.msra.mxu0 %v537
        %631 = vmatmul.bf16.gmra.mxu0 %v421
        %v632 = vpop.f32.mrf.mxu0
        %v633 = vadd.f32 %v620, %v632
        %v634 = vpop.f32.mrf.mxu0
        %635 = vdwg.mxu0
        %636 = vst [vmem:[#allocation1] ss:$9 sm:$0xff] %v298
        %s637 = scalar_lea.vmem [#allocation1], 1
        %638 = vst [vmem:[%s637] ss:$9 sm:$0xff] %v305
        %v639 = vld [vmem:[#allocation1] sm:$0xff]
        %v640 = vld [vmem:[#allocation1 + $0x9] sm:$0xff]
        %v675 = vunpack.c.l.b16 %v306
        %v676 = vunpack.c.h.b16 %v306
        %v677 = vunpack.c.l.b16 %v307
        %v678 = vunpack.c.h.b16 %v307
        %v679 = vunpack.c.l.b16 %v308
        %v680 = vunpack.c.h.b16 %v308
        %v681 = vunpack.c.l.b16 %v309
        %v682 = vunpack.c.h.b16 %v309
        %v683 = vunpack.c.l.b16 %v310
        %v684 = vunpack.c.h.b16 %v310
        %v685 = vunpack.c.l.b16 %v311
        %v686 = vunpack.c.h.b16 %v311
        %v687 = vunpack.c.l.b16 %v312
        %v688 = vunpack.c.h.b16 %v312
        %v689 = vunpack.c.l.b16 %v313
        %v690 = vunpack.c.h.b16 %v313
        %v691 = vunpack.c.l.b16 %v314
        %v692 = vunpack.c.h.b16 %v314
        %v693 = vunpack.c.l.b16 %v315
        %v694 = vunpack.c.h.b16 %v315
        %v695 = vunpack.c.l.b16 %v316
        %v696 = vunpack.c.h.b16 %v316
        %v697 = vunpack.c.l.b16 %v317
        %v698 = vunpack.c.h.b16 %v317
        %v699 = vunpack.c.l.b16 %v318
        %v700 = vunpack.c.h.b16 %v318
        %v701 = vunpack.c.l.b16 %v319
        %v702 = vunpack.c.h.b16 %v319
        %v703 = vunpack.c.l.b16 %v320
        %v704 = vunpack.c.h.b16 %v320
        %v705 = vunpack.c.l.b16 %v321
        %v706 = vunpack.c.h.b16 %v321
        %v707 = vunpack.c.l.b16 %v322
        %v708 = vunpack.c.h.b16 %v322
        %v709 = vunpack.c.l.b16 %v323
        %v710 = vunpack.c.h.b16 %v323
        %v711 = vunpack.c.l.b16 %v324
        %v712 = vunpack.c.h.b16 %v324
        %v713 = vunpack.c.l.b16 %v325
        %v714 = vunpack.c.h.b16 %v325
        %v715 = vunpack.c.l.b16 %v326
        %v716 = vunpack.c.h.b16 %v326
        %v717 = vunpack.c.l.b16 %v327
        %v718 = vunpack.c.h.b16 %v327
        %v719 = vunpack.c.l.b16 %v328
        %v720 = vunpack.c.h.b16 %v328
        %v721 = vunpack.c.l.b16 %v329
        %v722 = vunpack.c.h.b16 %v329
        %v723 = vunpack.c.l.b16 %v330
        %v724 = vunpack.c.h.b16 %v330
        %v725 = vunpack.c.l.b16 %v331
        %v726 = vunpack.c.h.b16 %v331
        %v727 = vunpack.c.l.b16 %v332
        %v728 = vunpack.c.h.b16 %v332
        %v729 = vunpack.c.l.b16 %v333
        %v730 = vunpack.c.h.b16 %v333
        %v731 = vunpack.c.l.b16 %v334
        %v732 = vunpack.c.h.b16 %v334
        %v733 = vunpack.c.l.b16 %v335
        %v734 = vunpack.c.h.b16 %v335
        %v735 = vunpack.c.l.b16 %v336
        %v736 = vunpack.c.h.b16 %v336
        %v737 = vunpack.c.l.b16 %v337
        %v738 = vunpack.c.h.b16 %v337
        %v739 = vpack.c.b16 %v677, %v675
        %v740 = vpack.c.b16 %v678, %v676
        %v741 = vpack.c.b16 %v681, %v679
        %v742 = vpack.c.b16 %v682, %v680
        %v743 = vpack.c.b16 %v685, %v683
        %v744 = vpack.c.b16 %v686, %v684
        %v745 = vpack.c.b16 %v689, %v687
        %v746 = vpack.c.b16 %v690, %v688
        %v747 = vpack.c.b16 %v693, %v691
        %v748 = vpack.c.b16 %v694, %v692
        %v749 = vpack.c.b16 %v697, %v695
        %v750 = vpack.c.b16 %v698, %v696
        %v751 = vpack.c.b16 %v701, %v699
        %v752 = vpack.c.b16 %v702, %v700
        %v753 = vpack.c.b16 %v705, %v703
        %v754 = vpack.c.b16 %v706, %v704
        %v755 = vpack.c.b16 %v709, %v707
        %v756 = vpack.c.b16 %v710, %v708
        %v757 = vpack.c.b16 %v713, %v711
        %v758 = vpack.c.b16 %v714, %v712
        %v759 = vpack.c.b16 %v717, %v715
        %v760 = vpack.c.b16 %v718, %v716
        %v761 = vpack.c.b16 %v721, %v719
        %v762 = vpack.c.b16 %v722, %v720
        %v763 = vpack.c.b16 %v725, %v723
        %v764 = vpack.c.b16 %v726, %v724
        %v765 = vpack.c.b16 %v729, %v727
        %v766 = vpack.c.b16 %v730, %v728
        %v767 = vpack.c.b16 %v733, %v731
        %v768 = vpack.c.b16 %v734, %v732
        %v769 = vpack.c.b16 %v737, %v735
        %v770 = vpack.c.b16 %v738, %v736
        %803 = vmatpush.bf16.msra.mxu0 %v753
        %804 = vmatpush.bf16.msra.mxu0 %v751
        %805 = vmatpush.bf16.msra.mxu0 %v749
        %806 = vmatpush.bf16.msra.mxu0 %v747
        %807 = vmatpush.bf16.msra.mxu0 %v745
        %808 = vmatpush.bf16.msra.mxu0 %v743
        %809 = vmatpush.bf16.msra.mxu0 %v741
        %810 = vmatpush.bf16.msra.mxu0 %v739
        %811 = vmatmul.bf16.gmra.mxu0 %v639
        %v812 = vpop.f32.mrf.mxu0
        %v813 = vadd.f32 %v607, %v812
        %v814 = vpop.f32.mrf.mxu0
        %815 = vdwg.mxu0
        %816 = vmatpush.bf16.msra.mxu0 %v769
        %817 = vmatpush.bf16.msra.mxu0 %v767
        %818 = vmatpush.bf16.msra.mxu0 %v765
        %819 = vmatpush.bf16.msra.mxu0 %v763
        %820 = vmatpush.bf16.msra.mxu0 %v761
        %821 = vmatpush.bf16.msra.mxu0 %v759
        %822 = vmatpush.bf16.msra.mxu0 %v757
        %823 = vmatpush.bf16.msra.mxu0 %v755
        %824 = vmatmul.bf16.gmra.mxu0 %v640
        %v825 = vpop.f32.mrf.mxu0
        %v826 = vadd.f32 %v813, %v825
        %v827 = vpop.f32.mrf.mxu0
        %828 = vdwg.mxu0
        %829 = vmatpush.bf16.msra.mxu0 %v754
        %830 = vmatpush.bf16.msra.mxu0 %v752
        %831 = vmatpush.bf16.msra.mxu0 %v750
        %832 = vmatpush.bf16.msra.mxu0 %v748
        %833 = vmatpush.bf16.msra.mxu0 %v746
        %834 = vmatpush.bf16.msra.mxu0 %v744
        %835 = vmatpush.bf16.msra.mxu0 %v742
        %836 = vmatpush.bf16.msra.mxu0 %v740
        %837 = vmatmul.bf16.gmra.mxu0 %v639
        %v838 = vpop.f32.mrf.mxu0
        %v839 = vadd.f32 %v633, %v838
        %v840 = vpop.f32.mrf.mxu0
        %841 = vdwg.mxu0
        %842 = vmatpush.bf16.msra.mxu0 %v770
        %843 = vmatpush.bf16.msra.mxu0 %v768
        %844 = vmatpush.bf16.msra.mxu0 %v766
        %845 = vmatpush.bf16.msra.mxu0 %v764
        %846 = vmatpush.bf16.msra.mxu0 %v762
        %847 = vmatpush.bf16.msra.mxu0 %v760
        %848 = vmatpush.bf16.msra.mxu0 %v758
        %849 = vmatpush.bf16.msra.mxu0 %v756
        %850 = vmatmul.bf16.gmra.mxu0 %v640
        %v851 = vpop.f32.mrf.mxu0
        %v852 = vadd.f32 %v839, %v851
        %v853 = vpop.f32.mrf.mxu0
        %854 = vdwg.mxu0
        %855 = vst [vmem:[#allocation1] sm:$0xff] %v277
        %s856 = scalar_lea.vmem [#allocation1], 1
        %v857 = vld [vmem:[%s856] ss:$2 sm:$0xff]
        %858 = vst [vmem:[#allocation1 + $0x10] sm:$0xff] %v278
        %s859 = scalar_lea.vmem [#allocation1], 17
        %v860 = vld [vmem:[%s859] ss:$2 sm:$0xff]
        %s861 = scalar_lea.vmem %s212, 512 [#allocation2]
        %v862 = vld [vmem:[%s861] sm:$0xff]
        %v863 = vld [vmem:[%s861 + $0x8] sm:$0xff]
        %v864 = vld [vmem:[%s861 + $0x10] sm:$0xff]
        %v865 = vld [vmem:[%s861 + $0x18] sm:$0xff]
        %v866 = vld [vmem:[%s861 + $0x20] sm:$0xff]
        %v867 = vld [vmem:[%s861 + $0x28] sm:$0xff]
        %v868 = vld [vmem:[%s861 + $0x30] sm:$0xff]
        %v869 = vld [vmem:[%s861 + $0x38] sm:$0xff]
        %v870 = vld [vmem:[%s861 + $0x40] sm:$0xff]
        %v871 = vld [vmem:[%s861 + $0x48] sm:$0xff]
        %v872 = vld [vmem:[%s861 + $0x50] sm:$0xff]
        %v873 = vld [vmem:[%s861 + $0x58] sm:$0xff]
        %v874 = vld [vmem:[%s861 + $0x60] sm:$0xff]
        %v875 = vld [vmem:[%s861 + $0x68] sm:$0xff]
        %v876 = vld [vmem:[%s861 + $0x70] sm:$0xff]
        %v877 = vld [vmem:[%s861 + $0x78] sm:$0xff]
        %v878 = vld [vmem:[%s861 + $0x80] sm:$0xff]
        %v879 = vld [vmem:[%s861 + $0x88] sm:$0xff]
        %v880 = vld [vmem:[%s861 + $0x90] sm:$0xff]
        %v881 = vld [vmem:[%s861 + $0x98] sm:$0xff]
        %v882 = vld [vmem:[%s861 + $0xa0] sm:$0xff]
        %v883 = vld [vmem:[%s861 + $0xa8] sm:$0xff]
        %v884 = vld [vmem:[%s861 + $0xb0] sm:$0xff]
        %v885 = vld [vmem:[%s861 + $0xb8] sm:$0xff]
        %v886 = vld [vmem:[%s861 + $0xc0] sm:$0xff]
        %v887 = vld [vmem:[%s861 + $0xc8] sm:$0xff]
        %v888 = vld [vmem:[%s861 + $0xd0] sm:$0xff]
        %v889 = vld [vmem:[%s861 + $0xd8] sm:$0xff]
        %v890 = vld [vmem:[%s861 + $0xe0] sm:$0xff]
        %v891 = vld [vmem:[%s861 + $0xe8] sm:$0xff]
        %v892 = vld [vmem:[%s861 + $0xf0] sm:$0xff]
        %v893 = vld [vmem:[%s861 + $0xf8] sm:$0xff]
        %894 = vst [vmem:[#allocation1] ss:$9 sm:$0xff] %v857
        %s895 = scalar_lea.vmem [#allocation1], 1
        %896 = vst [vmem:[%s895] ss:$9 sm:$0xff] %v860
        %v897 = vld [vmem:[#allocation1] sm:$0xff]
        %v898 = vld [vmem:[#allocation1 + $0x9] sm:$0xff]
        %v933 = vunpack.c.l.b16 %v862
        %v934 = vunpack.c.h.b16 %v862
        %v935 = vunpack.c.l.b16 %v863
        %v936 = vunpack.c.h.b16 %v863
        %v937 = vunpack.c.l.b16 %v864
        %v938 = vunpack.c.h.b16 %v864
        %v939 = vunpack.c.l.b16 %v865
        %v940 = vunpack.c.h.b16 %v865
        %v941 = vunpack.c.l.b16 %v866
        %v942 = vunpack.c.h.b16 %v866
        %v943 = vunpack.c.l.b16 %v867
        %v944 = vunpack.c.h.b16 %v867
        %v945 = vunpack.c.l.b16 %v868
        %v946 = vunpack.c.h.b16 %v868
        %v947 = vunpack.c.l.b16 %v869
        %v948 = vunpack.c.h.b16 %v869
        %v949 = vunpack.c.l.b16 %v870
        %v950 = vunpack.c.h.b16 %v870
        %v951 = vunpack.c.l.b16 %v871
        %v952 = vunpack.c.h.b16 %v871
        %v953 = vunpack.c.l.b16 %v872
        %v954 = vunpack.c.h.b16 %v872
        %v955 = vunpack.c.l.b16 %v873
        %v956 = vunpack.c.h.b16 %v873
        %v957 = vunpack.c.l.b16 %v874
        %v958 = vunpack.c.h.b16 %v874
        %v959 = vunpack.c.l.b16 %v875
        %v960 = vunpack.c.h.b16 %v875
        %v961 = vunpack.c.l.b16 %v876
        %v962 = vunpack.c.h.b16 %v876
        %v963 = vunpack.c.l.b16 %v877
        %v964 = vunpack.c.h.b16 %v877
        %v965 = vunpack.c.l.b16 %v878
        %v966 = vunpack.c.h.b16 %v878
        %v967 = vunpack.c.l.b16 %v879
        %v968 = vunpack.c.h.b16 %v879
        %v969 = vunpack.c.l.b16 %v880
        %v970 = vunpack.c.h.b16 %v880
        %v971 = vunpack.c.l.b16 %v881
        %v972 = vunpack.c.h.b16 %v881
        %v973 = vunpack.c.l.b16 %v882
        %v974 = vunpack.c.h.b16 %v882
        %v975 = vunpack.c.l.b16 %v883
        %v976 = vunpack.c.h.b16 %v883
        %v977 = vunpack.c.l.b16 %v884
        %v978 = vunpack.c.h.b16 %v884
        %v979 = vunpack.c.l.b16 %v885
        %v980 = vunpack.c.h.b16 %v885
        %v981 = vunpack.c.l.b16 %v886
        %v982 = vunpack.c.h.b16 %v886
        %v983 = vunpack.c.l.b16 %v887
        %v984 = vunpack.c.h.b16 %v887
        %v985 = vunpack.c.l.b16 %v888
        %v986 = vunpack.c.h.b16 %v888
        %v987 = vunpack.c.l.b16 %v889
        %v988 = vunpack.c.h.b16 %v889
        %v989 = vunpack.c.l.b16 %v890
        %v990 = vunpack.c.h.b16 %v890
        %v991 = vunpack.c.l.b16 %v891
        %v992 = vunpack.c.h.b16 %v891
        %v993 = vunpack.c.l.b16 %v892
        %v994 = vunpack.c.h.b16 %v892
        %v995 = vunpack.c.l.b16 %v893
        %v996 = vunpack.c.h.b16 %v893
        %v997 = vpack.c.b16 %v935, %v933
        %v998 = vpack.c.b16 %v936, %v934
        %v999 = vpack.c.b16 %v939, %v937
        %v1000 = vpack.c.b16 %v940, %v938
        %v1001 = vpack.c.b16 %v943, %v941
        %v1002 = vpack.c.b16 %v944, %v942
        %v1003 = vpack.c.b16 %v947, %v945
        %v1004 = vpack.c.b16 %v948, %v946
        %v1005 = vpack.c.b16 %v951, %v949
        %v1006 = vpack.c.b16 %v952, %v950
        %v1007 = vpack.c.b16 %v955, %v953
        %v1008 = vpack.c.b16 %v956, %v954
        %v1009 = vpack.c.b16 %v959, %v957
        %v1010 = vpack.c.b16 %v960, %v958
        %v1011 = vpack.c.b16 %v963, %v961
        %v1012 = vpack.c.b16 %v964, %v962
        %v1013 = vpack.c.b16 %v967, %v965
        %v1014 = vpack.c.b16 %v968, %v966
        %v1015 = vpack.c.b16 %v971, %v969
        %v1016 = vpack.c.b16 %v972, %v970
        %v1017 = vpack.c.b16 %v975, %v973
        %v1018 = vpack.c.b16 %v976, %v974
        %v1019 = vpack.c.b16 %v979, %v977
        %v1020 = vpack.c.b16 %v980, %v978
        %v1021 = vpack.c.b16 %v983, %v981
        %v1022 = vpack.c.b16 %v984, %v982
        %v1023 = vpack.c.b16 %v987, %v985
        %v1024 = vpack.c.b16 %v988, %v986
        %v1025 = vpack.c.b16 %v991, %v989
        %v1026 = vpack.c.b16 %v992, %v990
        %v1027 = vpack.c.b16 %v995, %v993
        %v1028 = vpack.c.b16 %v996, %v994
        %1061 = vmatpush.bf16.msra.mxu0 %v1011
        %1062 = vmatpush.bf16.msra.mxu0 %v1009
        %1063 = vmatpush.bf16.msra.mxu0 %v1007
        %1064 = vmatpush.bf16.msra.mxu0 %v1005
        %1065 = vmatpush.bf16.msra.mxu0 %v1003
        %1066 = vmatpush.bf16.msra.mxu0 %v1001
        %1067 = vmatpush.bf16.msra.mxu0 %v999
        %1068 = vmatpush.bf16.msra.mxu0 %v997
        %1069 = vmatmul.bf16.gmra.mxu0 %v897
        %v1070 = vpop.f32.mrf.mxu0
        %v1071 = vadd.f32 0.0, %v1070
        %v1072 = vpop.f32.mrf.mxu0
        %1073 = vdwg.mxu0
        %1074 = vmatpush.bf16.msra.mxu0 %v1027
        %1075 = vmatpush.bf16.msra.mxu0 %v1025
        %1076 = vmatpush.bf16.msra.mxu0 %v1023
        %1077 = vmatpush.bf16.msra.mxu0 %v1021
        %1078 = vmatpush.bf16.msra.mxu0 %v1019
        %1079 = vmatpush.bf16.msra.mxu0 %v1017
        %1080 = vmatpush.bf16.msra.mxu0 %v1015
        %1081 = vmatpush.bf16.msra.mxu0 %v1013
        %1082 = vmatmul.bf16.gmra.mxu0 %v898
        %v1083 = vpop.f32.mrf.mxu0
        %v1084 = vadd.f32 %v1071, %v1083
        %v1085 = vpop.f32.mrf.mxu0
        %1086 = vdwg.mxu0
        %1087 = vmatpush.bf16.msra.mxu0 %v1012
        %1088 = vmatpush.bf16.msra.mxu0 %v1010
        %1089 = vmatpush.bf16.msra.mxu0 %v1008
        %1090 = vmatpush.bf16.msra.mxu0 %v1006
        %1091 = vmatpush.bf16.msra.mxu0 %v1004
        %1092 = vmatpush.bf16.msra.mxu0 %v1002
        %1093 = vmatpush.bf16.msra.mxu0 %v1000
        %1094 = vmatpush.bf16.msra.mxu0 %v998
        %1095 = vmatmul.bf16.gmra.mxu0 %v897
        %v1096 = vpop.f32.mrf.mxu0
        %v1097 = vadd.f32 0.0, %v1096
        %v1098 = vpop.f32.mrf.mxu0
        %1099 = vdwg.mxu0
        %1100 = vmatpush.bf16.msra.mxu0 %v1028
        %1101 = vmatpush.bf16.msra.mxu0 %v1026
        %1102 = vmatpush.bf16.msra.mxu0 %v1024
        %1103 = vmatpush.bf16.msra.mxu0 %v1022
        %1104 = vmatpush.bf16.msra.mxu0 %v1020
        %1105 = vmatpush.bf16.msra.mxu0 %v1018
        %1106 = vmatpush.bf16.msra.mxu0 %v1016
        %1107 = vmatpush.bf16.msra.mxu0 %v1014
        %1108 = vmatmul.bf16.gmra.mxu0 %v898
        %v1109 = vpop.f32.mrf.mxu0
        %v1110 = vadd.f32 %v1097, %v1109
        %v1111 = vpop.f32.mrf.mxu0
        %1112 = vdwg.mxu0
        %v1113 = vadd.f32 %v826, %v1084
        %v1114 = vadd.f32 %v852, %v1110
        %v1116 = vrot.slane %v279, 1
        %v1117 = vrot.slane %v279, 2
        %v1118 = vrot.slane %v279, 3
        %v1121 = vsel %vm289, %v279, %v1116
        %v1124 = vsel %vm293, %v1117, %v1118
        %v1125 = vsel %vm297, %v1121, %v1124
        %s1126 = scalar_lea.vmem %s212, 768 [#allocation2]
        %v1127 = vld [vmem:[%s1126] sm:$0xff]
        %v1128 = vld [vmem:[%s1126 + $0x8] sm:$0xff]
        %v1129 = vld [vmem:[%s1126 + $0x10] sm:$0xff]
        %v1130 = vld [vmem:[%s1126 + $0x18] sm:$0xff]
        %v1131 = vld [vmem:[%s1126 + $0x20] sm:$0xff]
        %v1132 = vld [vmem:[%s1126 + $0x28] sm:$0xff]
        %v1133 = vld [vmem:[%s1126 + $0x30] sm:$0xff]
        %v1134 = vld [vmem:[%s1126 + $0x38] sm:$0xff]
        %v1135 = vld [vmem:[%s1126 + $0x40] sm:$0xff]
        %v1136 = vld [vmem:[%s1126 + $0x48] sm:$0xff]
        %v1137 = vld [vmem:[%s1126 + $0x50] sm:$0xff]
        %v1138 = vld [vmem:[%s1126 + $0x58] sm:$0xff]
        %v1139 = vld [vmem:[%s1126 + $0x60] sm:$0xff]
        %v1140 = vld [vmem:[%s1126 + $0x68] sm:$0xff]
        %v1141 = vld [vmem:[%s1126 + $0x70] sm:$0xff]
        %v1142 = vld [vmem:[%s1126 + $0x78] sm:$0xff]
        %v1143 = vld [vmem:[%s1126 + $0x80] sm:$0xff]
        %v1144 = vld [vmem:[%s1126 + $0x88] sm:$0xff]
        %v1145 = vld [vmem:[%s1126 + $0x90] sm:$0xff]
        %v1146 = vld [vmem:[%s1126 + $0x98] sm:$0xff]
        %v1147 = vld [vmem:[%s1126 + $0xa0] sm:$0xff]
        %v1148 = vld [vmem:[%s1126 + $0xa8] sm:$0xff]
        %v1149 = vld [vmem:[%s1126 + $0xb0] sm:$0xff]
        %v1150 = vld [vmem:[%s1126 + $0xb8] sm:$0xff]
        %v1151 = vld [vmem:[%s1126 + $0xc0] sm:$0xff]
        %v1152 = vld [vmem:[%s1126 + $0xc8] sm:$0xff]
        %v1153 = vld [vmem:[%s1126 + $0xd0] sm:$0xff]
        %v1154 = vld [vmem:[%s1126 + $0xd8] sm:$0xff]
        %v1155 = vld [vmem:[%s1126 + $0xe0] sm:$0xff]
        %v1156 = vld [vmem:[%s1126 + $0xe8] sm:$0xff]
        %v1157 = vld [vmem:[%s1126 + $0xf0] sm:$0xff]
        %v1158 = vld [vmem:[%s1126 + $0xf8] sm:$0xff]
        %1159 = vst [vmem:[#allocation1] ss:$9 sm:$0xff] %v305
        %s1160 = scalar_lea.vmem [#allocation1], 1
        %1161 = vst [vmem:[%s1160] ss:$9 sm:$0xff] %v1125
        %v1162 = vld [vmem:[#allocation1] sm:$0xff]
        %v1163 = vld [vmem:[#allocation1 + $0x9] sm:$0xff]
        %v1198 = vunpack.c.l.b16 %v1127
        %v1199 = vunpack.c.h.b16 %v1127
        %v1200 = vunpack.c.l.b16 %v1128
        %v1201 = vunpack.c.h.b16 %v1128
        %v1202 = vunpack.c.l.b16 %v1129
        %v1203 = vunpack.c.h.b16 %v1129
        %v1204 = vunpack.c.l.b16 %v1130
        %v1205 = vunpack.c.h.b16 %v1130
        %v1206 = vunpack.c.l.b16 %v1131
        %v1207 = vunpack.c.h.b16 %v1131
        %v1208 = vunpack.c.l.b16 %v1132
        %v1209 = vunpack.c.h.b16 %v1132
        %v1210 = vunpack.c.l.b16 %v1133
        %v1211 = vunpack.c.h.b16 %v1133
        %v1212 = vunpack.c.l.b16 %v1134
        %v1213 = vunpack.c.h.b16 %v1134
        %v1214 = vunpack.c.l.b16 %v1135
        %v1215 = vunpack.c.h.b16 %v1135
        %v1216 = vunpack.c.l.b16 %v1136
        %v1217 = vunpack.c.h.b16 %v1136
        %v1218 = vunpack.c.l.b16 %v1137
        %v1219 = vunpack.c.h.b16 %v1137
        %v1220 = vunpack.c.l.b16 %v1138
        %v1221 = vunpack.c.h.b16 %v1138
        %v1222 = vunpack.c.l.b16 %v1139
        %v1223 = vunpack.c.h.b16 %v1139
        %v1224 = vunpack.c.l.b16 %v1140
        %v1225 = vunpack.c.h.b16 %v1140
        %v1226 = vunpack.c.l.b16 %v1141
        %v1227 = vunpack.c.h.b16 %v1141
        %v1228 = vunpack.c.l.b16 %v1142
        %v1229 = vunpack.c.h.b16 %v1142
        %v1230 = vunpack.c.l.b16 %v1143
        %v1231 = vunpack.c.h.b16 %v1143
        %v1232 = vunpack.c.l.b16 %v1144
        %v1233 = vunpack.c.h.b16 %v1144
        %v1234 = vunpack.c.l.b16 %v1145
        %v1235 = vunpack.c.h.b16 %v1145
        %v1236 = vunpack.c.l.b16 %v1146
        %v1237 = vunpack.c.h.b16 %v1146
        %v1238 = vunpack.c.l.b16 %v1147
        %v1239 = vunpack.c.h.b16 %v1147
        %v1240 = vunpack.c.l.b16 %v1148
        %v1241 = vunpack.c.h.b16 %v1148
        %v1242 = vunpack.c.l.b16 %v1149
        %v1243 = vunpack.c.h.b16 %v1149
        %v1244 = vunpack.c.l.b16 %v1150
        %v1245 = vunpack.c.h.b16 %v1150
        %v1246 = vunpack.c.l.b16 %v1151
        %v1247 = vunpack.c.h.b16 %v1151
        %v1248 = vunpack.c.l.b16 %v1152
        %v1249 = vunpack.c.h.b16 %v1152
        %v1250 = vunpack.c.l.b16 %v1153
        %v1251 = vunpack.c.h.b16 %v1153
        %v1252 = vunpack.c.l.b16 %v1154
        %v1253 = vunpack.c.h.b16 %v1154
        %v1254 = vunpack.c.l.b16 %v1155
        %v1255 = vunpack.c.h.b16 %v1155
        %v1256 = vunpack.c.l.b16 %v1156
        %v1257 = vunpack.c.h.b16 %v1156
        %v1258 = vunpack.c.l.b16 %v1157
        %v1259 = vunpack.c.h.b16 %v1157
        %v1260 = vunpack.c.l.b16 %v1158
        %v1261 = vunpack.c.h.b16 %v1158
        %v1262 = vpack.c.b16 %v1200, %v1198
        %v1263 = vpack.c.b16 %v1201, %v1199
        %v1264 = vpack.c.b16 %v1204, %v1202
        %v1265 = vpack.c.b16 %v1205, %v1203
        %v1266 = vpack.c.b16 %v1208, %v1206
        %v1267 = vpack.c.b16 %v1209, %v1207
        %v1268 = vpack.c.b16 %v1212, %v1210
        %v1269 = vpack.c.b16 %v1213, %v1211
        %v1270 = vpack.c.b16 %v1216, %v1214
        %v1271 = vpack.c.b16 %v1217, %v1215
        %v1272 = vpack.c.b16 %v1220, %v1218
        %v1273 = vpack.c.b16 %v1221, %v1219
        %v1274 = vpack.c.b16 %v1224, %v1222
        %v1275 = vpack.c.b16 %v1225, %v1223
        %v1276 = vpack.c.b16 %v1228, %v1226
        %v1277 = vpack.c.b16 %v1229, %v1227
        %v1278 = vpack.c.b16 %v1232, %v1230
        %v1279 = vpack.c.b16 %v1233, %v1231
        %v1280 = vpack.c.b16 %v1236, %v1234
        %v1281 = vpack.c.b16 %v1237, %v1235
        %v1282 = vpack.c.b16 %v1240, %v1238
        %v1283 = vpack.c.b16 %v1241, %v1239
        %v1284 = vpack.c.b16 %v1244, %v1242
        %v1285 = vpack.c.b16 %v1245, %v1243
        %v1286 = vpack.c.b16 %v1248, %v1246
        %v1287 = vpack.c.b16 %v1249, %v1247
        %v1288 = vpack.c.b16 %v1252, %v1250
        %v1289 = vpack.c.b16 %v1253, %v1251
        %v1290 = vpack.c.b16 %v1256, %v1254
        %v1291 = vpack.c.b16 %v1257, %v1255
        %v1292 = vpack.c.b16 %v1260, %v1258
        %v1293 = vpack.c.b16 %v1261, %v1259
        %1326 = vmatpush.bf16.msra.mxu0 %v1276
        %1327 = vmatpush.bf16.msra.mxu0 %v1274
        %1328 = vmatpush.bf16.msra.mxu0 %v1272
        %1329 = vmatpush.bf16.msra.mxu0 %v1270
        %1330 = vmatpush.bf16.msra.mxu0 %v1268
        %1331 = vmatpush.bf16.msra.mxu0 %v1266
        %1332 = vmatpush.bf16.msra.mxu0 %v1264
        %1333 = vmatpush.bf16.msra.mxu0 %v1262
        %1334 = vmatmul.bf16.gmra.mxu0 %v1162
        %v1335 = vpop.f32.mrf.mxu0
        %v1336 = vadd.f32 0.0, %v1335
        %v1337 = vpop.f32.mrf.mxu0
        %1338 = vdwg.mxu0
        %1339 = vmatpush.bf16.msra.mxu0 %v1292
        %1340 = vmatpush.bf16.msra.mxu0 %v1290
        %1341 = vmatpush.bf16.msra.mxu0 %v1288
        %1342 = vmatpush.bf16.msra.mxu0 %v1286
        %1343 = vmatpush.bf16.msra.mxu0 %v1284
        %1344 = vmatpush.bf16.msra.mxu0 %v1282
        %1345 = vmatpush.bf16.msra.mxu0 %v1280
        %1346 = vmatpush.bf16.msra.mxu0 %v1278
        %1347 = vmatmul.bf16.gmra.mxu0 %v1163
        %v1348 = vpop.f32.mrf.mxu0
        %v1349 = vadd.f32 %v1336, %v1348
        %v1350 = vpop.f32.mrf.mxu0
        %1351 = vdwg.mxu0
        %1352 = vmatpush.bf16.msra.mxu0 %v1277
        %1353 = vmatpush.bf16.msra.mxu0 %v1275
        %1354 = vmatpush.bf16.msra.mxu0 %v1273
        %1355 = vmatpush.bf16.msra.mxu0 %v1271
        %1356 = vmatpush.bf16.msra.mxu0 %v1269
        %1357 = vmatpush.bf16.msra.mxu0 %v1267
        %1358 = vmatpush.bf16.msra.mxu0 %v1265
        %1359 = vmatpush.bf16.msra.mxu0 %v1263
        %1360 = vmatmul.bf16.gmra.mxu0 %v1162
        %v1361 = vpop.f32.mrf.mxu0
        %v1362 = vadd.f32 0.0, %v1361
        %v1363 = vpop.f32.mrf.mxu0
        %1364 = vdwg.mxu0
        %1365 = vmatpush.bf16.msra.mxu0 %v1293
        %1366 = vmatpush.bf16.msra.mxu0 %v1291
        %1367 = vmatpush.bf16.msra.mxu0 %v1289
        %1368 = vmatpush.bf16.msra.mxu0 %v1287
        %1369 = vmatpush.bf16.msra.mxu0 %v1285
        %1370 = vmatpush.bf16.msra.mxu0 %v1283
        %1371 = vmatpush.bf16.msra.mxu0 %v1281
        %1372 = vmatpush.bf16.msra.mxu0 %v1279
        %1373 = vmatmul.bf16.gmra.mxu0 %v1163
        %v1374 = vpop.f32.mrf.mxu0
        %v1375 = vadd.f32 %v1362, %v1374
        %v1376 = vpop.f32.mrf.mxu0
        %1377 = vdwg.mxu0
        %v1378 = vadd.f32 %v1113, %v1349
        %v1379 = vadd.f32 %v1114, %v1375
        %v1380 = vsel %vm338, %v279, %v1116
        %v1381 = vsel %vm340, %v1117, %v1118
        %v1382 = vsel %vm342, %v1380, %v1381
        %v1384 = vrot.slane %v1382, 1
        %v1385 = vshrl.u32 %v1125, 16
        %v1387 = vrot.slane %v1385, 7
        %v1388 = vrot.slane %v1387, 1
        %v1390 = vshll.u32 %v1384, 16
        %v1392 = vsel %vm365, %v1388, %v1390
        %s1393 = scalar_lea.vmem %s212, 1024 [#allocation2]
        %v1394 = vld [vmem:[%s1393] sm:$0xff]
        %v1395 = vld [vmem:[%s1393 + $0x8] sm:$0xff]
        %v1396 = vld [vmem:[%s1393 + $0x10] sm:$0xff]
        %v1397 = vld [vmem:[%s1393 + $0x18] sm:$0xff]
        %v1398 = vld [vmem:[%s1393 + $0x20] sm:$0xff]
        %v1399 = vld [vmem:[%s1393 + $0x28] sm:$0xff]
        %v1400 = vld [vmem:[%s1393 + $0x30] sm:$0xff]
        %v1401 = vld [vmem:[%s1393 + $0x38] sm:$0xff]
        %v1402 = vld [vmem:[%s1393 + $0x40] sm:$0xff]
        %v1403 = vld [vmem:[%s1393 + $0x48] sm:$0xff]
        %v1404 = vld [vmem:[%s1393 + $0x50] sm:$0xff]
        %v1405 = vld [vmem:[%s1393 + $0x58] sm:$0xff]
        %v1406 = vld [vmem:[%s1393 + $0x60] sm:$0xff]
        %v1407 = vld [vmem:[%s1393 + $0x68] sm:$0xff]
        %v1408 = vld [vmem:[%s1393 + $0x70] sm:$0xff]
        %v1409 = vld [vmem:[%s1393 + $0x78] sm:$0xff]
        %v1410 = vld [vmem:[%s1393 + $0x80] sm:$0xff]
        %v1411 = vld [vmem:[%s1393 + $0x88] sm:$0xff]
        %v1412 = vld [vmem:[%s1393 + $0x90] sm:$0xff]
        %v1413 = vld [vmem:[%s1393 + $0x98] sm:$0xff]
        %v1414 = vld [vmem:[%s1393 + $0xa0] sm:$0xff]
        %v1415 = vld [vmem:[%s1393 + $0xa8] sm:$0xff]
        %v1416 = vld [vmem:[%s1393 + $0xb0] sm:$0xff]
        %v1417 = vld [vmem:[%s1393 + $0xb8] sm:$0xff]
        %v1418 = vld [vmem:[%s1393 + $0xc0] sm:$0xff]
        %v1419 = vld [vmem:[%s1393 + $0xc8] sm:$0xff]
        %v1420 = vld [vmem:[%s1393 + $0xd0] sm:$0xff]
        %v1421 = vld [vmem:[%s1393 + $0xd8] sm:$0xff]
        %v1422 = vld [vmem:[%s1393 + $0xe0] sm:$0xff]
        %v1423 = vld [vmem:[%s1393 + $0xe8] sm:$0xff]
        %v1424 = vld [vmem:[%s1393 + $0xf0] sm:$0xff]
        %v1425 = vld [vmem:[%s1393 + $0xf8] sm:$0xff]
        %1426 = vst [vmem:[#allocation1] ss:$9 sm:$0xff] %v381
        %s1428 = scalar_lea.vmem [#allocation1], 1
        %1429 = vst [vmem:[%s1428] ss:$9 sm:$0xff] %v1392
        %v1430 = vld [vmem:[#allocation1] sm:$0xff]
        %v1431 = vld [vmem:[#allocation1 + $0x9] sm:$0xff]
        %v1466 = vunpack.c.l.b16 %v1394
        %v1467 = vunpack.c.h.b16 %v1394
        %v1468 = vunpack.c.l.b16 %v1395
        %v1469 = vunpack.c.h.b16 %v1395
        %v1470 = vunpack.c.l.b16 %v1396
        %v1471 = vunpack.c.h.b16 %v1396
        %v1472 = vunpack.c.l.b16 %v1397
        %v1473 = vunpack.c.h.b16 %v1397
        %v1474 = vunpack.c.l.b16 %v1398
        %v1475 = vunpack.c.h.b16 %v1398
        %v1476 = vunpack.c.l.b16 %v1399
        %v1477 = vunpack.c.h.b16 %v1399
        %v1478 = vunpack.c.l.b16 %v1400
        %v1479 = vunpack.c.h.b16 %v1400
        %v1480 = vunpack.c.l.b16 %v1401
        %v1481 = vunpack.c.h.b16 %v1401
        %v1482 = vunpack.c.l.b16 %v1402
        %v1483 = vunpack.c.h.b16 %v1402
        %v1484 = vunpack.c.l.b16 %v1403
        %v1485 = vunpack.c.h.b16 %v1403
        %v1486 = vunpack.c.l.b16 %v1404
        %v1487 = vunpack.c.h.b16 %v1404
        %v1488 = vunpack.c.l.b16 %v1405
        %v1489 = vunpack.c.h.b16 %v1405
        %v1490 = vunpack.c.l.b16 %v1406
        %v1491 = vunpack.c.h.b16 %v1406
        %v1492 = vunpack.c.l.b16 %v1407
        %v1493 = vunpack.c.h.b16 %v1407
        %v1494 = vunpack.c.l.b16 %v1408
        %v1495 = vunpack.c.h.b16 %v1408
        %v1496 = vunpack.c.l.b16 %v1409
        %v1497 = vunpack.c.h.b16 %v1409
        %v1498 = vunpack.c.l.b16 %v1410
        %v1499 = vunpack.c.h.b16 %v1410
        %v1500 = vunpack.c.l.b16 %v1411
        %v1501 = vunpack.c.h.b16 %v1411
        %v1502 = vunpack.c.l.b16 %v1412
        %v1503 = vunpack.c.h.b16 %v1412
        %v1504 = vunpack.c.l.b16 %v1413
        %v1505 = vunpack.c.h.b16 %v1413
        %v1506 = vunpack.c.l.b16 %v1414
        %v1507 = vunpack.c.h.b16 %v1414
        %v1508 = vunpack.c.l.b16 %v1415
        %v1509 = vunpack.c.h.b16 %v1415
        %v1510 = vunpack.c.l.b16 %v1416
        %v1511 = vunpack.c.h.b16 %v1416
        %v1512 = vunpack.c.l.b16 %v1417
        %v1513 = vunpack.c.h.b16 %v1417
        %v1514 = vunpack.c.l.b16 %v1418
        %v1515 = vunpack.c.h.b16 %v1418
        %v1516 = vunpack.c.l.b16 %v1419
        %v1517 = vunpack.c.h.b16 %v1419
        %v1518 = vunpack.c.l.b16 %v1420
        %v1519 = vunpack.c.h.b16 %v1420
        %v1520 = vunpack.c.l.b16 %v1421
        %v1521 = vunpack.c.h.b16 %v1421
        %v1522 = vunpack.c.l.b16 %v1422
        %v1523 = vunpack.c.h.b16 %v1422
        %v1524 = vunpack.c.l.b16 %v1423
        %v1525 = vunpack.c.h.b16 %v1423
        %v1526 = vunpack.c.l.b16 %v1424
        %v1527 = vunpack.c.h.b16 %v1424
        %v1528 = vunpack.c.l.b16 %v1425
        %v1529 = vunpack.c.h.b16 %v1425
        %v1530 = vpack.c.b16 %v1468, %v1466
        %v1531 = vpack.c.b16 %v1469, %v1467
        %v1532 = vpack.c.b16 %v1472, %v1470
        %v1533 = vpack.c.b16 %v1473, %v1471
        %v1534 = vpack.c.b16 %v1476, %v1474
        %v1535 = vpack.c.b16 %v1477, %v1475
        %v1536 = vpack.c.b16 %v1480, %v1478
        %v1537 = vpack.c.b16 %v1481, %v1479
        %v1538 = vpack.c.b16 %v1484, %v1482
        %v1539 = vpack.c.b16 %v1485, %v1483
        %v1540 = vpack.c.b16 %v1488, %v1486
        %v1541 = vpack.c.b16 %v1489, %v1487
        %v1542 = vpack.c.b16 %v1492, %v1490
        %v1543 = vpack.c.b16 %v1493, %v1491
        %v1544 = vpack.c.b16 %v1496, %v1494
        %v1545 = vpack.c.b16 %v1497, %v1495
        %v1546 = vpack.c.b16 %v1500, %v1498
        %v1547 = vpack.c.b16 %v1501, %v1499
        %v1548 = vpack.c.b16 %v1504, %v1502
        %v1549 = vpack.c.b16 %v1505, %v1503
        %v1550 = vpack.c.b16 %v1508, %v1506
        %v1551 = vpack.c.b16 %v1509, %v1507
        %v1552 = vpack.c.b16 %v1512, %v1510
        %v1553 = vpack.c.b16 %v1513, %v1511
        %v1554 = vpack.c.b16 %v1516, %v1514
        %v1555 = vpack.c.b16 %v1517, %v1515
        %v1556 = vpack.c.b16 %v1520, %v1518
        %v1557 = vpack.c.b16 %v1521, %v1519
        %v1558 = vpack.c.b16 %v1524, %v1522
        %v1559 = vpack.c.b16 %v1525, %v1523
        %v1560 = vpack.c.b16 %v1528, %v1526
        %v1561 = vpack.c.b16 %v1529, %v1527
        %1594 = vmatpush.bf16.msra.mxu0 %v1544
        %1595 = vmatpush.bf16.msra.mxu0 %v1542
        %1596 = vmatpush.bf16.msra.mxu0 %v1540
        %1597 = vmatpush.bf16.msra.mxu0 %v1538
        %1598 = vmatpush.bf16.msra.mxu0 %v1536
        %1599 = vmatpush.bf16.msra.mxu0 %v1534
        %1600 = vmatpush.bf16.msra.mxu0 %v1532
        %1601 = vmatpush.bf16.msra.mxu0 %v1530
        %1602 = vmatmul.bf16.gmra.mxu0 %v1430
        %v1603 = vpop.f32.mrf.mxu0
        %v1604 = vadd.f32 0.0, %v1603
        %v1605 = vpop.f32.mrf.mxu0
        %1606 = vdwg.mxu0
        %1607 = vmatpush.bf16.msra.mxu0 %v1560
        %1608 = vmatpush.bf16.msra.mxu0 %v1558
        %1609 = vmatpush.bf16.msra.mxu0 %v1556
        %1610 = vmatpush.bf16.msra.mxu0 %v1554
        %1611 = vmatpush.bf16.msra.mxu0 %v1552
        %1612 = vmatpush.bf16.msra.mxu0 %v1550
        %1613 = vmatpush.bf16.msra.mxu0 %v1548
        %1614 = vmatpush.bf16.msra.mxu0 %v1546
        %1615 = vmatmul.bf16.gmra.mxu0 %v1431
        %v1616 = vpop.f32.mrf.mxu0
        %v1617 = vadd.f32 %v1604, %v1616
        %v1618 = vpop.f32.mrf.mxu0
        %1619 = vdwg.mxu0
        %1620 = vmatpush.bf16.msra.mxu0 %v1545
        %1621 = vmatpush.bf16.msra.mxu0 %v1543
        %1622 = vmatpush.bf16.msra.mxu0 %v1541
        %1623 = vmatpush.bf16.msra.mxu0 %v1539
        %1624 = vmatpush.bf16.msra.mxu0 %v1537
        %1625 = vmatpush.bf16.msra.mxu0 %v1535
        %1626 = vmatpush.bf16.msra.mxu0 %v1533
        %1627 = vmatpush.bf16.msra.mxu0 %v1531
        %1628 = vmatmul.bf16.gmra.mxu0 %v1430
        %v1629 = vpop.f32.mrf.mxu0
        %v1630 = vadd.f32 0.0, %v1629
        %v1631 = vpop.f32.mrf.mxu0
        %1632 = vdwg.mxu0
        %1633 = vmatpush.bf16.msra.mxu0 %v1561
        %1634 = vmatpush.bf16.msra.mxu0 %v1559
        %1635 = vmatpush.bf16.msra.mxu0 %v1557
        %1636 = vmatpush.bf16.msra.mxu0 %v1555
        %1637 = vmatpush.bf16.msra.mxu0 %v1553
        %1638 = vmatpush.bf16.msra.mxu0 %v1551
        %1639 = vmatpush.bf16.msra.mxu0 %v1549
        %1640 = vmatpush.bf16.msra.mxu0 %v1547
        %1641 = vmatmul.bf16.gmra.mxu0 %v1431
        %v1642 = vpop.f32.mrf.mxu0
        %v1643 = vadd.f32 %v1630, %v1642
        %v1644 = vpop.f32.mrf.mxu0
        %1645 = vdwg.mxu0
        %v1646 = vadd.f32 %v1378, %v1617
        %v1647 = vadd.f32 %v1379, %v1643
        %1648 = vst [vmem:[#allocation1] sm:$0xff] %v278
        %s1649 = scalar_lea.vmem [#allocation1], 1
        %v1650 = vld [vmem:[%s1649] ss:$2 sm:$0xff]
        %1651 = vst [vmem:[#allocation1 + $0x10] sm:$0xff] %v279
        %s1652 = scalar_lea.vmem [#allocation1], 17
        %v1653 = vld [vmem:[%s1652] ss:$2 sm:$0xff]
        %s1654 = scalar_lea.vmem %s212, 1280 [#allocation2]
        %v1655 = vld [vmem:[%s1654] sm:$0xff]
        %v1656 = vld [vmem:[%s1654 + $0x8] sm:$0xff]
        %v1657 = vld [vmem:[%s1654 + $0x10] sm:$0xff]
        %v1658 = vld [vmem:[%s1654 + $0x18] sm:$0xff]
        %v1659 = vld [vmem:[%s1654 + $0x20] sm:$0xff]
        %v1660 = vld [vmem:[%s1654 + $0x28] sm:$0xff]
        %v1661 = vld [vmem:[%s1654 + $0x30] sm:$0xff]
        %v1662 = vld [vmem:[%s1654 + $0x38] sm:$0xff]
        %v1663 = vld [vmem:[%s1654 + $0x40] sm:$0xff]
        %v1664 = vld [vmem:[%s1654 + $0x48] sm:$0xff]
        %v1665 = vld [vmem:[%s1654 + $0x50] sm:$0xff]
        %v1666 = vld [vmem:[%s1654 + $0x58] sm:$0xff]
        %v1667 = vld [vmem:[%s1654 + $0x60] sm:$0xff]
        %v1668 = vld [vmem:[%s1654 + $0x68] sm:$0xff]
        %v1669 = vld [vmem:[%s1654 + $0x70] sm:$0xff]
        %v1670 = vld [vmem:[%s1654 + $0x78] sm:$0xff]
        %v1671 = vld [vmem:[%s1654 + $0x80] sm:$0xff]
        %v1672 = vld [vmem:[%s1654 + $0x88] sm:$0xff]
        %v1673 = vld [vmem:[%s1654 + $0x90] sm:$0xff]
        %v1674 = vld [vmem:[%s1654 + $0x98] sm:$0xff]
        %v1675 = vld [vmem:[%s1654 + $0xa0] sm:$0xff]
        %v1676 = vld [vmem:[%s1654 + $0xa8] sm:$0xff]
        %v1677 = vld [vmem:[%s1654 + $0xb0] sm:$0xff]
        %v1678 = vld [vmem:[%s1654 + $0xb8] sm:$0xff]
        %v1679 = vld [vmem:[%s1654 + $0xc0] sm:$0xff]
        %v1680 = vld [vmem:[%s1654 + $0xc8] sm:$0xff]
        %v1681 = vld [vmem:[%s1654 + $0xd0] sm:$0xff]
        %v1682 = vld [vmem:[%s1654 + $0xd8] sm:$0xff]
        %v1683 = vld [vmem:[%s1654 + $0xe0] sm:$0xff]
        %v1684 = vld [vmem:[%s1654 + $0xe8] sm:$0xff]
        %v1685 = vld [vmem:[%s1654 + $0xf0] sm:$0xff]
        %v1686 = vld [vmem:[%s1654 + $0xf8] sm:$0xff]
        %1687 = vst [vmem:[#allocation1] ss:$9 sm:$0xff] %v1650
        %s1688 = scalar_lea.vmem [#allocation1], 1
        %1689 = vst [vmem:[%s1688] ss:$9 sm:$0xff] %v1653
        %v1690 = vld [vmem:[#allocation1] sm:$0xff]
        %v1691 = vld [vmem:[#allocation1 + $0x9] sm:$0xff]
        %v1726 = vunpack.c.l.b16 %v1655
        %v1727 = vunpack.c.h.b16 %v1655
        %v1728 = vunpack.c.l.b16 %v1656
        %v1729 = vunpack.c.h.b16 %v1656
        %v1730 = vunpack.c.l.b16 %v1657
        %v1731 = vunpack.c.h.b16 %v1657
        %v1732 = vunpack.c.l.b16 %v1658
        %v1733 = vunpack.c.h.b16 %v1658
        %v1734 = vunpack.c.l.b16 %v1659
        %v1735 = vunpack.c.h.b16 %v1659
        %v1736 = vunpack.c.l.b16 %v1660
        %v1737 = vunpack.c.h.b16 %v1660
        %v1738 = vunpack.c.l.b16 %v1661
        %v1739 = vunpack.c.h.b16 %v1661
        %v1740 = vunpack.c.l.b16 %v1662
        %v1741 = vunpack.c.h.b16 %v1662
        %v1742 = vunpack.c.l.b16 %v1663
        %v1743 = vunpack.c.h.b16 %v1663
        %v1744 = vunpack.c.l.b16 %v1664
        %v1745 = vunpack.c.h.b16 %v1664
        %v1746 = vunpack.c.l.b16 %v1665
        %v1747 = vunpack.c.h.b16 %v1665
        %v1748 = vunpack.c.l.b16 %v1666
        %v1749 = vunpack.c.h.b16 %v1666
        %v1750 = vunpack.c.l.b16 %v1667
        %v1751 = vunpack.c.h.b16 %v1667
        %v1752 = vunpack.c.l.b16 %v1668
        %v1753 = vunpack.c.h.b16 %v1668
        %v1754 = vunpack.c.l.b16 %v1669
        %v1755 = vunpack.c.h.b16 %v1669
        %v1756 = vunpack.c.l.b16 %v1670
        %v1757 = vunpack.c.h.b16 %v1670
        %v1758 = vunpack.c.l.b16 %v1671
        %v1759 = vunpack.c.h.b16 %v1671
        %v1760 = vunpack.c.l.b16 %v1672
        %v1761 = vunpack.c.h.b16 %v1672
        %v1762 = vunpack.c.l.b16 %v1673
        %v1763 = vunpack.c.h.b16 %v1673
        %v1764 = vunpack.c.l.b16 %v1674
        %v1765 = vunpack.c.h.b16 %v1674
        %v1766 = vunpack.c.l.b16 %v1675
        %v1767 = vunpack.c.h.b16 %v1675
        %v1768 = vunpack.c.l.b16 %v1676
        %v1769 = vunpack.c.h.b16 %v1676
        %v1770 = vunpack.c.l.b16 %v1677
        %v1771 = vunpack.c.h.b16 %v1677
        %v1772 = vunpack.c.l.b16 %v1678
        %v1773 = vunpack.c.h.b16 %v1678
        %v1774 = vunpack.c.l.b16 %v1679
        %v1775 = vunpack.c.h.b16 %v1679
        %v1776 = vunpack.c.l.b16 %v1680
        %v1777 = vunpack.c.h.b16 %v1680
        %v1778 = vunpack.c.l.b16 %v1681
        %v1779 = vunpack.c.h.b16 %v1681
        %v1780 = vunpack.c.l.b16 %v1682
        %v1781 = vunpack.c.h.b16 %v1682
        %v1782 = vunpack.c.l.b16 %v1683
        %v1783 = vunpack.c.h.b16 %v1683
        %v1784 = vunpack.c.l.b16 %v1684
        %v1785 = vunpack.c.h.b16 %v1684
        %v1786 = vunpack.c.l.b16 %v1685
        %v1787 = vunpack.c.h.b16 %v1685
        %v1788 = vunpack.c.l.b16 %v1686
        %v1789 = vunpack.c.h.b16 %v1686
        %v1790 = vpack.c.b16 %v1728, %v1726
        %v1791 = vpack.c.b16 %v1729, %v1727
        %v1792 = vpack.c.b16 %v1732, %v1730
        %v1793 = vpack.c.b16 %v1733, %v1731
        %v1794 = vpack.c.b16 %v1736, %v1734
        %v1795 = vpack.c.b16 %v1737, %v1735
        %v1796 = vpack.c.b16 %v1740, %v1738
        %v1797 = vpack.c.b16 %v1741, %v1739
        %v1798 = vpack.c.b16 %v1744, %v1742
        %v1799 = vpack.c.b16 %v1745, %v1743
        %v1800 = vpack.c.b16 %v1748, %v1746
        %v1801 = vpack.c.b16 %v1749, %v1747
        %v1802 = vpack.c.b16 %v1752, %v1750
        %v1803 = vpack.c.b16 %v1753, %v1751
        %v1804 = vpack.c.b16 %v1756, %v1754
        %v1805 = vpack.c.b16 %v1757, %v1755
        %v1806 = vpack.c.b16 %v1760, %v1758
        %v1807 = vpack.c.b16 %v1761, %v1759
        %v1808 = vpack.c.b16 %v1764, %v1762
        %v1809 = vpack.c.b16 %v1765, %v1763
        %v1810 = vpack.c.b16 %v1768, %v1766
        %v1811 = vpack.c.b16 %v1769, %v1767
        %v1812 = vpack.c.b16 %v1772, %v1770
        %v1813 = vpack.c.b16 %v1773, %v1771
        %v1814 = vpack.c.b16 %v1776, %v1774
        %v1815 = vpack.c.b16 %v1777, %v1775
        %v1816 = vpack.c.b16 %v1780, %v1778
        %v1817 = vpack.c.b16 %v1781, %v1779
        %v1818 = vpack.c.b16 %v1784, %v1782
        %v1819 = vpack.c.b16 %v1785, %v1783
        %v1820 = vpack.c.b16 %v1788, %v1786
        %v1821 = vpack.c.b16 %v1789, %v1787
        %1854 = vmatpush.bf16.msra.mxu0 %v1804
        %1855 = vmatpush.bf16.msra.mxu0 %v1802
        %1856 = vmatpush.bf16.msra.mxu0 %v1800
        %1857 = vmatpush.bf16.msra.mxu0 %v1798
        %1858 = vmatpush.bf16.msra.mxu0 %v1796
        %1859 = vmatpush.bf16.msra.mxu0 %v1794
        %1860 = vmatpush.bf16.msra.mxu0 %v1792
        %1861 = vmatpush.bf16.msra.mxu0 %v1790
        %1862 = vmatmul.bf16.gmra.mxu0 %v1690
        %v1863 = vpop.f32.mrf.mxu0
        %v1864 = vadd.f32 0.0, %v1863
        %v1865 = vpop.f32.mrf.mxu0
        %1866 = vdwg.mxu0
        %1867 = vmatpush.bf16.msra.mxu0 %v1820
        %1868 = vmatpush.bf16.msra.mxu0 %v1818
        %1869 = vmatpush.bf16.msra.mxu0 %v1816
        %1870 = vmatpush.bf16.msra.mxu0 %v1814
        %1871 = vmatpush.bf16.msra.mxu0 %v1812
        %1872 = vmatpush.bf16.msra.mxu0 %v1810
        %1873 = vmatpush.bf16.msra.mxu0 %v1808
        %1874 = vmatpush.bf16.msra.mxu0 %v1806
        %1875 = vmatmul.bf16.gmra.mxu0 %v1691
        %v1876 = vpop.f32.mrf.mxu0
        %v1877 = vadd.f32 %v1864, %v1876
        %v1878 = vpop.f32.mrf.mxu0
        %1879 = vdwg.mxu0
        %1880 = vmatpush.bf16.msra.mxu0 %v1805
        %1881 = vmatpush.bf16.msra.mxu0 %v1803
        %1882 = vmatpush.bf16.msra.mxu0 %v1801
        %1883 = vmatpush.bf16.msra.mxu0 %v1799
        %1884 = vmatpush.bf16.msra.mxu0 %v1797
        %1885 = vmatpush.bf16.msra.mxu0 %v1795
        %1886 = vmatpush.bf16.msra.mxu0 %v1793
        %1887 = vmatpush.bf16.msra.mxu0 %v1791
        %1888 = vmatmul.bf16.gmra.mxu0 %v1690
        %v1889 = vpop.f32.mrf.mxu0
        %v1890 = vadd.f32 0.0, %v1889
        %v1891 = vpop.f32.mrf.mxu0
        %1892 = vdwg.mxu0
        %1893 = vmatpush.bf16.msra.mxu0 %v1821
        %1894 = vmatpush.bf16.msra.mxu0 %v1819
        %1895 = vmatpush.bf16.msra.mxu0 %v1817
        %1896 = vmatpush.bf16.msra.mxu0 %v1815
        %1897 = vmatpush.bf16.msra.mxu0 %v1813
        %1898 = vmatpush.bf16.msra.mxu0 %v1811
        %1899 = vmatpush.bf16.msra.mxu0 %v1809
        %1900 = vmatpush.bf16.msra.mxu0 %v1807
        %1901 = vmatmul.bf16.gmra.mxu0 %v1691
        %v1902 = vpop.f32.mrf.mxu0
        %v1903 = vadd.f32 %v1890, %v1902
        %v1904 = vpop.f32.mrf.mxu0
        %1905 = vdwg.mxu0
        %v1906 = vadd.f32 %v1646, %v1877
        %v1907 = vadd.f32 %v1647, %v1903
        %v1909 = vrot.slane %v280, 1
        %v1910 = vrot.slane %v280, 2
        %v1911 = vrot.slane %v280, 3
        %v1914 = vsel %vm289, %v280, %v1909
        %v1917 = vsel %vm293, %v1910, %v1911
        %v1918 = vsel %vm297, %v1914, %v1917
        %s1919 = scalar_lea.vmem %s212, 1536 [#allocation2]
        %v1920 = vld [vmem:[%s1919] sm:$0xff]
        %v1921 = vld [vmem:[%s1919 + $0x8] sm:$0xff]
        %v1922 = vld [vmem:[%s1919 + $0x10] sm:$0xff]
        %v1923 = vld [vmem:[%s1919 + $0x18] sm:$0xff]
        %v1924 = vld [vmem:[%s1919 + $0x20] sm:$0xff]
        %v1925 = vld [vmem:[%s1919 + $0x28] sm:$0xff]
        %v1926 = vld [vmem:[%s1919 + $0x30] sm:$0xff]
        %v1927 = vld [vmem:[%s1919 + $0x38] sm:$0xff]
        %v1928 = vld [vmem:[%s1919 + $0x40] sm:$0xff]
        %v1929 = vld [vmem:[%s1919 + $0x48] sm:$0xff]
        %v1930 = vld [vmem:[%s1919 + $0x50] sm:$0xff]
        %v1931 = vld [vmem:[%s1919 + $0x58] sm:$0xff]
        %v1932 = vld [vmem:[%s1919 + $0x60] sm:$0xff]
        %v1933 = vld [vmem:[%s1919 + $0x68] sm:$0xff]
        %v1934 = vld [vmem:[%s1919 + $0x70] sm:$0xff]
        %v1935 = vld [vmem:[%s1919 + $0x78] sm:$0xff]
        %v1936 = vld [vmem:[%s1919 + $0x80] sm:$0xff]
        %v1937 = vld [vmem:[%s1919 + $0x88] sm:$0xff]
        %v1938 = vld [vmem:[%s1919 + $0x90] sm:$0xff]
        %v1939 = vld [vmem:[%s1919 + $0x98] sm:$0xff]
        %v1940 = vld [vmem:[%s1919 + $0xa0] sm:$0xff]
        %v1941 = vld [vmem:[%s1919 + $0xa8] sm:$0xff]
        %v1942 = vld [vmem:[%s1919 + $0xb0] sm:$0xff]
        %v1943 = vld [vmem:[%s1919 + $0xb8] sm:$0xff]
        %v1944 = vld [vmem:[%s1919 + $0xc0] sm:$0xff]
        %v1945 = vld [vmem:[%s1919 + $0xc8] sm:$0xff]
        %v1946 = vld [vmem:[%s1919 + $0xd0] sm:$0xff]
        %v1947 = vld [vmem:[%s1919 + $0xd8] sm:$0xff]
        %v1948 = vld [vmem:[%s1919 + $0xe0] sm:$0xff]
        %v1949 = vld [vmem:[%s1919 + $0xe8] sm:$0xff]
        %v1950 = vld [vmem:[%s1919 + $0xf0] sm:$0xff]
        %v1951 = vld [vmem:[%s1919 + $0xf8] sm:$0xff]
        %1952 = vst [vmem:[#allocation1] ss:$9 sm:$0xff] %v1125
        %s1953 = scalar_lea.vmem [#allocation1], 1
        %1954 = vst [vmem:[%s1953] ss:$9 sm:$0xff] %v1918
        %v1955 = vld [vmem:[#allocation1] sm:$0xff]
        %v1956 = vld [vmem:[#allocation1 + $0x9] sm:$0xff]
        %v1991 = vunpack.c.l.b16 %v1920
        %v1992 = vunpack.c.h.b16 %v1920
        %v1993 = vunpack.c.l.b16 %v1921
        %v1994 = vunpack.c.h.b16 %v1921
        %v1995 = vunpack.c.l.b16 %v1922
        %v1996 = vunpack.c.h.b16 %v1922
        %v1997 = vunpack.c.l.b16 %v1923
        %v1998 = vunpack.c.h.b16 %v1923
        %v1999 = vunpack.c.l.b16 %v1924
        %v2000 = vunpack.c.h.b16 %v1924
        %v2001 = vunpack.c.l.b16 %v1925
        %v2002 = vunpack.c.h.b16 %v1925
        %v2003 = vunpack.c.l.b16 %v1926
        %v2004 = vunpack.c.h.b16 %v1926
        %v2005 = vunpack.c.l.b16 %v1927
        %v2006 = vunpack.c.h.b16 %v1927
        %v2007 = vunpack.c.l.b16 %v1928
        %v2008 = vunpack.c.h.b16 %v1928
        %v2009 = vunpack.c.l.b16 %v1929
        %v2010 = vunpack.c.h.b16 %v1929
        %v2011 = vunpack.c.l.b16 %v1930
        %v2012 = vunpack.c.h.b16 %v1930
        %v2013 = vunpack.c.l.b16 %v1931
        %v2014 = vunpack.c.h.b16 %v1931
        %v2015 = vunpack.c.l.b16 %v1932
        %v2016 = vunpack.c.h.b16 %v1932
        %v2017 = vunpack.c.l.b16 %v1933
        %v2018 = vunpack.c.h.b16 %v1933
        %v2019 = vunpack.c.l.b16 %v1934
        %v2020 = vunpack.c.h.b16 %v1934
        %v2021 = vunpack.c.l.b16 %v1935
        %v2022 = vunpack.c.h.b16 %v1935
        %v2023 = vunpack.c.l.b16 %v1936
        %v2024 = vunpack.c.h.b16 %v1936
        %v2025 = vunpack.c.l.b16 %v1937
        %v2026 = vunpack.c.h.b16 %v1937
        %v2027 = vunpack.c.l.b16 %v1938
        %v2028 = vunpack.c.h.b16 %v1938
        %v2029 = vunpack.c.l.b16 %v1939
        %v2030 = vunpack.c.h.b16 %v1939
        %v2031 = vunpack.c.l.b16 %v1940
        %v2032 = vunpack.c.h.b16 %v1940
        %v2033 = vunpack.c.l.b16 %v1941
        %v2034 = vunpack.c.h.b16 %v1941
        %v2035 = vunpack.c.l.b16 %v1942
        %v2036 = vunpack.c.h.b16 %v1942
        %v2037 = vunpack.c.l.b16 %v1943
        %v2038 = vunpack.c.h.b16 %v1943
        %v2039 = vunpack.c.l.b16 %v1944
        %v2040 = vunpack.c.h.b16 %v1944
        %v2041 = vunpack.c.l.b16 %v1945
        %v2042 = vunpack.c.h.b16 %v1945
        %v2043 = vunpack.c.l.b16 %v1946
        %v2044 = vunpack.c.h.b16 %v1946
        %v2045 = vunpack.c.l.b16 %v1947
        %v2046 = vunpack.c.h.b16 %v1947
        %v2047 = vunpack.c.l.b16 %v1948
        %v2048 = vunpack.c.h.b16 %v1948
        %v2049 = vunpack.c.l.b16 %v1949
        %v2050 = vunpack.c.h.b16 %v1949
        %v2051 = vunpack.c.l.b16 %v1950
        %v2052 = vunpack.c.h.b16 %v1950
        %v2053 = vunpack.c.l.b16 %v1951
        %v2054 = vunpack.c.h.b16 %v1951
        %v2055 = vpack.c.b16 %v1993, %v1991
        %v2056 = vpack.c.b16 %v1994, %v1992
        %v2057 = vpack.c.b16 %v1997, %v1995
        %v2058 = vpack.c.b16 %v1998, %v1996
        %v2059 = vpack.c.b16 %v2001, %v1999
        %v2060 = vpack.c.b16 %v2002, %v2000
        %v2061 = vpack.c.b16 %v2005, %v2003
        %v2062 = vpack.c.b16 %v2006, %v2004
        %v2063 = vpack.c.b16 %v2009, %v2007
        %v2064 = vpack.c.b16 %v2010, %v2008
        %v2065 = vpack.c.b16 %v2013, %v2011
        %v2066 = vpack.c.b16 %v2014, %v2012
        %v2067 = vpack.c.b16 %v2017, %v2015
        %v2068 = vpack.c.b16 %v2018, %v2016
        %v2069 = vpack.c.b16 %v2021, %v2019
        %v2070 = vpack.c.b16 %v2022, %v2020
        %v2071 = vpack.c.b16 %v2025, %v2023
        %v2072 = vpack.c.b16 %v2026, %v2024
        %v2073 = vpack.c.b16 %v2029, %v2027
        %v2074 = vpack.c.b16 %v2030, %v2028
        %v2075 = vpack.c.b16 %v2033, %v2031
        %v2076 = vpack.c.b16 %v2034, %v2032
        %v2077 = vpack.c.b16 %v2037, %v2035
        %v2078 = vpack.c.b16 %v2038, %v2036
        %v2079 = vpack.c.b16 %v2041, %v2039
        %v2080 = vpack.c.b16 %v2042, %v2040
        %v2081 = vpack.c.b16 %v2045, %v2043
        %v2082 = vpack.c.b16 %v2046, %v2044
        %v2083 = vpack.c.b16 %v2049, %v2047
        %v2084 = vpack.c.b16 %v2050, %v2048
        %v2085 = vpack.c.b16 %v2053, %v2051
        %v2086 = vpack.c.b16 %v2054, %v2052
        %2119 = vmatpush.bf16.msra.mxu0 %v2069
        %2120 = vmatpush.bf16.msra.mxu0 %v2067
        %2121 = vmatpush.bf16.msra.mxu0 %v2065
        %2122 = vmatpush.bf16.msra.mxu0 %v2063
        %2123 = vmatpush.bf16.msra.mxu0 %v2061
        %2124 = vmatpush.bf16.msra.mxu0 %v2059
        %2125 = vmatpush.bf16.msra.mxu0 %v2057
        %2126 = vmatpush.bf16.msra.mxu0 %v2055
        %2127 = vmatmul.bf16.gmra.mxu0 %v1955
        %v2128 = vpop.f32.mrf.mxu0
        %v2129 = vadd.f32 0.0, %v2128
        %v2130 = vpop.f32.mrf.mxu0
        %2131 = vdwg.mxu0
        %2132 = vmatpush.bf16.msra.mxu0 %v2085
        %2133 = vmatpush.bf16.msra.mxu0 %v2083
        %2134 = vmatpush.bf16.msra.mxu0 %v2081
        %2135 = vmatpush.bf16.msra.mxu0 %v2079
        %2136 = vmatpush.bf16.msra.mxu0 %v2077
        %2137 = vmatpush.bf16.msra.mxu0 %v2075
        %2138 = vmatpush.bf16.msra.mxu0 %v2073
        %2139 = vmatpush.bf16.msra.mxu0 %v2071
        %2140 = vmatmul.bf16.gmra.mxu0 %v1956
        %v2141 = vpop.f32.mrf.mxu0
        %v2142 = vadd.f32 %v2129, %v2141
        %v2143 = vpop.f32.mrf.mxu0
        %2144 = vdwg.mxu0
        %2145 = vmatpush.bf16.msra.mxu0 %v2070
        %2146 = vmatpush.bf16.msra.mxu0 %v2068
        %2147 = vmatpush.bf16.msra.mxu0 %v2066
        %2148 = vmatpush.bf16.msra.mxu0 %v2064
        %2149 = vmatpush.bf16.msra.mxu0 %v2062
        %2150 = vmatpush.bf16.msra.mxu0 %v2060
        %2151 = vmatpush.bf16.msra.mxu0 %v2058
        %2152 = vmatpush.bf16.msra.mxu0 %v2056
        %2153 = vmatmul.bf16.gmra.mxu0 %v1955
        %v2154 = vpop.f32.mrf.mxu0
        %v2155 = vadd.f32 0.0, %v2154
        %v2156 = vpop.f32.mrf.mxu0
        %2157 = vdwg.mxu0
        %2158 = vmatpush.bf16.msra.mxu0 %v2086
        %2159 = vmatpush.bf16.msra.mxu0 %v2084
        %2160 = vmatpush.bf16.msra.mxu0 %v2082
        %2161 = vmatpush.bf16.msra.mxu0 %v2080
        %2162 = vmatpush.bf16.msra.mxu0 %v2078
        %2163 = vmatpush.bf16.msra.mxu0 %v2076
        %2164 = vmatpush.bf16.msra.mxu0 %v2074
        %2165 = vmatpush.bf16.msra.mxu0 %v2072
        %2166 = vmatmul.bf16.gmra.mxu0 %v1956
        %v2167 = vpop.f32.mrf.mxu0
        %v2168 = vadd.f32 %v2155, %v2167
        %v2169 = vpop.f32.mrf.mxu0
        %2170 = vdwg.mxu0
        %v2171 = vadd.f32 %v1906, %v2142
        %v2172 = vadd.f32 %v1907, %v2168
        %v2173 = vsel %vm338, %v280, %v1909
        %v2174 = vsel %vm340, %v1910, %v1911
        %v2175 = vsel %vm342, %v2173, %v2174
        %v2177 = vrot.slane %v2175, 1
        %v2178 = vshrl.u32 %v1918, 16
        %v2180 = vrot.slane %v2178, 7
        %v2181 = vrot.slane %v2180, 1
        %v2183 = vshll.u32 %v2177, 16
        %v2185 = vsel %vm365, %v2181, %v2183
        %s2186 = scalar_lea.vmem %s212, 1792 [#allocation2]
        %v2187 = vld [vmem:[%s2186] sm:$0xff]
        %v2188 = vld [vmem:[%s2186 + $0x8] sm:$0xff]
        %v2189 = vld [vmem:[%s2186 + $0x10] sm:$0xff]
        %v2190 = vld [vmem:[%s2186 + $0x18] sm:$0xff]
        %v2191 = vld [vmem:[%s2186 + $0x20] sm:$0xff]
        %v2192 = vld [vmem:[%s2186 + $0x28] sm:$0xff]
        %v2193 = vld [vmem:[%s2186 + $0x30] sm:$0xff]
        %v2194 = vld [vmem:[%s2186 + $0x38] sm:$0xff]
        %v2195 = vld [vmem:[%s2186 + $0x40] sm:$0xff]
        %v2196 = vld [vmem:[%s2186 + $0x48] sm:$0xff]
        %v2197 = vld [vmem:[%s2186 + $0x50] sm:$0xff]
        %v2198 = vld [vmem:[%s2186 + $0x58] sm:$0xff]
        %v2199 = vld [vmem:[%s2186 + $0x60] sm:$0xff]
        %v2200 = vld [vmem:[%s2186 + $0x68] sm:$0xff]
        %v2201 = vld [vmem:[%s2186 + $0x70] sm:$0xff]
        %v2202 = vld [vmem:[%s2186 + $0x78] sm:$0xff]
        %v2203 = vld [vmem:[%s2186 + $0x80] sm:$0xff]
        %v2204 = vld [vmem:[%s2186 + $0x88] sm:$0xff]
        %v2205 = vld [vmem:[%s2186 + $0x90] sm:$0xff]
        %v2206 = vld [vmem:[%s2186 + $0x98] sm:$0xff]
        %v2207 = vld [vmem:[%s2186 + $0xa0] sm:$0xff]
        %v2208 = vld [vmem:[%s2186 + $0xa8] sm:$0xff]
        %v2209 = vld [vmem:[%s2186 + $0xb0] sm:$0xff]
        %v2210 = vld [vmem:[%s2186 + $0xb8] sm:$0xff]
        %v2211 = vld [vmem:[%s2186 + $0xc0] sm:$0xff]
        %v2212 = vld [vmem:[%s2186 + $0xc8] sm:$0xff]
        %v2213 = vld [vmem:[%s2186 + $0xd0] sm:$0xff]
        %v2214 = vld [vmem:[%s2186 + $0xd8] sm:$0xff]
        %v2215 = vld [vmem:[%s2186 + $0xe0] sm:$0xff]
        %v2216 = vld [vmem:[%s2186 + $0xe8] sm:$0xff]
        %v2217 = vld [vmem:[%s2186 + $0xf0] sm:$0xff]
        %v2218 = vld [vmem:[%s2186 + $0xf8] sm:$0xff]
        %2219 = vst [vmem:[#allocation1] ss:$9 sm:$0xff] %v1392
        %s2221 = scalar_lea.vmem [#allocation1], 1
        %2222 = vst [vmem:[%s2221] ss:$9 sm:$0xff] %v2185
        %v2223 = vld [vmem:[#allocation1] sm:$0xff]
        %v2224 = vld [vmem:[#allocation1 + $0x9] sm:$0xff]
        %v2259 = vunpack.c.l.b16 %v2187
        %v2260 = vunpack.c.h.b16 %v2187
        %v2261 = vunpack.c.l.b16 %v2188
        %v2262 = vunpack.c.h.b16 %v2188
        %v2263 = vunpack.c.l.b16 %v2189
        %v2264 = vunpack.c.h.b16 %v2189
        %v2265 = vunpack.c.l.b16 %v2190
        %v2266 = vunpack.c.h.b16 %v2190
        %v2267 = vunpack.c.l.b16 %v2191
        %v2268 = vunpack.c.h.b16 %v2191
        %v2269 = vunpack.c.l.b16 %v2192
        %v2270 = vunpack.c.h.b16 %v2192
        %v2271 = vunpack.c.l.b16 %v2193
        %v2272 = vunpack.c.h.b16 %v2193
        %v2273 = vunpack.c.l.b16 %v2194
        %v2274 = vunpack.c.h.b16 %v2194
        %v2275 = vunpack.c.l.b16 %v2195
        %v2276 = vunpack.c.h.b16 %v2195
        %v2277 = vunpack.c.l.b16 %v2196
        %v2278 = vunpack.c.h.b16 %v2196
        %v2279 = vunpack.c.l.b16 %v2197
        %v2280 = vunpack.c.h.b16 %v2197
        %v2281 = vunpack.c.l.b16 %v2198
        %v2282 = vunpack.c.h.b16 %v2198
        %v2283 = vunpack.c.l.b16 %v2199
        %v2284 = vunpack.c.h.b16 %v2199
        %v2285 = vunpack.c.l.b16 %v2200
        %v2286 = vunpack.c.h.b16 %v2200
        %v2287 = vunpack.c.l.b16 %v2201
        %v2288 = vunpack.c.h.b16 %v2201
        %v2289 = vunpack.c.l.b16 %v2202
        %v2290 = vunpack.c.h.b16 %v2202
        %v2291 = vunpack.c.l.b16 %v2203
        %v2292 = vunpack.c.h.b16 %v2203
        %v2293 = vunpack.c.l.b16 %v2204
        %v2294 = vunpack.c.h.b16 %v2204
        %v2295 = vunpack.c.l.b16 %v2205
        %v2296 = vunpack.c.h.b16 %v2205
        %v2297 = vunpack.c.l.b16 %v2206
        %v2298 = vunpack.c.h.b16 %v2206
        %v2299 = vunpack.c.l.b16 %v2207
        %v2300 = vunpack.c.h.b16 %v2207
        %v2301 = vunpack.c.l.b16 %v2208
        %v2302 = vunpack.c.h.b16 %v2208
        %v2303 = vunpack.c.l.b16 %v2209
        %v2304 = vunpack.c.h.b16 %v2209
        %v2305 = vunpack.c.l.b16 %v2210
        %v2306 = vunpack.c.h.b16 %v2210
        %v2307 = vunpack.c.l.b16 %v2211
        %v2308 = vunpack.c.h.b16 %v2211
        %v2309 = vunpack.c.l.b16 %v2212
        %v2310 = vunpack.c.h.b16 %v2212
        %v2311 = vunpack.c.l.b16 %v2213
        %v2312 = vunpack.c.h.b16 %v2213
        %v2313 = vunpack.c.l.b16 %v2214
        %v2314 = vunpack.c.h.b16 %v2214
        %v2315 = vunpack.c.l.b16 %v2215
        %v2316 = vunpack.c.h.b16 %v2215
        %v2317 = vunpack.c.l.b16 %v2216
        %v2318 = vunpack.c.h.b16 %v2216
        %v2319 = vunpack.c.l.b16 %v2217
        %v2320 = vunpack.c.h.b16 %v2217
        %v2321 = vunpack.c.l.b16 %v2218
        %v2322 = vunpack.c.h.b16 %v2218
        %v2323 = vpack.c.b16 %v2261, %v2259
        %v2324 = vpack.c.b16 %v2262, %v2260
        %v2325 = vpack.c.b16 %v2265, %v2263
        %v2326 = vpack.c.b16 %v2266, %v2264
        %v2327 = vpack.c.b16 %v2269, %v2267
        %v2328 = vpack.c.b16 %v2270, %v2268
        %v2329 = vpack.c.b16 %v2273, %v2271
        %v2330 = vpack.c.b16 %v2274, %v2272
        %v2331 = vpack.c.b16 %v2277, %v2275
        %v2332 = vpack.c.b16 %v2278, %v2276
        %v2333 = vpack.c.b16 %v2281, %v2279
        %v2334 = vpack.c.b16 %v2282, %v2280
        %v2335 = vpack.c.b16 %v2285, %v2283
        %v2336 = vpack.c.b16 %v2286, %v2284
        %v2337 = vpack.c.b16 %v2289, %v2287
        %v2338 = vpack.c.b16 %v2290, %v2288
        %v2339 = vpack.c.b16 %v2293, %v2291
        %v2340 = vpack.c.b16 %v2294, %v2292
        %v2341 = vpack.c.b16 %v2297, %v2295
        %v2342 = vpack.c.b16 %v2298, %v2296
        %v2343 = vpack.c.b16 %v2301, %v2299
        %v2344 = vpack.c.b16 %v2302, %v2300
        %v2345 = vpack.c.b16 %v2305, %v2303
        %v2346 = vpack.c.b16 %v2306, %v2304
        %v2347 = vpack.c.b16 %v2309, %v2307
        %v2348 = vpack.c.b16 %v2310, %v2308
        %v2349 = vpack.c.b16 %v2313, %v2311
        %v2350 = vpack.c.b16 %v2314, %v2312
        %v2351 = vpack.c.b16 %v2317, %v2315
        %v2352 = vpack.c.b16 %v2318, %v2316
        %v2353 = vpack.c.b16 %v2321, %v2319
        %v2354 = vpack.c.b16 %v2322, %v2320
        %2387 = vmatpush.bf16.msra.mxu0 %v2337
        %2388 = vmatpush.bf16.msra.mxu0 %v2335
        %2389 = vmatpush.bf16.msra.mxu0 %v2333
        %2390 = vmatpush.bf16.msra.mxu0 %v2331
        %2391 = vmatpush.bf16.msra.mxu0 %v2329
        %2392 = vmatpush.bf16.msra.mxu0 %v2327
        %2393 = vmatpush.bf16.msra.mxu0 %v2325
        %2394 = vmatpush.bf16.msra.mxu0 %v2323
        %2395 = vmatmul.bf16.gmra.mxu0 %v2223
        %v2396 = vpop.f32.mrf.mxu0
        %v2397 = vadd.f32 0.0, %v2396
        %v2398 = vpop.f32.mrf.mxu0
        %2399 = vdwg.mxu0
        %2400 = vmatpush.bf16.msra.mxu0 %v2353
        %2401 = vmatpush.bf16.msra.mxu0 %v2351
        %2402 = vmatpush.bf16.msra.mxu0 %v2349
        %2403 = vmatpush.bf16.msra.mxu0 %v2347
        %2404 = vmatpush.bf16.msra.mxu0 %v2345
        %2405 = vmatpush.bf16.msra.mxu0 %v2343
        %2406 = vmatpush.bf16.msra.mxu0 %v2341
        %2407 = vmatpush.bf16.msra.mxu0 %v2339
        %2408 = vmatmul.bf16.gmra.mxu0 %v2224
        %v2409 = vpop.f32.mrf.mxu0
        %v2410 = vadd.f32 %v2397, %v2409
        %v2411 = vpop.f32.mrf.mxu0
        %2412 = vdwg.mxu0
        %2413 = vmatpush.bf16.msra.mxu0 %v2338
        %2414 = vmatpush.bf16.msra.mxu0 %v2336
        %2415 = vmatpush.bf16.msra.mxu0 %v2334
        %2416 = vmatpush.bf16.msra.mxu0 %v2332
        %2417 = vmatpush.bf16.msra.mxu0 %v2330
        %2418 = vmatpush.bf16.msra.mxu0 %v2328
        %2419 = vmatpush.bf16.msra.mxu0 %v2326
        %2420 = vmatpush.bf16.msra.mxu0 %v2324
        %2421 = vmatmul.bf16.gmra.mxu0 %v2223
        %v2422 = vpop.f32.mrf.mxu0
        %v2423 = vadd.f32 0.0, %v2422
        %v2424 = vpop.f32.mrf.mxu0
        %2425 = vdwg.mxu0
        %2426 = vmatpush.bf16.msra.mxu0 %v2354
        %2427 = vmatpush.bf16.msra.mxu0 %v2352
        %2428 = vmatpush.bf16.msra.mxu0 %v2350
        %2429 = vmatpush.bf16.msra.mxu0 %v2348
        %2430 = vmatpush.bf16.msra.mxu0 %v2346
        %2431 = vmatpush.bf16.msra.mxu0 %v2344
        %2432 = vmatpush.bf16.msra.mxu0 %v2342
        %2433 = vmatpush.bf16.msra.mxu0 %v2340
        %2434 = vmatmul.bf16.gmra.mxu0 %v2224
        %v2435 = vpop.f32.mrf.mxu0
        %v2436 = vadd.f32 %v2423, %v2435
        %v2437 = vpop.f32.mrf.mxu0
        %2438 = vdwg.mxu0
        %v2439 = vadd.f32 %v2171, %v2410
        %v2440 = vadd.f32 %v2172, %v2436
        %2441 = vst [vmem:[#allocation1] sm:$0xff] %v279
        %s2442 = scalar_lea.vmem [#allocation1], 1
        %v2443 = vld [vmem:[%s2442] ss:$2 sm:$0xff]
        %2444 = vst [vmem:[#allocation1 + $0x10] sm:$0xff] %v280
        %s2445 = scalar_lea.vmem [#allocation1], 17
        %v2446 = vld [vmem:[%s2445] ss:$2 sm:$0xff]
        %s2447 = scalar_lea.vmem %s212, 2048 [#allocation2]
        %v2448 = vld [vmem:[%s2447] sm:$0xff]
        %v2449 = vld [vmem:[%s2447 + $0x8] sm:$0xff]
        %v2450 = vld [vmem:[%s2447 + $0x10] sm:$0xff]
        %v2451 = vld [vmem:[%s2447 + $0x18] sm:$0xff]
        %v2452 = vld [vmem:[%s2447 + $0x20] sm:$0xff]
        %v2453 = vld [vmem:[%s2447 + $0x28] sm:$0xff]
        %v2454 = vld [vmem:[%s2447 + $0x30] sm:$0xff]
        %v2455 = vld [vmem:[%s2447 + $0x38] sm:$0xff]
        %v2456 = vld [vmem:[%s2447 + $0x40] sm:$0xff]
        %v2457 = vld [vmem:[%s2447 + $0x48] sm:$0xff]
        %v2458 = vld [vmem:[%s2447 + $0x50] sm:$0xff]
        %v2459 = vld [vmem:[%s2447 + $0x58] sm:$0xff]
        %v2460 = vld [vmem:[%s2447 + $0x60] sm:$0xff]
        %v2461 = vld [vmem:[%s2447 + $0x68] sm:$0xff]
        %v2462 = vld [vmem:[%s2447 + $0x70] sm:$0xff]
        %v2463 = vld [vmem:[%s2447 + $0x78] sm:$0xff]
        %v2464 = vld [vmem:[%s2447 + $0x80] sm:$0xff]
        %v2465 = vld [vmem:[%s2447 + $0x88] sm:$0xff]
        %v2466 = vld [vmem:[%s2447 + $0x90] sm:$0xff]
        %v2467 = vld [vmem:[%s2447 + $0x98] sm:$0xff]
        %v2468 = vld [vmem:[%s2447 + $0xa0] sm:$0xff]
        %v2469 = vld [vmem:[%s2447 + $0xa8] sm:$0xff]
        %v2470 = vld [vmem:[%s2447 + $0xb0] sm:$0xff]
        %v2471 = vld [vmem:[%s2447 + $0xb8] sm:$0xff]
        %v2472 = vld [vmem:[%s2447 + $0xc0] sm:$0xff]
        %v2473 = vld [vmem:[%s2447 + $0xc8] sm:$0xff]
        %v2474 = vld [vmem:[%s2447 + $0xd0] sm:$0xff]
        %v2475 = vld [vmem:[%s2447 + $0xd8] sm:$0xff]
        %v2476 = vld [vmem:[%s2447 + $0xe0] sm:$0xff]
        %v2477 = vld [vmem:[%s2447 + $0xe8] sm:$0xff]
        %v2478 = vld [vmem:[%s2447 + $0xf0] sm:$0xff]
        %v2479 = vld [vmem:[%s2447 + $0xf8] sm:$0xff]
        %2480 = vst [vmem:[#allocation1] ss:$9 sm:$0xff] %v2443
        %s2481 = scalar_lea.vmem [#allocation1], 1
        %2482 = vst [vmem:[%s2481] ss:$9 sm:$0xff] %v2446
        %v2483 = vld [vmem:[#allocation1] sm:$0xff]
        %v2484 = vld [vmem:[#allocation1 + $0x9] sm:$0xff]
        %v2519 = vunpack.c.l.b16 %v2448
        %v2520 = vunpack.c.h.b16 %v2448
        %v2521 = vunpack.c.l.b16 %v2449
        %v2522 = vunpack.c.h.b16 %v2449
        %v2523 = vunpack.c.l.b16 %v2450
        %v2524 = vunpack.c.h.b16 %v2450
        %v2525 = vunpack.c.l.b16 %v2451
        %v2526 = vunpack.c.h.b16 %v2451
        %v2527 = vunpack.c.l.b16 %v2452
        %v2528 = vunpack.c.h.b16 %v2452
        %v2529 = vunpack.c.l.b16 %v2453
        %v2530 = vunpack.c.h.b16 %v2453
        %v2531 = vunpack.c.l.b16 %v2454
        %v2532 = vunpack.c.h.b16 %v2454
        %v2533 = vunpack.c.l.b16 %v2455
        %v2534 = vunpack.c.h.b16 %v2455
        %v2535 = vunpack.c.l.b16 %v2456
        %v2536 = vunpack.c.h.b16 %v2456
        %v2537 = vunpack.c.l.b16 %v2457
        %v2538 = vunpack.c.h.b16 %v2457
        %v2539 = vunpack.c.l.b16 %v2458
        %v2540 = vunpack.c.h.b16 %v2458
        %v2541 = vunpack.c.l.b16 %v2459
        %v2542 = vunpack.c.h.b16 %v2459
        %v2543 = vunpack.c.l.b16 %v2460
        %v2544 = vunpack.c.h.b16 %v2460
        %v2545 = vunpack.c.l.b16 %v2461
        %v2546 = vunpack.c.h.b16 %v2461
        %v2547 = vunpack.c.l.b16 %v2462
        %v2548 = vunpack.c.h.b16 %v2462
        %v2549 = vunpack.c.l.b16 %v2463
        %v2550 = vunpack.c.h.b16 %v2463
        %v2551 = vunpack.c.l.b16 %v2464
        %v2552 = vunpack.c.h.b16 %v2464
        %v2553 = vunpack.c.l.b16 %v2465
        %v2554 = vunpack.c.h.b16 %v2465
        %v2555 = vunpack.c.l.b16 %v2466
        %v2556 = vunpack.c.h.b16 %v2466
        %v2557 = vunpack.c.l.b16 %v2467
        %v2558 = vunpack.c.h.b16 %v2467
        %v2559 = vunpack.c.l.b16 %v2468
        %v2560 = vunpack.c.h.b16 %v2468
        %v2561 = vunpack.c.l.b16 %v2469
        %v2562 = vunpack.c.h.b16 %v2469
        %v2563 = vunpack.c.l.b16 %v2470
        %v2564 = vunpack.c.h.b16 %v2470
        %v2565 = vunpack.c.l.b16 %v2471
        %v2566 = vunpack.c.h.b16 %v2471
        %v2567 = vunpack.c.l.b16 %v2472
        %v2568 = vunpack.c.h.b16 %v2472
        %v2569 = vunpack.c.l.b16 %v2473
        %v2570 = vunpack.c.h.b16 %v2473
        %v2571 = vunpack.c.l.b16 %v2474
        %v2572 = vunpack.c.h.b16 %v2474
        %v2573 = vunpack.c.l.b16 %v2475
        %v2574 = vunpack.c.h.b16 %v2475
        %v2575 = vunpack.c.l.b16 %v2476
        %v2576 = vunpack.c.h.b16 %v2476
        %v2577 = vunpack.c.l.b16 %v2477
        %v2578 = vunpack.c.h.b16 %v2477
        %v2579 = vunpack.c.l.b16 %v2478
        %v2580 = vunpack.c.h.b16 %v2478
        %v2581 = vunpack.c.l.b16 %v2479
        %v2582 = vunpack.c.h.b16 %v2479
        %v2583 = vpack.c.b16 %v2521, %v2519
        %v2584 = vpack.c.b16 %v2522, %v2520
        %v2585 = vpack.c.b16 %v2525, %v2523
        %v2586 = vpack.c.b16 %v2526, %v2524
        %v2587 = vpack.c.b16 %v2529, %v2527
        %v2588 = vpack.c.b16 %v2530, %v2528
        %v2589 = vpack.c.b16 %v2533, %v2531
        %v2590 = vpack.c.b16 %v2534, %v2532
        %v2591 = vpack.c.b16 %v2537, %v2535
        %v2592 = vpack.c.b16 %v2538, %v2536
        %v2593 = vpack.c.b16 %v2541, %v2539
        %v2594 = vpack.c.b16 %v2542, %v2540
        %v2595 = vpack.c.b16 %v2545, %v2543
        %v2596 = vpack.c.b16 %v2546, %v2544
        %v2597 = vpack.c.b16 %v2549, %v2547
        %v2598 = vpack.c.b16 %v2550, %v2548
        %v2599 = vpack.c.b16 %v2553, %v2551
        %v2600 = vpack.c.b16 %v2554, %v2552
        %v2601 = vpack.c.b16 %v2557, %v2555
        %v2602 = vpack.c.b16 %v2558, %v2556
        %v2603 = vpack.c.b16 %v2561, %v2559
        %v2604 = vpack.c.b16 %v2562, %v2560
        %v2605 = vpack.c.b16 %v2565, %v2563
        %v2606 = vpack.c.b16 %v2566, %v2564
        %v2607 = vpack.c.b16 %v2569, %v2567
        %v2608 = vpack.c.b16 %v2570, %v2568
        %v2609 = vpack.c.b16 %v2573, %v2571
        %v2610 = vpack.c.b16 %v2574, %v2572
        %v2611 = vpack.c.b16 %v2577, %v2575
        %v2612 = vpack.c.b16 %v2578, %v2576
        %v2613 = vpack.c.b16 %v2581, %v2579
        %v2614 = vpack.c.b16 %v2582, %v2580
        %2647 = vmatpush.bf16.msra.mxu0 %v2597
        %2648 = vmatpush.bf16.msra.mxu0 %v2595
        %2649 = vmatpush.bf16.msra.mxu0 %v2593
        %2650 = vmatpush.bf16.msra.mxu0 %v2591
        %2651 = vmatpush.bf16.msra.mxu0 %v2589
        %2652 = vmatpush.bf16.msra.mxu0 %v2587
        %2653 = vmatpush.bf16.msra.mxu0 %v2585
        %2654 = vmatpush.bf16.msra.mxu0 %v2583
        %2655 = vmatmul.bf16.gmra.mxu0 %v2483
        %v2656 = vpop.f32.mrf.mxu0
        %v2657 = vadd.f32 0.0, %v2656
        %v2658 = vpop.f32.mrf.mxu0
        %2659 = vdwg.mxu0
        %2660 = vmatpush.bf16.msra.mxu0 %v2613
        %2661 = vmatpush.bf16.msra.mxu0 %v2611
        %2662 = vmatpush.bf16.msra.mxu0 %v2609
        %2663 = vmatpush.bf16.msra.mxu0 %v2607
        %2664 = vmatpush.bf16.msra.mxu0 %v2605
        %2665 = vmatpush.bf16.msra.mxu0 %v2603
        %2666 = vmatpush.bf16.msra.mxu0 %v2601
        %2667 = vmatpush.bf16.msra.mxu0 %v2599
        %2668 = vmatmul.bf16.gmra.mxu0 %v2484
        %v2669 = vpop.f32.mrf.mxu0
        %v2670 = vadd.f32 %v2657, %v2669
        %v2671 = vpop.f32.mrf.mxu0
        %2672 = vdwg.mxu0
        %2673 = vmatpush.bf16.msra.mxu0 %v2598
        %2674 = vmatpush.bf16.msra.mxu0 %v2596
        %2675 = vmatpush.bf16.msra.mxu0 %v2594
        %2676 = vmatpush.bf16.msra.mxu0 %v2592
        %2677 = vmatpush.bf16.msra.mxu0 %v2590
        %2678 = vmatpush.bf16.msra.mxu0 %v2588
        %2679 = vmatpush.bf16.msra.mxu0 %v2586
        %2680 = vmatpush.bf16.msra.mxu0 %v2584
        %2681 = vmatmul.bf16.gmra.mxu0 %v2483
        %v2682 = vpop.f32.mrf.mxu0
        %v2683 = vadd.f32 0.0, %v2682
        %v2684 = vpop.f32.mrf.mxu0
        %2685 = vdwg.mxu0
        %2686 = vmatpush.bf16.msra.mxu0 %v2614
        %2687 = vmatpush.bf16.msra.mxu0 %v2612
        %2688 = vmatpush.bf16.msra.mxu0 %v2610
        %2689 = vmatpush.bf16.msra.mxu0 %v2608
        %2690 = vmatpush.bf16.msra.mxu0 %v2606
        %2691 = vmatpush.bf16.msra.mxu0 %v2604
        %2692 = vmatpush.bf16.msra.mxu0 %v2602
        %2693 = vmatpush.bf16.msra.mxu0 %v2600
        %2694 = vmatmul.bf16.gmra.mxu0 %v2484
        %v2695 = vpop.f32.mrf.mxu0
        %v2696 = vadd.f32 %v2683, %v2695
        %v2697 = vpop.f32.mrf.mxu0
        %2698 = vdwg.mxu0
        %v2699 = vadd.f32 %v2439, %v2670
        %v2700 = vadd.f32 %v2440, %v2696
        %v2701 = vld [vmem:[%s222] sm:$0x3]
        %v2703 = vperm.slane %v2701, 0
        %v2704 = vperm.slane %v2701, 1
        %v2707 = vadd.f32 %v2699, %v2703
        %v2708 = vadd.f32 %v2700, %v2704
        %vm2709 = vcmask 1043456
        %v2710 = vsel %vm2709, %v2707, 0.0
        %v2711 = vrot.slane %v2710, 4
        %v2712 = vadd.f32 %v2710, %v2711
        %v2713 = vrot.slane %v2712, 2
        %v2714 = vadd.f32 %v2712, %v2713
        %v2715 = vrot.slane %v2714, 1
        %v2716 = vadd.f32 %v2714, %v2715
        %v2717 = vsel %vm2709, %v2708, 0.0
        %v2718 = vrot.slane %v2717, 4
        %v2719 = vadd.f32 %v2717, %v2718
        %v2720 = vrot.slane %v2719, 2
        %v2721 = vadd.f32 %v2719, %v2720
        %v2722 = vrot.slane %v2721, 1
        %v2723 = vadd.f32 %v2721, %v2722
        %v2724 = vrcp.pop 4.0
        %v2725 = vmul.f32 4.0, %v2724
        %v2726 = vsub.f32 1.0, %v2725
        %v2727 = vmul.f32 %v2724, %v2726
        %v2728 = vadd.f32 %v2724, %v2727
        %vm2729 = vweird.f32 %v2724
        %v2730 = vsel %vm2729, %v2724, %v2728
        %v2731 = vmul.f32 %v2716, %v2730
        %v2732 = vmul.f32 %v2723, %v2730
        %v2733 = vmul.f32 %v2707, %v2707
        %v2734 = vmul.f32 %v2708, %v2708
        %v2735 = vsel %vm2709, %v2733, 0.0
        %v2736 = vrot.slane %v2735, 4
        %v2737 = vadd.f32 %v2735, %v2736
        %v2738 = vrot.slane %v2737, 2
        %v2739 = vadd.f32 %v2737, %v2738
        %v2740 = vrot.slane %v2739, 1
        %v2741 = vadd.f32 %v2739, %v2740
        %v2742 = vsel %vm2709, %v2734, 0.0
        %v2743 = vrot.slane %v2742, 4
        %v2744 = vadd.f32 %v2742, %v2743
        %v2745 = vrot.slane %v2744, 2
        %v2746 = vadd.f32 %v2744, %v2745
        %v2747 = vrot.slane %v2746, 1
        %v2748 = vadd.f32 %v2746, %v2747
        %v2749 = vmul.f32 %v2741, %v2730
        %v2750 = vmul.f32 %v2748, %v2730
        %v2751 = vmul.f32 %v2731, %v2731
        %v2752 = vmul.f32 %v2732, %v2732
        %v2753 = vsub.f32 %v2749, %v2751
        %v2754 = vsub.f32 %v2750, %v2752
        %v2755 = vsub.f32 %v2707, %v2731
        %v2756 = vsub.f32 %v2708, %v2732
        %v2757 = vmax.f32 %v2753, 0.0
        %v2758 = vmax.f32 %v2754, 0.0
        %v2759 = vadd.f32 %v2757, 1e-05
        %v2760 = vadd.f32 %v2758, 1e-05
        %v2761 = vrsqrt.pop %v2759
        %v2762 = vmul.f32 %v2761, %v2759
        %v2763 = vmul.f32 %v2762, %v2761
        %v2764 = vmul.f32 0.5, %v2763
        %v2765 = vsub.f32 1.5, %v2764
        %v2766 = vmul.f32 %v2761, %v2765
        %vm2767 = vweird.f32 %v2759
        %vm2768 = vweird.f32 %v2761
        %vm2769 = vmor %vm2767, %vm2768
        %v2770 = vsel %vm2769, %v2761, %v2766
        %v2771 = vrsqrt.pop %v2760
        %v2772 = vmul.f32 %v2771, %v2760
        %v2773 = vmul.f32 %v2772, %v2771
        %v2774 = vmul.f32 0.5, %v2773
        %v2775 = vsub.f32 1.5, %v2774
        %v2776 = vmul.f32 %v2771, %v2775
        %vm2777 = vweird.f32 %v2760
        %vm2778 = vweird.f32 %v2771
        %vm2779 = vmor %vm2777, %vm2778
        %v2780 = vsel %vm2779, %v2771, %v2776
        %v2781 = vmul.f32 %v2755, %v2770
        %v2782 = vmul.f32 %v2756, %v2780
        %vm2783 = vcmp.ge.f32.partialorder %v2781, 0.0
        %vm2784 = vcmp.ge.f32.partialorder %v2782, 0.0
        %v2785 = vmul.f32 %v2781, 0.2
        %v2786 = vmul.f32 %v2782, 0.2
        %v2787 = vsel %vm2783, %v2781, %v2785
        %v2788 = vsel %vm2784, %v2782, %v2786
        %v2789 = vpack.c.bf16 %v2788, %v2787
        %v2791 = vrot.slane %v2789, 2
        %v2794 = vsel %vm297, %v2789, %v2791
        %2796 = vst [vmem:[%s275] sm:$0xf] %v2794
        %s2797 = smul.u32 2, %s25
        %p2798 = scmp.lt.s32.totalorder %s24, 1
        %s2799 = scalar_select %p2798, %s24, 1
        %p2800 = scmp.lt.s32.totalorder %s2797, 3
        %s2801 = scalar_select %p2800, %s2797, 3
        %s2802 = smul.addr %s2799, 4
        %s2803 = sadd.s32 %s2801, %s2802
        %s2804 = smul.addr %s2803, 2
        %s2805 = scalar_lea.vmem %s3, %s2804
        // Predicated region
        $region41: #{discriminator_forward.8} parent=31 // pred_check
          %p2806 = pneg %p130
        $region42: #{discriminator_forward.8} parent=31 // pred_check_branch
          %2808 = sbr.rel (%p2806) target = $region44
        $region43: #{discriminator_forward.8} parent=31 // pred_region
          %s2809 = smul.u32 2, %s25
        $region44: #{discriminator_forward.8} parent=31 // pred_fallthru
          _
      $region32: #{discriminator_forward.8} parent=5 // pred_fallthru
        _
      %p2810 = scmp.le.s32.totalorder 2, %s15
      // Predicated region
      $region45: #{discriminator_forward.8} parent=5 // pred_check
        %p2811 = pneg %p2810
      $region46: #{discriminator_forward.8} parent=5 // pred_check_branch
        %2813 = sbr.rel (%p2811) target = $region48
      $region47: #{discriminator_forward.8} parent=5 // pred_region
        %s2814 = ssub.s32 %s15, 2
        // Predicated region
        $region49: #{discriminator_forward.8} parent=47 // pred_check
          %p2815 = pneg %p136
        $region50: #{discriminator_forward.8} parent=47 // pred_check_branch
          %2817 = sbr.rel (%p2815) target = $region52
        $region51: #{discriminator_forward.8} parent=47 // pred_region
          %s2818 = smul.u32 2, %s27
          %p2819 = scmp.lt.s32.totalorder %s26, 1
          %s2820 = scalar_select %p2819, %s26, 1
          %p2821 = scmp.lt.s32.totalorder %s2818, 3
          %s2822 = scalar_select %p2821, %s2818, 3
          %s2823 = smul.addr %s2820, 4
          %s2824 = sadd.s32 %s2822, %s2823
          %s2825 = smul.addr %s2824, 2
          %s2826 = scalar_lea.vmem %s3, %s2825
        $region52: #{discriminator_forward.8} parent=47 // pred_fallthru
          _
      $region48: #{discriminator_forward.8} parent=5 // pred_fallthru
        _
    $region6: #{discriminator_forward.8} parent=1 // loop_footer
      %s19 = sadd.s32 1, %s15
    $region7: #{discriminator_forward.8} parent=1 // loop_footer_branch
      %14 = sbr.rel target = $region3
    $region8: #{discriminator_forward.8} parent=1 // loop_exit
      _
    %2827 = vsyncpa [#allocation3], 1
    %s2828 = scalar_lea.sflag [#allocation3], 1
    %2829 = vsyncpa %s2828, 1
    %2830 = vsyncpa [#allocation5], 1
    %s2831 = scalar_lea.sflag [#allocation5], 1
    %2832 = vsyncpa %s2831, 1

// kernel: discriminator_forward.9
$region0: #{discriminator_forward.9}
  #allocation0 [shape = 'u32[]', space=smem, size = 0x4, offset = 0x4, fixed_abs, tag = 'smem constant byte address 0x4 - core index']
  #allocation1 [shape = 'u32[72,128]{1,0:T(1,128)}', space=vmem, size = 0x9000, scoped, tag = 'internal scratch']
  #allocation2 [shape = 'f32[1,1]{1,0:T(1,128)S(1)}', space=vmem, size = 0x200, scoped, tag = 'scoped memory for discriminator_forward.9']
  %s0 = inlined_call_operand.vmem [shape: bf16[2,4,4,512], index: 0, kind: input, shape index: {}]
  %s1 = inlined_call_operand.vmem [shape: bf16[9,512,1], index: 1, kind: input, shape index: {}]
  %s2 = inlined_call_operand.<no memory space> [shape: f32[1,1], index: 2, kind: input, shape index: {}]
  %s3 = inlined_call_operand.vmem [shape: f32[2,4,1], index: 3, kind: output, shape index: {}]
  %s4 = sld [smem:[#allocation0]]
  $region45: #{discriminator_forward.9} parent=0
    _
  %s6 = ssub.s32 1, %s4
  %s7 = scalar_select 0, %s6, %s4
  %v8 = vstv %s2
  %9 = vst [vmem:[#allocation2] sm:$0x1] %v8
  loop: start=0, step=1, limit=4
  $region2: #{discriminator_forward.9} parent=0 // loop_pre_header
    _
  $region3: #{discriminator_forward.9} parent=0 // loop_header
    %s11 = sphi 0, %s15
    %p12 = scmp.ge.s32.totalorder %s11, 4
    %s18 = sphi 0, %s30
    %s19 = sphi 0, %s26
    %s20 = sphi 0, %s18
    %s21 = sphi 0, %s19
    %s22 = sphi 0, %s20
    %s23 = sphi 0, %s21
    %s33 = sphi 0, %s35
    %s36 = sphi 0, %s33
    %s37 = sphi 0, %s36
    %s53 = sphi 0, %s37
    %s59 = sphi 0, %s61
    %s62 = sphi 0, %s59
    %s63 = sphi 0, %s62
    %s79 = sphi 0, %s63
    %s85 = sphi 0, %s87
    %s88 = sphi 0, %s85
    %s89 = sphi 0, %s88
    %s105 = sphi 0, %s89
    %s113 = sphi 0, %s115
    %s116 = sphi 0, %s113
    %s117 = sphi 0, %s116
    %s133 = sphi 0, %s117
  $region4: #{discriminator_forward.9} parent=0 // loop_header_branch
    %14 = sbr.rel (%p12) target = $region8
  $region5: #{discriminator_forward.9} parent=0 // loop_body
    %s16 = ssub.s32 %s11, 1
    %s17 = ssub.s32 %s11, 2
    %s24 = sadd.s32 1, %s19
    %p25 = scmp.ge.s32.totalorder %s24, 1
    %s26 = scalar_select %p25, 0, %s24
    %s27 = sadd.s32 1, %s18
    %s28 = scalar_select %p25, %s27, %s18
    %p29 = scmp.ge.s32.totalorder %s28, 2
    %s30 = scalar_select %p29, 0, %s28
    %s31 = ssub.s32 %s18, %s30
    %p32 = scmp.eq.s32.totalorder %s31, 0
    %s34 = sadd.s32 %s33, 1
    %s35 = scalar_select %p32, %s33, %s34
    %p38 = pneg %p32
    %p39 = scmp.eq.s32.totalorder %s11, 1
    %p40 = por %p38, %p39
    %p41 = scmp.ne.s32.totalorder %s33, %s36
    %p42 = scmp.eq.s32.totalorder %s11, 0
    %p43 = por %p41, %p42
    %p44 = scmp.ne.s32.totalorder %s33, %s36
    %p45 = scmp.eq.s32.totalorder %s16, 1
    %p46 = por %p44, %p45
    %p47 = scmp.ne.s32.totalorder %s36, %s37
    %p48 = scmp.eq.s32.totalorder %s16, 0
    %p49 = por %p47, %p48
    %p50 = scmp.ne.s32.totalorder %s36, %s37
    %p51 = scmp.eq.s32.totalorder %s17, 1
    %p52 = por %p50, %p51
    %p54 = scmp.ne.s32.totalorder %s37, %s53
    %p55 = scmp.eq.s32.totalorder %s17, 0
    %p56 = por %p54, %p55
    %s57 = ssub.s32 %s19, %s26
    %p58 = scmp.eq.s32.totalorder %s57, 0
    %s60 = sadd.s32 %s59, 1
    %s61 = scalar_select %p58, %s59, %s60
    %p64 = pneg %p58
    %p65 = scmp.eq.s32.totalorder %s11, 1
    %p66 = por %p64, %p65
    %p67 = scmp.ne.s32.totalorder %s59, %s62
    %p68 = scmp.eq.s32.totalorder %s11, 0
    %p69 = por %p67, %p68
    %p70 = scmp.ne.s32.totalorder %s59, %s62
    %p71 = scmp.eq.s32.totalorder %s16, 1
    %p72 = por %p70, %p71
    %p73 = scmp.ne.s32.totalorder %s62, %s63
    %p74 = scmp.eq.s32.totalorder %s16, 0
    %p75 = por %p73, %p74
    %p76 = scmp.ne.s32.totalorder %s62, %s63
    %p77 = scmp.eq.s32.totalorder %s17, 1
    %p78 = por %p76, %p77
    %p80 = scmp.ne.s32.totalorder %s63, %s79
    %p81 = scmp.eq.s32.totalorder %s17, 0
    %p82 = por %p80, %p81
    %s83 = ssub.s32 %s19, %s26
    %p84 = scmp.eq.s32.totalorder %s83, 0
    %s86 = sadd.s32 %s85, 1
    %s87 = scalar_select %p84, %s85, %s86
    %p90 = pneg %p84
    %p91 = scmp.eq.s32.totalorder %s11, 1
    %p92 = por %p90, %p91
    %p93 = scmp.ne.s32.totalorder %s85, %s88
    %p94 = scmp.eq.s32.totalorder %s11, 0
    %p95 = por %p93, %p94
    %p96 = scmp.ne.s32.totalorder %s85, %s88
    %p97 = scmp.eq.s32.totalorder %s16, 1
    %p98 = por %p96, %p97
    %p99 = scmp.ne.s32.totalorder %s88, %s89
    %p100 = scmp.eq.s32.totalorder %s16, 0
    %p101 = por %p99, %p100
    %p102 = scmp.ne.s32.totalorder %s88, %s89
    %p103 = scmp.eq.s32.totalorder %s17, 1
    %p104 = por %p102, %p103
    %p106 = scmp.ne.s32.totalorder %s89, %s105
    %p107 = scmp.eq.s32.totalorder %s17, 0
    %p108 = por %p106, %p107
    %s109 = ssub.s32 %s18, %s30
    %s110 = ssub.s32 %s19, %s26
    %s111 = sor.u32 %s109, %s110
    %p112 = scmp.eq.s32.totalorder %s111, 0
    %s114 = sadd.s32 %s113, 1
    %s115 = scalar_select %p112, %s113, %s114
    %p118 = pneg %p112
    %p119 = scmp.eq.s32.totalorder %s11, 1
    %p120 = por %p118, %p119
    %p121 = scmp.ne.s32.totalorder %s113, %s116
    %p122 = scmp.eq.s32.totalorder %s11, 0
    %p123 = por %p121, %p122
    %p124 = scmp.ne.s32.totalorder %s113, %s116
    %p125 = scmp.eq.s32.totalorder %s16, 1
    %p126 = por %p124, %p125
    %p127 = scmp.ne.s32.totalorder %s116, %s117
    %p128 = scmp.eq.s32.totalorder %s16, 0
    %p129 = por %p127, %p128
    %p130 = scmp.ne.s32.totalorder %s116, %s117
    %p131 = scmp.eq.s32.totalorder %s17, 1
    %p132 = por %p130, %p131
    %p134 = scmp.ne.s32.totalorder %s117, %s133
    %p135 = scmp.eq.s32.totalorder %s17, 0
    %p136 = por %p134, %p135
    %p137 = scmp.le.s32.totalorder 1, %s11
    %p138 = scmp.lt.s32.totalorder %s11, 3
    %p139 = pnand %p137, %p138
    %p140 = pneg %p139
    // Predicated region
    $region9: #{discriminator_forward.9} parent=5 // pred_check
      _
    $region10: #{discriminator_forward.9} parent=5 // pred_check_branch
      %142 = sbr.rel (%p139) target = $region12
    $region11: #{discriminator_forward.9} parent=5 // pred_region
      %s143 = ssub.s32 %s11, 1
      // Predicated region
      $region13: #{discriminator_forward.9} parent=11 // pred_check
        %p144 = pneg %p75
      $region14: #{discriminator_forward.9} parent=11 // pred_check_branch
        %146 = sbr.rel (%p144) target = $region16
      $region15: #{discriminator_forward.9} parent=11 // pred_region
        %p147 = scmp.lt.s32.totalorder %s21, 0
        %s148 = scalar_select %p147, %s21, 0
        %s149 = smul.addr %s148, 4
        %s150 = scalar_lea.vmem %s1, %s149
      $region16: #{discriminator_forward.9} parent=11 // pred_fallthru
        _
      // Predicated region
      $region17: #{discriminator_forward.9} parent=11 // pred_check
        %p151 = pneg %p101
      $region18: #{discriminator_forward.9} parent=11 // pred_check_branch
        %153 = sbr.rel (%p151) target = $region20
      $region19: #{discriminator_forward.9} parent=11 // pred_region
        %p154 = scmp.lt.s32.totalorder %s21, 0
        %s155 = scalar_select %p154, %s21, 0
        %s156 = scalar_lea.vmem [#allocation2], %s155
      $region20: #{discriminator_forward.9} parent=11 // pred_fallthru
        _
    $region12: #{discriminator_forward.9} parent=5 // pred_fallthru
      _
    %p157 = scmp.lt.s32.totalorder %s11, 2
    // Predicated region
    $region21: #{discriminator_forward.9} parent=5 // pred_check
      %p158 = pneg %p157
    $region22: #{discriminator_forward.9} parent=5 // pred_check_branch
      %160 = sbr.rel (%p158) target = $region24
    $region23: #{discriminator_forward.9} parent=5 // pred_region
      // Predicated region
      $region25: #{discriminator_forward.9} parent=23 // pred_check
        %p161 = pneg %p43
      $region26: #{discriminator_forward.9} parent=23 // pred_check_branch
        %163 = sbr.rel (%p161) target = $region28
      $region27: #{discriminator_forward.9} parent=23 // pred_region
        %p164 = scmp.lt.s32.totalorder %s18, 1
        %s165 = scalar_select %p164, %s18, 1
        %s166 = smul.addr %s165, 16
        %s167 = smul.addr %s166, 2
        %s168 = scalar_lea.vmem %s0, %s167
      $region28: #{discriminator_forward.9} parent=23 // pred_fallthru
        _
    $region24: #{discriminator_forward.9} parent=5 // pred_fallthru
      _
    %p169 = scmp.le.s32.totalorder 1, %s11
    %p170 = scmp.lt.s32.totalorder %s11, 3
    %p171 = pnand %p169, %p170
    %p172 = pneg %p171
    // Predicated region
    $region29: #{discriminator_forward.9} parent=5 // pred_check
      _
    $region30: #{discriminator_forward.9} parent=5 // pred_check_branch
      %174 = sbr.rel (%p171) target = $region32
    $region31: #{discriminator_forward.9} parent=5 // pred_region
      %s175 = ssub.s32 %s11, 1
      %p176 = scmp.lt.s32.totalorder %s20, 1
      %s177 = scalar_select %p176, %s20, 1
      %s178 = smul.addr %s177, 16
      %s179 = smul.addr %s178, 2
      %s180 = scalar_lea.vmem %s0, %s179
      %p181 = pneg %p49
      %p182 = pneg %p46
      %p183 = scmp.lt.s32.totalorder %s21, 0
      %s184 = scalar_select %p183, %s21, 0
      %s185 = smul.addr %s184, 4
      %s186 = scalar_lea.vmem %s1, %s185
      %p187 = pneg %p75
      %p188 = pneg %p72
      %p189 = scmp.lt.s32.totalorder %s21, 0
      %s190 = scalar_select %p189, %s21, 0
      %s191 = scalar_lea.vmem [#allocation2], %s190
      %p192 = pneg %p101
      %p193 = pneg %p98
      %p194 = pneg %p129
      %p195 = pneg %p126
      %p196 = scmp.lt.s32.totalorder %s20, 1
      %s197 = scalar_select %p196, %s20, 1
      %p198 = scmp.lt.s32.totalorder %s21, 0
      %s199 = scalar_select %p198, %s21, 0
      %s200 = sadd.s32 %s199, %s197
      %s201 = smul.addr %s200, 4
      %s202 = scalar_lea.vmem %s3, %s201
      %p203 = scmp.lt.s32.totalorder %s20, 1
      %s204 = scalar_select %p203, %s20, 1
      %s205 = smul.addr %s204, 16
      %s206 = smul.addr %s205, 2
      %s207 = scalar_lea.vmem %s0, %s206
      %p208 = scmp.lt.s32.totalorder %s21, 0
      %s209 = scalar_select %p208, %s21, 0
      %s210 = smul.addr %s209, 4
      %s211 = scalar_lea.vmem %s1, %s210
      %p212 = scmp.lt.s32.totalorder %s21, 0
      %s213 = scalar_select %p212, %s21, 0
      %s214 = scalar_lea.vmem [#allocation2], %s213
      %p215 = scmp.lt.s32.totalorder %s20, 1
      %s216 = scalar_select %p215, %s20, 1
      %p217 = scmp.lt.s32.totalorder %s21, 0
      %s218 = scalar_select %p217, %s21, 0
      %s219 = sadd.s32 %s218, %s216
      %s220 = smul.addr %s219, 4
      %s221 = scalar_lea.vmem %s3, %s220
      %v222 = vld [vmem:[%s207] sm:$0xff]
      %v223 = vld [vmem:[%s207 + $0x8] sm:$0xff]
      %v224 = vld [vmem:[%s207 + $0x10] sm:$0xff]
      %v225 = vld [vmem:[%s207 + $0x18] sm:$0xff]
      %v228 = vrot.slane %v222, 1
      %v229 = vrot.slane %v222, 2
      %v230 = vrot.slane %v222, 3
      %v231 = vrot.slane %v223, 1
      %v232 = vrot.slane %v223, 2
      %v233 = vrot.slane %v223, 3
      %vm234 = vcmask 1040384
      %v237 = vsel %vm234, %v222, %v228
      %vm238 = vcmask 1042434
      %v241 = vsel %vm238, %v229, %v230
      %vm242 = vcmask 1041408
      %v243 = vsel %vm242, %v237, %v241
      %v246 = vsel %vm234, %v223, %v231
      %v249 = vsel %vm238, %v232, %v233
      %v250 = vsel %vm242, %v246, %v249
      %v251 = vld [vmem:[%s211] sm:$0xf]
      %v252 = vld [vmem:[%s211 + $0x4] sm:$0xf]
      %v253 = vld [vmem:[%s211 + $0x8] sm:$0xf]
      %v254 = vld [vmem:[%s211 + $0xc] sm:$0xf]
      %v255 = vld [vmem:[%s211 + $0x10] sm:$0xf]
      %v256 = vld [vmem:[%s211 + $0x14] sm:$0xf]
      %v257 = vld [vmem:[%s211 + $0x18] sm:$0xf]
      %v258 = vld [vmem:[%s211 + $0x1c] sm:$0xf]
      %v259 = vld [vmem:[%s211 + $0x20] sm:$0xf]
      %v260 = vld [vmem:[%s211 + $0x24] sm:$0xf]
      %v261 = vld [vmem:[%s211 + $0x28] sm:$0xf]
      %v262 = vld [vmem:[%s211 + $0x2c] sm:$0xf]
      %v263 = vld [vmem:[%s211 + $0x30] sm:$0xf]
      %v264 = vld [vmem:[%s211 + $0x34] sm:$0xf]
      %v265 = vld [vmem:[%s211 + $0x38] sm:$0xf]
      %v266 = vld [vmem:[%s211 + $0x3c] sm:$0xf]
      %v267 = vld [vmem:[%s211 + $0x40] sm:$0xf]
      %v268 = vld [vmem:[%s211 + $0x44] sm:$0xf]
      %v269 = vld [vmem:[%s211 + $0x48] sm:$0xf]
      %v270 = vld [vmem:[%s211 + $0x4c] sm:$0xf]
      %v271 = vld [vmem:[%s211 + $0x50] sm:$0xf]
      %v272 = vld [vmem:[%s211 + $0x54] sm:$0xf]
      %v273 = vld [vmem:[%s211 + $0x58] sm:$0xf]
      %v274 = vld [vmem:[%s211 + $0x5c] sm:$0xf]
      %v275 = vld [vmem:[%s211 + $0x60] sm:$0xf]
      %v276 = vld [vmem:[%s211 + $0x64] sm:$0xf]
      %v277 = vld [vmem:[%s211 + $0x68] sm:$0xf]
      %v278 = vld [vmem:[%s211 + $0x6c] sm:$0xf]
      %v279 = vld [vmem:[%s211 + $0x70] sm:$0xf]
      %v280 = vld [vmem:[%s211 + $0x74] sm:$0xf]
      %v281 = vld [vmem:[%s211 + $0x78] sm:$0xf]
      %v282 = vld [vmem:[%s211 + $0x7c] sm:$0xf]
      %v283 = vld [vmem:[%s211 + $0x80] sm:$0xf]
      %v284 = vld [vmem:[%s211 + $0x84] sm:$0xf]
      %v285 = vld [vmem:[%s211 + $0x88] sm:$0xf]
      %v286 = vld [vmem:[%s211 + $0x8c] sm:$0xf]
      %v287 = vld [vmem:[%s211 + $0x90] sm:$0xf]
      %v288 = vld [vmem:[%s211 + $0x94] sm:$0xf]
      %v289 = vld [vmem:[%s211 + $0x98] sm:$0xf]
      %v290 = vld [vmem:[%s211 + $0x9c] sm:$0xf]
      %v291 = vld [vmem:[%s211 + $0xa0] sm:$0xf]
      %v292 = vld [vmem:[%s211 + $0xa4] sm:$0xf]
      %v293 = vld [vmem:[%s211 + $0xa8] sm:$0xf]
      %v294 = vld [vmem:[%s211 + $0xac] sm:$0xf]
      %v295 = vld [vmem:[%s211 + $0xb0] sm:$0xf]
      %v296 = vld [vmem:[%s211 + $0xb4] sm:$0xf]
      %v297 = vld [vmem:[%s211 + $0xb8] sm:$0xf]
      %v298 = vld [vmem:[%s211 + $0xbc] sm:$0xf]
      %v299 = vld [vmem:[%s211 + $0xc0] sm:$0xf]
      %v300 = vld [vmem:[%s211 + $0xc4] sm:$0xf]
      %v301 = vld [vmem:[%s211 + $0xc8] sm:$0xf]
      %v302 = vld [vmem:[%s211 + $0xcc] sm:$0xf]
      %v303 = vld [vmem:[%s211 + $0xd0] sm:$0xf]
      %v304 = vld [vmem:[%s211 + $0xd4] sm:$0xf]
      %v305 = vld [vmem:[%s211 + $0xd8] sm:$0xf]
      %v306 = vld [vmem:[%s211 + $0xdc] sm:$0xf]
      %v307 = vld [vmem:[%s211 + $0xe0] sm:$0xf]
      %v308 = vld [vmem:[%s211 + $0xe4] sm:$0xf]
      %v309 = vld [vmem:[%s211 + $0xe8] sm:$0xf]
      %v310 = vld [vmem:[%s211 + $0xec] sm:$0xf]
      %v311 = vld [vmem:[%s211 + $0xf0] sm:$0xf]
      %v312 = vld [vmem:[%s211 + $0xf4] sm:$0xf]
      %v313 = vld [vmem:[%s211 + $0xf8] sm:$0xf]
      %v314 = vld [vmem:[%s211 + $0xfc] sm:$0xf]
      %vm315 = vcmask 1041409
      %v316 = vsel %vm315, %v222, %v228
      %vm317 = vcmask 1043459
      %v318 = vsel %vm317, %v229, %v230
      %vm319 = vcmask 1042433
      %v320 = vsel %vm319, %v316, %v318
      %v322 = vrot.slane %v320, 1
      %v323 = vsel %vm315, %v223, %v231
      %v324 = vsel %vm317, %v232, %v233
      %v325 = vsel %vm319, %v323, %v324
      %v327 = vrot.slane %v325, 1
      %vm328 = vsmask.f32 256
      %vm329 = vsmask.f32 1284
      %vm330 = vmor %vm328, %vm329
      %vm331 = vsmask.f32 2312
      %vm332 = vmor %vm330, %vm331
      %vm333 = vsmask.f32 3340
      %vm334 = vmor %vm332, %vm333
      %vm335 = vsmask.f32 4368
      %vm336 = vmor %vm334, %vm335
      %vm337 = vsmask.f32 5396
      %vm338 = vmor %vm336, %vm337
      %vm339 = vsmask.f32 6424
      %vm340 = vmor %vm338, %vm339
      %vm341 = vsmask.f32 7452
      %vm342 = vmor %vm340, %vm341
      %v343 = vshrl.u32 %v243, 16
      %v345 = vrot.slane %v343, 7
      %v346 = vrot.slane %v345, 1
      %v348 = vshll.u32 %v322, 16
      %v350 = vsel %vm342, %v346, %v348
      %v351 = vshrl.u32 %v250, 16
      %v353 = vrot.slane %v351, 7
      %v354 = vrot.slane %v353, 1
      %v356 = vshll.u32 %v327, 16
      %v358 = vsel %vm342, %v354, %v356
      %s359 = scalar_lea.vmem %s211, 256
      %v360 = vld [vmem:[%s359] sm:$0xf]
      %v361 = vld [vmem:[%s359 + $0x4] sm:$0xf]
      %v362 = vld [vmem:[%s359 + $0x8] sm:$0xf]
      %v363 = vld [vmem:[%s359 + $0xc] sm:$0xf]
      %v364 = vld [vmem:[%s359 + $0x10] sm:$0xf]
      %v365 = vld [vmem:[%s359 + $0x14] sm:$0xf]
      %v366 = vld [vmem:[%s359 + $0x18] sm:$0xf]
      %v367 = vld [vmem:[%s359 + $0x1c] sm:$0xf]
      %v368 = vld [vmem:[%s359 + $0x20] sm:$0xf]
      %v369 = vld [vmem:[%s359 + $0x24] sm:$0xf]
      %v370 = vld [vmem:[%s359 + $0x28] sm:$0xf]
      %v371 = vld [vmem:[%s359 + $0x2c] sm:$0xf]
      %v372 = vld [vmem:[%s359 + $0x30] sm:$0xf]
      %v373 = vld [vmem:[%s359 + $0x34] sm:$0xf]
      %v374 = vld [vmem:[%s359 + $0x38] sm:$0xf]
      %v375 = vld [vmem:[%s359 + $0x3c] sm:$0xf]
      %v376 = vld [vmem:[%s359 + $0x40] sm:$0xf]
      %v377 = vld [vmem:[%s359 + $0x44] sm:$0xf]
      %v378 = vld [vmem:[%s359 + $0x48] sm:$0xf]
      %v379 = vld [vmem:[%s359 + $0x4c] sm:$0xf]
      %v380 = vld [vmem:[%s359 + $0x50] sm:$0xf]
      %v381 = vld [vmem:[%s359 + $0x54] sm:$0xf]
      %v382 = vld [vmem:[%s359 + $0x58] sm:$0xf]
      %v383 = vld [vmem:[%s359 + $0x5c] sm:$0xf]
      %v384 = vld [vmem:[%s359 + $0x60] sm:$0xf]
      %v385 = vld [vmem:[%s359 + $0x64] sm:$0xf]
      %v386 = vld [vmem:[%s359 + $0x68] sm:$0xf]
      %v387 = vld [vmem:[%s359 + $0x6c] sm:$0xf]
      %v388 = vld [vmem:[%s359 + $0x70] sm:$0xf]
      %v389 = vld [vmem:[%s359 + $0x74] sm:$0xf]
      %v390 = vld [vmem:[%s359 + $0x78] sm:$0xf]
      %v391 = vld [vmem:[%s359 + $0x7c] sm:$0xf]
      %v392 = vld [vmem:[%s359 + $0x80] sm:$0xf]
      %v393 = vld [vmem:[%s359 + $0x84] sm:$0xf]
      %v394 = vld [vmem:[%s359 + $0x88] sm:$0xf]
      %v395 = vld [vmem:[%s359 + $0x8c] sm:$0xf]
      %v396 = vld [vmem:[%s359 + $0x90] sm:$0xf]
      %v397 = vld [vmem:[%s359 + $0x94] sm:$0xf]
      %v398 = vld [vmem:[%s359 + $0x98] sm:$0xf]
      %v399 = vld [vmem:[%s359 + $0x9c] sm:$0xf]
      %v400 = vld [vmem:[%s359 + $0xa0] sm:$0xf]
      %v401 = vld [vmem:[%s359 + $0xa4] sm:$0xf]
      %v402 = vld [vmem:[%s359 + $0xa8] sm:$0xf]
      %v403 = vld [vmem:[%s359 + $0xac] sm:$0xf]
      %v404 = vld [vmem:[%s359 + $0xb0] sm:$0xf]
      %v405 = vld [vmem:[%s359 + $0xb4] sm:$0xf]
      %v406 = vld [vmem:[%s359 + $0xb8] sm:$0xf]
      %v407 = vld [vmem:[%s359 + $0xbc] sm:$0xf]
      %v408 = vld [vmem:[%s359 + $0xc0] sm:$0xf]
      %v409 = vld [vmem:[%s359 + $0xc4] sm:$0xf]
      %v410 = vld [vmem:[%s359 + $0xc8] sm:$0xf]
      %v411 = vld [vmem:[%s359 + $0xcc] sm:$0xf]
      %v412 = vld [vmem:[%s359 + $0xd0] sm:$0xf]
      %v413 = vld [vmem:[%s359 + $0xd4] sm:$0xf]
      %v414 = vld [vmem:[%s359 + $0xd8] sm:$0xf]
      %v415 = vld [vmem:[%s359 + $0xdc] sm:$0xf]
      %v416 = vld [vmem:[%s359 + $0xe0] sm:$0xf]
      %v417 = vld [vmem:[%s359 + $0xe4] sm:$0xf]
      %v418 = vld [vmem:[%s359 + $0xe8] sm:$0xf]
      %v419 = vld [vmem:[%s359 + $0xec] sm:$0xf]
      %v420 = vld [vmem:[%s359 + $0xf0] sm:$0xf]
      %v421 = vld [vmem:[%s359 + $0xf4] sm:$0xf]
      %v422 = vld [vmem:[%s359 + $0xf8] sm:$0xf]
      %v423 = vld [vmem:[%s359 + $0xfc] sm:$0xf]
      %425 = vst [vmem:[#allocation1] ss:$9 sm:$0xff] %v350
      %s427 = scalar_lea.vmem [#allocation1], 1
      %428 = vst [vmem:[%s427] ss:$9 sm:$0xff] %v358
      %v429 = vld [vmem:[#allocation1] sm:$0xff]
      %v430 = vld [vmem:[#allocation1 + $0x9] sm:$0xff]
      %v431 = vld [vmem:[#allocation1 + $0x12] sm:$0xff]
      %v432 = vld [vmem:[#allocation1 + $0x1b] sm:$0xff]
      %v501 = vunpack.c.l.b16 %v360
      %v502 = vunpack.c.l.b16 %v361
      %v503 = vunpack.c.l.b16 %v362
      %v504 = vunpack.c.l.b16 %v363
      %v505 = vunpack.c.l.b16 %v364
      %v506 = vunpack.c.l.b16 %v365
      %v507 = vunpack.c.l.b16 %v366
      %v508 = vunpack.c.l.b16 %v367
      %v509 = vunpack.c.l.b16 %v368
      %v510 = vunpack.c.l.b16 %v369
      %v511 = vunpack.c.l.b16 %v370
      %v512 = vunpack.c.l.b16 %v371
      %v513 = vunpack.c.l.b16 %v372
      %v514 = vunpack.c.l.b16 %v373
      %v515 = vunpack.c.l.b16 %v374
      %v516 = vunpack.c.l.b16 %v375
      %v517 = vunpack.c.l.b16 %v376
      %v518 = vunpack.c.l.b16 %v377
      %v519 = vunpack.c.l.b16 %v378
      %v520 = vunpack.c.l.b16 %v379
      %v521 = vunpack.c.l.b16 %v380
      %v522 = vunpack.c.l.b16 %v381
      %v523 = vunpack.c.l.b16 %v382
      %v524 = vunpack.c.l.b16 %v383
      %v525 = vunpack.c.l.b16 %v384
      %v526 = vunpack.c.l.b16 %v385
      %v527 = vunpack.c.l.b16 %v386
      %v528 = vunpack.c.l.b16 %v387
      %v529 = vunpack.c.l.b16 %v388
      %v530 = vunpack.c.l.b16 %v389
      %v531 = vunpack.c.l.b16 %v390
      %v532 = vunpack.c.l.b16 %v391
      %v533 = vunpack.c.l.b16 %v392
      %v534 = vunpack.c.l.b16 %v393
      %v535 = vunpack.c.l.b16 %v394
      %v536 = vunpack.c.l.b16 %v395
      %v537 = vunpack.c.l.b16 %v396
      %v538 = vunpack.c.l.b16 %v397
      %v539 = vunpack.c.l.b16 %v398
      %v540 = vunpack.c.l.b16 %v399
      %v541 = vunpack.c.l.b16 %v400
      %v542 = vunpack.c.l.b16 %v401
      %v543 = vunpack.c.l.b16 %v402
      %v544 = vunpack.c.l.b16 %v403
      %v545 = vunpack.c.l.b16 %v404
      %v546 = vunpack.c.l.b16 %v405
      %v547 = vunpack.c.l.b16 %v406
      %v548 = vunpack.c.l.b16 %v407
      %v549 = vunpack.c.l.b16 %v408
      %v550 = vunpack.c.l.b16 %v409
      %v551 = vunpack.c.l.b16 %v410
      %v552 = vunpack.c.l.b16 %v411
      %v553 = vunpack.c.l.b16 %v412
      %v554 = vunpack.c.l.b16 %v413
      %v555 = vunpack.c.l.b16 %v414
      %v556 = vunpack.c.l.b16 %v415
      %v557 = vunpack.c.l.b16 %v416
      %v558 = vunpack.c.l.b16 %v417
      %v559 = vunpack.c.l.b16 %v418
      %v560 = vunpack.c.l.b16 %v419
      %v561 = vunpack.c.l.b16 %v420
      %v562 = vunpack.c.l.b16 %v421
      %v563 = vunpack.c.l.b16 %v422
      %v564 = vunpack.c.l.b16 %v423
      %v565 = vpack.c.b16 %v502, %v501
      %v566 = vpack.c.b16 %v504, %v503
      %v567 = vpack.c.b16 %v506, %v505
      %v568 = vpack.c.b16 %v508, %v507
      %v569 = vpack.c.b16 %v510, %v509
      %v570 = vpack.c.b16 %v512, %v511
      %v571 = vpack.c.b16 %v514, %v513
      %v572 = vpack.c.b16 %v516, %v515
      %v573 = vpack.c.b16 %v518, %v517
      %v574 = vpack.c.b16 %v520, %v519
      %v575 = vpack.c.b16 %v522, %v521
      %v576 = vpack.c.b16 %v524, %v523
      %v577 = vpack.c.b16 %v526, %v525
      %v578 = vpack.c.b16 %v528, %v527
      %v579 = vpack.c.b16 %v530, %v529
      %v580 = vpack.c.b16 %v532, %v531
      %v581 = vpack.c.b16 %v534, %v533
      %v582 = vpack.c.b16 %v536, %v535
      %v583 = vpack.c.b16 %v538, %v537
      %v584 = vpack.c.b16 %v540, %v539
      %v585 = vpack.c.b16 %v542, %v541
      %v586 = vpack.c.b16 %v544, %v543
      %v587 = vpack.c.b16 %v546, %v545
      %v588 = vpack.c.b16 %v548, %v547
      %v589 = vpack.c.b16 %v550, %v549
      %v590 = vpack.c.b16 %v552, %v551
      %v591 = vpack.c.b16 %v554, %v553
      %v592 = vpack.c.b16 %v556, %v555
      %v593 = vpack.c.b16 %v558, %v557
      %v594 = vpack.c.b16 %v560, %v559
      %v595 = vpack.c.b16 %v562, %v561
      %v596 = vpack.c.b16 %v564, %v563
      %629 = vmatpush.bf16.msra.mxu0 %v572
      %630 = vmatpush.bf16.msra.mxu0 %v571
      %631 = vmatpush.bf16.msra.mxu0 %v570
      %632 = vmatpush.bf16.msra.mxu0 %v569
      %633 = vmatpush.bf16.msra.mxu0 %v568
      %634 = vmatpush.bf16.msra.mxu0 %v567
      %635 = vmatpush.bf16.msra.mxu0 %v566
      %636 = vmatpush.bf16.msra.mxu0 %v565
      %637 = vmatmul.bf16.gmra.mxu0 %v429
      %v638 = vpop.f32.mrf.mxu0
      %v639 = vadd.f32 0.0, %v638
      %v640 = vpop.f32.mrf.mxu0
      %641 = vdwg.mxu0
      %642 = vmatpush.bf16.msra.mxu0 %v580
      %643 = vmatpush.bf16.msra.mxu0 %v579
      %644 = vmatpush.bf16.msra.mxu0 %v578
      %645 = vmatpush.bf16.msra.mxu0 %v577
      %646 = vmatpush.bf16.msra.mxu0 %v576
      %647 = vmatpush.bf16.msra.mxu0 %v575
      %648 = vmatpush.bf16.msra.mxu0 %v574
      %649 = vmatpush.bf16.msra.mxu0 %v573
      %650 = vmatmul.bf16.gmra.mxu0 %v430
      %v651 = vpop.f32.mrf.mxu0
      %v652 = vadd.f32 %v639, %v651
      %v653 = vpop.f32.mrf.mxu0
      %654 = vdwg.mxu0
      %655 = vmatpush.bf16.msra.mxu0 %v588
      %656 = vmatpush.bf16.msra.mxu0 %v587
      %657 = vmatpush.bf16.msra.mxu0 %v586
      %658 = vmatpush.bf16.msra.mxu0 %v585
      %659 = vmatpush.bf16.msra.mxu0 %v584
      %660 = vmatpush.bf16.msra.mxu0 %v583
      %661 = vmatpush.bf16.msra.mxu0 %v582
      %662 = vmatpush.bf16.msra.mxu0 %v581
      %663 = vmatmul.bf16.gmra.mxu0 %v431
      %v664 = vpop.f32.mrf.mxu0
      %v665 = vadd.f32 %v652, %v664
      %v666 = vpop.f32.mrf.mxu0
      %667 = vdwg.mxu0
      %668 = vmatpush.bf16.msra.mxu0 %v596
      %669 = vmatpush.bf16.msra.mxu0 %v595
      %670 = vmatpush.bf16.msra.mxu0 %v594
      %671 = vmatpush.bf16.msra.mxu0 %v593
      %672 = vmatpush.bf16.msra.mxu0 %v592
      %673 = vmatpush.bf16.msra.mxu0 %v591
      %674 = vmatpush.bf16.msra.mxu0 %v590
      %675 = vmatpush.bf16.msra.mxu0 %v589
      %676 = vmatmul.bf16.gmra.mxu0 %v432
      %v677 = vpop.f32.mrf.mxu0
      %v678 = vadd.f32 %v665, %v677
      %v679 = vpop.f32.mrf.mxu0
      %680 = vdwg.mxu0
      %681 = vst [vmem:[#allocation1] ss:$9 sm:$0xff] %v243
      %s682 = scalar_lea.vmem [#allocation1], 1
      %683 = vst [vmem:[%s682] ss:$9 sm:$0xff] %v250
      %v684 = vld [vmem:[#allocation1] sm:$0xff]
      %v685 = vld [vmem:[#allocation1 + $0x9] sm:$0xff]
      %v686 = vld [vmem:[#allocation1 + $0x12] sm:$0xff]
      %v687 = vld [vmem:[#allocation1 + $0x1b] sm:$0xff]
      %v756 = vunpack.c.l.b16 %v251
      %v757 = vunpack.c.l.b16 %v252
      %v758 = vunpack.c.l.b16 %v253
      %v759 = vunpack.c.l.b16 %v254
      %v760 = vunpack.c.l.b16 %v255
      %v761 = vunpack.c.l.b16 %v256
      %v762 = vunpack.c.l.b16 %v257
      %v763 = vunpack.c.l.b16 %v258
      %v764 = vunpack.c.l.b16 %v259
      %v765 = vunpack.c.l.b16 %v260
      %v766 = vunpack.c.l.b16 %v261
      %v767 = vunpack.c.l.b16 %v262
      %v768 = vunpack.c.l.b16 %v263
      %v769 = vunpack.c.l.b16 %v264
      %v770 = vunpack.c.l.b16 %v265
      %v771 = vunpack.c.l.b16 %v266
      %v772 = vunpack.c.l.b16 %v267
      %v773 = vunpack.c.l.b16 %v268
      %v774 = vunpack.c.l.b16 %v269
      %v775 = vunpack.c.l.b16 %v270
      %v776 = vunpack.c.l.b16 %v271
      %v777 = vunpack.c.l.b16 %v272
      %v778 = vunpack.c.l.b16 %v273
      %v779 = vunpack.c.l.b16 %v274
      %v780 = vunpack.c.l.b16 %v275
      %v781 = vunpack.c.l.b16 %v276
      %v782 = vunpack.c.l.b16 %v277
      %v783 = vunpack.c.l.b16 %v278
      %v784 = vunpack.c.l.b16 %v279
      %v785 = vunpack.c.l.b16 %v280
      %v786 = vunpack.c.l.b16 %v281
      %v787 = vunpack.c.l.b16 %v282
      %v788 = vunpack.c.l.b16 %v283
      %v789 = vunpack.c.l.b16 %v284
      %v790 = vunpack.c.l.b16 %v285
      %v791 = vunpack.c.l.b16 %v286
      %v792 = vunpack.c.l.b16 %v287
      %v793 = vunpack.c.l.b16 %v288
      %v794 = vunpack.c.l.b16 %v289
      %v795 = vunpack.c.l.b16 %v290
      %v796 = vunpack.c.l.b16 %v291
      %v797 = vunpack.c.l.b16 %v292
      %v798 = vunpack.c.l.b16 %v293
      %v799 = vunpack.c.l.b16 %v294
      %v800 = vunpack.c.l.b16 %v295
      %v801 = vunpack.c.l.b16 %v296
      %v802 = vunpack.c.l.b16 %v297
      %v803 = vunpack.c.l.b16 %v298
      %v804 = vunpack.c.l.b16 %v299
      %v805 = vunpack.c.l.b16 %v300
      %v806 = vunpack.c.l.b16 %v301
      %v807 = vunpack.c.l.b16 %v302
      %v808 = vunpack.c.l.b16 %v303
      %v809 = vunpack.c.l.b16 %v304
      %v810 = vunpack.c.l.b16 %v305
      %v811 = vunpack.c.l.b16 %v306
      %v812 = vunpack.c.l.b16 %v307
      %v813 = vunpack.c.l.b16 %v308
      %v814 = vunpack.c.l.b16 %v309
      %v815 = vunpack.c.l.b16 %v310
      %v816 = vunpack.c.l.b16 %v311
      %v817 = vunpack.c.l.b16 %v312
      %v818 = vunpack.c.l.b16 %v313
      %v819 = vunpack.c.l.b16 %v314
      %v820 = vpack.c.b16 %v757, %v756
      %v821 = vpack.c.b16 %v759, %v758
      %v822 = vpack.c.b16 %v761, %v760
      %v823 = vpack.c.b16 %v763, %v762
      %v824 = vpack.c.b16 %v765, %v764
      %v825 = vpack.c.b16 %v767, %v766
      %v826 = vpack.c.b16 %v769, %v768
      %v827 = vpack.c.b16 %v771, %v770
      %v828 = vpack.c.b16 %v773, %v772
      %v829 = vpack.c.b16 %v775, %v774
      %v830 = vpack.c.b16 %v777, %v776
      %v831 = vpack.c.b16 %v779, %v778
      %v832 = vpack.c.b16 %v781, %v780
      %v833 = vpack.c.b16 %v783, %v782
      %v834 = vpack.c.b16 %v785, %v784
      %v835 = vpack.c.b16 %v787, %v786
      %v836 = vpack.c.b16 %v789, %v788
      %v837 = vpack.c.b16 %v791, %v790
      %v838 = vpack.c.b16 %v793, %v792
      %v839 = vpack.c.b16 %v795, %v794
      %v840 = vpack.c.b16 %v797, %v796
      %v841 = vpack.c.b16 %v799, %v798
      %v842 = vpack.c.b16 %v801, %v800
      %v843 = vpack.c.b16 %v803, %v802
      %v844 = vpack.c.b16 %v805, %v804
      %v845 = vpack.c.b16 %v807, %v806
      %v846 = vpack.c.b16 %v809, %v808
      %v847 = vpack.c.b16 %v811, %v810
      %v848 = vpack.c.b16 %v813, %v812
      %v849 = vpack.c.b16 %v815, %v814
      %v850 = vpack.c.b16 %v817, %v816
      %v851 = vpack.c.b16 %v819, %v818
      %884 = vmatpush.bf16.msra.mxu0 %v827
      %885 = vmatpush.bf16.msra.mxu0 %v826
      %886 = vmatpush.bf16.msra.mxu0 %v825
      %887 = vmatpush.bf16.msra.mxu0 %v824
      %888 = vmatpush.bf16.msra.mxu0 %v823
      %889 = vmatpush.bf16.msra.mxu0 %v822
      %890 = vmatpush.bf16.msra.mxu0 %v821
      %891 = vmatpush.bf16.msra.mxu0 %v820
      %892 = vmatmul.bf16.gmra.mxu0 %v684
      %v893 = vpop.f32.mrf.mxu0
      %v894 = vadd.f32 %v678, %v893
      %v895 = vpop.f32.mrf.mxu0
      %896 = vdwg.mxu0
      %897 = vmatpush.bf16.msra.mxu0 %v835
      %898 = vmatpush.bf16.msra.mxu0 %v834
      %899 = vmatpush.bf16.msra.mxu0 %v833
      %900 = vmatpush.bf16.msra.mxu0 %v832
      %901 = vmatpush.bf16.msra.mxu0 %v831
      %902 = vmatpush.bf16.msra.mxu0 %v830
      %903 = vmatpush.bf16.msra.mxu0 %v829
      %904 = vmatpush.bf16.msra.mxu0 %v828
      %905 = vmatmul.bf16.gmra.mxu0 %v685
      %v906 = vpop.f32.mrf.mxu0
      %v907 = vadd.f32 %v894, %v906
      %v908 = vpop.f32.mrf.mxu0
      %909 = vdwg.mxu0
      %910 = vmatpush.bf16.msra.mxu0 %v843
      %911 = vmatpush.bf16.msra.mxu0 %v842
      %912 = vmatpush.bf16.msra.mxu0 %v841
      %913 = vmatpush.bf16.msra.mxu0 %v840
      %914 = vmatpush.bf16.msra.mxu0 %v839
      %915 = vmatpush.bf16.msra.mxu0 %v838
      %916 = vmatpush.bf16.msra.mxu0 %v837
      %917 = vmatpush.bf16.msra.mxu0 %v836
      %918 = vmatmul.bf16.gmra.mxu0 %v686
      %v919 = vpop.f32.mrf.mxu0
      %v920 = vadd.f32 %v907, %v919
      %v921 = vpop.f32.mrf.mxu0
      %922 = vdwg.mxu0
      %923 = vmatpush.bf16.msra.mxu0 %v851
      %924 = vmatpush.bf16.msra.mxu0 %v850
      %925 = vmatpush.bf16.msra.mxu0 %v849
      %926 = vmatpush.bf16.msra.mxu0 %v848
      %927 = vmatpush.bf16.msra.mxu0 %v847
      %928 = vmatpush.bf16.msra.mxu0 %v846
      %929 = vmatpush.bf16.msra.mxu0 %v845
      %930 = vmatpush.bf16.msra.mxu0 %v844
      %931 = vmatmul.bf16.gmra.mxu0 %v687
      %v932 = vpop.f32.mrf.mxu0
      %v933 = vadd.f32 %v920, %v932
      %v934 = vpop.f32.mrf.mxu0
      %935 = vdwg.mxu0
      %936 = vst [vmem:[#allocation1] sm:$0xff] %v222
      %s937 = scalar_lea.vmem [#allocation1], 1
      %v938 = vld [vmem:[%s937] ss:$2 sm:$0xff]
      %939 = vst [vmem:[#allocation1 + $0x10] sm:$0xff] %v223
      %s940 = scalar_lea.vmem [#allocation1], 17
      %v941 = vld [vmem:[%s940] ss:$2 sm:$0xff]
      %s942 = scalar_lea.vmem %s211, 512
      %v943 = vld [vmem:[%s942] sm:$0xf]
      %v944 = vld [vmem:[%s942 + $0x4] sm:$0xf]
      %v945 = vld [vmem:[%s942 + $0x8] sm:$0xf]
      %v946 = vld [vmem:[%s942 + $0xc] sm:$0xf]
      %v947 = vld [vmem:[%s942 + $0x10] sm:$0xf]
      %v948 = vld [vmem:[%s942 + $0x14] sm:$0xf]
      %v949 = vld [vmem:[%s942 + $0x18] sm:$0xf]
      %v950 = vld [vmem:[%s942 + $0x1c] sm:$0xf]
      %v951 = vld [vmem:[%s942 + $0x20] sm:$0xf]
      %v952 = vld [vmem:[%s942 + $0x24] sm:$0xf]
      %v953 = vld [vmem:[%s942 + $0x28] sm:$0xf]
      %v954 = vld [vmem:[%s942 + $0x2c] sm:$0xf]
      %v955 = vld [vmem:[%s942 + $0x30] sm:$0xf]
      %v956 = vld [vmem:[%s942 + $0x34] sm:$0xf]
      %v957 = vld [vmem:[%s942 + $0x38] sm:$0xf]
      %v958 = vld [vmem:[%s942 + $0x3c] sm:$0xf]
      %v959 = vld [vmem:[%s942 + $0x40] sm:$0xf]
      %v960 = vld [vmem:[%s942 + $0x44] sm:$0xf]
      %v961 = vld [vmem:[%s942 + $0x48] sm:$0xf]
      %v962 = vld [vmem:[%s942 + $0x4c] sm:$0xf]
      %v963 = vld [vmem:[%s942 + $0x50] sm:$0xf]
      %v964 = vld [vmem:[%s942 + $0x54] sm:$0xf]
      %v965 = vld [vmem:[%s942 + $0x58] sm:$0xf]
      %v966 = vld [vmem:[%s942 + $0x5c] sm:$0xf]
      %v967 = vld [vmem:[%s942 + $0x60] sm:$0xf]
      %v968 = vld [vmem:[%s942 + $0x64] sm:$0xf]
      %v969 = vld [vmem:[%s942 + $0x68] sm:$0xf]
      %v970 = vld [vmem:[%s942 + $0x6c] sm:$0xf]
      %v971 = vld [vmem:[%s942 + $0x70] sm:$0xf]
      %v972 = vld [vmem:[%s942 + $0x74] sm:$0xf]
      %v973 = vld [vmem:[%s942 + $0x78] sm:$0xf]
      %v974 = vld [vmem:[%s942 + $0x7c] sm:$0xf]
      %v975 = vld [vmem:[%s942 + $0x80] sm:$0xf]
      %v976 = vld [vmem:[%s942 + $0x84] sm:$0xf]
      %v977 = vld [vmem:[%s942 + $0x88] sm:$0xf]
      %v978 = vld [vmem:[%s942 + $0x8c] sm:$0xf]
      %v979 = vld [vmem:[%s942 + $0x90] sm:$0xf]
      %v980 = vld [vmem:[%s942 + $0x94] sm:$0xf]
      %v981 = vld [vmem:[%s942 + $0x98] sm:$0xf]
      %v982 = vld [vmem:[%s942 + $0x9c] sm:$0xf]
      %v983 = vld [vmem:[%s942 + $0xa0] sm:$0xf]
      %v984 = vld [vmem:[%s942 + $0xa4] sm:$0xf]
      %v985 = vld [vmem:[%s942 + $0xa8] sm:$0xf]
      %v986 = vld [vmem:[%s942 + $0xac] sm:$0xf]
      %v987 = vld [vmem:[%s942 + $0xb0] sm:$0xf]
      %v988 = vld [vmem:[%s942 + $0xb4] sm:$0xf]
      %v989 = vld [vmem:[%s942 + $0xb8] sm:$0xf]
      %v990 = vld [vmem:[%s942 + $0xbc] sm:$0xf]
      %v991 = vld [vmem:[%s942 + $0xc0] sm:$0xf]
      %v992 = vld [vmem:[%s942 + $0xc4] sm:$0xf]
      %v993 = vld [vmem:[%s942 + $0xc8] sm:$0xf]
      %v994 = vld [vmem:[%s942 + $0xcc] sm:$0xf]
      %v995 = vld [vmem:[%s942 + $0xd0] sm:$0xf]
      %v996 = vld [vmem:[%s942 + $0xd4] sm:$0xf]
      %v997 = vld [vmem:[%s942 + $0xd8] sm:$0xf]
      %v998 = vld [vmem:[%s942 + $0xdc] sm:$0xf]
      %v999 = vld [vmem:[%s942 + $0xe0] sm:$0xf]
      %v1000 = vld [vmem:[%s942 + $0xe4] sm:$0xf]
      %v1001 = vld [vmem:[%s942 + $0xe8] sm:$0xf]
      %v1002 = vld [vmem:[%s942 + $0xec] sm:$0xf]
      %v1003 = vld [vmem:[%s942 + $0xf0] sm:$0xf]
      %v1004 = vld [vmem:[%s942 + $0xf4] sm:$0xf]
      %v1005 = vld [vmem:[%s942 + $0xf8] sm:$0xf]
      %v1006 = vld [vmem:[%s942 + $0xfc] sm:$0xf]
      %1007 = vst [vmem:[#allocation1] ss:$9 sm:$0xff] %v938
      %s1008 = scalar_lea.vmem [#allocation1], 1
      %1009 = vst [vmem:[%s1008] ss:$9 sm:$0xff] %v941
      %v1010 = vld [vmem:[#allocation1] sm:$0xff]
      %v1011 = vld [vmem:[#allocation1 + $0x9] sm:$0xff]
      %v1012 = vld [vmem:[#allocation1 + $0x12] sm:$0xff]
      %v1013 = vld [vmem:[#allocation1 + $0x1b] sm:$0xff]
      %v1082 = vunpack.c.l.b16 %v943
      %v1083 = vunpack.c.l.b16 %v944
      %v1084 = vunpack.c.l.b16 %v945
      %v1085 = vunpack.c.l.b16 %v946
      %v1086 = vunpack.c.l.b16 %v947
      %v1087 = vunpack.c.l.b16 %v948
      %v1088 = vunpack.c.l.b16 %v949
      %v1089 = vunpack.c.l.b16 %v950
      %v1090 = vunpack.c.l.b16 %v951
      %v1091 = vunpack.c.l.b16 %v952
      %v1092 = vunpack.c.l.b16 %v953
      %v1093 = vunpack.c.l.b16 %v954
      %v1094 = vunpack.c.l.b16 %v955
      %v1095 = vunpack.c.l.b16 %v956
      %v1096 = vunpack.c.l.b16 %v957
      %v1097 = vunpack.c.l.b16 %v958
      %v1098 = vunpack.c.l.b16 %v959
      %v1099 = vunpack.c.l.b16 %v960
      %v1100 = vunpack.c.l.b16 %v961
      %v1101 = vunpack.c.l.b16 %v962
      %v1102 = vunpack.c.l.b16 %v963
      %v1103 = vunpack.c.l.b16 %v964
      %v1104 = vunpack.c.l.b16 %v965
      %v1105 = vunpack.c.l.b16 %v966
      %v1106 = vunpack.c.l.b16 %v967
      %v1107 = vunpack.c.l.b16 %v968
      %v1108 = vunpack.c.l.b16 %v969
      %v1109 = vunpack.c.l.b16 %v970
      %v1110 = vunpack.c.l.b16 %v971
      %v1111 = vunpack.c.l.b16 %v972
      %v1112 = vunpack.c.l.b16 %v973
      %v1113 = vunpack.c.l.b16 %v974
      %v1114 = vunpack.c.l.b16 %v975
      %v1115 = vunpack.c.l.b16 %v976
      %v1116 = vunpack.c.l.b16 %v977
      %v1117 = vunpack.c.l.b16 %v978
      %v1118 = vunpack.c.l.b16 %v979
      %v1119 = vunpack.c.l.b16 %v980
      %v1120 = vunpack.c.l.b16 %v981
      %v1121 = vunpack.c.l.b16 %v982
      %v1122 = vunpack.c.l.b16 %v983
      %v1123 = vunpack.c.l.b16 %v984
      %v1124 = vunpack.c.l.b16 %v985
      %v1125 = vunpack.c.l.b16 %v986
      %v1126 = vunpack.c.l.b16 %v987
      %v1127 = vunpack.c.l.b16 %v988
      %v1128 = vunpack.c.l.b16 %v989
      %v1129 = vunpack.c.l.b16 %v990
      %v1130 = vunpack.c.l.b16 %v991
      %v1131 = vunpack.c.l.b16 %v992
      %v1132 = vunpack.c.l.b16 %v993
      %v1133 = vunpack.c.l.b16 %v994
      %v1134 = vunpack.c.l.b16 %v995
      %v1135 = vunpack.c.l.b16 %v996
      %v1136 = vunpack.c.l.b16 %v997
      %v1137 = vunpack.c.l.b16 %v998
      %v1138 = vunpack.c.l.b16 %v999
      %v1139 = vunpack.c.l.b16 %v1000
      %v1140 = vunpack.c.l.b16 %v1001
      %v1141 = vunpack.c.l.b16 %v1002
      %v1142 = vunpack.c.l.b16 %v1003
      %v1143 = vunpack.c.l.b16 %v1004
      %v1144 = vunpack.c.l.b16 %v1005
      %v1145 = vunpack.c.l.b16 %v1006
      %v1146 = vpack.c.b16 %v1083, %v1082
      %v1147 = vpack.c.b16 %v1085, %v1084
      %v1148 = vpack.c.b16 %v1087, %v1086
      %v1149 = vpack.c.b16 %v1089, %v1088
      %v1150 = vpack.c.b16 %v1091, %v1090
      %v1151 = vpack.c.b16 %v1093, %v1092
      %v1152 = vpack.c.b16 %v1095, %v1094
      %v1153 = vpack.c.b16 %v1097, %v1096
      %v1154 = vpack.c.b16 %v1099, %v1098
      %v1155 = vpack.c.b16 %v1101, %v1100
      %v1156 = vpack.c.b16 %v1103, %v1102
      %v1157 = vpack.c.b16 %v1105, %v1104
      %v1158 = vpack.c.b16 %v1107, %v1106
      %v1159 = vpack.c.b16 %v1109, %v1108
      %v1160 = vpack.c.b16 %v1111, %v1110
      %v1161 = vpack.c.b16 %v1113, %v1112
      %v1162 = vpack.c.b16 %v1115, %v1114
      %v1163 = vpack.c.b16 %v1117, %v1116
      %v1164 = vpack.c.b16 %v1119, %v1118
      %v1165 = vpack.c.b16 %v1121, %v1120
      %v1166 = vpack.c.b16 %v1123, %v1122
      %v1167 = vpack.c.b16 %v1125, %v1124
      %v1168 = vpack.c.b16 %v1127, %v1126
      %v1169 = vpack.c.b16 %v1129, %v1128
      %v1170 = vpack.c.b16 %v1131, %v1130
      %v1171 = vpack.c.b16 %v1133, %v1132
      %v1172 = vpack.c.b16 %v1135, %v1134
      %v1173 = vpack.c.b16 %v1137, %v1136
      %v1174 = vpack.c.b16 %v1139, %v1138
      %v1175 = vpack.c.b16 %v1141, %v1140
      %v1176 = vpack.c.b16 %v1143, %v1142
      %v1177 = vpack.c.b16 %v1145, %v1144
      %1210 = vmatpush.bf16.msra.mxu0 %v1153
      %1211 = vmatpush.bf16.msra.mxu0 %v1152
      %1212 = vmatpush.bf16.msra.mxu0 %v1151
      %1213 = vmatpush.bf16.msra.mxu0 %v1150
      %1214 = vmatpush.bf16.msra.mxu0 %v1149
      %1215 = vmatpush.bf16.msra.mxu0 %v1148
      %1216 = vmatpush.bf16.msra.mxu0 %v1147
      %1217 = vmatpush.bf16.msra.mxu0 %v1146
      %1218 = vmatmul.bf16.gmra.mxu0 %v1010
      %v1219 = vpop.f32.mrf.mxu0
      %v1220 = vadd.f32 0.0, %v1219
      %v1221 = vpop.f32.mrf.mxu0
      %1222 = vdwg.mxu0
      %1223 = vmatpush.bf16.msra.mxu0 %v1161
      %1224 = vmatpush.bf16.msra.mxu0 %v1160
      %1225 = vmatpush.bf16.msra.mxu0 %v1159
      %1226 = vmatpush.bf16.msra.mxu0 %v1158
      %1227 = vmatpush.bf16.msra.mxu0 %v1157
      %1228 = vmatpush.bf16.msra.mxu0 %v1156
      %1229 = vmatpush.bf16.msra.mxu0 %v1155
      %1230 = vmatpush.bf16.msra.mxu0 %v1154
      %1231 = vmatmul.bf16.gmra.mxu0 %v1011
      %v1232 = vpop.f32.mrf.mxu0
      %v1233 = vadd.f32 %v1220, %v1232
      %v1234 = vpop.f32.mrf.mxu0
      %1235 = vdwg.mxu0
      %1236 = vmatpush.bf16.msra.mxu0 %v1169
      %1237 = vmatpush.bf16.msra.mxu0 %v1168
      %1238 = vmatpush.bf16.msra.mxu0 %v1167
      %1239 = vmatpush.bf16.msra.mxu0 %v1166
      %1240 = vmatpush.bf16.msra.mxu0 %v1165
      %1241 = vmatpush.bf16.msra.mxu0 %v1164
      %1242 = vmatpush.bf16.msra.mxu0 %v1163
      %1243 = vmatpush.bf16.msra.mxu0 %v1162
      %1244 = vmatmul.bf16.gmra.mxu0 %v1012
      %v1245 = vpop.f32.mrf.mxu0
      %v1246 = vadd.f32 %v1233, %v1245
      %v1247 = vpop.f32.mrf.mxu0
      %1248 = vdwg.mxu0
      %1249 = vmatpush.bf16.msra.mxu0 %v1177
      %1250 = vmatpush.bf16.msra.mxu0 %v1176
      %1251 = vmatpush.bf16.msra.mxu0 %v1175
      %1252 = vmatpush.bf16.msra.mxu0 %v1174
      %1253 = vmatpush.bf16.msra.mxu0 %v1173
      %1254 = vmatpush.bf16.msra.mxu0 %v1172
      %1255 = vmatpush.bf16.msra.mxu0 %v1171
      %1256 = vmatpush.bf16.msra.mxu0 %v1170
      %1257 = vmatmul.bf16.gmra.mxu0 %v1013
      %v1258 = vpop.f32.mrf.mxu0
      %v1259 = vadd.f32 %v1246, %v1258
      %v1260 = vpop.f32.mrf.mxu0
      %1261 = vdwg.mxu0
      %v1262 = vadd.f32 %v933, %v1259
      %v1264 = vrot.slane %v224, 1
      %v1265 = vrot.slane %v224, 2
      %v1266 = vrot.slane %v224, 3
      %v1269 = vsel %vm234, %v224, %v1264
      %v1272 = vsel %vm238, %v1265, %v1266
      %v1273 = vsel %vm242, %v1269, %v1272
      %s1274 = scalar_lea.vmem %s211, 768
      %v1275 = vld [vmem:[%s1274] sm:$0xf]
      %v1276 = vld [vmem:[%s1274 + $0x4] sm:$0xf]
      %v1277 = vld [vmem:[%s1274 + $0x8] sm:$0xf]
      %v1278 = vld [vmem:[%s1274 + $0xc] sm:$0xf]
      %v1279 = vld [vmem:[%s1274 + $0x10] sm:$0xf]
      %v1280 = vld [vmem:[%s1274 + $0x14] sm:$0xf]
      %v1281 = vld [vmem:[%s1274 + $0x18] sm:$0xf]
      %v1282 = vld [vmem:[%s1274 + $0x1c] sm:$0xf]
      %v1283 = vld [vmem:[%s1274 + $0x20] sm:$0xf]
      %v1284 = vld [vmem:[%s1274 + $0x24] sm:$0xf]
      %v1285 = vld [vmem:[%s1274 + $0x28] sm:$0xf]
      %v1286 = vld [vmem:[%s1274 + $0x2c] sm:$0xf]
      %v1287 = vld [vmem:[%s1274 + $0x30] sm:$0xf]
      %v1288 = vld [vmem:[%s1274 + $0x34] sm:$0xf]
      %v1289 = vld [vmem:[%s1274 + $0x38] sm:$0xf]
      %v1290 = vld [vmem:[%s1274 + $0x3c] sm:$0xf]
      %v1291 = vld [vmem:[%s1274 + $0x40] sm:$0xf]
      %v1292 = vld [vmem:[%s1274 + $0x44] sm:$0xf]
      %v1293 = vld [vmem:[%s1274 + $0x48] sm:$0xf]
      %v1294 = vld [vmem:[%s1274 + $0x4c] sm:$0xf]
      %v1295 = vld [vmem:[%s1274 + $0x50] sm:$0xf]
      %v1296 = vld [vmem:[%s1274 + $0x54] sm:$0xf]
      %v1297 = vld [vmem:[%s1274 + $0x58] sm:$0xf]
      %v1298 = vld [vmem:[%s1274 + $0x5c] sm:$0xf]
      %v1299 = vld [vmem:[%s1274 + $0x60] sm:$0xf]
      %v1300 = vld [vmem:[%s1274 + $0x64] sm:$0xf]
      %v1301 = vld [vmem:[%s1274 + $0x68] sm:$0xf]
      %v1302 = vld [vmem:[%s1274 + $0x6c] sm:$0xf]
      %v1303 = vld [vmem:[%s1274 + $0x70] sm:$0xf]
      %v1304 = vld [vmem:[%s1274 + $0x74] sm:$0xf]
      %v1305 = vld [vmem:[%s1274 + $0x78] sm:$0xf]
      %v1306 = vld [vmem:[%s1274 + $0x7c] sm:$0xf]
      %v1307 = vld [vmem:[%s1274 + $0x80] sm:$0xf]
      %v1308 = vld [vmem:[%s1274 + $0x84] sm:$0xf]
      %v1309 = vld [vmem:[%s1274 + $0x88] sm:$0xf]
      %v1310 = vld [vmem:[%s1274 + $0x8c] sm:$0xf]
      %v1311 = vld [vmem:[%s1274 + $0x90] sm:$0xf]
      %v1312 = vld [vmem:[%s1274 + $0x94] sm:$0xf]
      %v1313 = vld [vmem:[%s1274 + $0x98] sm:$0xf]
      %v1314 = vld [vmem:[%s1274 + $0x9c] sm:$0xf]
      %v1315 = vld [vmem:[%s1274 + $0xa0] sm:$0xf]
      %v1316 = vld [vmem:[%s1274 + $0xa4] sm:$0xf]
      %v1317 = vld [vmem:[%s1274 + $0xa8] sm:$0xf]
      %v1318 = vld [vmem:[%s1274 + $0xac] sm:$0xf]
      %v1319 = vld [vmem:[%s1274 + $0xb0] sm:$0xf]
      %v1320 = vld [vmem:[%s1274 + $0xb4] sm:$0xf]
      %v1321 = vld [vmem:[%s1274 + $0xb8] sm:$0xf]
      %v1322 = vld [vmem:[%s1274 + $0xbc] sm:$0xf]
      %v1323 = vld [vmem:[%s1274 + $0xc0] sm:$0xf]
      %v1324 = vld [vmem:[%s1274 + $0xc4] sm:$0xf]
      %v1325 = vld [vmem:[%s1274 + $0xc8] sm:$0xf]
      %v1326 = vld [vmem:[%s1274 + $0xcc] sm:$0xf]
      %v1327 = vld [vmem:[%s1274 + $0xd0] sm:$0xf]
      %v1328 = vld [vmem:[%s1274 + $0xd4] sm:$0xf]
      %v1329 = vld [vmem:[%s1274 + $0xd8] sm:$0xf]
      %v1330 = vld [vmem:[%s1274 + $0xdc] sm:$0xf]
      %v1331 = vld [vmem:[%s1274 + $0xe0] sm:$0xf]
      %v1332 = vld [vmem:[%s1274 + $0xe4] sm:$0xf]
      %v1333 = vld [vmem:[%s1274 + $0xe8] sm:$0xf]
      %v1334 = vld [vmem:[%s1274 + $0xec] sm:$0xf]
      %v1335 = vld [vmem:[%s1274 + $0xf0] sm:$0xf]
      %v1336 = vld [vmem:[%s1274 + $0xf4] sm:$0xf]
      %v1337 = vld [vmem:[%s1274 + $0xf8] sm:$0xf]
      %v1338 = vld [vmem:[%s1274 + $0xfc] sm:$0xf]
      %1339 = vst [vmem:[#allocation1] ss:$9 sm:$0xff] %v250
      %s1340 = scalar_lea.vmem [#allocation1], 1
      %1341 = vst [vmem:[%s1340] ss:$9 sm:$0xff] %v1273
      %v1342 = vld [vmem:[#allocation1] sm:$0xff]
      %v1343 = vld [vmem:[#allocation1 + $0x9] sm:$0xff]
      %v1344 = vld [vmem:[#allocation1 + $0x12] sm:$0xff]
      %v1345 = vld [vmem:[#allocation1 + $0x1b] sm:$0xff]
      %v1414 = vunpack.c.l.b16 %v1275
      %v1415 = vunpack.c.l.b16 %v1276
      %v1416 = vunpack.c.l.b16 %v1277
      %v1417 = vunpack.c.l.b16 %v1278
      %v1418 = vunpack.c.l.b16 %v1279
      %v1419 = vunpack.c.l.b16 %v1280
      %v1420 = vunpack.c.l.b16 %v1281
      %v1421 = vunpack.c.l.b16 %v1282
      %v1422 = vunpack.c.l.b16 %v1283
      %v1423 = vunpack.c.l.b16 %v1284
      %v1424 = vunpack.c.l.b16 %v1285
      %v1425 = vunpack.c.l.b16 %v1286
      %v1426 = vunpack.c.l.b16 %v1287
      %v1427 = vunpack.c.l.b16 %v1288
      %v1428 = vunpack.c.l.b16 %v1289
      %v1429 = vunpack.c.l.b16 %v1290
      %v1430 = vunpack.c.l.b16 %v1291
      %v1431 = vunpack.c.l.b16 %v1292
      %v1432 = vunpack.c.l.b16 %v1293
      %v1433 = vunpack.c.l.b16 %v1294
      %v1434 = vunpack.c.l.b16 %v1295
      %v1435 = vunpack.c.l.b16 %v1296
      %v1436 = vunpack.c.l.b16 %v1297
      %v1437 = vunpack.c.l.b16 %v1298
      %v1438 = vunpack.c.l.b16 %v1299
      %v1439 = vunpack.c.l.b16 %v1300
      %v1440 = vunpack.c.l.b16 %v1301
      %v1441 = vunpack.c.l.b16 %v1302
      %v1442 = vunpack.c.l.b16 %v1303
      %v1443 = vunpack.c.l.b16 %v1304
      %v1444 = vunpack.c.l.b16 %v1305
      %v1445 = vunpack.c.l.b16 %v1306
      %v1446 = vunpack.c.l.b16 %v1307
      %v1447 = vunpack.c.l.b16 %v1308
      %v1448 = vunpack.c.l.b16 %v1309
      %v1449 = vunpack.c.l.b16 %v1310
      %v1450 = vunpack.c.l.b16 %v1311
      %v1451 = vunpack.c.l.b16 %v1312
      %v1452 = vunpack.c.l.b16 %v1313
      %v1453 = vunpack.c.l.b16 %v1314
      %v1454 = vunpack.c.l.b16 %v1315
      %v1455 = vunpack.c.l.b16 %v1316
      %v1456 = vunpack.c.l.b16 %v1317
      %v1457 = vunpack.c.l.b16 %v1318
      %v1458 = vunpack.c.l.b16 %v1319
      %v1459 = vunpack.c.l.b16 %v1320
      %v1460 = vunpack.c.l.b16 %v1321
      %v1461 = vunpack.c.l.b16 %v1322
      %v1462 = vunpack.c.l.b16 %v1323
      %v1463 = vunpack.c.l.b16 %v1324
      %v1464 = vunpack.c.l.b16 %v1325
      %v1465 = vunpack.c.l.b16 %v1326
      %v1466 = vunpack.c.l.b16 %v1327
      %v1467 = vunpack.c.l.b16 %v1328
      %v1468 = vunpack.c.l.b16 %v1329
      %v1469 = vunpack.c.l.b16 %v1330
      %v1470 = vunpack.c.l.b16 %v1331
      %v1471 = vunpack.c.l.b16 %v1332
      %v1472 = vunpack.c.l.b16 %v1333
      %v1473 = vunpack.c.l.b16 %v1334
      %v1474 = vunpack.c.l.b16 %v1335
      %v1475 = vunpack.c.l.b16 %v1336
      %v1476 = vunpack.c.l.b16 %v1337
      %v1477 = vunpack.c.l.b16 %v1338
      %v1478 = vpack.c.b16 %v1415, %v1414
      %v1479 = vpack.c.b16 %v1417, %v1416
      %v1480 = vpack.c.b16 %v1419, %v1418
      %v1481 = vpack.c.b16 %v1421, %v1420
      %v1482 = vpack.c.b16 %v1423, %v1422
      %v1483 = vpack.c.b16 %v1425, %v1424
      %v1484 = vpack.c.b16 %v1427, %v1426
      %v1485 = vpack.c.b16 %v1429, %v1428
      %v1486 = vpack.c.b16 %v1431, %v1430
      %v1487 = vpack.c.b16 %v1433, %v1432
      %v1488 = vpack.c.b16 %v1435, %v1434
      %v1489 = vpack.c.b16 %v1437, %v1436
      %v1490 = vpack.c.b16 %v1439, %v1438
      %v1491 = vpack.c.b16 %v1441, %v1440
      %v1492 = vpack.c.b16 %v1443, %v1442
      %v1493 = vpack.c.b16 %v1445, %v1444
      %v1494 = vpack.c.b16 %v1447, %v1446
      %v1495 = vpack.c.b16 %v1449, %v1448
      %v1496 = vpack.c.b16 %v1451, %v1450
      %v1497 = vpack.c.b16 %v1453, %v1452
      %v1498 = vpack.c.b16 %v1455, %v1454
      %v1499 = vpack.c.b16 %v1457, %v1456
      %v1500 = vpack.c.b16 %v1459, %v1458
      %v1501 = vpack.c.b16 %v1461, %v1460
      %v1502 = vpack.c.b16 %v1463, %v1462
      %v1503 = vpack.c.b16 %v1465, %v1464
      %v1504 = vpack.c.b16 %v1467, %v1466
      %v1505 = vpack.c.b16 %v1469, %v1468
      %v1506 = vpack.c.b16 %v1471, %v1470
      %v1507 = vpack.c.b16 %v1473, %v1472
      %v1508 = vpack.c.b16 %v1475, %v1474
      %v1509 = vpack.c.b16 %v1477, %v1476
      %1542 = vmatpush.bf16.msra.mxu0 %v1485
      %1543 = vmatpush.bf16.msra.mxu0 %v1484
      %1544 = vmatpush.bf16.msra.mxu0 %v1483
      %1545 = vmatpush.bf16.msra.mxu0 %v1482
      %1546 = vmatpush.bf16.msra.mxu0 %v1481
      %1547 = vmatpush.bf16.msra.mxu0 %v1480
      %1548 = vmatpush.bf16.msra.mxu0 %v1479
      %1549 = vmatpush.bf16.msra.mxu0 %v1478
      %1550 = vmatmul.bf16.gmra.mxu0 %v1342
      %v1551 = vpop.f32.mrf.mxu0
      %v1552 = vadd.f32 0.0, %v1551
      %v1553 = vpop.f32.mrf.mxu0
      %1554 = vdwg.mxu0
      %1555 = vmatpush.bf16.msra.mxu0 %v1493
      %1556 = vmatpush.bf16.msra.mxu0 %v1492
      %1557 = vmatpush.bf16.msra.mxu0 %v1491
      %1558 = vmatpush.bf16.msra.mxu0 %v1490
      %1559 = vmatpush.bf16.msra.mxu0 %v1489
      %1560 = vmatpush.bf16.msra.mxu0 %v1488
      %1561 = vmatpush.bf16.msra.mxu0 %v1487
      %1562 = vmatpush.bf16.msra.mxu0 %v1486
      %1563 = vmatmul.bf16.gmra.mxu0 %v1343
      %v1564 = vpop.f32.mrf.mxu0
      %v1565 = vadd.f32 %v1552, %v1564
      %v1566 = vpop.f32.mrf.mxu0
      %1567 = vdwg.mxu0
      %1568 = vmatpush.bf16.msra.mxu0 %v1501
      %1569 = vmatpush.bf16.msra.mxu0 %v1500
      %1570 = vmatpush.bf16.msra.mxu0 %v1499
      %1571 = vmatpush.bf16.msra.mxu0 %v1498
      %1572 = vmatpush.bf16.msra.mxu0 %v1497
      %1573 = vmatpush.bf16.msra.mxu0 %v1496
      %1574 = vmatpush.bf16.msra.mxu0 %v1495
      %1575 = vmatpush.bf16.msra.mxu0 %v1494
      %1576 = vmatmul.bf16.gmra.mxu0 %v1344
      %v1577 = vpop.f32.mrf.mxu0
      %v1578 = vadd.f32 %v1565, %v1577
      %v1579 = vpop.f32.mrf.mxu0
      %1580 = vdwg.mxu0
      %1581 = vmatpush.bf16.msra.mxu0 %v1509
      %1582 = vmatpush.bf16.msra.mxu0 %v1508
      %1583 = vmatpush.bf16.msra.mxu0 %v1507
      %1584 = vmatpush.bf16.msra.mxu0 %v1506
      %1585 = vmatpush.bf16.msra.mxu0 %v1505
      %1586 = vmatpush.bf16.msra.mxu0 %v1504
      %1587 = vmatpush.bf16.msra.mxu0 %v1503
      %1588 = vmatpush.bf16.msra.mxu0 %v1502
      %1589 = vmatmul.bf16.gmra.mxu0 %v1345
      %v1590 = vpop.f32.mrf.mxu0
      %v1591 = vadd.f32 %v1578, %v1590
      %v1592 = vpop.f32.mrf.mxu0
      %1593 = vdwg.mxu0
      %v1594 = vadd.f32 %v1262, %v1591
      %v1595 = vsel %vm315, %v224, %v1264
      %v1596 = vsel %vm317, %v1265, %v1266
      %v1597 = vsel %vm319, %v1595, %v1596
      %v1599 = vrot.slane %v1597, 1
      %v1600 = vshrl.u32 %v1273, 16
      %v1602 = vrot.slane %v1600, 7
      %v1603 = vrot.slane %v1602, 1
      %v1605 = vshll.u32 %v1599, 16
      %v1607 = vsel %vm342, %v1603, %v1605
      %s1608 = scalar_lea.vmem %s211, 1024
      %v1609 = vld [vmem:[%s1608] sm:$0xf]
      %v1610 = vld [vmem:[%s1608 + $0x4] sm:$0xf]
      %v1611 = vld [vmem:[%s1608 + $0x8] sm:$0xf]
      %v1612 = vld [vmem:[%s1608 + $0xc] sm:$0xf]
      %v1613 = vld [vmem:[%s1608 + $0x10] sm:$0xf]
      %v1614 = vld [vmem:[%s1608 + $0x14] sm:$0xf]
      %v1615 = vld [vmem:[%s1608 + $0x18] sm:$0xf]
      %v1616 = vld [vmem:[%s1608 + $0x1c] sm:$0xf]
      %v1617 = vld [vmem:[%s1608 + $0x20] sm:$0xf]
      %v1618 = vld [vmem:[%s1608 + $0x24] sm:$0xf]
      %v1619 = vld [vmem:[%s1608 + $0x28] sm:$0xf]
      %v1620 = vld [vmem:[%s1608 + $0x2c] sm:$0xf]
      %v1621 = vld [vmem:[%s1608 + $0x30] sm:$0xf]
      %v1622 = vld [vmem:[%s1608 + $0x34] sm:$0xf]
      %v1623 = vld [vmem:[%s1608 + $0x38] sm:$0xf]
      %v1624 = vld [vmem:[%s1608 + $0x3c] sm:$0xf]
      %v1625 = vld [vmem:[%s1608 + $0x40] sm:$0xf]
      %v1626 = vld [vmem:[%s1608 + $0x44] sm:$0xf]
      %v1627 = vld [vmem:[%s1608 + $0x48] sm:$0xf]
      %v1628 = vld [vmem:[%s1608 + $0x4c] sm:$0xf]
      %v1629 = vld [vmem:[%s1608 + $0x50] sm:$0xf]
      %v1630 = vld [vmem:[%s1608 + $0x54] sm:$0xf]
      %v1631 = vld [vmem:[%s1608 + $0x58] sm:$0xf]
      %v1632 = vld [vmem:[%s1608 + $0x5c] sm:$0xf]
      %v1633 = vld [vmem:[%s1608 + $0x60] sm:$0xf]
      %v1634 = vld [vmem:[%s1608 + $0x64] sm:$0xf]
      %v1635 = vld [vmem:[%s1608 + $0x68] sm:$0xf]
      %v1636 = vld [vmem:[%s1608 + $0x6c] sm:$0xf]
      %v1637 = vld [vmem:[%s1608 + $0x70] sm:$0xf]
      %v1638 = vld [vmem:[%s1608 + $0x74] sm:$0xf]
      %v1639 = vld [vmem:[%s1608 + $0x78] sm:$0xf]
      %v1640 = vld [vmem:[%s1608 + $0x7c] sm:$0xf]
      %v1641 = vld [vmem:[%s1608 + $0x80] sm:$0xf]
      %v1642 = vld [vmem:[%s1608 + $0x84] sm:$0xf]
      %v1643 = vld [vmem:[%s1608 + $0x88] sm:$0xf]
      %v1644 = vld [vmem:[%s1608 + $0x8c] sm:$0xf]
      %v1645 = vld [vmem:[%s1608 + $0x90] sm:$0xf]
      %v1646 = vld [vmem:[%s1608 + $0x94] sm:$0xf]
      %v1647 = vld [vmem:[%s1608 + $0x98] sm:$0xf]
      %v1648 = vld [vmem:[%s1608 + $0x9c] sm:$0xf]
      %v1649 = vld [vmem:[%s1608 + $0xa0] sm:$0xf]
      %v1650 = vld [vmem:[%s1608 + $0xa4] sm:$0xf]
      %v1651 = vld [vmem:[%s1608 + $0xa8] sm:$0xf]
      %v1652 = vld [vmem:[%s1608 + $0xac] sm:$0xf]
      %v1653 = vld [vmem:[%s1608 + $0xb0] sm:$0xf]
      %v1654 = vld [vmem:[%s1608 + $0xb4] sm:$0xf]
      %v1655 = vld [vmem:[%s1608 + $0xb8] sm:$0xf]
      %v1656 = vld [vmem:[%s1608 + $0xbc] sm:$0xf]
      %v1657 = vld [vmem:[%s1608 + $0xc0] sm:$0xf]
      %v1658 = vld [vmem:[%s1608 + $0xc4] sm:$0xf]
      %v1659 = vld [vmem:[%s1608 + $0xc8] sm:$0xf]
      %v1660 = vld [vmem:[%s1608 + $0xcc] sm:$0xf]
      %v1661 = vld [vmem:[%s1608 + $0xd0] sm:$0xf]
      %v1662 = vld [vmem:[%s1608 + $0xd4] sm:$0xf]
      %v1663 = vld [vmem:[%s1608 + $0xd8] sm:$0xf]
      %v1664 = vld [vmem:[%s1608 + $0xdc] sm:$0xf]
      %v1665 = vld [vmem:[%s1608 + $0xe0] sm:$0xf]
      %v1666 = vld [vmem:[%s1608 + $0xe4] sm:$0xf]
      %v1667 = vld [vmem:[%s1608 + $0xe8] sm:$0xf]
      %v1668 = vld [vmem:[%s1608 + $0xec] sm:$0xf]
      %v1669 = vld [vmem:[%s1608 + $0xf0] sm:$0xf]
      %v1670 = vld [vmem:[%s1608 + $0xf4] sm:$0xf]
      %v1671 = vld [vmem:[%s1608 + $0xf8] sm:$0xf]
      %v1672 = vld [vmem:[%s1608 + $0xfc] sm:$0xf]
      %1673 = vst [vmem:[#allocation1] ss:$9 sm:$0xff] %v358
      %s1675 = scalar_lea.vmem [#allocation1], 1
      %1676 = vst [vmem:[%s1675] ss:$9 sm:$0xff] %v1607
      %v1677 = vld [vmem:[#allocation1] sm:$0xff]
      %v1678 = vld [vmem:[#allocation1 + $0x9] sm:$0xff]
      %v1679 = vld [vmem:[#allocation1 + $0x12] sm:$0xff]
      %v1680 = vld [vmem:[#allocation1 + $0x1b] sm:$0xff]
      %v1749 = vunpack.c.l.b16 %v1609
      %v1750 = vunpack.c.l.b16 %v1610
      %v1751 = vunpack.c.l.b16 %v1611
      %v1752 = vunpack.c.l.b16 %v1612
      %v1753 = vunpack.c.l.b16 %v1613
      %v1754 = vunpack.c.l.b16 %v1614
      %v1755 = vunpack.c.l.b16 %v1615
      %v1756 = vunpack.c.l.b16 %v1616
      %v1757 = vunpack.c.l.b16 %v1617
      %v1758 = vunpack.c.l.b16 %v1618
      %v1759 = vunpack.c.l.b16 %v1619
      %v1760 = vunpack.c.l.b16 %v1620
      %v1761 = vunpack.c.l.b16 %v1621
      %v1762 = vunpack.c.l.b16 %v1622
      %v1763 = vunpack.c.l.b16 %v1623
      %v1764 = vunpack.c.l.b16 %v1624
      %v1765 = vunpack.c.l.b16 %v1625
      %v1766 = vunpack.c.l.b16 %v1626
      %v1767 = vunpack.c.l.b16 %v1627
      %v1768 = vunpack.c.l.b16 %v1628
      %v1769 = vunpack.c.l.b16 %v1629
      %v1770 = vunpack.c.l.b16 %v1630
      %v1771 = vunpack.c.l.b16 %v1631
      %v1772 = vunpack.c.l.b16 %v1632
      %v1773 = vunpack.c.l.b16 %v1633
      %v1774 = vunpack.c.l.b16 %v1634
      %v1775 = vunpack.c.l.b16 %v1635
      %v1776 = vunpack.c.l.b16 %v1636
      %v1777 = vunpack.c.l.b16 %v1637
      %v1778 = vunpack.c.l.b16 %v1638
      %v1779 = vunpack.c.l.b16 %v1639
      %v1780 = vunpack.c.l.b16 %v1640
      %v1781 = vunpack.c.l.b16 %v1641
      %v1782 = vunpack.c.l.b16 %v1642
      %v1783 = vunpack.c.l.b16 %v1643
      %v1784 = vunpack.c.l.b16 %v1644
      %v1785 = vunpack.c.l.b16 %v1645
      %v1786 = vunpack.c.l.b16 %v1646
      %v1787 = vunpack.c.l.b16 %v1647
      %v1788 = vunpack.c.l.b16 %v1648
      %v1789 = vunpack.c.l.b16 %v1649
      %v1790 = vunpack.c.l.b16 %v1650
      %v1791 = vunpack.c.l.b16 %v1651
      %v1792 = vunpack.c.l.b16 %v1652
      %v1793 = vunpack.c.l.b16 %v1653
      %v1794 = vunpack.c.l.b16 %v1654
      %v1795 = vunpack.c.l.b16 %v1655
      %v1796 = vunpack.c.l.b16 %v1656
      %v1797 = vunpack.c.l.b16 %v1657
      %v1798 = vunpack.c.l.b16 %v1658
      %v1799 = vunpack.c.l.b16 %v1659
      %v1800 = vunpack.c.l.b16 %v1660
      %v1801 = vunpack.c.l.b16 %v1661
      %v1802 = vunpack.c.l.b16 %v1662
      %v1803 = vunpack.c.l.b16 %v1663
      %v1804 = vunpack.c.l.b16 %v1664
      %v1805 = vunpack.c.l.b16 %v1665
      %v1806 = vunpack.c.l.b16 %v1666
      %v1807 = vunpack.c.l.b16 %v1667
      %v1808 = vunpack.c.l.b16 %v1668
      %v1809 = vunpack.c.l.b16 %v1669
      %v1810 = vunpack.c.l.b16 %v1670
      %v1811 = vunpack.c.l.b16 %v1671
      %v1812 = vunpack.c.l.b16 %v1672
      %v1813 = vpack.c.b16 %v1750, %v1749
      %v1814 = vpack.c.b16 %v1752, %v1751
      %v1815 = vpack.c.b16 %v1754, %v1753
      %v1816 = vpack.c.b16 %v1756, %v1755
      %v1817 = vpack.c.b16 %v1758, %v1757
      %v1818 = vpack.c.b16 %v1760, %v1759
      %v1819 = vpack.c.b16 %v1762, %v1761
      %v1820 = vpack.c.b16 %v1764, %v1763
      %v1821 = vpack.c.b16 %v1766, %v1765
      %v1822 = vpack.c.b16 %v1768, %v1767
      %v1823 = vpack.c.b16 %v1770, %v1769
      %v1824 = vpack.c.b16 %v1772, %v1771
      %v1825 = vpack.c.b16 %v1774, %v1773
      %v1826 = vpack.c.b16 %v1776, %v1775
      %v1827 = vpack.c.b16 %v1778, %v1777
      %v1828 = vpack.c.b16 %v1780, %v1779
      %v1829 = vpack.c.b16 %v1782, %v1781
      %v1830 = vpack.c.b16 %v1784, %v1783
      %v1831 = vpack.c.b16 %v1786, %v1785
      %v1832 = vpack.c.b16 %v1788, %v1787
      %v1833 = vpack.c.b16 %v1790, %v1789
      %v1834 = vpack.c.b16 %v1792, %v1791
      %v1835 = vpack.c.b16 %v1794, %v1793
      %v1836 = vpack.c.b16 %v1796, %v1795
      %v1837 = vpack.c.b16 %v1798, %v1797
      %v1838 = vpack.c.b16 %v1800, %v1799
      %v1839 = vpack.c.b16 %v1802, %v1801
      %v1840 = vpack.c.b16 %v1804, %v1803
      %v1841 = vpack.c.b16 %v1806, %v1805
      %v1842 = vpack.c.b16 %v1808, %v1807
      %v1843 = vpack.c.b16 %v1810, %v1809
      %v1844 = vpack.c.b16 %v1812, %v1811
      %1877 = vmatpush.bf16.msra.mxu0 %v1820
      %1878 = vmatpush.bf16.msra.mxu0 %v1819
      %1879 = vmatpush.bf16.msra.mxu0 %v1818
      %1880 = vmatpush.bf16.msra.mxu0 %v1817
      %1881 = vmatpush.bf16.msra.mxu0 %v1816
      %1882 = vmatpush.bf16.msra.mxu0 %v1815
      %1883 = vmatpush.bf16.msra.mxu0 %v1814
      %1884 = vmatpush.bf16.msra.mxu0 %v1813
      %1885 = vmatmul.bf16.gmra.mxu0 %v1677
      %v1886 = vpop.f32.mrf.mxu0
      %v1887 = vadd.f32 0.0, %v1886
      %v1888 = vpop.f32.mrf.mxu0
      %1889 = vdwg.mxu0
      %1890 = vmatpush.bf16.msra.mxu0 %v1828
      %1891 = vmatpush.bf16.msra.mxu0 %v1827
      %1892 = vmatpush.bf16.msra.mxu0 %v1826
      %1893 = vmatpush.bf16.msra.mxu0 %v1825
      %1894 = vmatpush.bf16.msra.mxu0 %v1824
      %1895 = vmatpush.bf16.msra.mxu0 %v1823
      %1896 = vmatpush.bf16.msra.mxu0 %v1822
      %1897 = vmatpush.bf16.msra.mxu0 %v1821
      %1898 = vmatmul.bf16.gmra.mxu0 %v1678
      %v1899 = vpop.f32.mrf.mxu0
      %v1900 = vadd.f32 %v1887, %v1899
      %v1901 = vpop.f32.mrf.mxu0
      %1902 = vdwg.mxu0
      %1903 = vmatpush.bf16.msra.mxu0 %v1836
      %1904 = vmatpush.bf16.msra.mxu0 %v1835
      %1905 = vmatpush.bf16.msra.mxu0 %v1834
      %1906 = vmatpush.bf16.msra.mxu0 %v1833
      %1907 = vmatpush.bf16.msra.mxu0 %v1832
      %1908 = vmatpush.bf16.msra.mxu0 %v1831
      %1909 = vmatpush.bf16.msra.mxu0 %v1830
      %1910 = vmatpush.bf16.msra.mxu0 %v1829
      %1911 = vmatmul.bf16.gmra.mxu0 %v1679
      %v1912 = vpop.f32.mrf.mxu0
      %v1913 = vadd.f32 %v1900, %v1912
      %v1914 = vpop.f32.mrf.mxu0
      %1915 = vdwg.mxu0
      %1916 = vmatpush.bf16.msra.mxu0 %v1844
      %1917 = vmatpush.bf16.msra.mxu0 %v1843
      %1918 = vmatpush.bf16.msra.mxu0 %v1842
      %1919 = vmatpush.bf16.msra.mxu0 %v1841
      %1920 = vmatpush.bf16.msra.mxu0 %v1840
      %1921 = vmatpush.bf16.msra.mxu0 %v1839
      %1922 = vmatpush.bf16.msra.mxu0 %v1838
      %1923 = vmatpush.bf16.msra.mxu0 %v1837
      %1924 = vmatmul.bf16.gmra.mxu0 %v1680
      %v1925 = vpop.f32.mrf.mxu0
      %v1926 = vadd.f32 %v1913, %v1925
      %v1927 = vpop.f32.mrf.mxu0
      %1928 = vdwg.mxu0
      %v1929 = vadd.f32 %v1594, %v1926
      %1930 = vst [vmem:[#allocation1] sm:$0xff] %v223
      %s1931 = scalar_lea.vmem [#allocation1], 1
      %v1932 = vld [vmem:[%s1931] ss:$2 sm:$0xff]
      %1933 = vst [vmem:[#allocation1 + $0x10] sm:$0xff] %v224
      %s1934 = scalar_lea.vmem [#allocation1], 17
      %v1935 = vld [vmem:[%s1934] ss:$2 sm:$0xff]
      %s1936 = scalar_lea.vmem %s211, 1280
      %v1937 = vld [vmem:[%s1936] sm:$0xf]
      %v1938 = vld [vmem:[%s1936 + $0x4] sm:$0xf]
      %v1939 = vld [vmem:[%s1936 + $0x8] sm:$0xf]
      %v1940 = vld [vmem:[%s1936 + $0xc] sm:$0xf]
      %v1941 = vld [vmem:[%s1936 + $0x10] sm:$0xf]
      %v1942 = vld [vmem:[%s1936 + $0x14] sm:$0xf]
      %v1943 = vld [vmem:[%s1936 + $0x18] sm:$0xf]
      %v1944 = vld [vmem:[%s1936 + $0x1c] sm:$0xf]
      %v1945 = vld [vmem:[%s1936 + $0x20] sm:$0xf]
      %v1946 = vld [vmem:[%s1936 + $0x24] sm:$0xf]
      %v1947 = vld [vmem:[%s1936 + $0x28] sm:$0xf]
      %v1948 = vld [vmem:[%s1936 + $0x2c] sm:$0xf]
      %v1949 = vld [vmem:[%s1936 + $0x30] sm:$0xf]
      %v1950 = vld [vmem:[%s1936 + $0x34] sm:$0xf]
      %v1951 = vld [vmem:[%s1936 + $0x38] sm:$0xf]
      %v1952 = vld [vmem:[%s1936 + $0x3c] sm:$0xf]
      %v1953 = vld [vmem:[%s1936 + $0x40] sm:$0xf]
      %v1954 = vld [vmem:[%s1936 + $0x44] sm:$0xf]
      %v1955 = vld [vmem:[%s1936 + $0x48] sm:$0xf]
      %v1956 = vld [vmem:[%s1936 + $0x4c] sm:$0xf]
      %v1957 = vld [vmem:[%s1936 + $0x50] sm:$0xf]
      %v1958 = vld [vmem:[%s1936 + $0x54] sm:$0xf]
      %v1959 = vld [vmem:[%s1936 + $0x58] sm:$0xf]
      %v1960 = vld [vmem:[%s1936 + $0x5c] sm:$0xf]
      %v1961 = vld [vmem:[%s1936 + $0x60] sm:$0xf]
      %v1962 = vld [vmem:[%s1936 + $0x64] sm:$0xf]
      %v1963 = vld [vmem:[%s1936 + $0x68] sm:$0xf]
      %v1964 = vld [vmem:[%s1936 + $0x6c] sm:$0xf]
      %v1965 = vld [vmem:[%s1936 + $0x70] sm:$0xf]
      %v1966 = vld [vmem:[%s1936 + $0x74] sm:$0xf]
      %v1967 = vld [vmem:[%s1936 + $0x78] sm:$0xf]
      %v1968 = vld [vmem:[%s1936 + $0x7c] sm:$0xf]
      %v1969 = vld [vmem:[%s1936 + $0x80] sm:$0xf]
      %v1970 = vld [vmem:[%s1936 + $0x84] sm:$0xf]
      %v1971 = vld [vmem:[%s1936 + $0x88] sm:$0xf]
      %v1972 = vld [vmem:[%s1936 + $0x8c] sm:$0xf]
      %v1973 = vld [vmem:[%s1936 + $0x90] sm:$0xf]
      %v1974 = vld [vmem:[%s1936 + $0x94] sm:$0xf]
      %v1975 = vld [vmem:[%s1936 + $0x98] sm:$0xf]
      %v1976 = vld [vmem:[%s1936 + $0x9c] sm:$0xf]
      %v1977 = vld [vmem:[%s1936 + $0xa0] sm:$0xf]
      %v1978 = vld [vmem:[%s1936 + $0xa4] sm:$0xf]
      %v1979 = vld [vmem:[%s1936 + $0xa8] sm:$0xf]
      %v1980 = vld [vmem:[%s1936 + $0xac] sm:$0xf]
      %v1981 = vld [vmem:[%s1936 + $0xb0] sm:$0xf]
      %v1982 = vld [vmem:[%s1936 + $0xb4] sm:$0xf]
      %v1983 = vld [vmem:[%s1936 + $0xb8] sm:$0xf]
      %v1984 = vld [vmem:[%s1936 + $0xbc] sm:$0xf]
      %v1985 = vld [vmem:[%s1936 + $0xc0] sm:$0xf]
      %v1986 = vld [vmem:[%s1936 + $0xc4] sm:$0xf]
      %v1987 = vld [vmem:[%s1936 + $0xc8] sm:$0xf]
      %v1988 = vld [vmem:[%s1936 + $0xcc] sm:$0xf]
      %v1989 = vld [vmem:[%s1936 + $0xd0] sm:$0xf]
      %v1990 = vld [vmem:[%s1936 + $0xd4] sm:$0xf]
      %v1991 = vld [vmem:[%s1936 + $0xd8] sm:$0xf]
      %v1992 = vld [vmem:[%s1936 + $0xdc] sm:$0xf]
      %v1993 = vld [vmem:[%s1936 + $0xe0] sm:$0xf]
      %v1994 = vld [vmem:[%s1936 + $0xe4] sm:$0xf]
      %v1995 = vld [vmem:[%s1936 + $0xe8] sm:$0xf]
      %v1996 = vld [vmem:[%s1936 + $0xec] sm:$0xf]
      %v1997 = vld [vmem:[%s1936 + $0xf0] sm:$0xf]
      %v1998 = vld [vmem:[%s1936 + $0xf4] sm:$0xf]
      %v1999 = vld [vmem:[%s1936 + $0xf8] sm:$0xf]
      %v2000 = vld [vmem:[%s1936 + $0xfc] sm:$0xf]
      %2001 = vst [vmem:[#allocation1] ss:$9 sm:$0xff] %v1932
      %s2002 = scalar_lea.vmem [#allocation1], 1
      %2003 = vst [vmem:[%s2002] ss:$9 sm:$0xff] %v1935
      %v2004 = vld [vmem:[#allocation1] sm:$0xff]
      %v2005 = vld [vmem:[#allocation1 + $0x9] sm:$0xff]
      %v2006 = vld [vmem:[#allocation1 + $0x12] sm:$0xff]
      %v2007 = vld [vmem:[#allocation1 + $0x1b] sm:$0xff]
      %v2076 = vunpack.c.l.b16 %v1937
      %v2077 = vunpack.c.l.b16 %v1938
      %v2078 = vunpack.c.l.b16 %v1939
      %v2079 = vunpack.c.l.b16 %v1940
      %v2080 = vunpack.c.l.b16 %v1941
      %v2081 = vunpack.c.l.b16 %v1942
      %v2082 = vunpack.c.l.b16 %v1943
      %v2083 = vunpack.c.l.b16 %v1944
      %v2084 = vunpack.c.l.b16 %v1945
      %v2085 = vunpack.c.l.b16 %v1946
      %v2086 = vunpack.c.l.b16 %v1947
      %v2087 = vunpack.c.l.b16 %v1948
      %v2088 = vunpack.c.l.b16 %v1949
      %v2089 = vunpack.c.l.b16 %v1950
      %v2090 = vunpack.c.l.b16 %v1951
      %v2091 = vunpack.c.l.b16 %v1952
      %v2092 = vunpack.c.l.b16 %v1953
      %v2093 = vunpack.c.l.b16 %v1954
      %v2094 = vunpack.c.l.b16 %v1955
      %v2095 = vunpack.c.l.b16 %v1956
      %v2096 = vunpack.c.l.b16 %v1957
      %v2097 = vunpack.c.l.b16 %v1958
      %v2098 = vunpack.c.l.b16 %v1959
      %v2099 = vunpack.c.l.b16 %v1960
      %v2100 = vunpack.c.l.b16 %v1961
      %v2101 = vunpack.c.l.b16 %v1962
      %v2102 = vunpack.c.l.b16 %v1963
      %v2103 = vunpack.c.l.b16 %v1964
      %v2104 = vunpack.c.l.b16 %v1965
      %v2105 = vunpack.c.l.b16 %v1966
      %v2106 = vunpack.c.l.b16 %v1967
      %v2107 = vunpack.c.l.b16 %v1968
      %v2108 = vunpack.c.l.b16 %v1969
      %v2109 = vunpack.c.l.b16 %v1970
      %v2110 = vunpack.c.l.b16 %v1971
      %v2111 = vunpack.c.l.b16 %v1972
      %v2112 = vunpack.c.l.b16 %v1973
      %v2113 = vunpack.c.l.b16 %v1974
      %v2114 = vunpack.c.l.b16 %v1975
      %v2115 = vunpack.c.l.b16 %v1976
      %v2116 = vunpack.c.l.b16 %v1977
      %v2117 = vunpack.c.l.b16 %v1978
      %v2118 = vunpack.c.l.b16 %v1979
      %v2119 = vunpack.c.l.b16 %v1980
      %v2120 = vunpack.c.l.b16 %v1981
      %v2121 = vunpack.c.l.b16 %v1982
      %v2122 = vunpack.c.l.b16 %v1983
      %v2123 = vunpack.c.l.b16 %v1984
      %v2124 = vunpack.c.l.b16 %v1985
      %v2125 = vunpack.c.l.b16 %v1986
      %v2126 = vunpack.c.l.b16 %v1987
      %v2127 = vunpack.c.l.b16 %v1988
      %v2128 = vunpack.c.l.b16 %v1989
      %v2129 = vunpack.c.l.b16 %v1990
      %v2130 = vunpack.c.l.b16 %v1991
      %v2131 = vunpack.c.l.b16 %v1992
      %v2132 = vunpack.c.l.b16 %v1993
      %v2133 = vunpack.c.l.b16 %v1994
      %v2134 = vunpack.c.l.b16 %v1995
      %v2135 = vunpack.c.l.b16 %v1996
      %v2136 = vunpack.c.l.b16 %v1997
      %v2137 = vunpack.c.l.b16 %v1998
      %v2138 = vunpack.c.l.b16 %v1999
      %v2139 = vunpack.c.l.b16 %v2000
      %v2140 = vpack.c.b16 %v2077, %v2076
      %v2141 = vpack.c.b16 %v2079, %v2078
      %v2142 = vpack.c.b16 %v2081, %v2080
      %v2143 = vpack.c.b16 %v2083, %v2082
      %v2144 = vpack.c.b16 %v2085, %v2084
      %v2145 = vpack.c.b16 %v2087, %v2086
      %v2146 = vpack.c.b16 %v2089, %v2088
      %v2147 = vpack.c.b16 %v2091, %v2090
      %v2148 = vpack.c.b16 %v2093, %v2092
      %v2149 = vpack.c.b16 %v2095, %v2094
      %v2150 = vpack.c.b16 %v2097, %v2096
      %v2151 = vpack.c.b16 %v2099, %v2098
      %v2152 = vpack.c.b16 %v2101, %v2100
      %v2153 = vpack.c.b16 %v2103, %v2102
      %v2154 = vpack.c.b16 %v2105, %v2104
      %v2155 = vpack.c.b16 %v2107, %v2106
      %v2156 = vpack.c.b16 %v2109, %v2108
      %v2157 = vpack.c.b16 %v2111, %v2110
      %v2158 = vpack.c.b16 %v2113, %v2112
      %v2159 = vpack.c.b16 %v2115, %v2114
      %v2160 = vpack.c.b16 %v2117, %v2116
      %v2161 = vpack.c.b16 %v2119, %v2118
      %v2162 = vpack.c.b16 %v2121, %v2120
      %v2163 = vpack.c.b16 %v2123, %v2122
      %v2164 = vpack.c.b16 %v2125, %v2124
      %v2165 = vpack.c.b16 %v2127, %v2126
      %v2166 = vpack.c.b16 %v2129, %v2128
      %v2167 = vpack.c.b16 %v2131, %v2130
      %v2168 = vpack.c.b16 %v2133, %v2132
      %v2169 = vpack.c.b16 %v2135, %v2134
      %v2170 = vpack.c.b16 %v2137, %v2136
      %v2171 = vpack.c.b16 %v2139, %v2138
      %2204 = vmatpush.bf16.msra.mxu0 %v2147
      %2205 = vmatpush.bf16.msra.mxu0 %v2146
      %2206 = vmatpush.bf16.msra.mxu0 %v2145
      %2207 = vmatpush.bf16.msra.mxu0 %v2144
      %2208 = vmatpush.bf16.msra.mxu0 %v2143
      %2209 = vmatpush.bf16.msra.mxu0 %v2142
      %2210 = vmatpush.bf16.msra.mxu0 %v2141
      %2211 = vmatpush.bf16.msra.mxu0 %v2140
      %2212 = vmatmul.bf16.gmra.mxu0 %v2004
      %v2213 = vpop.f32.mrf.mxu0
      %v2214 = vadd.f32 0.0, %v2213
      %v2215 = vpop.f32.mrf.mxu0
      %2216 = vdwg.mxu0
      %2217 = vmatpush.bf16.msra.mxu0 %v2155
      %2218 = vmatpush.bf16.msra.mxu0 %v2154
      %2219 = vmatpush.bf16.msra.mxu0 %v2153
      %2220 = vmatpush.bf16.msra.mxu0 %v2152
      %2221 = vmatpush.bf16.msra.mxu0 %v2151
      %2222 = vmatpush.bf16.msra.mxu0 %v2150
      %2223 = vmatpush.bf16.msra.mxu0 %v2149
      %2224 = vmatpush.bf16.msra.mxu0 %v2148
      %2225 = vmatmul.bf16.gmra.mxu0 %v2005
      %v2226 = vpop.f32.mrf.mxu0
      %v2227 = vadd.f32 %v2214, %v2226
      %v2228 = vpop.f32.mrf.mxu0
      %2229 = vdwg.mxu0
      %2230 = vmatpush.bf16.msra.mxu0 %v2163
      %2231 = vmatpush.bf16.msra.mxu0 %v2162
      %2232 = vmatpush.bf16.msra.mxu0 %v2161
      %2233 = vmatpush.bf16.msra.mxu0 %v2160
      %2234 = vmatpush.bf16.msra.mxu0 %v2159
      %2235 = vmatpush.bf16.msra.mxu0 %v2158
      %2236 = vmatpush.bf16.msra.mxu0 %v2157
      %2237 = vmatpush.bf16.msra.mxu0 %v2156
      %2238 = vmatmul.bf16.gmra.mxu0 %v2006
      %v2239 = vpop.f32.mrf.mxu0
      %v2240 = vadd.f32 %v2227, %v2239
      %v2241 = vpop.f32.mrf.mxu0
      %2242 = vdwg.mxu0
      %2243 = vmatpush.bf16.msra.mxu0 %v2171
      %2244 = vmatpush.bf16.msra.mxu0 %v2170
      %2245 = vmatpush.bf16.msra.mxu0 %v2169
      %2246 = vmatpush.bf16.msra.mxu0 %v2168
      %2247 = vmatpush.bf16.msra.mxu0 %v2167
      %2248 = vmatpush.bf16.msra.mxu0 %v2166
      %2249 = vmatpush.bf16.msra.mxu0 %v2165
      %2250 = vmatpush.bf16.msra.mxu0 %v2164
      %2251 = vmatmul.bf16.gmra.mxu0 %v2007
      %v2252 = vpop.f32.mrf.mxu0
      %v2253 = vadd.f32 %v2240, %v2252
      %v2254 = vpop.f32.mrf.mxu0
      %2255 = vdwg.mxu0
      %v2256 = vadd.f32 %v1929, %v2253
      %v2258 = vrot.slane %v225, 1
      %v2259 = vrot.slane %v225, 2
      %v2260 = vrot.slane %v225, 3
      %v2263 = vsel %vm234, %v225, %v2258
      %v2266 = vsel %vm238, %v2259, %v2260
      %v2267 = vsel %vm242, %v2263, %v2266
      %s2268 = scalar_lea.vmem %s211, 1536
      %v2269 = vld [vmem:[%s2268] sm:$0xf]
      %v2270 = vld [vmem:[%s2268 + $0x4] sm:$0xf]
      %v2271 = vld [vmem:[%s2268 + $0x8] sm:$0xf]
      %v2272 = vld [vmem:[%s2268 + $0xc] sm:$0xf]
      %v2273 = vld [vmem:[%s2268 + $0x10] sm:$0xf]
      %v2274 = vld [vmem:[%s2268 + $0x14] sm:$0xf]
      %v2275 = vld [vmem:[%s2268 + $0x18] sm:$0xf]
      %v2276 = vld [vmem:[%s2268 + $0x1c] sm:$0xf]
      %v2277 = vld [vmem:[%s2268 + $0x20] sm:$0xf]
      %v2278 = vld [vmem:[%s2268 + $0x24] sm:$0xf]
      %v2279 = vld [vmem:[%s2268 + $0x28] sm:$0xf]
      %v2280 = vld [vmem:[%s2268 + $0x2c] sm:$0xf]
      %v2281 = vld [vmem:[%s2268 + $0x30] sm:$0xf]
      %v2282 = vld [vmem:[%s2268 + $0x34] sm:$0xf]
      %v2283 = vld [vmem:[%s2268 + $0x38] sm:$0xf]
      %v2284 = vld [vmem:[%s2268 + $0x3c] sm:$0xf]
      %v2285 = vld [vmem:[%s2268 + $0x40] sm:$0xf]
      %v2286 = vld [vmem:[%s2268 + $0x44] sm:$0xf]
      %v2287 = vld [vmem:[%s2268 + $0x48] sm:$0xf]
      %v2288 = vld [vmem:[%s2268 + $0x4c] sm:$0xf]
      %v2289 = vld [vmem:[%s2268 + $0x50] sm:$0xf]
      %v2290 = vld [vmem:[%s2268 + $0x54] sm:$0xf]
      %v2291 = vld [vmem:[%s2268 + $0x58] sm:$0xf]
      %v2292 = vld [vmem:[%s2268 + $0x5c] sm:$0xf]
      %v2293 = vld [vmem:[%s2268 + $0x60] sm:$0xf]
      %v2294 = vld [vmem:[%s2268 + $0x64] sm:$0xf]
      %v2295 = vld [vmem:[%s2268 + $0x68] sm:$0xf]
      %v2296 = vld [vmem:[%s2268 + $0x6c] sm:$0xf]
      %v2297 = vld [vmem:[%s2268 + $0x70] sm:$0xf]
      %v2298 = vld [vmem:[%s2268 + $0x74] sm:$0xf]
      %v2299 = vld [vmem:[%s2268 + $0x78] sm:$0xf]
      %v2300 = vld [vmem:[%s2268 + $0x7c] sm:$0xf]
      %v2301 = vld [vmem:[%s2268 + $0x80] sm:$0xf]
      %v2302 = vld [vmem:[%s2268 + $0x84] sm:$0xf]
      %v2303 = vld [vmem:[%s2268 + $0x88] sm:$0xf]
      %v2304 = vld [vmem:[%s2268 + $0x8c] sm:$0xf]
      %v2305 = vld [vmem:[%s2268 + $0x90] sm:$0xf]
      %v2306 = vld [vmem:[%s2268 + $0x94] sm:$0xf]
      %v2307 = vld [vmem:[%s2268 + $0x98] sm:$0xf]
      %v2308 = vld [vmem:[%s2268 + $0x9c] sm:$0xf]
      %v2309 = vld [vmem:[%s2268 + $0xa0] sm:$0xf]
      %v2310 = vld [vmem:[%s2268 + $0xa4] sm:$0xf]
      %v2311 = vld [vmem:[%s2268 + $0xa8] sm:$0xf]
      %v2312 = vld [vmem:[%s2268 + $0xac] sm:$0xf]
      %v2313 = vld [vmem:[%s2268 + $0xb0] sm:$0xf]
      %v2314 = vld [vmem:[%s2268 + $0xb4] sm:$0xf]
      %v2315 = vld [vmem:[%s2268 + $0xb8] sm:$0xf]
      %v2316 = vld [vmem:[%s2268 + $0xbc] sm:$0xf]
      %v2317 = vld [vmem:[%s2268 + $0xc0] sm:$0xf]
      %v2318 = vld [vmem:[%s2268 + $0xc4] sm:$0xf]
      %v2319 = vld [vmem:[%s2268 + $0xc8] sm:$0xf]
      %v2320 = vld [vmem:[%s2268 + $0xcc] sm:$0xf]
      %v2321 = vld [vmem:[%s2268 + $0xd0] sm:$0xf]
      %v2322 = vld [vmem:[%s2268 + $0xd4] sm:$0xf]
      %v2323 = vld [vmem:[%s2268 + $0xd8] sm:$0xf]
      %v2324 = vld [vmem:[%s2268 + $0xdc] sm:$0xf]
      %v2325 = vld [vmem:[%s2268 + $0xe0] sm:$0xf]
      %v2326 = vld [vmem:[%s2268 + $0xe4] sm:$0xf]
      %v2327 = vld [vmem:[%s2268 + $0xe8] sm:$0xf]
      %v2328 = vld [vmem:[%s2268 + $0xec] sm:$0xf]
      %v2329 = vld [vmem:[%s2268 + $0xf0] sm:$0xf]
      %v2330 = vld [vmem:[%s2268 + $0xf4] sm:$0xf]
      %v2331 = vld [vmem:[%s2268 + $0xf8] sm:$0xf]
      %v2332 = vld [vmem:[%s2268 + $0xfc] sm:$0xf]
      %2333 = vst [vmem:[#allocation1] ss:$9 sm:$0xff] %v1273
      %s2334 = scalar_lea.vmem [#allocation1], 1
      %2335 = vst [vmem:[%s2334] ss:$9 sm:$0xff] %v2267
      %v2336 = vld [vmem:[#allocation1] sm:$0xff]
      %v2337 = vld [vmem:[#allocation1 + $0x9] sm:$0xff]
      %v2338 = vld [vmem:[#allocation1 + $0x12] sm:$0xff]
      %v2339 = vld [vmem:[#allocation1 + $0x1b] sm:$0xff]
      %v2408 = vunpack.c.l.b16 %v2269
      %v2409 = vunpack.c.l.b16 %v2270
      %v2410 = vunpack.c.l.b16 %v2271
      %v2411 = vunpack.c.l.b16 %v2272
      %v2412 = vunpack.c.l.b16 %v2273
      %v2413 = vunpack.c.l.b16 %v2274
      %v2414 = vunpack.c.l.b16 %v2275
      %v2415 = vunpack.c.l.b16 %v2276
      %v2416 = vunpack.c.l.b16 %v2277
      %v2417 = vunpack.c.l.b16 %v2278
      %v2418 = vunpack.c.l.b16 %v2279
      %v2419 = vunpack.c.l.b16 %v2280
      %v2420 = vunpack.c.l.b16 %v2281
      %v2421 = vunpack.c.l.b16 %v2282
      %v2422 = vunpack.c.l.b16 %v2283
      %v2423 = vunpack.c.l.b16 %v2284
      %v2424 = vunpack.c.l.b16 %v2285
      %v2425 = vunpack.c.l.b16 %v2286
      %v2426 = vunpack.c.l.b16 %v2287
      %v2427 = vunpack.c.l.b16 %v2288
      %v2428 = vunpack.c.l.b16 %v2289
      %v2429 = vunpack.c.l.b16 %v2290
      %v2430 = vunpack.c.l.b16 %v2291
      %v2431 = vunpack.c.l.b16 %v2292
      %v2432 = vunpack.c.l.b16 %v2293
      %v2433 = vunpack.c.l.b16 %v2294
      %v2434 = vunpack.c.l.b16 %v2295
      %v2435 = vunpack.c.l.b16 %v2296
      %v2436 = vunpack.c.l.b16 %v2297
      %v2437 = vunpack.c.l.b16 %v2298
      %v2438 = vunpack.c.l.b16 %v2299
      %v2439 = vunpack.c.l.b16 %v2300
      %v2440 = vunpack.c.l.b16 %v2301
      %v2441 = vunpack.c.l.b16 %v2302
      %v2442 = vunpack.c.l.b16 %v2303
      %v2443 = vunpack.c.l.b16 %v2304
      %v2444 = vunpack.c.l.b16 %v2305
      %v2445 = vunpack.c.l.b16 %v2306
      %v2446 = vunpack.c.l.b16 %v2307
      %v2447 = vunpack.c.l.b16 %v2308
      %v2448 = vunpack.c.l.b16 %v2309
      %v2449 = vunpack.c.l.b16 %v2310
      %v2450 = vunpack.c.l.b16 %v2311
      %v2451 = vunpack.c.l.b16 %v2312
      %v2452 = vunpack.c.l.b16 %v2313
      %v2453 = vunpack.c.l.b16 %v2314
      %v2454 = vunpack.c.l.b16 %v2315
      %v2455 = vunpack.c.l.b16 %v2316
      %v2456 = vunpack.c.l.b16 %v2317
      %v2457 = vunpack.c.l.b16 %v2318
      %v2458 = vunpack.c.l.b16 %v2319
      %v2459 = vunpack.c.l.b16 %v2320
      %v2460 = vunpack.c.l.b16 %v2321
      %v2461 = vunpack.c.l.b16 %v2322
      %v2462 = vunpack.c.l.b16 %v2323
      %v2463 = vunpack.c.l.b16 %v2324
      %v2464 = vunpack.c.l.b16 %v2325
      %v2465 = vunpack.c.l.b16 %v2326
      %v2466 = vunpack.c.l.b16 %v2327
      %v2467 = vunpack.c.l.b16 %v2328
      %v2468 = vunpack.c.l.b16 %v2329
      %v2469 = vunpack.c.l.b16 %v2330
      %v2470 = vunpack.c.l.b16 %v2331
      %v2471 = vunpack.c.l.b16 %v2332
      %v2472 = vpack.c.b16 %v2409, %v2408
      %v2473 = vpack.c.b16 %v2411, %v2410
      %v2474 = vpack.c.b16 %v2413, %v2412
      %v2475 = vpack.c.b16 %v2415, %v2414
      %v2476 = vpack.c.b16 %v2417, %v2416
      %v2477 = vpack.c.b16 %v2419, %v2418
      %v2478 = vpack.c.b16 %v2421, %v2420
      %v2479 = vpack.c.b16 %v2423, %v2422
      %v2480 = vpack.c.b16 %v2425, %v2424
      %v2481 = vpack.c.b16 %v2427, %v2426
      %v2482 = vpack.c.b16 %v2429, %v2428
      %v2483 = vpack.c.b16 %v2431, %v2430
      %v2484 = vpack.c.b16 %v2433, %v2432
      %v2485 = vpack.c.b16 %v2435, %v2434
      %v2486 = vpack.c.b16 %v2437, %v2436
      %v2487 = vpack.c.b16 %v2439, %v2438
      %v2488 = vpack.c.b16 %v2441, %v2440
      %v2489 = vpack.c.b16 %v2443, %v2442
      %v2490 = vpack.c.b16 %v2445, %v2444
      %v2491 = vpack.c.b16 %v2447, %v2446
      %v2492 = vpack.c.b16 %v2449, %v2448
      %v2493 = vpack.c.b16 %v2451, %v2450
      %v2494 = vpack.c.b16 %v2453, %v2452
      %v2495 = vpack.c.b16 %v2455, %v2454
      %v2496 = vpack.c.b16 %v2457, %v2456
      %v2497 = vpack.c.b16 %v2459, %v2458
      %v2498 = vpack.c.b16 %v2461, %v2460
      %v2499 = vpack.c.b16 %v2463, %v2462
      %v2500 = vpack.c.b16 %v2465, %v2464
      %v2501 = vpack.c.b16 %v2467, %v2466
      %v2502 = vpack.c.b16 %v2469, %v2468
      %v2503 = vpack.c.b16 %v2471, %v2470
      %2536 = vmatpush.bf16.msra.mxu0 %v2479
      %2537 = vmatpush.bf16.msra.mxu0 %v2478
      %2538 = vmatpush.bf16.msra.mxu0 %v2477
      %2539 = vmatpush.bf16.msra.mxu0 %v2476
      %2540 = vmatpush.bf16.msra.mxu0 %v2475
      %2541 = vmatpush.bf16.msra.mxu0 %v2474
      %2542 = vmatpush.bf16.msra.mxu0 %v2473
      %2543 = vmatpush.bf16.msra.mxu0 %v2472
      %2544 = vmatmul.bf16.gmra.mxu0 %v2336
      %v2545 = vpop.f32.mrf.mxu0
      %v2546 = vadd.f32 0.0, %v2545
      %v2547 = vpop.f32.mrf.mxu0
      %2548 = vdwg.mxu0
      %2549 = vmatpush.bf16.msra.mxu0 %v2487
      %2550 = vmatpush.bf16.msra.mxu0 %v2486
      %2551 = vmatpush.bf16.msra.mxu0 %v2485
      %2552 = vmatpush.bf16.msra.mxu0 %v2484
      %2553 = vmatpush.bf16.msra.mxu0 %v2483
      %2554 = vmatpush.bf16.msra.mxu0 %v2482
      %2555 = vmatpush.bf16.msra.mxu0 %v2481
      %2556 = vmatpush.bf16.msra.mxu0 %v2480
      %2557 = vmatmul.bf16.gmra.mxu0 %v2337
      %v2558 = vpop.f32.mrf.mxu0
      %v2559 = vadd.f32 %v2546, %v2558
      %v2560 = vpop.f32.mrf.mxu0
      %2561 = vdwg.mxu0
      %2562 = vmatpush.bf16.msra.mxu0 %v2495
      %2563 = vmatpush.bf16.msra.mxu0 %v2494
      %2564 = vmatpush.bf16.msra.mxu0 %v2493
      %2565 = vmatpush.bf16.msra.mxu0 %v2492
      %2566 = vmatpush.bf16.msra.mxu0 %v2491
      %2567 = vmatpush.bf16.msra.mxu0 %v2490
      %2568 = vmatpush.bf16.msra.mxu0 %v2489
      %2569 = vmatpush.bf16.msra.mxu0 %v2488
      %2570 = vmatmul.bf16.gmra.mxu0 %v2338
      %v2571 = vpop.f32.mrf.mxu0
      %v2572 = vadd.f32 %v2559, %v2571
      %v2573 = vpop.f32.mrf.mxu0
      %2574 = vdwg.mxu0
      %2575 = vmatpush.bf16.msra.mxu0 %v2503
      %2576 = vmatpush.bf16.msra.mxu0 %v2502
      %2577 = vmatpush.bf16.msra.mxu0 %v2501
      %2578 = vmatpush.bf16.msra.mxu0 %v2500
      %2579 = vmatpush.bf16.msra.mxu0 %v2499
      %2580 = vmatpush.bf16.msra.mxu0 %v2498
      %2581 = vmatpush.bf16.msra.mxu0 %v2497
      %2582 = vmatpush.bf16.msra.mxu0 %v2496
      %2583 = vmatmul.bf16.gmra.mxu0 %v2339
      %v2584 = vpop.f32.mrf.mxu0
      %v2585 = vadd.f32 %v2572, %v2584
      %v2586 = vpop.f32.mrf.mxu0
      %2587 = vdwg.mxu0
      %v2588 = vadd.f32 %v2256, %v2585
      %v2589 = vsel %vm315, %v225, %v2258
      %v2590 = vsel %vm317, %v2259, %v2260
      %v2591 = vsel %vm319, %v2589, %v2590
      %v2593 = vrot.slane %v2591, 1
      %v2594 = vshrl.u32 %v2267, 16
      %v2596 = vrot.slane %v2594, 7
      %v2597 = vrot.slane %v2596, 1
      %v2599 = vshll.u32 %v2593, 16
      %v2601 = vsel %vm342, %v2597, %v2599
      %s2602 = scalar_lea.vmem %s211, 1792
      %v2603 = vld [vmem:[%s2602] sm:$0xf]
      %v2604 = vld [vmem:[%s2602 + $0x4] sm:$0xf]
      %v2605 = vld [vmem:[%s2602 + $0x8] sm:$0xf]
      %v2606 = vld [vmem:[%s2602 + $0xc] sm:$0xf]
      %v2607 = vld [vmem:[%s2602 + $0x10] sm:$0xf]
      %v2608 = vld [vmem:[%s2602 + $0x14] sm:$0xf]
      %v2609 = vld [vmem:[%s2602 + $0x18] sm:$0xf]
      %v2610 = vld [vmem:[%s2602 + $0x1c] sm:$0xf]
      %v2611 = vld [vmem:[%s2602 + $0x20] sm:$0xf]
      %v2612 = vld [vmem:[%s2602 + $0x24] sm:$0xf]
      %v2613 = vld [vmem:[%s2602 + $0x28] sm:$0xf]
      %v2614 = vld [vmem:[%s2602 + $0x2c] sm:$0xf]
      %v2615 = vld [vmem:[%s2602 + $0x30] sm:$0xf]
      %v2616 = vld [vmem:[%s2602 + $0x34] sm:$0xf]
      %v2617 = vld [vmem:[%s2602 + $0x38] sm:$0xf]
      %v2618 = vld [vmem:[%s2602 + $0x3c] sm:$0xf]
      %v2619 = vld [vmem:[%s2602 + $0x40] sm:$0xf]
      %v2620 = vld [vmem:[%s2602 + $0x44] sm:$0xf]
      %v2621 = vld [vmem:[%s2602 + $0x48] sm:$0xf]
      %v2622 = vld [vmem:[%s2602 + $0x4c] sm:$0xf]
      %v2623 = vld [vmem:[%s2602 + $0x50] sm:$0xf]
      %v2624 = vld [vmem:[%s2602 + $0x54] sm:$0xf]
      %v2625 = vld [vmem:[%s2602 + $0x58] sm:$0xf]
      %v2626 = vld [vmem:[%s2602 + $0x5c] sm:$0xf]
      %v2627 = vld [vmem:[%s2602 + $0x60] sm:$0xf]
      %v2628 = vld [vmem:[%s2602 + $0x64] sm:$0xf]
      %v2629 = vld [vmem:[%s2602 + $0x68] sm:$0xf]
      %v2630 = vld [vmem:[%s2602 + $0x6c] sm:$0xf]
      %v2631 = vld [vmem:[%s2602 + $0x70] sm:$0xf]
      %v2632 = vld [vmem:[%s2602 + $0x74] sm:$0xf]
      %v2633 = vld [vmem:[%s2602 + $0x78] sm:$0xf]
      %v2634 = vld [vmem:[%s2602 + $0x7c] sm:$0xf]
      %v2635 = vld [vmem:[%s2602 + $0x80] sm:$0xf]
      %v2636 = vld [vmem:[%s2602 + $0x84] sm:$0xf]
      %v2637 = vld [vmem:[%s2602 + $0x88] sm:$0xf]
      %v2638 = vld [vmem:[%s2602 + $0x8c] sm:$0xf]
      %v2639 = vld [vmem:[%s2602 + $0x90] sm:$0xf]
      %v2640 = vld [vmem:[%s2602 + $0x94] sm:$0xf]
      %v2641 = vld [vmem:[%s2602 + $0x98] sm:$0xf]
      %v2642 = vld [vmem:[%s2602 + $0x9c] sm:$0xf]
      %v2643 = vld [vmem:[%s2602 + $0xa0] sm:$0xf]
      %v2644 = vld [vmem:[%s2602 + $0xa4] sm:$0xf]
      %v2645 = vld [vmem:[%s2602 + $0xa8] sm:$0xf]
      %v2646 = vld [vmem:[%s2602 + $0xac] sm:$0xf]
      %v2647 = vld [vmem:[%s2602 + $0xb0] sm:$0xf]
      %v2648 = vld [vmem:[%s2602 + $0xb4] sm:$0xf]
      %v2649 = vld [vmem:[%s2602 + $0xb8] sm:$0xf]
      %v2650 = vld [vmem:[%s2602 + $0xbc] sm:$0xf]
      %v2651 = vld [vmem:[%s2602 + $0xc0] sm:$0xf]
      %v2652 = vld [vmem:[%s2602 + $0xc4] sm:$0xf]
      %v2653 = vld [vmem:[%s2602 + $0xc8] sm:$0xf]
      %v2654 = vld [vmem:[%s2602 + $0xcc] sm:$0xf]
      %v2655 = vld [vmem:[%s2602 + $0xd0] sm:$0xf]
      %v2656 = vld [vmem:[%s2602 + $0xd4] sm:$0xf]
      %v2657 = vld [vmem:[%s2602 + $0xd8] sm:$0xf]
      %v2658 = vld [vmem:[%s2602 + $0xdc] sm:$0xf]
      %v2659 = vld [vmem:[%s2602 + $0xe0] sm:$0xf]
      %v2660 = vld [vmem:[%s2602 + $0xe4] sm:$0xf]
      %v2661 = vld [vmem:[%s2602 + $0xe8] sm:$0xf]
      %v2662 = vld [vmem:[%s2602 + $0xec] sm:$0xf]
      %v2663 = vld [vmem:[%s2602 + $0xf0] sm:$0xf]
      %v2664 = vld [vmem:[%s2602 + $0xf4] sm:$0xf]
      %v2665 = vld [vmem:[%s2602 + $0xf8] sm:$0xf]
      %v2666 = vld [vmem:[%s2602 + $0xfc] sm:$0xf]
      %2667 = vst [vmem:[#allocation1] ss:$9 sm:$0xff] %v1607
      %s2669 = scalar_lea.vmem [#allocation1], 1
      %2670 = vst [vmem:[%s2669] ss:$9 sm:$0xff] %v2601
      %v2671 = vld [vmem:[#allocation1] sm:$0xff]
      %v2672 = vld [vmem:[#allocation1 + $0x9] sm:$0xff]
      %v2673 = vld [vmem:[#allocation1 + $0x12] sm:$0xff]
      %v2674 = vld [vmem:[#allocation1 + $0x1b] sm:$0xff]
      %v2743 = vunpack.c.l.b16 %v2603
      %v2744 = vunpack.c.l.b16 %v2604
      %v2745 = vunpack.c.l.b16 %v2605
      %v2746 = vunpack.c.l.b16 %v2606
      %v2747 = vunpack.c.l.b16 %v2607
      %v2748 = vunpack.c.l.b16 %v2608
      %v2749 = vunpack.c.l.b16 %v2609
      %v2750 = vunpack.c.l.b16 %v2610
      %v2751 = vunpack.c.l.b16 %v2611
      %v2752 = vunpack.c.l.b16 %v2612
      %v2753 = vunpack.c.l.b16 %v2613
      %v2754 = vunpack.c.l.b16 %v2614
      %v2755 = vunpack.c.l.b16 %v2615
      %v2756 = vunpack.c.l.b16 %v2616
      %v2757 = vunpack.c.l.b16 %v2617
      %v2758 = vunpack.c.l.b16 %v2618
      %v2759 = vunpack.c.l.b16 %v2619
      %v2760 = vunpack.c.l.b16 %v2620
      %v2761 = vunpack.c.l.b16 %v2621
      %v2762 = vunpack.c.l.b16 %v2622
      %v2763 = vunpack.c.l.b16 %v2623
      %v2764 = vunpack.c.l.b16 %v2624
      %v2765 = vunpack.c.l.b16 %v2625
      %v2766 = vunpack.c.l.b16 %v2626
      %v2767 = vunpack.c.l.b16 %v2627
      %v2768 = vunpack.c.l.b16 %v2628
      %v2769 = vunpack.c.l.b16 %v2629
      %v2770 = vunpack.c.l.b16 %v2630
      %v2771 = vunpack.c.l.b16 %v2631
      %v2772 = vunpack.c.l.b16 %v2632
      %v2773 = vunpack.c.l.b16 %v2633
      %v2774 = vunpack.c.l.b16 %v2634
      %v2775 = vunpack.c.l.b16 %v2635
      %v2776 = vunpack.c.l.b16 %v2636
      %v2777 = vunpack.c.l.b16 %v2637
      %v2778 = vunpack.c.l.b16 %v2638
      %v2779 = vunpack.c.l.b16 %v2639
      %v2780 = vunpack.c.l.b16 %v2640
      %v2781 = vunpack.c.l.b16 %v2641
      %v2782 = vunpack.c.l.b16 %v2642
      %v2783 = vunpack.c.l.b16 %v2643
      %v2784 = vunpack.c.l.b16 %v2644
      %v2785 = vunpack.c.l.b16 %v2645
      %v2786 = vunpack.c.l.b16 %v2646
      %v2787 = vunpack.c.l.b16 %v2647
      %v2788 = vunpack.c.l.b16 %v2648
      %v2789 = vunpack.c.l.b16 %v2649
      %v2790 = vunpack.c.l.b16 %v2650
      %v2791 = vunpack.c.l.b16 %v2651
      %v2792 = vunpack.c.l.b16 %v2652
      %v2793 = vunpack.c.l.b16 %v2653
      %v2794 = vunpack.c.l.b16 %v2654
      %v2795 = vunpack.c.l.b16 %v2655
      %v2796 = vunpack.c.l.b16 %v2656
      %v2797 = vunpack.c.l.b16 %v2657
      %v2798 = vunpack.c.l.b16 %v2658
      %v2799 = vunpack.c.l.b16 %v2659
      %v2800 = vunpack.c.l.b16 %v2660
      %v2801 = vunpack.c.l.b16 %v2661
      %v2802 = vunpack.c.l.b16 %v2662
      %v2803 = vunpack.c.l.b16 %v2663
      %v2804 = vunpack.c.l.b16 %v2664
      %v2805 = vunpack.c.l.b16 %v2665
      %v2806 = vunpack.c.l.b16 %v2666
      %v2807 = vpack.c.b16 %v2744, %v2743
      %v2808 = vpack.c.b16 %v2746, %v2745
      %v2809 = vpack.c.b16 %v2748, %v2747
      %v2810 = vpack.c.b16 %v2750, %v2749
      %v2811 = vpack.c.b16 %v2752, %v2751
      %v2812 = vpack.c.b16 %v2754, %v2753
      %v2813 = vpack.c.b16 %v2756, %v2755
      %v2814 = vpack.c.b16 %v2758, %v2757
      %v2815 = vpack.c.b16 %v2760, %v2759
      %v2816 = vpack.c.b16 %v2762, %v2761
      %v2817 = vpack.c.b16 %v2764, %v2763
      %v2818 = vpack.c.b16 %v2766, %v2765
      %v2819 = vpack.c.b16 %v2768, %v2767
      %v2820 = vpack.c.b16 %v2770, %v2769
      %v2821 = vpack.c.b16 %v2772, %v2771
      %v2822 = vpack.c.b16 %v2774, %v2773
      %v2823 = vpack.c.b16 %v2776, %v2775
      %v2824 = vpack.c.b16 %v2778, %v2777
      %v2825 = vpack.c.b16 %v2780, %v2779
      %v2826 = vpack.c.b16 %v2782, %v2781
      %v2827 = vpack.c.b16 %v2784, %v2783
      %v2828 = vpack.c.b16 %v2786, %v2785
      %v2829 = vpack.c.b16 %v2788, %v2787
      %v2830 = vpack.c.b16 %v2790, %v2789
      %v2831 = vpack.c.b16 %v2792, %v2791
      %v2832 = vpack.c.b16 %v2794, %v2793
      %v2833 = vpack.c.b16 %v2796, %v2795
      %v2834 = vpack.c.b16 %v2798, %v2797
      %v2835 = vpack.c.b16 %v2800, %v2799
      %v2836 = vpack.c.b16 %v2802, %v2801
      %v2837 = vpack.c.b16 %v2804, %v2803
      %v2838 = vpack.c.b16 %v2806, %v2805
      %2871 = vmatpush.bf16.msra.mxu0 %v2814
      %2872 = vmatpush.bf16.msra.mxu0 %v2813
      %2873 = vmatpush.bf16.msra.mxu0 %v2812
      %2874 = vmatpush.bf16.msra.mxu0 %v2811
      %2875 = vmatpush.bf16.msra.mxu0 %v2810
      %2876 = vmatpush.bf16.msra.mxu0 %v2809
      %2877 = vmatpush.bf16.msra.mxu0 %v2808
      %2878 = vmatpush.bf16.msra.mxu0 %v2807
      %2879 = vmatmul.bf16.gmra.mxu0 %v2671
      %v2880 = vpop.f32.mrf.mxu0
      %v2881 = vadd.f32 0.0, %v2880
      %v2882 = vpop.f32.mrf.mxu0
      %2883 = vdwg.mxu0
      %2884 = vmatpush.bf16.msra.mxu0 %v2822
      %2885 = vmatpush.bf16.msra.mxu0 %v2821
      %2886 = vmatpush.bf16.msra.mxu0 %v2820
      %2887 = vmatpush.bf16.msra.mxu0 %v2819
      %2888 = vmatpush.bf16.msra.mxu0 %v2818
      %2889 = vmatpush.bf16.msra.mxu0 %v2817
      %2890 = vmatpush.bf16.msra.mxu0 %v2816
      %2891 = vmatpush.bf16.msra.mxu0 %v2815
      %2892 = vmatmul.bf16.gmra.mxu0 %v2672
      %v2893 = vpop.f32.mrf.mxu0
      %v2894 = vadd.f32 %v2881, %v2893
      %v2895 = vpop.f32.mrf.mxu0
      %2896 = vdwg.mxu0
      %2897 = vmatpush.bf16.msra.mxu0 %v2830
      %2898 = vmatpush.bf16.msra.mxu0 %v2829
      %2899 = vmatpush.bf16.msra.mxu0 %v2828
      %2900 = vmatpush.bf16.msra.mxu0 %v2827
      %2901 = vmatpush.bf16.msra.mxu0 %v2826
      %2902 = vmatpush.bf16.msra.mxu0 %v2825
      %2903 = vmatpush.bf16.msra.mxu0 %v2824
      %2904 = vmatpush.bf16.msra.mxu0 %v2823
      %2905 = vmatmul.bf16.gmra.mxu0 %v2673
      %v2906 = vpop.f32.mrf.mxu0
      %v2907 = vadd.f32 %v2894, %v2906
      %v2908 = vpop.f32.mrf.mxu0
      %2909 = vdwg.mxu0
      %2910 = vmatpush.bf16.msra.mxu0 %v2838
      %2911 = vmatpush.bf16.msra.mxu0 %v2837
      %2912 = vmatpush.bf16.msra.mxu0 %v2836
      %2913 = vmatpush.bf16.msra.mxu0 %v2835
      %2914 = vmatpush.bf16.msra.mxu0 %v2834
      %2915 = vmatpush.bf16.msra.mxu0 %v2833
      %2916 = vmatpush.bf16.msra.mxu0 %v2832
      %2917 = vmatpush.bf16.msra.mxu0 %v2831
      %2918 = vmatmul.bf16.gmra.mxu0 %v2674
      %v2919 = vpop.f32.mrf.mxu0
      %v2920 = vadd.f32 %v2907, %v2919
      %v2921 = vpop.f32.mrf.mxu0
      %2922 = vdwg.mxu0
      %v2923 = vadd.f32 %v2588, %v2920
      %2924 = vst [vmem:[#allocation1] sm:$0xff] %v224
      %s2925 = scalar_lea.vmem [#allocation1], 1
      %v2926 = vld [vmem:[%s2925] ss:$2 sm:$0xff]
      %2927 = vst [vmem:[#allocation1 + $0x10] sm:$0xff] %v225
      %s2928 = scalar_lea.vmem [#allocation1], 17
      %v2929 = vld [vmem:[%s2928] ss:$2 sm:$0xff]
      %s2930 = scalar_lea.vmem %s211, 2048
      %v2931 = vld [vmem:[%s2930] sm:$0xf]
      %v2932 = vld [vmem:[%s2930 + $0x4] sm:$0xf]
      %v2933 = vld [vmem:[%s2930 + $0x8] sm:$0xf]
      %v2934 = vld [vmem:[%s2930 + $0xc] sm:$0xf]
      %v2935 = vld [vmem:[%s2930 + $0x10] sm:$0xf]
      %v2936 = vld [vmem:[%s2930 + $0x14] sm:$0xf]
      %v2937 = vld [vmem:[%s2930 + $0x18] sm:$0xf]
      %v2938 = vld [vmem:[%s2930 + $0x1c] sm:$0xf]
      %v2939 = vld [vmem:[%s2930 + $0x20] sm:$0xf]
      %v2940 = vld [vmem:[%s2930 + $0x24] sm:$0xf]
      %v2941 = vld [vmem:[%s2930 + $0x28] sm:$0xf]
      %v2942 = vld [vmem:[%s2930 + $0x2c] sm:$0xf]
      %v2943 = vld [vmem:[%s2930 + $0x30] sm:$0xf]
      %v2944 = vld [vmem:[%s2930 + $0x34] sm:$0xf]
      %v2945 = vld [vmem:[%s2930 + $0x38] sm:$0xf]
      %v2946 = vld [vmem:[%s2930 + $0x3c] sm:$0xf]
      %v2947 = vld [vmem:[%s2930 + $0x40] sm:$0xf]
      %v2948 = vld [vmem:[%s2930 + $0x44] sm:$0xf]
      %v2949 = vld [vmem:[%s2930 + $0x48] sm:$0xf]
      %v2950 = vld [vmem:[%s2930 + $0x4c] sm:$0xf]
      %v2951 = vld [vmem:[%s2930 + $0x50] sm:$0xf]
      %v2952 = vld [vmem:[%s2930 + $0x54] sm:$0xf]
      %v2953 = vld [vmem:[%s2930 + $0x58] sm:$0xf]
      %v2954 = vld [vmem:[%s2930 + $0x5c] sm:$0xf]
      %v2955 = vld [vmem:[%s2930 + $0x60] sm:$0xf]
      %v2956 = vld [vmem:[%s2930 + $0x64] sm:$0xf]
      %v2957 = vld [vmem:[%s2930 + $0x68] sm:$0xf]
      %v2958 = vld [vmem:[%s2930 + $0x6c] sm:$0xf]
      %v2959 = vld [vmem:[%s2930 + $0x70] sm:$0xf]
      %v2960 = vld [vmem:[%s2930 + $0x74] sm:$0xf]
      %v2961 = vld [vmem:[%s2930 + $0x78] sm:$0xf]
      %v2962 = vld [vmem:[%s2930 + $0x7c] sm:$0xf]
      %v2963 = vld [vmem:[%s2930 + $0x80] sm:$0xf]
      %v2964 = vld [vmem:[%s2930 + $0x84] sm:$0xf]
      %v2965 = vld [vmem:[%s2930 + $0x88] sm:$0xf]
      %v2966 = vld [vmem:[%s2930 + $0x8c] sm:$0xf]
      %v2967 = vld [vmem:[%s2930 + $0x90] sm:$0xf]
      %v2968 = vld [vmem:[%s2930 + $0x94] sm:$0xf]
      %v2969 = vld [vmem:[%s2930 + $0x98] sm:$0xf]
      %v2970 = vld [vmem:[%s2930 + $0x9c] sm:$0xf]
      %v2971 = vld [vmem:[%s2930 + $0xa0] sm:$0xf]
      %v2972 = vld [vmem:[%s2930 + $0xa4] sm:$0xf]
      %v2973 = vld [vmem:[%s2930 + $0xa8] sm:$0xf]
      %v2974 = vld [vmem:[%s2930 + $0xac] sm:$0xf]
      %v2975 = vld [vmem:[%s2930 + $0xb0] sm:$0xf]
      %v2976 = vld [vmem:[%s2930 + $0xb4] sm:$0xf]
      %v2977 = vld [vmem:[%s2930 + $0xb8] sm:$0xf]
      %v2978 = vld [vmem:[%s2930 + $0xbc] sm:$0xf]
      %v2979 = vld [vmem:[%s2930 + $0xc0] sm:$0xf]
      %v2980 = vld [vmem:[%s2930 + $0xc4] sm:$0xf]
      %v2981 = vld [vmem:[%s2930 + $0xc8] sm:$0xf]
      %v2982 = vld [vmem:[%s2930 + $0xcc] sm:$0xf]
      %v2983 = vld [vmem:[%s2930 + $0xd0] sm:$0xf]
      %v2984 = vld [vmem:[%s2930 + $0xd4] sm:$0xf]
      %v2985 = vld [vmem:[%s2930 + $0xd8] sm:$0xf]
      %v2986 = vld [vmem:[%s2930 + $0xdc] sm:$0xf]
      %v2987 = vld [vmem:[%s2930 + $0xe0] sm:$0xf]
      %v2988 = vld [vmem:[%s2930 + $0xe4] sm:$0xf]
      %v2989 = vld [vmem:[%s2930 + $0xe8] sm:$0xf]
      %v2990 = vld [vmem:[%s2930 + $0xec] sm:$0xf]
      %v2991 = vld [vmem:[%s2930 + $0xf0] sm:$0xf]
      %v2992 = vld [vmem:[%s2930 + $0xf4] sm:$0xf]
      %v2993 = vld [vmem:[%s2930 + $0xf8] sm:$0xf]
      %v2994 = vld [vmem:[%s2930 + $0xfc] sm:$0xf]
      %2995 = vst [vmem:[#allocation1] ss:$9 sm:$0xff] %v2926
      %s2996 = scalar_lea.vmem [#allocation1], 1
      %2997 = vst [vmem:[%s2996] ss:$9 sm:$0xff] %v2929
      %v2998 = vld [vmem:[#allocation1] sm:$0xff]
      %v2999 = vld [vmem:[#allocation1 + $0x9] sm:$0xff]
      %v3000 = vld [vmem:[#allocation1 + $0x12] sm:$0xff]
      %v3001 = vld [vmem:[#allocation1 + $0x1b] sm:$0xff]
      %v3070 = vunpack.c.l.b16 %v2931
      %v3071 = vunpack.c.l.b16 %v2932
      %v3072 = vunpack.c.l.b16 %v2933
      %v3073 = vunpack.c.l.b16 %v2934
      %v3074 = vunpack.c.l.b16 %v2935
      %v3075 = vunpack.c.l.b16 %v2936
      %v3076 = vunpack.c.l.b16 %v2937
      %v3077 = vunpack.c.l.b16 %v2938
      %v3078 = vunpack.c.l.b16 %v2939
      %v3079 = vunpack.c.l.b16 %v2940
      %v3080 = vunpack.c.l.b16 %v2941
      %v3081 = vunpack.c.l.b16 %v2942
      %v3082 = vunpack.c.l.b16 %v2943
      %v3083 = vunpack.c.l.b16 %v2944
      %v3084 = vunpack.c.l.b16 %v2945
      %v3085 = vunpack.c.l.b16 %v2946
      %v3086 = vunpack.c.l.b16 %v2947
      %v3087 = vunpack.c.l.b16 %v2948
      %v3088 = vunpack.c.l.b16 %v2949
      %v3089 = vunpack.c.l.b16 %v2950
      %v3090 = vunpack.c.l.b16 %v2951
      %v3091 = vunpack.c.l.b16 %v2952
      %v3092 = vunpack.c.l.b16 %v2953
      %v3093 = vunpack.c.l.b16 %v2954
      %v3094 = vunpack.c.l.b16 %v2955
      %v3095 = vunpack.c.l.b16 %v2956
      %v3096 = vunpack.c.l.b16 %v2957
      %v3097 = vunpack.c.l.b16 %v2958
      %v3098 = vunpack.c.l.b16 %v2959
      %v3099 = vunpack.c.l.b16 %v2960
      %v3100 = vunpack.c.l.b16 %v2961
      %v3101 = vunpack.c.l.b16 %v2962
      %v3102 = vunpack.c.l.b16 %v2963
      %v3103 = vunpack.c.l.b16 %v2964
      %v3104 = vunpack.c.l.b16 %v2965
      %v3105 = vunpack.c.l.b16 %v2966
      %v3106 = vunpack.c.l.b16 %v2967
      %v3107 = vunpack.c.l.b16 %v2968
      %v3108 = vunpack.c.l.b16 %v2969
      %v3109 = vunpack.c.l.b16 %v2970
      %v3110 = vunpack.c.l.b16 %v2971
      %v3111 = vunpack.c.l.b16 %v2972
      %v3112 = vunpack.c.l.b16 %v2973
      %v3113 = vunpack.c.l.b16 %v2974
      %v3114 = vunpack.c.l.b16 %v2975
      %v3115 = vunpack.c.l.b16 %v2976
      %v3116 = vunpack.c.l.b16 %v2977
      %v3117 = vunpack.c.l.b16 %v2978
      %v3118 = vunpack.c.l.b16 %v2979
      %v3119 = vunpack.c.l.b16 %v2980
      %v3120 = vunpack.c.l.b16 %v2981
      %v3121 = vunpack.c.l.b16 %v2982
      %v3122 = vunpack.c.l.b16 %v2983
      %v3123 = vunpack.c.l.b16 %v2984
      %v3124 = vunpack.c.l.b16 %v2985
      %v3125 = vunpack.c.l.b16 %v2986
      %v3126 = vunpack.c.l.b16 %v2987
      %v3127 = vunpack.c.l.b16 %v2988
      %v3128 = vunpack.c.l.b16 %v2989
      %v3129 = vunpack.c.l.b16 %v2990
      %v3130 = vunpack.c.l.b16 %v2991
      %v3131 = vunpack.c.l.b16 %v2992
      %v3132 = vunpack.c.l.b16 %v2993
      %v3133 = vunpack.c.l.b16 %v2994
      %v3134 = vpack.c.b16 %v3071, %v3070
      %v3135 = vpack.c.b16 %v3073, %v3072
      %v3136 = vpack.c.b16 %v3075, %v3074
      %v3137 = vpack.c.b16 %v3077, %v3076
      %v3138 = vpack.c.b16 %v3079, %v3078
      %v3139 = vpack.c.b16 %v3081, %v3080
      %v3140 = vpack.c.b16 %v3083, %v3082
      %v3141 = vpack.c.b16 %v3085, %v3084
      %v3142 = vpack.c.b16 %v3087, %v3086
      %v3143 = vpack.c.b16 %v3089, %v3088
      %v3144 = vpack.c.b16 %v3091, %v3090
      %v3145 = vpack.c.b16 %v3093, %v3092
      %v3146 = vpack.c.b16 %v3095, %v3094
      %v3147 = vpack.c.b16 %v3097, %v3096
      %v3148 = vpack.c.b16 %v3099, %v3098
      %v3149 = vpack.c.b16 %v3101, %v3100
      %v3150 = vpack.c.b16 %v3103, %v3102
      %v3151 = vpack.c.b16 %v3105, %v3104
      %v3152 = vpack.c.b16 %v3107, %v3106
      %v3153 = vpack.c.b16 %v3109, %v3108
      %v3154 = vpack.c.b16 %v3111, %v3110
      %v3155 = vpack.c.b16 %v3113, %v3112
      %v3156 = vpack.c.b16 %v3115, %v3114
      %v3157 = vpack.c.b16 %v3117, %v3116
      %v3158 = vpack.c.b16 %v3119, %v3118
      %v3159 = vpack.c.b16 %v3121, %v3120
      %v3160 = vpack.c.b16 %v3123, %v3122
      %v3161 = vpack.c.b16 %v3125, %v3124
      %v3162 = vpack.c.b16 %v3127, %v3126
      %v3163 = vpack.c.b16 %v3129, %v3128
      %v3164 = vpack.c.b16 %v3131, %v3130
      %v3165 = vpack.c.b16 %v3133, %v3132
      %3198 = vmatpush.bf16.msra.mxu0 %v3141
      %3199 = vmatpush.bf16.msra.mxu0 %v3140
      %3200 = vmatpush.bf16.msra.mxu0 %v3139
      %3201 = vmatpush.bf16.msra.mxu0 %v3138
      %3202 = vmatpush.bf16.msra.mxu0 %v3137
      %3203 = vmatpush.bf16.msra.mxu0 %v3136
      %3204 = vmatpush.bf16.msra.mxu0 %v3135
      %3205 = vmatpush.bf16.msra.mxu0 %v3134
      %3206 = vmatmul.bf16.gmra.mxu0 %v2998
      %v3207 = vpop.f32.mrf.mxu0
      %v3208 = vadd.f32 0.0, %v3207
      %v3209 = vpop.f32.mrf.mxu0
      %3210 = vdwg.mxu0
      %3211 = vmatpush.bf16.msra.mxu0 %v3149
      %3212 = vmatpush.bf16.msra.mxu0 %v3148
      %3213 = vmatpush.bf16.msra.mxu0 %v3147
      %3214 = vmatpush.bf16.msra.mxu0 %v3146
      %3215 = vmatpush.bf16.msra.mxu0 %v3145
      %3216 = vmatpush.bf16.msra.mxu0 %v3144
      %3217 = vmatpush.bf16.msra.mxu0 %v3143
      %3218 = vmatpush.bf16.msra.mxu0 %v3142
      %3219 = vmatmul.bf16.gmra.mxu0 %v2999
      %v3220 = vpop.f32.mrf.mxu0
      %v3221 = vadd.f32 %v3208, %v3220
      %v3222 = vpop.f32.mrf.mxu0
      %3223 = vdwg.mxu0
      %3224 = vmatpush.bf16.msra.mxu0 %v3157
      %3225 = vmatpush.bf16.msra.mxu0 %v3156
      %3226 = vmatpush.bf16.msra.mxu0 %v3155
      %3227 = vmatpush.bf16.msra.mxu0 %v3154
      %3228 = vmatpush.bf16.msra.mxu0 %v3153
      %3229 = vmatpush.bf16.msra.mxu0 %v3152
      %3230 = vmatpush.bf16.msra.mxu0 %v3151
      %3231 = vmatpush.bf16.msra.mxu0 %v3150
      %3232 = vmatmul.bf16.gmra.mxu0 %v3000
      %v3233 = vpop.f32.mrf.mxu0
      %v3234 = vadd.f32 %v3221, %v3233
      %v3235 = vpop.f32.mrf.mxu0
      %3236 = vdwg.mxu0
      %3237 = vmatpush.bf16.msra.mxu0 %v3165
      %3238 = vmatpush.bf16.msra.mxu0 %v3164
      %3239 = vmatpush.bf16.msra.mxu0 %v3163
      %3240 = vmatpush.bf16.msra.mxu0 %v3162
      %3241 = vmatpush.bf16.msra.mxu0 %v3161
      %3242 = vmatpush.bf16.msra.mxu0 %v3160
      %3243 = vmatpush.bf16.msra.mxu0 %v3159
      %3244 = vmatpush.bf16.msra.mxu0 %v3158
      %3245 = vmatmul.bf16.gmra.mxu0 %v3001
      %v3246 = vpop.f32.mrf.mxu0
      %v3247 = vadd.f32 %v3234, %v3246
      %v3248 = vpop.f32.mrf.mxu0
      %3249 = vdwg.mxu0
      %v3250 = vadd.f32 %v2923, %v3247
      %v3251 = vld [vmem:[%s214] sm:$0x1]
      %v3253 = vperm.slane %v3251, 0
      %v3255 = vadd.f32 %v3250, %v3253
      %vm3256 = vcmask 3072
      %3257 = vst.msk [vmem:[%s221] sm:$0xf] %vm3256, %v3255
      %p3258 = scmp.lt.s32.totalorder %s20, 1
      %s3259 = scalar_select %p3258, %s20, 1
      %p3260 = scmp.lt.s32.totalorder %s21, 0
      %s3261 = scalar_select %p3260, %s21, 0
      %s3262 = sadd.s32 %s3261, %s3259
      %s3263 = smul.addr %s3262, 4
      %s3264 = scalar_lea.vmem %s3, %s3263
      // Predicated region
      $region33: #{discriminator_forward.9} parent=31 // pred_check
        %p3265 = pneg %p126
      $region34: #{discriminator_forward.9} parent=31 // pred_check_branch
        %3267 = sbr.rel (%p3265) target = $region36
      $region35: #{discriminator_forward.9} parent=31 // pred_region
        _
      $region36: #{discriminator_forward.9} parent=31 // pred_fallthru
        _
    $region32: #{discriminator_forward.9} parent=5 // pred_fallthru
      _
    %p3268 = scmp.le.s32.totalorder 2, %s11
    // Predicated region
    $region37: #{discriminator_forward.9} parent=5 // pred_check
      %p3269 = pneg %p3268
    $region38: #{discriminator_forward.9} parent=5 // pred_check_branch
      %3271 = sbr.rel (%p3269) target = $region40
    $region39: #{discriminator_forward.9} parent=5 // pred_region
      %s3272 = ssub.s32 %s11, 2
      // Predicated region
      $region41: #{discriminator_forward.9} parent=39 // pred_check
        %p3273 = pneg %p132
      $region42: #{discriminator_forward.9} parent=39 // pred_check_branch
        %3275 = sbr.rel (%p3273) target = $region44
      $region43: #{discriminator_forward.9} parent=39 // pred_region
        %p3276 = scmp.lt.s32.totalorder %s22, 1
        %s3277 = scalar_select %p3276, %s22, 1
        %p3278 = scmp.lt.s32.totalorder %s23, 0
        %s3279 = scalar_select %p3278, %s23, 0
        %s3280 = sadd.s32 %s3279, %s3277
        %s3281 = smul.addr %s3280, 4
        %s3282 = scalar_lea.vmem %s3, %s3281
      $region44: #{discriminator_forward.9} parent=39 // pred_fallthru
        _
    $region40: #{discriminator_forward.9} parent=5 // pred_fallthru
      _
  $region6: #{discriminator_forward.9} parent=0 // loop_footer
    %s15 = sadd.s32 1, %s11
  $region7: #{discriminator_forward.9} parent=0 // loop_footer_branch
    %10 = sbr.rel target = $region3
  $region8: #{discriminator_forward.9} parent=0 // loop_exit
    _

</llo_original>
